<compile_context>
chip_gen: v6e
topology: v6e:2x2x1
jax: 0.10.0
libtpu: 0.0.40
codegen_flags: <defaults>
</compile_context>

<pallas_src>
import jax
import jax.numpy as jnp
from jax import lax
from jax.experimental import pallas as pl
from jax.experimental.pallas import tpu as pltpu

# ----------------------------------------------------------------------------
# Hyper-parameters mirroring STGCN.__init__ at small, TPU-friendly sizes
# ----------------------------------------------------------------------------
BATCH = 2            # n_batch
NUM_FRAMES = 8       # cfg.config['data']['num_frames']
NUM_JOINTS = 16      # cfg.dataset_config.joint_num
NUM_DIM = 3          # xyz
NUM_SEEDS = 8        # cfg.config['data']['num_seeds'] (>= num_frames -> linspace branch)
ORIGIN_JOINT_ID = 0  # cfg.dataset_config.origin_joint_id
KNN = 20             # self.knn
IN_CHANNELS = 64
OUT_JOINT_CHANNELS = 64
OUT_CHANNELS = 256
TEMPORAL_KERNEL = 3
SPATIAL_KERNEL = 3   # A.shape[0]  (spatial partitions)
NUM_BLOCKS = 6
BN_EPS = 1e-5
PAD_DIM = 8          # xyz padded 3 -> 8 along the matmul K (lane) dim of the first MLP layer

T = NUM_FRAMES
J = NUM_JOINTS
C = IN_CHANNELS


# ============================================================================
# Chip-aware batch folding: fold batch into rows on single-TC chips
# ============================================================================
def _pick_batch_fold(batch):
    try:
        kind = jax.devices()[0].device_kind.lower()
    except Exception:
        return batch
    multi_tc = ("v7" in kind) or ("7x" in kind) or ("v4" in kind) or ("v5p" in kind)
    return 1 if multi_tc else batch


# ============================================================================
# The fused Pallas kernel (parameterized by BB = batch elements per grid step)
# ============================================================================
def _make_kernel(bb):
    BT = bb * T                 # rows of the per-frame (batch, time) axis
    ROWS = J * BT               # skeleton activation rows, ordered (joint, batch, time)
    RELR = BT * KNN             # knn-graph rows, ordered (batch, time, knn)
    f32 = jnp.float32
    bf16 = jnp.bfloat16

    def kernel(rel_ref, xrel_ref,
               mw1_ref, mw2_ref, mw3_ref, mb_ref,          # packed pos_embed / sk_feat MLPs
               wg_ref, ak_ref, wt_ref, blkb_ref,            # 6 stacked st_gcn blocks
               wj_ref, cjb_ref,                             # conv_joint
               out_ref):

        def mlp(xin, w1, w2, w3, bias):
            # SingleConv(3->64,'cbr') -> SingleConv(64->64,'cbr') -> SingleConv(64->64,'c')
            # BN scale folded into the conv weights; bf16 matmuls, f32 accumulation.
            h = jnp.dot(xin, w1, preferred_element_type=f32) + bias[0:1, :]
            h = jnp.maximum(h, 0.0)
            h = jnp.dot(h.astype(bf16), w2, preferred_element_type=f32) + bias[1:2, :]
            h = jnp.maximum(h, 0.0)
            return jnp.dot(h.astype(bf16), w3, preferred_element_type=f32) + bias[2:3, :]

        # ---- pos_embed MLP over knn temporal-graph offsets, then mean over KNN ----
        rel = rel_ref[0].astype(bf16)                                  # (RELR, 8)
        hp = mlp(rel, mw1_ref[0], mw2_ref[0], mw3_ref[0], mb_ref[0])   # (RELR, 64)
        seg_c = lax.broadcasted_iota(jnp.int32, (BT, RELR), 1)
        seg_r = lax.broadcasted_iota(jnp.int32, (BT, RELR), 0)
        in_seg = (seg_c >= seg_r * KNN) & (seg_c < (seg_r + 1) * KNN)
        seg = jnp.where(in_seg, 1.0, 0.0).astype(bf16)                 # (BT, RELR)
        pos = jnp.dot(seg, hp.astype(bf16),
                      preferred_element_type=f32) * (1.0 / KNN)        # (BT, 64) knn mean

        # ---- sk_feat MLP + broadcast-add of pos over joints (rows = (j, b, t)) ----
        xr = xrel_ref[0].astype(bf16)                                  # (ROWS, 8)
        feats = mlp(xr, mw1_ref[1], mw2_ref[1], mw3_ref[1], mb_ref[1])  # (ROWS, 64)
        rep_r = lax.broadcasted_iota(jnp.int32, (ROWS, BT), 0)
        rep_c = lax.broadcasted_iota(jnp.int32, (ROWS, BT), 1)
        rep = jnp.where((rep_r % BT) == rep_c, 1.0, 0.0).astype(bf16)  # (ROWS, BT)
        x = feats + jnp.dot(rep, pos.astype(bf16), preferred_element_type=f32)

        # temporal boundary masks: row = j*BT + b*T + t  ->  t == row % T
        tpos = lax.broadcasted_iota(jnp.int32, (ROWS, C), 0) % T
        is_t0 = tpos == 0
        is_tl = tpos == (T - 1)

        # ---- 6 st_gcn blocks in a fori_loop (bounded live ranges) ----
        def block(l, x):
            xb = x.astype(bf16)
            # gcn: fused per-partition 1x1 convs (BN1 scale folded), 192-lane output
            y_all = jnp.dot(xb, wg_ref[l], preferred_element_type=f32)   # (ROWS, 192)
            bv = blkb_ref[l]                                             # (5, 64)
            acc = jnp.zeros((ROWS, C), f32)
            for k in range(SPATIAL_KERNEL):
                yk = (y_all[:, k * C:(k + 1) * C] + bv[k:k + 1, :]).astype(bf16)
                acc = acc + jnp.dot(ak_ref[l, k], yk, preferred_element_type=f32)
            # tcn: BN1 shift -> ReLU -> 3-tap temporal conv (BN2 folded) -> residual -> ReLU
            h = jnp.maximum(acc + bv[3:4, :], 0.0)                       # (ROWS, 64)
            h_prev = jnp.where(is_t0, 0.0, pltpu.roll(h, 1, axis=0)).astype(bf16)
            h_next = jnp.where(is_tl, 0.0, pltpu.roll(h, ROWS - 1, axis=0)).astype(bf16)
            wt = wt_ref[l]                                               # (3, 64, 64)
            out = (jnp.dot(h_prev, wt[0], preferred_element_type=f32)
                   + jnp.dot(h.astype(bf16), wt[1], preferred_element_type=f32)
                   + jnp.dot(h_next, wt[2], preferred_element_type=f32)
                   + bv[4:5, :])
            out = out + (l > 0).astype(f32) * x      # identity residual, blocks 1..5 only
            return jnp.maximum(out, 0.0)

        x = lax.fori_loop(0, NUM_BLOCKS, block, x)

        # ---- conv_joint: Conv1d(J*64 -> 256, k=1) over (batch, time) ----
        # Per-joint (BT,64) slabs are contiguous in the (j, b, t) row order; lane-concat
        # them into one (BT, J*64) slab and do a single K=1024 matmul (no perm matmul,
        # no 16-push loop).
        xflat = jnp.concatenate(
            [x[j * BT:(j + 1) * BT, :] for j in range(J)], axis=-1).astype(bf16)
        sf = jnp.dot(xflat, wj_ref[...], preferred_element_type=f32) + cjb_ref[...]
        out_ref[0] = sf                                                  # (BT, 256) lane-dense

    return kernel, BT, ROWS, RELR


# ============================================================================
# pallas_call wrapper
# ============================================================================
def _fused_call(rel, xrel, kops, bb):
    kernel, BT, ROWS, RELR = _make_kernel(bb)
    G = rel.shape[0]

    def const_spec(a):
        nd = a.ndim
        return pl.BlockSpec(a.shape, lambda b, _nd=nd: (0,) * _nd)

    in_specs = ([pl.BlockSpec((1, RELR, PAD_DIM), lambda b: (b, 0, 0)),
                 pl.BlockSpec((1, ROWS, PAD_DIM), lambda b: (b, 0, 0))]
                + [const_spec(a) for a in kops])

    flops_per_step = (
        RELR * (PAD_DIM + 64 + 64) * 64 * 2                      # pos_embed MLP
        + BT * RELR * 64 * 2                                     # knn mean
        + ROWS * (PAD_DIM + 64 + 64) * 64 * 2                    # sk_feat MLP
        + ROWS * BT * 64 * 2                                     # pos broadcast
        + NUM_BLOCKS * (ROWS * 64 * 192 * 2
                        + SPATIAL_KERNEL * ROWS * ROWS * 64 * 2
                        + 3 * ROWS * 64 * 64 * 2)                # st_gcn blocks
        + BT * (J * OUT_JOINT_CHANNELS) * OUT_CHANNELS * 2       # conv_joint
    )
    bytes_accessed = int(
        (rel.size + xrel.size) * 4
        + sum(int(a.size) * a.dtype.itemsize for a in kops)
        + G * BT * OUT_CHANNELS * 4)
    cost = pl.CostEstimate(flops=int(flops_per_step * G),
                           transcendentals=0,
                           bytes_accessed=bytes_accessed)

    return pl.pallas_call(
        kernel,
        grid=(G,),
        in_specs=in_specs,
        out_specs=pl.BlockSpec((1, BT, OUT_CHANNELS), lambda b: (b, 0, 0)),
        out_shape=jax.ShapeDtypeStruct((G, BT, OUT_CHANNELS), jnp.float32),
        compiler_params=pltpu.CompilerParams(
            dimension_semantics=("parallel",) if G > 1 else ("arbitrary",)),
        cost_estimate=cost,
    )(rel, xrel, *kops)


# ============================================================================
# Deterministic parameter initialization (shapes from STGCN.__init__)
# ============================================================================
def _fold_bn(gamma, beta, mean, var, eps=BN_EPS):
    s = gamma / jnp.sqrt(var + eps)
    t = beta - mean * s
    return s[None, :], t[None, :]


def _default_bn(c):
    # PyTorch BatchNorm defaults (eval mode): weight=1, bias=0, rm=0, rv=1
    return _fold_bn(jnp.ones((c,), jnp.float32), jnp.zeros((c,), jnp.float32),
                    jnp.zeros((c,), jnp.float32), jnp.ones((c,), jnp.float32))


def _init_point_mlp(key, cin, cmid, cout):
    k1, k2, k3, k4 = jax.random.split(key, 4)
    s1, t1 = _default_bn(cmid)
    s2, t2 = _default_bn(cmid)
    return dict(
        w1=0.2 * jax.random.normal(k1, (cin, cmid), jnp.float32), s1=s1, t1=t1,
        w2=0.1 * jax.random.normal(k2, (cmid, cmid), jnp.float32), s2=s2, t2=t2,
        w3=0.1 * jax.random.normal(k3, (cmid, cout), jnp.float32),
        b3=0.05 * jax.random.normal(k4, (1, cout), jnp.float32),
    )


def _init_block(key, cin, cout, k_spatial):
    k1, k2, k3, k4 = jax.random.split(key, 4)
    s1, t1 = _default_bn(cout)
    s2, t2 = _default_bn(cout)
    return dict(
        wg=0.1 * jax.random.normal(k1, (k_spatial, cin, cout), jnp.float32),
        bg=0.05 * jax.random.normal(k2, (k_spatial, 1, cout), jnp.float32),
        s1=s1, t1=t1,
        wt=0.1 * jax.random.normal(k3, (TEMPORAL_KERNEL, cout, cout), jnp.float32),
        bt=0.05 * jax.random.normal(k4, (1, cout), jnp.float32),
        s2=s2, t2=t2,
    )


def _build_graph_adjacency(n_joints, k_spatial):
    # TODO(synk): Graph(layout='virtualroom', strategy='spatial', max_hop=5) depends
    # on the dataset skeleton; replaced by a deterministic synthetic chain skeleton
    # with the same (K, V, V) spatial-partition / normalization structure.
    eye = jnp.eye(n_joints, dtype=jnp.float32)
    toward = jnp.zeros((n_joints, n_joints), jnp.float32)
    toward = toward.at[jnp.arange(1, n_joints), jnp.arange(0, n_joints - 1)].set(1.0)
    away = toward.T

    def _norm(a):
        d = a.sum(axis=0)
        dinv = jnp.where(d > 0, 1.0 / jnp.maximum(d, 1e-6), 0.0)
        return a * dinv[None, :]

    mats = [eye, _norm(toward), _norm(away)]
    while len(mats) < k_spatial:
        mats.append(jnp.zeros((n_joints, n_joints), jnp.float32))
    return jnp.stack(mats[:k_spatial], axis=0)


def init_params(key):
    keys = jax.random.split(key, NUM_BLOCKS + 4)
    params = dict(
        pos_embed=_init_point_mlp(keys[0], NUM_DIM, 64, IN_CHANNELS),
        sk_feat=_init_point_mlp(keys[1], NUM_DIM, 64, IN_CHANNELS),
        A=_build_graph_adjacency(NUM_JOINTS, SPATIAL_KERNEL),
        edge_importance=[jnp.ones((SPATIAL_KERNEL, NUM_JOINTS, NUM_JOINTS), jnp.float32)
                         for _ in range(NUM_BLOCKS)],   # nn.Parameter(torch.ones(A.size()))
        # TODO(synk): PyTorch flattens conv_joint input channels as (channel, joint);
        # here the synthetic weight is stored per-(joint, channel) block -- a pure
        # relabelling with synthetic weights, but real checkpoints would need a permute.
        conv_joint_w=0.05 * jax.random.normal(
            keys[2], (NUM_JOINTS, OUT_JOINT_CHANNELS, OUT_CHANNELS), jnp.float32),
        conv_joint_b=0.05 * jax.random.normal(keys[3], (1, OUT_CHANNELS), jnp.float32),
        blocks=[],
    )
    for i in range(NUM_BLOCKS):
        params['blocks'].append(_init_block(keys[4 + i], 64, 64, SPATIAL_KERNEL))
    return params


# ============================================================================
# One-time (eager, outside jit) weight packing / BN folding / kron construction
# ============================================================================
def prepare_params(params, bb):
    bf16 = jnp.bfloat16
    f32 = jnp.float32
    BT = bb * T

    def fold_mlp(p):
        w1 = p['w1'] * p['s1']                                   # fold BN1 scale
        w1 = jnp.concatenate(
            [w1, jnp.zeros((PAD_DIM - NUM_DIM, w1.shape[1]), f32)], axis=0)
        w2 = p['w2'] * p['s2']                                   # fold BN2 scale
        bias = jnp.concatenate([p['t1'], p['t2'], p['b3']], axis=0)   # (3, 64)
        return w1, w2, p['w3'], bias

    pw1, pw2, pw3, pb = fold_mlp(params['pos_embed'])
    sw1, sw2, sw3, sb = fold_mlp(params['sk_feat'])
    mw1 = jnp.stack([pw1, sw1]).astype(bf16)                     # (2, 8, 64)
    mw2 = jnp.stack([pw2, sw2]).astype(bf16)                     # (2, 64, 64)
    mw3 = jnp.stack([pw3, sw3]).astype(bf16)                     # (2, 64, 64)
    mb = jnp.stack([pb, sb]).astype(f32)                         # (2, 3, 64)

    eye_bt = jnp.eye(BT, dtype=f32)
    wg_l, ak_l, wt_l, bv_l = [], [], [], []
    for l, blk in enumerate(params['blocks']):
        s1, t1 = blk['s1'], blk['t1']
        s2, t2 = blk['s2'], blk['t2']
        # BN1 per-channel scale commutes with the joint contraction -> fold into wg/bg
        wg_s = blk['wg'] * s1[None]                              # (K, 64, 64)
        wg_l.append(jnp.concatenate([wg_s[k] for k in range(SPATIAL_KERNEL)], axis=-1))
        a_eff = params['A'] * params['edge_importance'][l]       # A * importance
        a_t = jnp.transpose(a_eff, (0, 2, 1))                    # a_t[k][w,v] = A[k,v,w]
        ak_l.append(jnp.stack(
            [jnp.kron(a_t[k], eye_bt) for k in range(SPATIAL_KERNEL)], axis=0))
        wt_l.append(blk['wt'] * s2[None])                        # fold BN2 scale into taps
        bg_s = (blk['bg'] * s1).reshape(SPATIAL_KERNEL, C)
        bv_l.append(jnp.concatenate([bg_s, t1, blk['bt'] * s2 + t2], axis=0))  # (5, 64)

    wg = jnp.stack(wg_l).astype(bf16)                            # (NB, 64, 192)
    ak = jnp.stack(ak_l).astype(bf16)                            # (NB, K, J*BT, J*BT)
    wt = jnp.stack(wt_l).astype(bf16)                            # (NB, 3, 64, 64)
    bv = jnp.stack(bv_l).astype(f32)                             # (NB, 5, 64)

    wj = params['conv_joint_w'].reshape(
        J * OUT_JOINT_CHANNELS, OUT_CHANNELS).astype(bf16)       # (1024, 256)
    cjb = params['conv_joint_b'].astype(f32)                     # (1, 256)

    return (mw1, mw2, mw3, mb, wg, ak, wt, bv, wj, cjb)


# ============================================================================
# Forward pass (index glue in JAX, everything heavy in ONE Pallas kernel)
# ============================================================================
def make_forward(bb):
    @jax.jit
    def forward(input_joints, prepared):
        B, T_, J_, D = input_joints.shape
        G = B // bb
        f32 = jnp.float32
        x_in = input_joints.astype(f32)

        # ---- seed indices (n_seeds >= num_frames branch) ----
        seed_inds = jnp.round(jnp.linspace(0.0, T_ - 1, NUM_SEEDS)).astype(jnp.int32)
        seed_inds = jnp.broadcast_to(seed_inds[None, :], (B, NUM_SEEDS))

        # ---- origin-relative joints and temporal knn graph offsets ----
        origin = x_in[:, :, ORIGIN_JOINT_ID, :]                              # (B, T, 3)
        x_rel = x_in - x_in[:, :, ORIGIN_JOINT_ID:ORIGIN_JOINT_ID + 1, :]    # (B, T, J, 3)

        offs = jnp.arange(-(KNN // 2), KNN // 2)                 # same window as the module
        idx = jnp.arange(T_)[None, :, None] + offs[None, None, :]
        idx = jnp.clip(idx, 0, T_ - 1)
        idx = jnp.broadcast_to(idx, (B, T_, KNN))
        b_idx = jnp.arange(B)[:, None, None]
        neigh = origin[b_idx, idx]                                           # (B, T, KNN, 3)
        rel_dist = neigh - origin[:, :, None, :]          # get_graph_offset(...).squeeze(3)

        def pad_last(a):
            return jnp.concatenate(
                [a, jnp.zeros(a.shape[:-1] + (PAD_DIM - D,), f32)], axis=-1)

        # rows (batch, time, knn) per grid-group
        rel = pad_last(rel_dist.reshape(G, bb * T_ * KNN, D))                # (G, RELR, 8)
        # rows (joint, batch, time) per grid-group
        xr = jnp.transpose(x_rel, (0, 2, 1, 3)).reshape(G, bb, J_, T_, D)
        xr = jnp.transpose(xr, (0, 2, 1, 3, 4)).reshape(G, J_ * bb * T_, D)
        xrel = pad_last(xr)                                                  # (G, ROWS, 8)

        # ---- single fused Pallas kernel: MLPs + 6 st_gcn blocks + conv_joint ----
        sf = _fused_call(rel, xrel, prepared, bb)                            # (G, bb*T, 256)
        sf_full = sf.reshape(B, T_, OUT_CHANNELS)

        # ---- gather seeds (index glue) ----
        sk_idx = jnp.broadcast_to(seed_inds[:, :, None, None], (B, NUM_SEEDS, J_, D))
        seed_skeleton = jnp.take_along_axis(x_in, sk_idx, axis=1)
        sf_idx = jnp.broadcast_to(seed_inds[:, :, None], (B, NUM_SEEDS, OUT_CHANNELS))
        seed_features = jnp.take_along_axis(sf_full, sf_idx, axis=1)

        return dict(seed_inds=seed_inds,
                    seed_skeleton=seed_skeleton[..., :3],
                    seed_features=seed_features)

    return forward


if __name__ == "__main__":
    key = jax.random.PRNGKey(0)
    pkey, xkey = jax.random.split(key)
    params = init_params(pkey)

    bb = _pick_batch_fold(BATCH)          # fold batch into rows on single-TC chips
    # Hoisted out of the jitted forward: BN folds, kron matrices, weight stacking.
    prepared = prepare_params(params, bb)

    fwd = make_forward(bb)
    input_joints = jax.random.normal(
        xkey, (BATCH, NUM_FRAMES, NUM_JOINTS, NUM_DIM), jnp.float32)

    end_points = fwd(input_joints, prepared)
    jax.block_until_ready(end_points)

    assert end_points['seed_inds'].shape == (BATCH, NUM_SEEDS)
    assert end_points['seed_skeleton'].shape == (BATCH, NUM_SEEDS, NUM_JOINTS, 3)
    assert end_points['seed_features'].shape == (BATCH, NUM_SEEDS, OUT_CHANNELS)
    assert bool(jnp.all(jnp.isfinite(end_points['seed_features'])))
    print("KERNEL_OK")
</pallas_src>

<mosaic_0001>
module attributes {stable_mosaic.version = 11 : i64} {
  func.func @kernel(%arg0: i32, %arg1: memref<1x320x8xf32, #tpu.memory_space<vmem>>, %arg2: memref<1x256x8xf32, #tpu.memory_space<vmem>>, %arg3: memref<2x8x64xbf16, #tpu.memory_space<vmem>>, %arg4: memref<2x64x64xbf16, #tpu.memory_space<vmem>>, %arg5: memref<2x64x64xbf16, #tpu.memory_space<vmem>>, %arg6: memref<2x3x64xf32, #tpu.memory_space<vmem>>, %arg7: memref<6x64x192xbf16, #tpu.memory_space<vmem>>, %arg8: memref<6x3x256x256xbf16, #tpu.memory_space<vmem>>, %arg9: memref<6x3x64x64xbf16, #tpu.memory_space<vmem>>, %arg10: memref<6x5x64xf32, #tpu.memory_space<vmem>>, %arg11: memref<1024x256xbf16, #tpu.memory_space<vmem>>, %arg12: memref<1x256xf32, #tpu.memory_space<vmem>>, %arg13: memref<1x16x256xf32, #tpu.memory_space<vmem>>) attributes {dimension_semantics = [#tpu.dimension_semantics<arbitrary>], iteration_bounds = array<i64: 1>, scalar_prefetch = 0 : i64, scratch_operands = 0 : i64, tpu.core_type = #tpu.core_type<tc>, window_params = [{transform_indices = @transform_0, window_bounds = array<i64: 1, 320, 8>}, {transform_indices = @transform_1, window_bounds = array<i64: 1, 256, 8>}, {pipeline_mode = #tpu.pipeline_mode<synchronous>, transform_indices = @transform_2, window_bounds = array<i64: 2, 8, 64>}, {pipeline_mode = #tpu.pipeline_mode<synchronous>, transform_indices = @transform_3, window_bounds = array<i64: 2, 64, 64>}, {pipeline_mode = #tpu.pipeline_mode<synchronous>, transform_indices = @transform_4, window_bounds = array<i64: 2, 64, 64>}, {pipeline_mode = #tpu.pipeline_mode<synchronous>, transform_indices = @transform_5, window_bounds = array<i64: 2, 3, 64>}, {pipeline_mode = #tpu.pipeline_mode<synchronous>, transform_indices = @transform_6, window_bounds = array<i64: 6, 64, 192>}, {pipeline_mode = #tpu.pipeline_mode<synchronous>, transform_indices = @transform_7, window_bounds = array<i64: 6, 3, 256, 256>}, {pipeline_mode = #tpu.pipeline_mode<synchronous>, transform_indices = @transform_8, window_bounds = array<i64: 6, 3, 64, 64>}, {pipeline_mode = #tpu.pipeline_mode<synchronous>, transform_indices = @transform_9, window_bounds = array<i64: 6, 5, 64>}, {pipeline_mode = #tpu.pipeline_mode<synchronous>, transform_indices = @transform_10, window_bounds = array<i64: 1024, 256>}, {pipeline_mode = #tpu.pipeline_mode<synchronous>, transform_indices = @transform_11, window_bounds = array<i64: 1, 256>}, {transform_indices = @transform_12, window_bounds = array<i64: 1, 16, 256>}]} {
    %c0 = arith.constant 0 : index
    %c0_0 = arith.constant 0 : index
    %c0_1 = arith.constant 0 : index
    %0 = vector.load %arg1[%c0, %c0_0, %c0_1] : memref<1x320x8xf32, #tpu.memory_space<vmem>>, vector<1x320x8xf32>
    %1 = vector.shape_cast %0 : vector<1x320x8xf32> to vector<320x8xf32>
    %2 = arith.truncf %1 : vector<320x8xf32> to vector<320x8xbf16>
    %c0_2 = arith.constant 0 : index
    %c0_3 = arith.constant 0 : index
    %c0_4 = arith.constant 0 : index
    %3 = vector.load %arg3[%c0_2, %c0_3, %c0_4] : memref<2x8x64xbf16, #tpu.memory_space<vmem>>, vector<1x8x64xbf16>
    %4 = vector.shape_cast %3 : vector<1x8x64xbf16> to vector<8x64xbf16>
    %c0_5 = arith.constant 0 : index
    %c0_6 = arith.constant 0 : index
    %c0_7 = arith.constant 0 : index
    %5 = vector.load %arg4[%c0_5, %c0_6, %c0_7] : memref<2x64x64xbf16, #tpu.memory_space<vmem>>, vector<1x64x64xbf16>
    %6 = vector.shape_cast %5 : vector<1x64x64xbf16> to vector<64x64xbf16>
    %c0_8 = arith.constant 0 : index
    %c0_9 = arith.constant 0 : index
    %c0_10 = arith.constant 0 : index
    %7 = vector.load %arg5[%c0_8, %c0_9, %c0_10] : memref<2x64x64xbf16, #tpu.memory_space<vmem>>, vector<1x64x64xbf16>
    %8 = vector.shape_cast %7 : vector<1x64x64xbf16> to vector<64x64xbf16>
    %c0_11 = arith.constant 0 : index
    %c0_12 = arith.constant 0 : index
    %c0_13 = arith.constant 0 : index
    %9 = vector.load %arg6[%c0_11, %c0_12, %c0_13] : memref<2x3x64xf32, #tpu.memory_space<vmem>>, vector<1x3x64xf32>
    %10 = vector.shape_cast %9 : vector<1x3x64xf32> to vector<3x64xf32>
    %cst = arith.constant dense<0.000000e+00> : vector<320x64xf32>
    %11 = tpu.matmul %2, %4, %cst {dimension_numbers = #tpu.dot_dimension_numbers<[1], [0], [0], [1], [0, 0, 1, 1], [], []>} : vector<320x8xbf16>, vector<8x64xbf16>, vector<320x64xf32> -> vector<320x64xf32>
    %12 = vector.extract_strided_slice %10 {offsets = [0, 0], sizes = [1, 64], strides = [1, 1]} : vector<3x64xf32> to vector<1x64xf32>
    %13 = vector.broadcast %12 : vector<1x64xf32> to vector<320x64xf32>
    %14 = arith.addf %11, %13 : vector<320x64xf32>
    %cst_14 = arith.constant 0.000000e+00 : f32
    %15 = vector.broadcast %cst_14 : f32 to vector<320x64xf32>
    %16 = arith.maximumf %14, %15 : vector<320x64xf32>
    %17 = arith.truncf %16 : vector<320x64xf32> to vector<320x64xbf16>
    %cst_15 = arith.constant dense<0.000000e+00> : vector<320x64xf32>
    %18 = tpu.matmul %17, %6, %cst_15 {dimension_numbers = #tpu.dot_dimension_numbers<[1], [0], [0], [1], [0, 0, 1, 1], [], []>} : vector<320x64xbf16>, vector<64x64xbf16>, vector<320x64xf32> -> vector<320x64xf32>
    %19 = vector.extract_strided_slice %10 {offsets = [1, 0], sizes = [1, 64], strides = [1, 1]} : vector<3x64xf32> to vector<1x64xf32>
    %20 = vector.broadcast %19 : vector<1x64xf32> to vector<320x64xf32>
    %21 = arith.addf %18, %20 : vector<320x64xf32>
    %cst_16 = arith.constant 0.000000e+00 : f32
    %22 = vector.broadcast %cst_16 : f32 to vector<320x64xf32>
    %23 = arith.maximumf %21, %22 : vector<320x64xf32>
    %24 = arith.truncf %23 : vector<320x64xf32> to vector<320x64xbf16>
    %cst_17 = arith.constant dense<0.000000e+00> : vector<320x64xf32>
    %25 = tpu.matmul %24, %8, %cst_17 {dimension_numbers = #tpu.dot_dimension_numbers<[1], [0], [0], [1], [0, 0, 1, 1], [], []>} : vector<320x64xbf16>, vector<64x64xbf16>, vector<320x64xf32> -> vector<320x64xf32>
    %26 = vector.extract_strided_slice %10 {offsets = [2, 0], sizes = [1, 64], strides = [1, 1]} : vector<3x64xf32> to vector<1x64xf32>
    %27 = vector.broadcast %26 : vector<1x64xf32> to vector<320x64xf32>
    %28 = arith.addf %25, %27 : vector<320x64xf32>
    %29 = tpu.iota {dimensions = array<i32: 1>} : vector<16x320xi32>
    %30 = tpu.iota {dimensions = array<i32: 0>} : vector<16x320xi32>
    %c20_i32 = arith.constant 20 : i32
    %31 = vector.broadcast %c20_i32 : i32 to vector<16x320xi32>
    %32 = arith.muli %30, %31 : vector<16x320xi32>
    %33 = arith.cmpi sge, %29, %32 : vector<16x320xi32>
    %c1_i32 = arith.constant 1 : i32
    %34 = vector.broadcast %c1_i32 : i32 to vector<16x320xi32>
    %35 = arith.addi %30, %34 : vector<16x320xi32>
    %c20_i32_18 = arith.constant 20 : i32
    %36 = vector.broadcast %c20_i32_18 : i32 to vector<16x320xi32>
    %37 = arith.muli %35, %36 : vector<16x320xi32>
    %38 = arith.cmpi slt, %29, %37 : vector<16x320xi32>
    %39 = arith.andi %33, %38 : vector<16x320xi1>
    %cst_19 = arith.constant 1.000000e+00 : f32
    %cst_20 = arith.constant 0.000000e+00 : f32
    %40 = vector.broadcast %cst_19 : f32 to vector<16x320xf32>
    %41 = vector.broadcast %cst_20 : f32 to vector<16x320xf32>
    %42 = arith.select %39, %40, %41 : vector<16x320xi1>, vector<16x320xf32>
    %43 = arith.truncf %42 : vector<16x320xf32> to vector<16x320xbf16>
    %44 = arith.truncf %28 : vector<320x64xf32> to vector<320x64xbf16>
    %cst_21 = arith.constant dense<0.000000e+00> : vector<16x64xf32>
    %45 = tpu.matmul %43, %44, %cst_21 {dimension_numbers = #tpu.dot_dimension_numbers<[1], [0], [0], [1], [0, 0, 1, 1], [], []>} : vector<16x320xbf16>, vector<320x64xbf16>, vector<16x64xf32> -> vector<16x64xf32>
    %cst_22 = arith.constant 5.000000e-02 : f32
    %46 = vector.broadcast %cst_22 : f32 to vector<16x64xf32>
    %47 = arith.mulf %45, %46 : vector<16x64xf32>
    %c0_23 = arith.constant 0 : index
    %c0_24 = arith.constant 0 : index
    %c0_25 = arith.constant 0 : index
    %48 = vector.load %arg2[%c0_23, %c0_24, %c0_25] : memref<1x256x8xf32, #tpu.memory_space<vmem>>, vector<1x256x8xf32>
    %49 = vector.shape_cast %48 : vector<1x256x8xf32> to vector<256x8xf32>
    %50 = arith.truncf %49 : vector<256x8xf32> to vector<256x8xbf16>
    %c1 = arith.constant 1 : index
    %c0_26 = arith.constant 0 : index
    %c0_27 = arith.constant 0 : index
    %51 = vector.load %arg3[%c1, %c0_26, %c0_27] : memref<2x8x64xbf16, #tpu.memory_space<vmem>>, vector<1x8x64xbf16>
    %52 = vector.shape_cast %51 : vector<1x8x64xbf16> to vector<8x64xbf16>
    %c1_28 = arith.constant 1 : index
    %c0_29 = arith.constant 0 : index
    %c0_30 = arith.constant 0 : index
    %53 = vector.load %arg4[%c1_28, %c0_29, %c0_30] : memref<2x64x64xbf16, #tpu.memory_space<vmem>>, vector<1x64x64xbf16>
    %54 = vector.shape_cast %53 : vector<1x64x64xbf16> to vector<64x64xbf16>
    %c1_31 = arith.constant 1 : index
    %c0_32 = arith.constant 0 : index
    %c0_33 = arith.constant 0 : index
    %55 = vector.load %arg5[%c1_31, %c0_32, %c0_33] : memref<2x64x64xbf16, #tpu.memory_space<vmem>>, vector<1x64x64xbf16>
    %56 = vector.shape_cast %55 : vector<1x64x64xbf16> to vector<64x64xbf16>
    %c1_34 = arith.constant 1 : index
    %c0_35 = arith.constant 0 : index
    %c0_36 = arith.constant 0 : index
    %57 = vector.load %arg6[%c1_34, %c0_35, %c0_36] : memref<2x3x64xf32, #tpu.memory_space<vmem>>, vector<1x3x64xf32>
    %58 = vector.shape_cast %57 : vector<1x3x64xf32> to vector<3x64xf32>
    %cst_37 = arith.constant dense<0.000000e+00> : vector<256x64xf32>
    %59 = tpu.matmul %50, %52, %cst_37 {dimension_numbers = #tpu.dot_dimension_numbers<[1], [0], [0], [1], [0, 0, 1, 1], [], []>} : vector<256x8xbf16>, vector<8x64xbf16>, vector<256x64xf32> -> vector<256x64xf32>
    %60 = vector.extract_strided_slice %58 {offsets = [0, 0], sizes = [1, 64], strides = [1, 1]} : vector<3x64xf32> to vector<1x64xf32>
    %61 = vector.broadcast %60 : vector<1x64xf32> to vector<256x64xf32>
    %62 = arith.addf %59, %61 : vector<256x64xf32>
    %cst_38 = arith.constant 0.000000e+00 : f32
    %63 = vector.broadcast %cst_38 : f32 to vector<256x64xf32>
    %64 = arith.maximumf %62, %63 : vector<256x64xf32>
    %65 = arith.truncf %64 : vector<256x64xf32> to vector<256x64xbf16>
    %cst_39 = arith.constant dense<0.000000e+00> : vector<256x64xf32>
    %66 = tpu.matmul %65, %54, %cst_39 {dimension_numbers = #tpu.dot_dimension_numbers<[1], [0], [0], [1], [0, 0, 1, 1], [], []>} : vector<256x64xbf16>, vector<64x64xbf16>, vector<256x64xf32> -> vector<256x64xf32>
    %67 = vector.extract_strided_slice %58 {offsets = [1, 0], sizes = [1, 64], strides = [1, 1]} : vector<3x64xf32> to vector<1x64xf32>
    %68 = vector.broadcast %67 : vector<1x64xf32> to vector<256x64xf32>
    %69 = arith.addf %66, %68 : vector<256x64xf32>
    %cst_40 = arith.constant 0.000000e+00 : f32
    %70 = vector.broadcast %cst_40 : f32 to vector<256x64xf32>
    %71 = arith.maximumf %69, %70 : vector<256x64xf32>
    %72 = arith.truncf %71 : vector<256x64xf32> to vector<256x64xbf16>
    %cst_41 = arith.constant dense<0.000000e+00> : vector<256x64xf32>
    %73 = tpu.matmul %72, %56, %cst_41 {dimension_numbers = #tpu.dot_dimension_numbers<[1], [0], [0], [1], [0, 0, 1, 1], [], []>} : vector<256x64xbf16>, vector<64x64xbf16>, vector<256x64xf32> -> vector<256x64xf32>
    %74 = vector.extract_strided_slice %58 {offsets = [2, 0], sizes = [1, 64], strides = [1, 1]} : vector<3x64xf32> to vector<1x64xf32>
    %75 = vector.broadcast %74 : vector<1x64xf32> to vector<256x64xf32>
    %76 = arith.addf %73, %75 : vector<256x64xf32>
    %77 = tpu.iota {dimensions = array<i32: 0>} : vector<256x16xi32>
    %78 = tpu.iota {dimensions = array<i32: 1>} : vector<256x16xi32>
    %c16_i32 = arith.constant 16 : i32
    %c0_i32 = arith.constant 0 : i32
    %79 = arith.cmpi eq, %c16_i32, %c0_i32 : i32
    %c1_i32_42 = arith.constant 1 : i32
    %80 = arith.select %79, %c1_i32_42, %c16_i32 : i32
    %81 = vector.broadcast %80 : i32 to vector<256x16xi32>
    %82 = arith.remsi %77, %81 : vector<256x16xi32>
    %c0_i32_43 = arith.constant 0 : i32
    %83 = vector.broadcast %c0_i32_43 : i32 to vector<256x16xi32>
    %84 = arith.cmpi ne, %82, %83 : vector<256x16xi32>
    %c0_i32_44 = arith.constant 0 : i32
    %85 = vector.broadcast %c0_i32_44 : i32 to vector<256x16xi32>
    %86 = arith.cmpi slt, %82, %85 : vector<256x16xi32>
    %c0_i32_45 = arith.constant 0 : i32
    %87 = arith.cmpi slt, %80, %c0_i32_45 : i32
    %88 = vector.broadcast %87 : i1 to vector<256x16xi1>
    %89 = vector.broadcast %88 : vector<256x16xi1> to vector<256x16xi1>
    %90 = arith.xori %86, %89 : vector<256x16xi1>
    %91 = arith.andi %90, %84 : vector<256x16xi1>
    %92 = vector.broadcast %80 : i32 to vector<256x16xi32>
    %93 = arith.addi %82, %92 : vector<256x16xi32>
    %94 = arith.select %91, %93, %82 : vector<256x16xi1>, vector<256x16xi32>
    %95 = arith.cmpi eq, %94, %78 : vector<256x16xi32>
    %cst_46 = arith.constant 1.000000e+00 : f32
    %cst_47 = arith.constant 0.000000e+00 : f32
    %96 = vector.broadcast %cst_46 : f32 to vector<256x16xf32>
    %97 = vector.broadcast %cst_47 : f32 to vector<256x16xf32>
    %98 = arith.select %95, %96, %97 : vector<256x16xi1>, vector<256x16xf32>
    %99 = arith.truncf %98 : vector<256x16xf32> to vector<256x16xbf16>
    %100 = arith.truncf %47 : vector<16x64xf32> to vector<16x64xbf16>
    %cst_48 = arith.constant dense<0.000000e+00> : vector<256x64xf32>
    %101 = tpu.matmul %99, %100, %cst_48 {dimension_numbers = #tpu.dot_dimension_numbers<[1], [0], [0], [1], [0, 0, 1, 1], [], []>} : vector<256x16xbf16>, vector<16x64xbf16>, vector<256x64xf32> -> vector<256x64xf32>
    %102 = arith.addf %76, %101 : vector<256x64xf32>
    %103 = tpu.iota {dimensions = array<i32: 0>} : vector<256x64xi32>
    %c8_i32 = arith.constant 8 : i32
    %c0_i32_49 = arith.constant 0 : i32
    %104 = arith.cmpi eq, %c8_i32, %c0_i32_49 : i32
    %c1_i32_50 = arith.constant 1 : i32
    %105 = arith.select %104, %c1_i32_50, %c8_i32 : i32
    %106 = vector.broadcast %105 : i32 to vector<256x64xi32>
    %107 = arith.remsi %103, %106 : vector<256x64xi32>
    %c0_i32_51 = arith.constant 0 : i32
    %108 = vector.broadcast %c0_i32_51 : i32 to vector<256x64xi32>
    %109 = arith.cmpi ne, %107, %108 : vector<256x64xi32>
    %c0_i32_52 = arith.constant 0 : i32
    %110 = vector.broadcast %c0_i32_52 : i32 to vector<256x64xi32>
    %111 = arith.cmpi slt, %107, %110 : vector<256x64xi32>
    %c0_i32_53 = arith.constant 0 : i32
    %112 = arith.cmpi slt, %105, %c0_i32_53 : i32
    %113 = vector.broadcast %112 : i1 to vector<256x64xi1>
    %114 = vector.broadcast %113 : vector<256x64xi1> to vector<256x64xi1>
    %115 = arith.xori %111, %114 : vector<256x64xi1>
    %116 = arith.andi %115, %109 : vector<256x64xi1>
    %117 = vector.broadcast %105 : i32 to vector<256x64xi32>
    %118 = arith.addi %107, %117 : vector<256x64xi32>
    %119 = arith.select %116, %118, %107 : vector<256x64xi1>, vector<256x64xi32>
    %c0_i32_54 = arith.constant 0 : i32
    %120 = vector.broadcast %c0_i32_54 : i32 to vector<256x64xi32>
    %121 = arith.cmpi eq, %119, %120 : vector<256x64xi32>
    %c7_i32 = arith.constant 7 : i32
    %122 = vector.broadcast %c7_i32 : i32 to vector<256x64xi32>
    %123 = arith.cmpi eq, %119, %122 : vector<256x64xi32>
    %c0_i32_55 = arith.constant 0 : i32
    %c6_i32 = arith.constant 6 : i32
    %124 = arith.addi %c0_i32_55, %c6_i32 : i32
    %c1_i32_56 = arith.constant 1 : i32
    %125 = scf.for %arg14 = %c0_i32_55 to %124 step %c1_i32_56 iter_args(%arg15 = %102) -> (vector<256x64xf32>)  : i32 {
      %152 = arith.truncf %arg15 : vector<256x64xf32> to vector<256x64xbf16>
      %153 = arith.index_cast %arg14 : i32 to index
      %c0_66 = arith.constant 0 : index
      %c0_67 = arith.constant 0 : index
      %154 = vector.load %arg7[%153, %c0_66, %c0_67] : memref<6x64x192xbf16, #tpu.memory_space<vmem>>, vector<1x64x192xbf16>
      %155 = vector.shape_cast %154 : vector<1x64x192xbf16> to vector<64x192xbf16>
      %cst_68 = arith.constant dense<0.000000e+00> : vector<256x192xf32>
      %156 = tpu.matmul %152, %155, %cst_68 {dimension_numbers = #tpu.dot_dimension_numbers<[1], [0], [0], [1], [0, 0, 1, 1], [], []>} : vector<256x64xbf16>, vector<64x192xbf16>, vector<256x192xf32> -> vector<256x192xf32>
      %157 = arith.index_cast %arg14 : i32 to index
      %c0_69 = arith.constant 0 : index
      %c0_70 = arith.constant 0 : index
      %158 = vector.load %arg10[%157, %c0_69, %c0_70] : memref<6x5x64xf32, #tpu.memory_space<vmem>>, vector<1x5x64xf32>
      %159 = vector.shape_cast %158 : vector<1x5x64xf32> to vector<5x64xf32>
      %cst_71 = arith.constant 0.000000e+00 : f32
      %160 = vector.broadcast %cst_71 : f32 to vector<256x64xf32>
      %161 = vector.extract_strided_slice %156 {offsets = [0, 0], sizes = [256, 64], strides = [1, 1]} : vector<256x192xf32> to vector<256x64xf32>
      %162 = vector.extract_strided_slice %159 {offsets = [0, 0], sizes = [1, 64], strides = [1, 1]} : vector<5x64xf32> to vector<1x64xf32>
      %163 = vector.broadcast %162 : vector<1x64xf32> to vector<256x64xf32>
      %164 = arith.addf %161, %163 : vector<256x64xf32>
      %165 = arith.truncf %164 : vector<256x64xf32> to vector<256x64xbf16>
      %166 = arith.index_cast %arg14 : i32 to index
      %c0_72 = arith.constant 0 : index
      %c0_73 = arith.constant 0 : index
      %c0_74 = arith.constant 0 : index
      %167 = vector.load %arg8[%166, %c0_72, %c0_73, %c0_74] : memref<6x3x256x256xbf16, #tpu.memory_space<vmem>>, vector<1x1x256x256xbf16>
      %168 = vector.shape_cast %167 : vector<1x1x256x256xbf16> to vector<256x256xbf16>
      %cst_75 = arith.constant dense<0.000000e+00> : vector<256x64xf32>
      %169 = tpu.matmul %168, %165, %cst_75 {dimension_numbers = #tpu.dot_dimension_numbers<[1], [0], [0], [1], [0, 0, 1, 1], [], []>} : vector<256x256xbf16>, vector<256x64xbf16>, vector<256x64xf32> -> vector<256x64xf32>
      %170 = arith.addf %160, %169 : vector<256x64xf32>
      %171 = vector.extract_strided_slice %156 {offsets = [0, 64], sizes = [256, 64], strides = [1, 1]} : vector<256x192xf32> to vector<256x64xf32>
      %172 = vector.extract_strided_slice %159 {offsets = [1, 0], sizes = [1, 64], strides = [1, 1]} : vector<5x64xf32> to vector<1x64xf32>
      %173 = vector.broadcast %172 : vector<1x64xf32> to vector<256x64xf32>
      %174 = arith.addf %171, %173 : vector<256x64xf32>
      %175 = arith.truncf %174 : vector<256x64xf32> to vector<256x64xbf16>
      %176 = arith.index_cast %arg14 : i32 to index
      %c1_76 = arith.constant 1 : index
      %c0_77 = arith.constant 0 : index
      %c0_78 = arith.constant 0 : index
      %177 = vector.load %arg8[%176, %c1_76, %c0_77, %c0_78] : memref<6x3x256x256xbf16, #tpu.memory_space<vmem>>, vector<1x1x256x256xbf16>
      %178 = vector.shape_cast %177 : vector<1x1x256x256xbf16> to vector<256x256xbf16>
      %cst_79 = arith.constant dense<0.000000e+00> : vector<256x64xf32>
      %179 = tpu.matmul %178, %175, %cst_79 {dimension_numbers = #tpu.dot_dimension_numbers<[1], [0], [0], [1], [0, 0, 1, 1], [], []>} : vector<256x256xbf16>, vector<256x64xbf16>, vector<256x64xf32> -> vector<256x64xf32>
      %180 = arith.addf %170, %179 : vector<256x64xf32>
      %181 = vector.extract_strided_slice %156 {offsets = [0, 128], sizes = [256, 64], strides = [1, 1]} : vector<256x192xf32> to vector<256x64xf32>
      %182 = vector.extract_strided_slice %159 {offsets = [2, 0], sizes = [1, 64], strides = [1, 1]} : vector<5x64xf32> to vector<1x64xf32>
      %183 = vector.broadcast %182 : vector<1x64xf32> to vector<256x64xf32>
      %184 = arith.addf %181, %183 : vector<256x64xf32>
      %185 = arith.truncf %184 : vector<256x64xf32> to vector<256x64xbf16>
      %186 = arith.index_cast %arg14 : i32 to index
      %c2 = arith.constant 2 : index
      %c0_80 = arith.constant 0 : index
      %c0_81 = arith.constant 0 : index
      %187 = vector.load %arg8[%186, %c2, %c0_80, %c0_81] : memref<6x3x256x256xbf16, #tpu.memory_space<vmem>>, vector<1x1x256x256xbf16>
      %188 = vector.shape_cast %187 : vector<1x1x256x256xbf16> to vector<256x256xbf16>
      %cst_82 = arith.constant dense<0.000000e+00> : vector<256x64xf32>
      %189 = tpu.matmul %188, %185, %cst_82 {dimension_numbers = #tpu.dot_dimension_numbers<[1], [0], [0], [1], [0, 0, 1, 1], [], []>} : vector<256x256xbf16>, vector<256x64xbf16>, vector<256x64xf32> -> vector<256x64xf32>
      %190 = arith.addf %180, %189 : vector<256x64xf32>
      %191 = vector.extract_strided_slice %159 {offsets = [3, 0], sizes = [1, 64], strides = [1, 1]} : vector<5x64xf32> to vector<1x64xf32>
      %192 = vector.broadcast %191 : vector<1x64xf32> to vector<256x64xf32>
      %193 = arith.addf %190, %192 : vector<256x64xf32>
      %cst_83 = arith.constant 0.000000e+00 : f32
      %194 = vector.broadcast %cst_83 : f32 to vector<256x64xf32>
      %195 = arith.maximumf %193, %194 : vector<256x64xf32>
      %c1_i32_84 = arith.constant 1 : i32
      %196 = tpu.dynamic_rotate %195 by %c1_i32_84 dim 0 : vector<256x64xf32>, i32 -> vector<256x64xf32>
      %cst_85 = arith.constant 0.000000e+00 : f32
      %197 = vector.broadcast %cst_85 : f32 to vector<256x64xf32>
      %198 = arith.select %121, %197, %196 : vector<256x64xi1>, vector<256x64xf32>
      %199 = arith.truncf %198 : vector<256x64xf32> to vector<256x64xbf16>
      %c255_i32 = arith.constant 255 : i32
      %200 = tpu.dynamic_rotate %195 by %c255_i32 dim 0 : vector<256x64xf32>, i32 -> vector<256x64xf32>
      %cst_86 = arith.constant 0.000000e+00 : f32
      %201 = vector.broadcast %cst_86 : f32 to vector<256x64xf32>
      %202 = arith.select %123, %201, %200 : vector<256x64xi1>, vector<256x64xf32>
      %203 = arith.truncf %202 : vector<256x64xf32> to vector<256x64xbf16>
      %204 = arith.index_cast %arg14 : i32 to index
      %c0_87 = arith.constant 0 : index
      %c0_88 = arith.constant 0 : index
      %c0_89 = arith.constant 0 : index
      %205 = vector.load %arg9[%204, %c0_87, %c0_88, %c0_89] : memref<6x3x64x64xbf16, #tpu.memory_space<vmem>>, vector<1x3x64x64xbf16>
      %206 = vector.shape_cast %205 : vector<1x3x64x64xbf16> to vector<3x64x64xbf16>
      %207 = vector.extract_strided_slice %206 {offsets = [0, 0, 0], sizes = [1, 64, 64], strides = [1, 1, 1]} : vector<3x64x64xbf16> to vector<1x64x64xbf16>
      %208 = vector.shape_cast %207 : vector<1x64x64xbf16> to vector<64x64xbf16>
      %cst_90 = arith.constant dense<0.000000e+00> : vector<256x64xf32>
      %209 = tpu.matmul %199, %208, %cst_90 {dimension_numbers = #tpu.dot_dimension_numbers<[1], [0], [0], [1], [0, 0, 1, 1], [], []>} : vector<256x64xbf16>, vector<64x64xbf16>, vector<256x64xf32> -> vector<256x64xf32>
      %210 = arith.truncf %195 : vector<256x64xf32> to vector<256x64xbf16>
      %211 = vector.extract_strided_slice %206 {offsets = [1, 0, 0], sizes = [1, 64, 64], strides = [1, 1, 1]} : vector<3x64x64xbf16> to vector<1x64x64xbf16>
      %212 = vector.shape_cast %211 : vector<1x64x64xbf16> to vector<64x64xbf16>
      %cst_91 = arith.constant dense<0.000000e+00> : vector<256x64xf32>
      %213 = tpu.matmul %210, %212, %cst_91 {dimension_numbers = #tpu.dot_dimension_numbers<[1], [0], [0], [1], [0, 0, 1, 1], [], []>} : vector<256x64xbf16>, vector<64x64xbf16>, vector<256x64xf32> -> vector<256x64xf32>
      %214 = arith.addf %209, %213 : vector<256x64xf32>
      %215 = vector.extract_strided_slice %206 {offsets = [2, 0, 0], sizes = [1, 64, 64], strides = [1, 1, 1]} : vector<3x64x64xbf16> to vector<1x64x64xbf16>
      %216 = vector.shape_cast %215 : vector<1x64x64xbf16> to vector<64x64xbf16>
      %cst_92 = arith.constant dense<0.000000e+00> : vector<256x64xf32>
      %217 = tpu.matmul %203, %216, %cst_92 {dimension_numbers = #tpu.dot_dimension_numbers<[1], [0], [0], [1], [0, 0, 1, 1], [], []>} : vector<256x64xbf16>, vector<64x64xbf16>, vector<256x64xf32> -> vector<256x64xf32>
      %218 = arith.addf %214, %217 : vector<256x64xf32>
      %219 = vector.extract_strided_slice %159 {offsets = [4, 0], sizes = [1, 64], strides = [1, 1]} : vector<5x64xf32> to vector<1x64xf32>
      %220 = vector.broadcast %219 : vector<1x64xf32> to vector<256x64xf32>
      %221 = arith.addf %218, %220 : vector<256x64xf32>
      %c0_i32_93 = arith.constant 0 : i32
      %222 = arith.cmpi sgt, %arg14, %c0_i32_93 : i32
      %223 = arith.extui %222 : i1 to i32
      %224 = arith.sitofp %223 : i32 to f32
      %225 = vector.broadcast %224 : f32 to vector<256x64xf32>
      %226 = arith.mulf %225, %arg15 : vector<256x64xf32>
      %227 = arith.addf %221, %226 : vector<256x64xf32>
      %cst_94 = arith.constant 0.000000e+00 : f32
      %228 = vector.broadcast %cst_94 : f32 to vector<256x64xf32>
      %229 = arith.maximumf %227, %228 : vector<256x64xf32>
      scf.yield %229 : vector<256x64xf32>
    }
    %c6_i32_57 = arith.constant 6 : i32
    %126 = vector.extract_strided_slice %125 {offsets = [0, 0], sizes = [16, 64], strides = [1, 1]} : vector<256x64xf32> to vector<16x64xf32>
    %127 = vector.extract_strided_slice %125 {offsets = [16, 0], sizes = [16, 64], strides = [1, 1]} : vector<256x64xf32> to vector<16x64xf32>
    %128 = vector.extract_strided_slice %125 {offsets = [32, 0], sizes = [16, 64], strides = [1, 1]} : vector<256x64xf32> to vector<16x64xf32>
    %129 = vector.extract_strided_slice %125 {offsets = [48, 0], sizes = [16, 64], strides = [1, 1]} : vector<256x64xf32> to vector<16x64xf32>
    %130 = vector.extract_strided_slice %125 {offsets = [64, 0], sizes = [16, 64], strides = [1, 1]} : vector<256x64xf32> to vector<16x64xf32>
    %131 = vector.extract_strided_slice %125 {offsets = [80, 0], sizes = [16, 64], strides = [1, 1]} : vector<256x64xf32> to vector<16x64xf32>
    %132 = vector.extract_strided_slice %125 {offsets = [96, 0], sizes = [16, 64], strides = [1, 1]} : vector<256x64xf32> to vector<16x64xf32>
    %133 = vector.extract_strided_slice %125 {offsets = [112, 0], sizes = [16, 64], strides = [1, 1]} : vector<256x64xf32> to vector<16x64xf32>
    %134 = vector.extract_strided_slice %125 {offsets = [128, 0], sizes = [16, 64], strides = [1, 1]} : vector<256x64xf32> to vector<16x64xf32>
    %135 = vector.extract_strided_slice %125 {offsets = [144, 0], sizes = [16, 64], strides = [1, 1]} : vector<256x64xf32> to vector<16x64xf32>
    %136 = vector.extract_strided_slice %125 {offsets = [160, 0], sizes = [16, 64], strides = [1, 1]} : vector<256x64xf32> to vector<16x64xf32>
    %137 = vector.extract_strided_slice %125 {offsets = [176, 0], sizes = [16, 64], strides = [1, 1]} : vector<256x64xf32> to vector<16x64xf32>
    %138 = vector.extract_strided_slice %125 {offsets = [192, 0], sizes = [16, 64], strides = [1, 1]} : vector<256x64xf32> to vector<16x64xf32>
    %139 = vector.extract_strided_slice %125 {offsets = [208, 0], sizes = [16, 64], strides = [1, 1]} : vector<256x64xf32> to vector<16x64xf32>
    %140 = vector.extract_strided_slice %125 {offsets = [224, 0], sizes = [16, 64], strides = [1, 1]} : vector<256x64xf32> to vector<16x64xf32>
    %141 = vector.extract_strided_slice %125 {offsets = [240, 0], sizes = [16, 64], strides = [1, 1]} : vector<256x64xf32> to vector<16x64xf32>
    %142 = tpu.concatenate %126, %127, %128, %129, %130, %131, %132, %133, %134, %135, %136, %137, %138, %139, %140, %141 in 1 : vector<16x64xf32>, vector<16x64xf32>, vector<16x64xf32>, vector<16x64xf32>, vector<16x64xf32>, vector<16x64xf32>, vector<16x64xf32>, vector<16x64xf32>, vector<16x64xf32>, vector<16x64xf32>, vector<16x64xf32>, vector<16x64xf32>, vector<16x64xf32>, vector<16x64xf32>, vector<16x64xf32>, vector<16x64xf32> -> vector<16x1024xf32>
    %143 = arith.truncf %142 : vector<16x1024xf32> to vector<16x1024xbf16>
    %c0_58 = arith.constant 0 : index
    %c0_59 = arith.constant 0 : index
    %144 = vector.load %arg11[%c0_58, %c0_59] : memref<1024x256xbf16, #tpu.memory_space<vmem>>, vector<1024x256xbf16>
    %cst_60 = arith.constant dense<0.000000e+00> : vector<16x256xf32>
    %145 = tpu.matmul %143, %144, %cst_60 {dimension_numbers = #tpu.dot_dimension_numbers<[1], [0], [0], [1], [0, 0, 1, 1], [], []>} : vector<16x1024xbf16>, vector<1024x256xbf16>, vector<16x256xf32> -> vector<16x256xf32>
    %c0_61 = arith.constant 0 : index
    %c0_62 = arith.constant 0 : index
    %146 = vector.load %arg12[%c0_61, %c0_62] : memref<1x256xf32, #tpu.memory_space<vmem>>, vector<1x256xf32>
    %147 = vector.broadcast %146 : vector<1x256xf32> to vector<16x256xf32>
    %148 = arith.addf %145, %147 : vector<16x256xf32>
    %c0_63 = arith.constant 0 : index
    %c0_64 = arith.constant 0 : index
    %c0_65 = arith.constant 0 : index
    %149 = vector.load %arg13[%c0_63, %c0_64, %c0_65] : memref<1x16x256xf32, #tpu.memory_space<vmem>>, vector<1x16x256xf32>
    %150 = vector.shape_cast %149 : vector<1x16x256xf32> to vector<16x256xf32>
    %151 = vector.shape_cast %148 : vector<16x256xf32> to vector<1x16x256xf32>
    tpu.vector_store %arg13[%c0_63, %c0_64, %c0_65], %151 {strides = array<i32>} : memref<1x16x256xf32, #tpu.memory_space<vmem>>, vector<1x16x256xf32>,
    return
  }
  func.func @transform_0(%arg0: i32) -> (i32, i32, i32) {
    %c0_i32 = arith.constant 0 : i32
    %c0_i32_0 = arith.constant 0 : i32
    %c0_i32_1 = arith.constant 0 : i32
    return %arg0, %c0_i32, %c0_i32_0 : i32, i32, i32
  }
  func.func @transform_1(%arg0: i32) -> (i32, i32, i32) {
    %c0_i32 = arith.constant 0 : i32
    %c0_i32_0 = arith.constant 0 : i32
    %c0_i32_1 = arith.constant 0 : i32
    return %arg0, %c0_i32, %c0_i32_0 : i32, i32, i32
  }
  func.func @transform_2(%arg0: i32) -> (i32, i32, i32) {
    %c0_i32 = arith.constant 0 : i32
    %c0_i32_0 = arith.constant 0 : i32
    %c0_i32_1 = arith.constant 0 : i32
    %c0_i32_2 = arith.constant 0 : i32
    return %c0_i32, %c0_i32_0, %c0_i32_1 : i32, i32, i32
  }
  func.func @transform_3(%arg0: i32) -> (i32, i32, i32) {
    %c0_i32 = arith.constant 0 : i32
    %c0_i32_0 = arith.constant 0 : i32
    %c0_i32_1 = arith.constant 0 : i32
    %c0_i32_2 = arith.constant 0 : i32
    return %c0_i32, %c0_i32_0, %c0_i32_1 : i32, i32, i32
  }
  func.func @transform_4(%arg0: i32) -> (i32, i32, i32) {
    %c0_i32 = arith.constant 0 : i32
    %c0_i32_0 = arith.constant 0 : i32
    %c0_i32_1 = arith.constant 0 : i32
    %c0_i32_2 = arith.constant 0 : i32
    return %c0_i32, %c0_i32_0, %c0_i32_1 : i32, i32, i32
  }
  func.func @transform_5(%arg0: i32) -> (i32, i32, i32) {
    %c0_i32 = arith.constant 0 : i32
    %c0_i32_0 = arith.constant 0 : i32
    %c0_i32_1 = arith.constant 0 : i32
    %c0_i32_2 = arith.constant 0 : i32
    return %c0_i32, %c0_i32_0, %c0_i32_1 : i32, i32, i32
  }
  func.func @transform_6(%arg0: i32) -> (i32, i32, i32) {
    %c0_i32 = arith.constant 0 : i32
    %c0_i32_0 = arith.constant 0 : i32
    %c0_i32_1 = arith.constant 0 : i32
    %c0_i32_2 = arith.constant 0 : i32
    return %c0_i32, %c0_i32_0, %c0_i32_1 : i32, i32, i32
  }
  func.func @transform_7(%arg0: i32) -> (i32, i32, i32, i32) {
    %c0_i32 = arith.constant 0 : i32
    %c0_i32_0 = arith.constant 0 : i32
    %c0_i32_1 = arith.constant 0 : i32
    %c0_i32_2 = arith.constant 0 : i32
    %c0_i32_3 = arith.constant 0 : i32
    return %c0_i32, %c0_i32_0, %c0_i32_1, %c0_i32_2 : i32, i32, i32, i32
  }
  func.func @transform_8(%arg0: i32) -> (i32, i32, i32, i32) {
    %c0_i32 = arith.constant 0 : i32
    %c0_i32_0 = arith.constant 0 : i32
    %c0_i32_1 = arith.constant 0 : i32
    %c0_i32_2 = arith.constant 0 : i32
    %c0_i32_3 = arith.constant 0 : i32
    return %c0_i32, %c0_i32_0, %c0_i32_1, %c0_i32_2 : i32, i32, i32, i32
  }
  func.func @transform_9(%arg0: i32) -> (i32, i32, i32) {
    %c0_i32 = arith.constant 0 : i32
    %c0_i32_0 = arith.constant 0 : i32
    %c0_i32_1 = arith.constant 0 : i32
    %c0_i32_2 = arith.constant 0 : i32
    return %c0_i32, %c0_i32_0, %c0_i32_1 : i32, i32, i32
  }
  func.func @transform_10(%arg0: i32) -> (i32, i32) {
    %c0_i32 = arith.constant 0 : i32
    %c0_i32_0 = arith.constant 0 : i32
    %c0_i32_1 = arith.constant 0 : i32
    return %c0_i32, %c0_i32_0 : i32, i32
  }
  func.func @transform_11(%arg0: i32) -> (i32, i32) {
    %c0_i32 = arith.constant 0 : i32
    %c0_i32_0 = arith.constant 0 : i32
    %c0_i32_1 = arith.constant 0 : i32
    return %c0_i32, %c0_i32_0 : i32, i32
  }
  func.func @transform_12(%arg0: i32) -> (i32, i32, i32) {
    %c0_i32 = arith.constant 0 : i32
    %c0_i32_0 = arith.constant 0 : i32
    %c0_i32_1 = arith.constant 0 : i32
    return %arg0, %c0_i32, %c0_i32_0 : i32, i32, i32
  }
}

</mosaic_0001>

<llo_original>
// kernel: forward.1
$region0: #{forward.1}
  #allocation0 [shape = 'u32[]', space=smem, size = 0x4, offset = 0x4, fixed_abs, tag = 'smem constant byte address 0x4 - core index']
  #allocation1 [shape = 'u32[144,128]{1,0:T(1,128)}', space=vmem, size = 0x12000, scoped, tag = 'internal scratch']
  %s0 = inlined_call_operand.vmem [shape: f32[1,320,8], index: 0, kind: input, shape index: {}]
  %s1 = inlined_call_operand.vmem [shape: f32[1,256,8], index: 1, kind: input, shape index: {}]
  %s2 = inlined_call_operand.vmem [shape: bf16[2,8,64], index: 2, kind: input, shape index: {}]
  %s3 = inlined_call_operand.vmem [shape: bf16[2,64,64], index: 3, kind: input, shape index: {}]
  %s4 = inlined_call_operand.vmem [shape: bf16[2,64,64], index: 4, kind: input, shape index: {}]
  %s5 = inlined_call_operand.vmem [shape: f32[2,3,64], index: 5, kind: input, shape index: {}]
  %s6 = inlined_call_operand.hbm [shape: bf16[6,64,192], index: 6, kind: input, shape index: {}]
  %s7 = inlined_call_operand.vmem [shape: bf16[6,3,256,256], index: 7, kind: input, shape index: {}]
  %s8 = inlined_call_operand.vmem [shape: bf16[6,3,64,64], index: 8, kind: input, shape index: {}]
  %s9 = inlined_call_operand.vmem [shape: f32[6,5,64], index: 9, kind: input, shape index: {}]
  %s10 = inlined_call_operand.vmem [shape: bf16[1024,256], index: 10, kind: input, shape index: {}]
  %s11 = inlined_call_operand.vmem [shape: f32[1,256], index: 11, kind: input, shape index: {}]
  %s12 = inlined_call_operand.vmem [shape: f32[1,16,256], index: 12, kind: output, shape index: {}]
  %s13 = sld [smem:[#allocation0]]
  $region69: #{forward.1} parent=0
    _
  %s15 = ssub.s32 1, %s13
  %s16 = scalar_select 0, %s15, %s13
  $region1: #{forward.1} parent=0
    #allocation2 [shape = 'u8[196608]{0}', space=vmem, size = 0x30000, scoped, tag = 'input window, operand 6, single buffered']
    #allocation3 [shape = 's32[1]{0}', space=sflag, size = 0x4, scoped, tag = 'scoped memory for forward.1']
    %17 = vsyncpa [#allocation3], 0
    // Predicated region
    $region2: #{forward.1} parent=1 // pred_check
      _
    $region3: #{forward.1} parent=1 // pred_check_branch
      %19 = sbr.rel (0) target = $region5
    $region4: #{forward.1} parent=1 // pred_region
      _
    $region5: #{forward.1} parent=1 // pred_fallthru
      _
    // Predicated region
    $region6: #{forward.1} parent=1 // pred_check
      _
    $region7: #{forward.1} parent=1 // pred_check_branch
      %21 = sbr.rel (0) target = $region9
    $region8: #{forward.1} parent=1 // pred_region
      _
    $region9: #{forward.1} parent=1 // pred_fallthru
      _
    // Predicated region
    $region10: #{forward.1} parent=1 // pred_check
      _
    $region11: #{forward.1} parent=1 // pred_check_branch
      %23 = sbr.rel (0) target = $region13
    $region12: #{forward.1} parent=1 // pred_region
      _
    $region13: #{forward.1} parent=1 // pred_fallthru
      _
    // Predicated region
    $region14: #{forward.1} parent=1 // pred_check
      _
    $region15: #{forward.1} parent=1 // pred_check_branch
      %25 = sbr.rel (0) target = $region17
    $region16: #{forward.1} parent=1 // pred_region
      _
    $region17: #{forward.1} parent=1 // pred_fallthru
      _
    // Predicated region
    $region18: #{forward.1} parent=1 // pred_check
      _
    $region19: #{forward.1} parent=1 // pred_check_branch
      %27 = sbr.rel (0) target = $region21
    $region20: #{forward.1} parent=1 // pred_region
      _
    $region21: #{forward.1} parent=1 // pred_fallthru
      _
    // Predicated region
    $region22: #{forward.1} parent=1 // pred_check
      _
    $region23: #{forward.1} parent=1 // pred_check_branch
      %29 = sbr.rel (0) target = $region25
    $region24: #{forward.1} parent=1 // pred_region
      _
    $region25: #{forward.1} parent=1 // pred_fallthru
      _
    // Predicated region
    $region26: #{forward.1} parent=1 // pred_check
      _
    $region27: #{forward.1} parent=1 // pred_check_branch
      %31 = sbr.rel (0) target = $region29
    $region28: #{forward.1} parent=1 // pred_region
      %s33 = ssub.s32 6144, 6144
      %34 = vsyncadd [#allocation3], %s33
      %s35 = sshll.u32 [#allocation2], 4
      %s36 = int_to_ptr.vmem [resolvable:$true] %s35
      %41 = dma.hbm_to_vmem [thread:$0]  %s6, 6144, %s36, [#allocation3], 128, 128, 8
    $region29: #{forward.1} parent=1 // pred_fallthru
      _
    // Predicated region
    $region30: #{forward.1} parent=1 // pred_check
      _
    $region31: #{forward.1} parent=1 // pred_check_branch
      %43 = sbr.rel (0) target = $region33
    $region32: #{forward.1} parent=1 // pred_region
      _
    $region33: #{forward.1} parent=1 // pred_fallthru
      _
    // Predicated region
    $region34: #{forward.1} parent=1 // pred_check
      _
    $region35: #{forward.1} parent=1 // pred_check_branch
      %45 = sbr.rel (0) target = $region37
    $region36: #{forward.1} parent=1 // pred_region
      _
    $region37: #{forward.1} parent=1 // pred_fallthru
      _
    // Predicated region
    $region38: #{forward.1} parent=1 // pred_check
      _
    $region39: #{forward.1} parent=1 // pred_check_branch
      %47 = sbr.rel (0) target = $region41
    $region40: #{forward.1} parent=1 // pred_region
      _
    $region41: #{forward.1} parent=1 // pred_fallthru
      _
    // Predicated region
    $region42: #{forward.1} parent=1 // pred_check
      _
    $region43: #{forward.1} parent=1 // pred_check_branch
      %49 = sbr.rel (0) target = $region45
    $region44: #{forward.1} parent=1 // pred_region
      _
    $region45: #{forward.1} parent=1 // pred_fallthru
      _
    // Predicated region
    $region46: #{forward.1} parent=1 // pred_check
      _
    $region47: #{forward.1} parent=1 // pred_check_branch
      %51 = sbr.rel (0) target = $region49
    $region48: #{forward.1} parent=1 // pred_region
      _
    $region49: #{forward.1} parent=1 // pred_fallthru
      _
    // Predicated region
    $region50: #{forward.1} parent=1 // pred_check
      _
    $region51: #{forward.1} parent=1 // pred_check_branch
      %53 = sbr.rel (0) target = $region53
    $region52: #{forward.1} parent=1 // pred_region
      %54 = dma.done [#allocation3], 6144
    $region53: #{forward.1} parent=1 // pred_fallthru
      _
    %v56 = vld [vmem:[%s0] sm:$0xff]
    %v57 = vld [vmem:[%s0 + $0x8] sm:$0xff]
    %v58 = vld [vmem:[%s0 + $0x10] sm:$0xff]
    %v59 = vld [vmem:[%s0 + $0x18] sm:$0xff]
    %v60 = vld [vmem:[%s0 + $0x20] sm:$0xff]
    %v61 = vld [vmem:[%s0 + $0x28] sm:$0xff]
    %v62 = vld [vmem:[%s0 + $0x30] sm:$0xff]
    %v63 = vld [vmem:[%s0 + $0x38] sm:$0xff]
    %v64 = vld [vmem:[%s0 + $0x40] sm:$0xff]
    %v65 = vld [vmem:[%s0 + $0x48] sm:$0xff]
    %v66 = vld [vmem:[%s0 + $0x50] sm:$0xff]
    %v67 = vld [vmem:[%s0 + $0x58] sm:$0xff]
    %v68 = vld [vmem:[%s0 + $0x60] sm:$0xff]
    %v69 = vld [vmem:[%s0 + $0x68] sm:$0xff]
    %v70 = vld [vmem:[%s0 + $0x70] sm:$0xff]
    %v71 = vld [vmem:[%s0 + $0x78] sm:$0xff]
    %v72 = vld [vmem:[%s0 + $0x80] sm:$0xff]
    %v73 = vld [vmem:[%s0 + $0x88] sm:$0xff]
    %v74 = vld [vmem:[%s0 + $0x90] sm:$0xff]
    %v75 = vld [vmem:[%s0 + $0x98] sm:$0xff]
    %v76 = vld [vmem:[%s0 + $0xa0] sm:$0xff]
    %v77 = vld [vmem:[%s0 + $0xa8] sm:$0xff]
    %v78 = vld [vmem:[%s0 + $0xb0] sm:$0xff]
    %v79 = vld [vmem:[%s0 + $0xb8] sm:$0xff]
    %v80 = vld [vmem:[%s0 + $0xc0] sm:$0xff]
    %v81 = vld [vmem:[%s0 + $0xc8] sm:$0xff]
    %v82 = vld [vmem:[%s0 + $0xd0] sm:$0xff]
    %v83 = vld [vmem:[%s0 + $0xd8] sm:$0xff]
    %v84 = vld [vmem:[%s0 + $0xe0] sm:$0xff]
    %v85 = vld [vmem:[%s0 + $0xe8] sm:$0xff]
    %v86 = vld [vmem:[%s0 + $0xf0] sm:$0xff]
    %v87 = vld [vmem:[%s0 + $0xf8] sm:$0xff]
    %v88 = vld [vmem:[%s0 + $0x100] sm:$0xff]
    %v89 = vld [vmem:[%s0 + $0x108] sm:$0xff]
    %v90 = vld [vmem:[%s0 + $0x110] sm:$0xff]
    %v91 = vld [vmem:[%s0 + $0x118] sm:$0xff]
    %v92 = vld [vmem:[%s0 + $0x120] sm:$0xff]
    %v93 = vld [vmem:[%s0 + $0x128] sm:$0xff]
    %v94 = vld [vmem:[%s0 + $0x130] sm:$0xff]
    %v95 = vld [vmem:[%s0 + $0x138] sm:$0xff]
    %v96 = vpack.c.bf16 %v57, %v56
    %v97 = vpack.c.bf16 %v59, %v58
    %v98 = vpack.c.bf16 %v61, %v60
    %v99 = vpack.c.bf16 %v63, %v62
    %v100 = vpack.c.bf16 %v65, %v64
    %v101 = vpack.c.bf16 %v67, %v66
    %v102 = vpack.c.bf16 %v69, %v68
    %v103 = vpack.c.bf16 %v71, %v70
    %v104 = vpack.c.bf16 %v73, %v72
    %v105 = vpack.c.bf16 %v75, %v74
    %v106 = vpack.c.bf16 %v77, %v76
    %v107 = vpack.c.bf16 %v79, %v78
    %v108 = vpack.c.bf16 %v81, %v80
    %v109 = vpack.c.bf16 %v83, %v82
    %v110 = vpack.c.bf16 %v85, %v84
    %v111 = vpack.c.bf16 %v87, %v86
    %v112 = vpack.c.bf16 %v89, %v88
    %v113 = vpack.c.bf16 %v91, %v90
    %v114 = vpack.c.bf16 %v93, %v92
    %v115 = vpack.c.bf16 %v95, %v94
    %v116 = vld [vmem:[%s2] sm:$0xf]
    %v117 = vld [vmem:[%s3] sm:$0xf]
    %v118 = vld [vmem:[%s3 + $0x4] sm:$0xf]
    %v119 = vld [vmem:[%s3 + $0x8] sm:$0xf]
    %v120 = vld [vmem:[%s3 + $0xc] sm:$0xf]
    %v121 = vld [vmem:[%s3 + $0x10] sm:$0xf]
    %v122 = vld [vmem:[%s3 + $0x14] sm:$0xf]
    %v123 = vld [vmem:[%s3 + $0x18] sm:$0xf]
    %v124 = vld [vmem:[%s3 + $0x1c] sm:$0xf]
    %v125 = vld [vmem:[%s4] sm:$0xf]
    %v126 = vld [vmem:[%s4 + $0x4] sm:$0xf]
    %v127 = vld [vmem:[%s4 + $0x8] sm:$0xf]
    %v128 = vld [vmem:[%s4 + $0xc] sm:$0xf]
    %v129 = vld [vmem:[%s4 + $0x10] sm:$0xf]
    %v130 = vld [vmem:[%s4 + $0x14] sm:$0xf]
    %v131 = vld [vmem:[%s4 + $0x18] sm:$0xf]
    %v132 = vld [vmem:[%s4 + $0x1c] sm:$0xf]
    %v133 = vld [vmem:[%s5] sm:$0x7]
    %v134 = vlaneseq
    %v135 = vshrl.u32 %v134, 7
    %v136 = vsub.s32 0, %v135
    %v137 = vrot.slane %v133, %v136
    %vm138 = vcmask 64512
    %v140 = vsel %vm138, %v96, 0
    %v143 = vsel %vm138, %v97, 0
    %v146 = vsel %vm138, %v98, 0
    %v149 = vsel %vm138, %v99, 0
    %v152 = vsel %vm138, %v100, 0
    %v155 = vsel %vm138, %v101, 0
    %v158 = vsel %vm138, %v102, 0
    %v161 = vsel %vm138, %v103, 0
    %v164 = vsel %vm138, %v104, 0
    %v167 = vsel %vm138, %v105, 0
    %v170 = vsel %vm138, %v106, 0
    %v173 = vsel %vm138, %v107, 0
    %v176 = vsel %vm138, %v108, 0
    %v179 = vsel %vm138, %v109, 0
    %v182 = vsel %vm138, %v110, 0
    %v185 = vsel %vm138, %v111, 0
    %v188 = vsel %vm138, %v112, 0
    %v191 = vsel %vm138, %v113, 0
    %v194 = vsel %vm138, %v114, 0
    %v197 = vsel %vm138, %v115, 0
    %vm199 = vcmask 1043456
    %v201 = vsel %vm199, %v116, 0
    %203 = vmatprep.subr.bf16.mxu0 0
    %204 = vmatpush1.bf16.msra.mxu0 0
    %205 = vmatprep.subr.bf16.mxu0 0
    %206 = vmatpush1.bf16.msra.mxu0 0
    %207 = vmatprep.subr.bf16.mxu0 0
    %208 = vmatpush1.bf16.msra.mxu0 0
    %209 = vmatprep.subr.bf16.mxu0 0
    %210 = vmatpush1.bf16.msra.mxu0 0
    %211 = vmatprep.subr.bf16.mxu0 0
    %212 = vmatpush1.bf16.msra.mxu0 0
    %213 = vmatprep.subr.bf16.mxu0 0
    %214 = vmatpush1.bf16.msra.mxu0 0
    %215 = vmatprep.subr.bf16.mxu0 0
    %216 = vmatpush1.bf16.msra.mxu0 0
    %217 = vmatprep.subr.bf16.mxu0 0
    %218 = vmatpush1.bf16.msra.mxu0 %v201
    %219 = vmatprep.subr.bf16.mxu0 0
    %220 = vmatpush2.bf16.msra.mxu0 0
    %221 = vmatprep.subr.bf16.mxu0 0
    %222 = vmatpush2.bf16.msra.mxu0 0
    %223 = vmatprep.subr.bf16.mxu0 0
    %224 = vmatpush2.bf16.msra.mxu0 0
    %225 = vmatprep.subr.bf16.mxu0 0
    %226 = vmatpush2.bf16.msra.mxu0 0
    %227 = vmatprep.subr.bf16.mxu0 0
    %228 = vmatpush2.bf16.msra.mxu0 0
    %229 = vmatprep.subr.bf16.mxu0 0
    %230 = vmatpush2.bf16.msra.mxu0 0
    %231 = vmatprep.subr.bf16.mxu0 0
    %232 = vmatpush2.bf16.msra.mxu0 0
    %233 = vmatprep.subr.bf16.mxu0 0
    %234 = vmatpush2.bf16.msra.mxu0 0
    %235 = vmatprep.mubr.bf16.mxu0 0
    %236 = vmatmul.mubr.bf16.gmra.mxu0 %v140
    %v237 = vpop.f32.mrf.mxu0
    %v238 = vadd.f32 %v137, %v237
    %v239 = vpop.f32.mrf.mxu0
    %v240 = vpop.f32.mrf.mxu0
    %v241 = vadd.f32 %v137, %v240
    %v242 = vpop.f32.mrf.mxu0
    %243 = vmatprep.mubr.bf16.mxu0 0
    %244 = vmatmul.mubr.bf16.gmra.mxu0 %v143
    %v245 = vpop.f32.mrf.mxu0
    %v246 = vadd.f32 %v137, %v245
    %v247 = vpop.f32.mrf.mxu0
    %v248 = vpop.f32.mrf.mxu0
    %v249 = vadd.f32 %v137, %v248
    %v250 = vpop.f32.mrf.mxu0
    %251 = vmatprep.mubr.bf16.mxu0 0
    %252 = vmatmul.mubr.bf16.gmra.mxu0 %v146
    %v253 = vpop.f32.mrf.mxu0
    %v254 = vadd.f32 %v137, %v253
    %v255 = vpop.f32.mrf.mxu0
    %v256 = vpop.f32.mrf.mxu0
    %v257 = vadd.f32 %v137, %v256
    %v258 = vpop.f32.mrf.mxu0
    %259 = vmatprep.mubr.bf16.mxu0 0
    %260 = vmatmul.mubr.bf16.gmra.mxu0 %v149
    %v261 = vpop.f32.mrf.mxu0
    %v262 = vadd.f32 %v137, %v261
    %v263 = vpop.f32.mrf.mxu0
    %v264 = vpop.f32.mrf.mxu0
    %v265 = vadd.f32 %v137, %v264
    %v266 = vpop.f32.mrf.mxu0
    %267 = vmatprep.mubr.bf16.mxu0 0
    %268 = vmatmul.mubr.bf16.gmra.mxu0 %v152
    %v269 = vpop.f32.mrf.mxu0
    %v270 = vadd.f32 %v137, %v269
    %v271 = vpop.f32.mrf.mxu0
    %v272 = vpop.f32.mrf.mxu0
    %v273 = vadd.f32 %v137, %v272
    %v274 = vpop.f32.mrf.mxu0
    %275 = vmatprep.mubr.bf16.mxu0 0
    %276 = vmatmul.mubr.bf16.gmra.mxu0 %v155
    %v277 = vpop.f32.mrf.mxu0
    %v278 = vadd.f32 %v137, %v277
    %v279 = vpop.f32.mrf.mxu0
    %v280 = vpop.f32.mrf.mxu0
    %v281 = vadd.f32 %v137, %v280
    %v282 = vpop.f32.mrf.mxu0
    %283 = vmatprep.mubr.bf16.mxu0 0
    %284 = vmatmul.mubr.bf16.gmra.mxu0 %v158
    %v285 = vpop.f32.mrf.mxu0
    %v286 = vadd.f32 %v137, %v285
    %v287 = vpop.f32.mrf.mxu0
    %v288 = vpop.f32.mrf.mxu0
    %v289 = vadd.f32 %v137, %v288
    %v290 = vpop.f32.mrf.mxu0
    %291 = vmatprep.mubr.bf16.mxu0 0
    %292 = vmatmul.mubr.bf16.gmra.mxu0 %v161
    %v293 = vpop.f32.mrf.mxu0
    %v294 = vadd.f32 %v137, %v293
    %v295 = vpop.f32.mrf.mxu0
    %v296 = vpop.f32.mrf.mxu0
    %v297 = vadd.f32 %v137, %v296
    %v298 = vpop.f32.mrf.mxu0
    %299 = vmatprep.mubr.bf16.mxu0 0
    %300 = vmatmul.mubr.bf16.gmra.mxu0 %v164
    %v301 = vpop.f32.mrf.mxu0
    %v302 = vadd.f32 %v137, %v301
    %v303 = vpop.f32.mrf.mxu0
    %v304 = vpop.f32.mrf.mxu0
    %v305 = vadd.f32 %v137, %v304
    %v306 = vpop.f32.mrf.mxu0
    %307 = vmatprep.mubr.bf16.mxu0 0
    %308 = vmatmul.mubr.bf16.gmra.mxu0 %v167
    %v309 = vpop.f32.mrf.mxu0
    %v310 = vadd.f32 %v137, %v309
    %v311 = vpop.f32.mrf.mxu0
    %v312 = vpop.f32.mrf.mxu0
    %v313 = vadd.f32 %v137, %v312
    %v314 = vpop.f32.mrf.mxu0
    %315 = vmatprep.mubr.bf16.mxu0 0
    %316 = vmatmul.mubr.bf16.gmra.mxu0 %v170
    %v317 = vpop.f32.mrf.mxu0
    %v318 = vadd.f32 %v137, %v317
    %v319 = vpop.f32.mrf.mxu0
    %v320 = vpop.f32.mrf.mxu0
    %v321 = vadd.f32 %v137, %v320
    %v322 = vpop.f32.mrf.mxu0
    %323 = vmatprep.mubr.bf16.mxu0 0
    %324 = vmatmul.mubr.bf16.gmra.mxu0 %v173
    %v325 = vpop.f32.mrf.mxu0
    %v326 = vadd.f32 %v137, %v325
    %v327 = vpop.f32.mrf.mxu0
    %v328 = vpop.f32.mrf.mxu0
    %v329 = vadd.f32 %v137, %v328
    %v330 = vpop.f32.mrf.mxu0
    %331 = vmatprep.mubr.bf16.mxu0 0
    %332 = vmatmul.mubr.bf16.gmra.mxu0 %v176
    %v333 = vpop.f32.mrf.mxu0
    %v334 = vadd.f32 %v137, %v333
    %v335 = vpop.f32.mrf.mxu0
    %v336 = vpop.f32.mrf.mxu0
    %v337 = vadd.f32 %v137, %v336
    %v338 = vpop.f32.mrf.mxu0
    %339 = vmatprep.mubr.bf16.mxu0 0
    %340 = vmatmul.mubr.bf16.gmra.mxu0 %v179
    %v341 = vpop.f32.mrf.mxu0
    %v342 = vadd.f32 %v137, %v341
    %v343 = vpop.f32.mrf.mxu0
    %v344 = vpop.f32.mrf.mxu0
    %v345 = vadd.f32 %v137, %v344
    %v346 = vpop.f32.mrf.mxu0
    %347 = vmatprep.mubr.bf16.mxu0 0
    %348 = vmatmul.mubr.bf16.gmra.mxu0 %v182
    %v349 = vpop.f32.mrf.mxu0
    %v350 = vadd.f32 %v137, %v349
    %v351 = vpop.f32.mrf.mxu0
    %v352 = vpop.f32.mrf.mxu0
    %v353 = vadd.f32 %v137, %v352
    %v354 = vpop.f32.mrf.mxu0
    %355 = vmatprep.mubr.bf16.mxu0 0
    %356 = vmatmul.mubr.bf16.gmra.mxu0 %v185
    %v357 = vpop.f32.mrf.mxu0
    %v358 = vadd.f32 %v137, %v357
    %v359 = vpop.f32.mrf.mxu0
    %v360 = vpop.f32.mrf.mxu0
    %v361 = vadd.f32 %v137, %v360
    %v362 = vpop.f32.mrf.mxu0
    %363 = vmatprep.mubr.bf16.mxu0 0
    %364 = vmatmul.mubr.bf16.gmra.mxu0 %v188
    %v365 = vpop.f32.mrf.mxu0
    %v366 = vadd.f32 %v137, %v365
    %v367 = vpop.f32.mrf.mxu0
    %v368 = vpop.f32.mrf.mxu0
    %v369 = vadd.f32 %v137, %v368
    %v370 = vpop.f32.mrf.mxu0
    %371 = vmatprep.mubr.bf16.mxu0 0
    %372 = vmatmul.mubr.bf16.gmra.mxu0 %v191
    %v373 = vpop.f32.mrf.mxu0
    %v374 = vadd.f32 %v137, %v373
    %v375 = vpop.f32.mrf.mxu0
    %v376 = vpop.f32.mrf.mxu0
    %v377 = vadd.f32 %v137, %v376
    %v378 = vpop.f32.mrf.mxu0
    %379 = vmatprep.mubr.bf16.mxu0 0
    %380 = vmatmul.mubr.bf16.gmra.mxu0 %v194
    %v381 = vpop.f32.mrf.mxu0
    %v382 = vadd.f32 %v137, %v381
    %v383 = vpop.f32.mrf.mxu0
    %v384 = vpop.f32.mrf.mxu0
    %v385 = vadd.f32 %v137, %v384
    %v386 = vpop.f32.mrf.mxu0
    %387 = vmatprep.mubr.bf16.mxu0 0
    %388 = vmatmul.mubr.bf16.gmra.mxu0 %v197
    %v389 = vpop.f32.mrf.mxu0
    %v390 = vadd.f32 %v137, %v389
    %v391 = vpop.f32.mrf.mxu0
    %v392 = vpop.f32.mrf.mxu0
    %v393 = vadd.f32 %v137, %v392
    %v394 = vpop.f32.mrf.mxu0
    %395 = vdwg.mxu0
    %v396 = vmax.f32 %v238, 0.0
    %v397 = vmax.f32 %v241, 0.0
    %v398 = vmax.f32 %v246, 0.0
    %v399 = vmax.f32 %v249, 0.0
    %v400 = vmax.f32 %v254, 0.0
    %v401 = vmax.f32 %v257, 0.0
    %v402 = vmax.f32 %v262, 0.0
    %v403 = vmax.f32 %v265, 0.0
    %v404 = vmax.f32 %v270, 0.0
    %v405 = vmax.f32 %v273, 0.0
    %v406 = vmax.f32 %v278, 0.0
    %v407 = vmax.f32 %v281, 0.0
    %v408 = vmax.f32 %v286, 0.0
    %v409 = vmax.f32 %v289, 0.0
    %v410 = vmax.f32 %v294, 0.0
    %v411 = vmax.f32 %v297, 0.0
    %v412 = vmax.f32 %v302, 0.0
    %v413 = vmax.f32 %v305, 0.0
    %v414 = vmax.f32 %v310, 0.0
    %v415 = vmax.f32 %v313, 0.0
    %v416 = vmax.f32 %v318, 0.0
    %v417 = vmax.f32 %v321, 0.0
    %v418 = vmax.f32 %v326, 0.0
    %v419 = vmax.f32 %v329, 0.0
    %v420 = vmax.f32 %v334, 0.0
    %v421 = vmax.f32 %v337, 0.0
    %v422 = vmax.f32 %v342, 0.0
    %v423 = vmax.f32 %v345, 0.0
    %v424 = vmax.f32 %v350, 0.0
    %v425 = vmax.f32 %v353, 0.0
    %v426 = vmax.f32 %v358, 0.0
    %v427 = vmax.f32 %v361, 0.0
    %v428 = vmax.f32 %v366, 0.0
    %v429 = vmax.f32 %v369, 0.0
    %v430 = vmax.f32 %v374, 0.0
    %v431 = vmax.f32 %v377, 0.0
    %v432 = vmax.f32 %v382, 0.0
    %v433 = vmax.f32 %v385, 0.0
    %v434 = vmax.f32 %v390, 0.0
    %v435 = vmax.f32 %v393, 0.0
    %v436 = vpack.c.bf16 %v397, %v396
    %v437 = vpack.c.bf16 %v399, %v398
    %v438 = vpack.c.bf16 %v401, %v400
    %v439 = vpack.c.bf16 %v403, %v402
    %v440 = vpack.c.bf16 %v405, %v404
    %v441 = vpack.c.bf16 %v407, %v406
    %v442 = vpack.c.bf16 %v409, %v408
    %v443 = vpack.c.bf16 %v411, %v410
    %v444 = vpack.c.bf16 %v413, %v412
    %v445 = vpack.c.bf16 %v415, %v414
    %v446 = vpack.c.bf16 %v417, %v416
    %v447 = vpack.c.bf16 %v419, %v418
    %v448 = vpack.c.bf16 %v421, %v420
    %v449 = vpack.c.bf16 %v423, %v422
    %v450 = vpack.c.bf16 %v425, %v424
    %v451 = vpack.c.bf16 %v427, %v426
    %v452 = vpack.c.bf16 %v429, %v428
    %v453 = vpack.c.bf16 %v431, %v430
    %v454 = vpack.c.bf16 %v433, %v432
    %v455 = vpack.c.bf16 %v435, %v434
    %v456 = vlaneseq
    %v457 = vshrl.u32 %v456, 7
    %v458 = vsub.s32 1, %v457
    %v459 = vrot.slane %v133, %v458
    %v468 = vunpack.c.l.b16 %v117
    %v469 = vunpack.c.l.b16 %v118
    %v470 = vunpack.c.l.b16 %v119
    %v471 = vunpack.c.l.b16 %v120
    %v472 = vunpack.c.l.b16 %v121
    %v473 = vunpack.c.l.b16 %v122
    %v474 = vunpack.c.l.b16 %v123
    %v475 = vunpack.c.l.b16 %v124
    %v476 = vpack.c.b16 %v469, %v468
    %v477 = vpack.c.b16 %v471, %v470
    %v478 = vpack.c.b16 %v473, %v472
    %v479 = vpack.c.b16 %v475, %v474
    %vm484 = vcmask 523264
    %v486 = vsel %vm484, %v436, 0
    %v489 = vsel %vm484, %v437, 0
    %v492 = vsel %vm484, %v438, 0
    %v495 = vsel %vm484, %v439, 0
    %v498 = vsel %vm484, %v440, 0
    %v501 = vsel %vm484, %v441, 0
    %v504 = vsel %vm484, %v442, 0
    %v507 = vsel %vm484, %v443, 0
    %v510 = vsel %vm484, %v444, 0
    %v513 = vsel %vm484, %v445, 0
    %v516 = vsel %vm484, %v446, 0
    %v519 = vsel %vm484, %v447, 0
    %v522 = vsel %vm484, %v448, 0
    %v525 = vsel %vm484, %v449, 0
    %v528 = vsel %vm484, %v450, 0
    %v531 = vsel %vm484, %v451, 0
    %v534 = vsel %vm484, %v452, 0
    %v537 = vsel %vm484, %v453, 0
    %v540 = vsel %vm484, %v454, 0
    %v543 = vsel %vm484, %v455, 0
    %545 = vmatprep.subr.bf16.mxu0 0
    %546 = vmatpush1.bf16.msra.mxu0 0
    %547 = vmatprep.subr.bf16.mxu0 0
    %548 = vmatpush1.bf16.msra.mxu0 0
    %549 = vmatprep.subr.bf16.mxu0 0
    %550 = vmatpush1.bf16.msra.mxu0 0
    %551 = vmatprep.subr.bf16.mxu0 0
    %552 = vmatpush1.bf16.msra.mxu0 0
    %553 = vmatprep.subr.bf16.mxu0 0
    %554 = vmatpush1.bf16.msra.mxu0 %v479
    %555 = vmatprep.subr.bf16.mxu0 0
    %556 = vmatpush1.bf16.msra.mxu0 %v478
    %557 = vmatprep.subr.bf16.mxu0 0
    %558 = vmatpush1.bf16.msra.mxu0 %v477
    %559 = vmatprep.subr.bf16.mxu0 0
    %560 = vmatpush1.bf16.msra.mxu0 %v476
    %561 = vmatprep.subr.bf16.mxu0 0
    %562 = vmatpush2.bf16.msra.mxu0 0
    %563 = vmatprep.subr.bf16.mxu0 0
    %564 = vmatpush2.bf16.msra.mxu0 0
    %565 = vmatprep.subr.bf16.mxu0 0
    %566 = vmatpush2.bf16.msra.mxu0 0
    %567 = vmatprep.subr.bf16.mxu0 0
    %568 = vmatpush2.bf16.msra.mxu0 0
    %569 = vmatprep.subr.bf16.mxu0 0
    %570 = vmatpush2.bf16.msra.mxu0 0
    %571 = vmatprep.subr.bf16.mxu0 0
    %572 = vmatpush2.bf16.msra.mxu0 0
    %573 = vmatprep.subr.bf16.mxu0 0
    %574 = vmatpush2.bf16.msra.mxu0 0
    %575 = vmatprep.subr.bf16.mxu0 0
    %576 = vmatpush2.bf16.msra.mxu0 0
    %577 = vmatprep.mubr.bf16.mxu0 0
    %578 = vmatmul.mubr.bf16.gmra.mxu0 %v486
    %v579 = vpop.f32.mrf.mxu0
    %v580 = vadd.f32 %v459, %v579
    %v581 = vpop.f32.mrf.mxu0
    %v582 = vpop.f32.mrf.mxu0
    %v583 = vadd.f32 %v459, %v582
    %v584 = vpop.f32.mrf.mxu0
    %585 = vmatprep.mubr.bf16.mxu0 0
    %586 = vmatmul.mubr.bf16.gmra.mxu0 %v489
    %v587 = vpop.f32.mrf.mxu0
    %v588 = vadd.f32 %v459, %v587
    %v589 = vpop.f32.mrf.mxu0
    %v590 = vpop.f32.mrf.mxu0
    %v591 = vadd.f32 %v459, %v590
    %v592 = vpop.f32.mrf.mxu0
    %593 = vmatprep.mubr.bf16.mxu0 0
    %594 = vmatmul.mubr.bf16.gmra.mxu0 %v492
    %v595 = vpop.f32.mrf.mxu0
    %v596 = vadd.f32 %v459, %v595
    %v597 = vpop.f32.mrf.mxu0
    %v598 = vpop.f32.mrf.mxu0
    %v599 = vadd.f32 %v459, %v598
    %v600 = vpop.f32.mrf.mxu0
    %601 = vmatprep.mubr.bf16.mxu0 0
    %602 = vmatmul.mubr.bf16.gmra.mxu0 %v495
    %v603 = vpop.f32.mrf.mxu0
    %v604 = vadd.f32 %v459, %v603
    %v605 = vpop.f32.mrf.mxu0
    %v606 = vpop.f32.mrf.mxu0
    %v607 = vadd.f32 %v459, %v606
    %v608 = vpop.f32.mrf.mxu0
    %609 = vmatprep.mubr.bf16.mxu0 0
    %610 = vmatmul.mubr.bf16.gmra.mxu0 %v498
    %v611 = vpop.f32.mrf.mxu0
    %v612 = vadd.f32 %v459, %v611
    %v613 = vpop.f32.mrf.mxu0
    %v614 = vpop.f32.mrf.mxu0
    %v615 = vadd.f32 %v459, %v614
    %v616 = vpop.f32.mrf.mxu0
    %617 = vmatprep.mubr.bf16.mxu0 0
    %618 = vmatmul.mubr.bf16.gmra.mxu0 %v501
    %v619 = vpop.f32.mrf.mxu0
    %v620 = vadd.f32 %v459, %v619
    %v621 = vpop.f32.mrf.mxu0
    %v622 = vpop.f32.mrf.mxu0
    %v623 = vadd.f32 %v459, %v622
    %v624 = vpop.f32.mrf.mxu0
    %625 = vmatprep.mubr.bf16.mxu0 0
    %626 = vmatmul.mubr.bf16.gmra.mxu0 %v504
    %v627 = vpop.f32.mrf.mxu0
    %v628 = vadd.f32 %v459, %v627
    %v629 = vpop.f32.mrf.mxu0
    %v630 = vpop.f32.mrf.mxu0
    %v631 = vadd.f32 %v459, %v630
    %v632 = vpop.f32.mrf.mxu0
    %633 = vmatprep.mubr.bf16.mxu0 0
    %634 = vmatmul.mubr.bf16.gmra.mxu0 %v507
    %v635 = vpop.f32.mrf.mxu0
    %v636 = vadd.f32 %v459, %v635
    %v637 = vpop.f32.mrf.mxu0
    %v638 = vpop.f32.mrf.mxu0
    %v639 = vadd.f32 %v459, %v638
    %v640 = vpop.f32.mrf.mxu0
    %641 = vmatprep.mubr.bf16.mxu0 0
    %642 = vmatmul.mubr.bf16.gmra.mxu0 %v510
    %v643 = vpop.f32.mrf.mxu0
    %v644 = vadd.f32 %v459, %v643
    %v645 = vpop.f32.mrf.mxu0
    %v646 = vpop.f32.mrf.mxu0
    %v647 = vadd.f32 %v459, %v646
    %v648 = vpop.f32.mrf.mxu0
    %649 = vmatprep.mubr.bf16.mxu0 0
    %650 = vmatmul.mubr.bf16.gmra.mxu0 %v513
    %v651 = vpop.f32.mrf.mxu0
    %v652 = vadd.f32 %v459, %v651
    %v653 = vpop.f32.mrf.mxu0
    %v654 = vpop.f32.mrf.mxu0
    %v655 = vadd.f32 %v459, %v654
    %v656 = vpop.f32.mrf.mxu0
    %657 = vmatprep.mubr.bf16.mxu0 0
    %658 = vmatmul.mubr.bf16.gmra.mxu0 %v516
    %v659 = vpop.f32.mrf.mxu0
    %v660 = vadd.f32 %v459, %v659
    %v661 = vpop.f32.mrf.mxu0
    %v662 = vpop.f32.mrf.mxu0
    %v663 = vadd.f32 %v459, %v662
    %v664 = vpop.f32.mrf.mxu0
    %665 = vmatprep.mubr.bf16.mxu0 0
    %666 = vmatmul.mubr.bf16.gmra.mxu0 %v519
    %v667 = vpop.f32.mrf.mxu0
    %v668 = vadd.f32 %v459, %v667
    %v669 = vpop.f32.mrf.mxu0
    %v670 = vpop.f32.mrf.mxu0
    %v671 = vadd.f32 %v459, %v670
    %v672 = vpop.f32.mrf.mxu0
    %673 = vmatprep.mubr.bf16.mxu0 0
    %674 = vmatmul.mubr.bf16.gmra.mxu0 %v522
    %v675 = vpop.f32.mrf.mxu0
    %v676 = vadd.f32 %v459, %v675
    %v677 = vpop.f32.mrf.mxu0
    %v678 = vpop.f32.mrf.mxu0
    %v679 = vadd.f32 %v459, %v678
    %v680 = vpop.f32.mrf.mxu0
    %681 = vmatprep.mubr.bf16.mxu0 0
    %682 = vmatmul.mubr.bf16.gmra.mxu0 %v525
    %v683 = vpop.f32.mrf.mxu0
    %v684 = vadd.f32 %v459, %v683
    %v685 = vpop.f32.mrf.mxu0
    %v686 = vpop.f32.mrf.mxu0
    %v687 = vadd.f32 %v459, %v686
    %v688 = vpop.f32.mrf.mxu0
    %689 = vmatprep.mubr.bf16.mxu0 0
    %690 = vmatmul.mubr.bf16.gmra.mxu0 %v528
    %v691 = vpop.f32.mrf.mxu0
    %v692 = vadd.f32 %v459, %v691
    %v693 = vpop.f32.mrf.mxu0
    %v694 = vpop.f32.mrf.mxu0
    %v695 = vadd.f32 %v459, %v694
    %v696 = vpop.f32.mrf.mxu0
    %697 = vmatprep.mubr.bf16.mxu0 0
    %698 = vmatmul.mubr.bf16.gmra.mxu0 %v531
    %v699 = vpop.f32.mrf.mxu0
    %v700 = vadd.f32 %v459, %v699
    %v701 = vpop.f32.mrf.mxu0
    %v702 = vpop.f32.mrf.mxu0
    %v703 = vadd.f32 %v459, %v702
    %v704 = vpop.f32.mrf.mxu0
    %705 = vmatprep.mubr.bf16.mxu0 0
    %706 = vmatmul.mubr.bf16.gmra.mxu0 %v534
    %v707 = vpop.f32.mrf.mxu0
    %v708 = vadd.f32 %v459, %v707
    %v709 = vpop.f32.mrf.mxu0
    %v710 = vpop.f32.mrf.mxu0
    %v711 = vadd.f32 %v459, %v710
    %v712 = vpop.f32.mrf.mxu0
    %713 = vmatprep.mubr.bf16.mxu0 0
    %714 = vmatmul.mubr.bf16.gmra.mxu0 %v537
    %v715 = vpop.f32.mrf.mxu0
    %v716 = vadd.f32 %v459, %v715
    %v717 = vpop.f32.mrf.mxu0
    %v718 = vpop.f32.mrf.mxu0
    %v719 = vadd.f32 %v459, %v718
    %v720 = vpop.f32.mrf.mxu0
    %721 = vmatprep.mubr.bf16.mxu0 0
    %722 = vmatmul.mubr.bf16.gmra.mxu0 %v540
    %v723 = vpop.f32.mrf.mxu0
    %v724 = vadd.f32 %v459, %v723
    %v725 = vpop.f32.mrf.mxu0
    %v726 = vpop.f32.mrf.mxu0
    %v727 = vadd.f32 %v459, %v726
    %v728 = vpop.f32.mrf.mxu0
    %729 = vmatprep.mubr.bf16.mxu0 0
    %730 = vmatmul.mubr.bf16.gmra.mxu0 %v543
    %v731 = vpop.f32.mrf.mxu0
    %v732 = vadd.f32 %v459, %v731
    %v733 = vpop.f32.mrf.mxu0
    %v734 = vpop.f32.mrf.mxu0
    %v735 = vadd.f32 %v459, %v734
    %v736 = vpop.f32.mrf.mxu0
    %737 = vdwg.mxu0
    %v738 = vmax.f32 %v580, 0.0
    %v739 = vmax.f32 %v583, 0.0
    %v740 = vmax.f32 %v588, 0.0
    %v741 = vmax.f32 %v591, 0.0
    %v742 = vmax.f32 %v596, 0.0
    %v743 = vmax.f32 %v599, 0.0
    %v744 = vmax.f32 %v604, 0.0
    %v745 = vmax.f32 %v607, 0.0
    %v746 = vmax.f32 %v612, 0.0
    %v747 = vmax.f32 %v615, 0.0
    %v748 = vmax.f32 %v620, 0.0
    %v749 = vmax.f32 %v623, 0.0
    %v750 = vmax.f32 %v628, 0.0
    %v751 = vmax.f32 %v631, 0.0
    %v752 = vmax.f32 %v636, 0.0
    %v753 = vmax.f32 %v639, 0.0
    %v754 = vmax.f32 %v644, 0.0
    %v755 = vmax.f32 %v647, 0.0
    %v756 = vmax.f32 %v652, 0.0
    %v757 = vmax.f32 %v655, 0.0
    %v758 = vmax.f32 %v660, 0.0
    %v759 = vmax.f32 %v663, 0.0
    %v760 = vmax.f32 %v668, 0.0
    %v761 = vmax.f32 %v671, 0.0
    %v762 = vmax.f32 %v676, 0.0
    %v763 = vmax.f32 %v679, 0.0
    %v764 = vmax.f32 %v684, 0.0
    %v765 = vmax.f32 %v687, 0.0
    %v766 = vmax.f32 %v692, 0.0
    %v767 = vmax.f32 %v695, 0.0
    %v768 = vmax.f32 %v700, 0.0
    %v769 = vmax.f32 %v703, 0.0
    %v770 = vmax.f32 %v708, 0.0
    %v771 = vmax.f32 %v711, 0.0
    %v772 = vmax.f32 %v716, 0.0
    %v773 = vmax.f32 %v719, 0.0
    %v774 = vmax.f32 %v724, 0.0
    %v775 = vmax.f32 %v727, 0.0
    %v776 = vmax.f32 %v732, 0.0
    %v777 = vmax.f32 %v735, 0.0
    %v778 = vpack.c.bf16 %v739, %v738
    %v779 = vpack.c.bf16 %v741, %v740
    %v780 = vpack.c.bf16 %v743, %v742
    %v781 = vpack.c.bf16 %v745, %v744
    %v782 = vpack.c.bf16 %v747, %v746
    %v783 = vpack.c.bf16 %v749, %v748
    %v784 = vpack.c.bf16 %v751, %v750
    %v785 = vpack.c.bf16 %v753, %v752
    %v786 = vpack.c.bf16 %v755, %v754
    %v787 = vpack.c.bf16 %v757, %v756
    %v788 = vpack.c.bf16 %v759, %v758
    %v789 = vpack.c.bf16 %v761, %v760
    %v790 = vpack.c.bf16 %v763, %v762
    %v791 = vpack.c.bf16 %v765, %v764
    %v792 = vpack.c.bf16 %v767, %v766
    %v793 = vpack.c.bf16 %v769, %v768
    %v794 = vpack.c.bf16 %v771, %v770
    %v795 = vpack.c.bf16 %v773, %v772
    %v796 = vpack.c.bf16 %v775, %v774
    %v797 = vpack.c.bf16 %v777, %v776
    %v798 = vlaneseq
    %v799 = vshrl.u32 %v798, 7
    %v800 = vsub.s32 2, %v799
    %v801 = vrot.slane %v133, %v800
    %v810 = vunpack.c.l.b16 %v125
    %v811 = vunpack.c.l.b16 %v126
    %v812 = vunpack.c.l.b16 %v127
    %v813 = vunpack.c.l.b16 %v128
    %v814 = vunpack.c.l.b16 %v129
    %v815 = vunpack.c.l.b16 %v130
    %v816 = vunpack.c.l.b16 %v131
    %v817 = vunpack.c.l.b16 %v132
    %v818 = vpack.c.b16 %v811, %v810
    %v819 = vpack.c.b16 %v813, %v812
    %v820 = vpack.c.b16 %v815, %v814
    %v821 = vpack.c.b16 %v817, %v816
    %v827 = vsel %vm484, %v778, 0
    %v830 = vsel %vm484, %v779, 0
    %v833 = vsel %vm484, %v780, 0
    %v836 = vsel %vm484, %v781, 0
    %v839 = vsel %vm484, %v782, 0
    %v842 = vsel %vm484, %v783, 0
    %v845 = vsel %vm484, %v784, 0
    %v848 = vsel %vm484, %v785, 0
    %v851 = vsel %vm484, %v786, 0
    %v854 = vsel %vm484, %v787, 0
    %v857 = vsel %vm484, %v788, 0
    %v860 = vsel %vm484, %v789, 0
    %v863 = vsel %vm484, %v790, 0
    %v866 = vsel %vm484, %v791, 0
    %v869 = vsel %vm484, %v792, 0
    %v872 = vsel %vm484, %v793, 0
    %v875 = vsel %vm484, %v794, 0
    %v878 = vsel %vm484, %v795, 0
    %v881 = vsel %vm484, %v796, 0
    %v884 = vsel %vm484, %v797, 0
    %886 = vmatprep.subr.bf16.mxu0 0
    %887 = vmatpush1.bf16.msra.mxu0 0
    %888 = vmatprep.subr.bf16.mxu0 0
    %889 = vmatpush1.bf16.msra.mxu0 0
    %890 = vmatprep.subr.bf16.mxu0 0
    %891 = vmatpush1.bf16.msra.mxu0 0
    %892 = vmatprep.subr.bf16.mxu0 0
    %893 = vmatpush1.bf16.msra.mxu0 0
    %894 = vmatprep.subr.bf16.mxu0 0
    %895 = vmatpush1.bf16.msra.mxu0 %v821
    %896 = vmatprep.subr.bf16.mxu0 0
    %897 = vmatpush1.bf16.msra.mxu0 %v820
    %898 = vmatprep.subr.bf16.mxu0 0
    %899 = vmatpush1.bf16.msra.mxu0 %v819
    %900 = vmatprep.subr.bf16.mxu0 0
    %901 = vmatpush1.bf16.msra.mxu0 %v818
    %902 = vmatprep.subr.bf16.mxu0 0
    %903 = vmatpush2.bf16.msra.mxu0 0
    %904 = vmatprep.subr.bf16.mxu0 0
    %905 = vmatpush2.bf16.msra.mxu0 0
    %906 = vmatprep.subr.bf16.mxu0 0
    %907 = vmatpush2.bf16.msra.mxu0 0
    %908 = vmatprep.subr.bf16.mxu0 0
    %909 = vmatpush2.bf16.msra.mxu0 0
    %910 = vmatprep.subr.bf16.mxu0 0
    %911 = vmatpush2.bf16.msra.mxu0 0
    %912 = vmatprep.subr.bf16.mxu0 0
    %913 = vmatpush2.bf16.msra.mxu0 0
    %914 = vmatprep.subr.bf16.mxu0 0
    %915 = vmatpush2.bf16.msra.mxu0 0
    %916 = vmatprep.subr.bf16.mxu0 0
    %917 = vmatpush2.bf16.msra.mxu0 0
    %918 = vmatprep.mubr.bf16.mxu0 0
    %919 = vmatmul.mubr.bf16.gmra.mxu0 %v827
    %v920 = vpop.f32.mrf.mxu0
    %v921 = vadd.f32 %v801, %v920
    %v922 = vpop.f32.mrf.mxu0
    %v923 = vpop.f32.mrf.mxu0
    %v924 = vadd.f32 %v801, %v923
    %v925 = vpop.f32.mrf.mxu0
    %926 = vmatprep.mubr.bf16.mxu0 0
    %927 = vmatmul.mubr.bf16.gmra.mxu0 %v830
    %v928 = vpop.f32.mrf.mxu0
    %v929 = vadd.f32 %v801, %v928
    %v930 = vpop.f32.mrf.mxu0
    %v931 = vpop.f32.mrf.mxu0
    %v932 = vadd.f32 %v801, %v931
    %v933 = vpop.f32.mrf.mxu0
    %934 = vmatprep.mubr.bf16.mxu0 0
    %935 = vmatmul.mubr.bf16.gmra.mxu0 %v833
    %v936 = vpop.f32.mrf.mxu0
    %v937 = vadd.f32 %v801, %v936
    %v938 = vpop.f32.mrf.mxu0
    %v939 = vpop.f32.mrf.mxu0
    %v940 = vadd.f32 %v801, %v939
    %v941 = vpop.f32.mrf.mxu0
    %942 = vmatprep.mubr.bf16.mxu0 0
    %943 = vmatmul.mubr.bf16.gmra.mxu0 %v836
    %v944 = vpop.f32.mrf.mxu0
    %v945 = vadd.f32 %v801, %v944
    %v946 = vpop.f32.mrf.mxu0
    %v947 = vpop.f32.mrf.mxu0
    %v948 = vadd.f32 %v801, %v947
    %v949 = vpop.f32.mrf.mxu0
    %950 = vmatprep.mubr.bf16.mxu0 0
    %951 = vmatmul.mubr.bf16.gmra.mxu0 %v839
    %v952 = vpop.f32.mrf.mxu0
    %v953 = vadd.f32 %v801, %v952
    %v954 = vpop.f32.mrf.mxu0
    %v955 = vpop.f32.mrf.mxu0
    %v956 = vadd.f32 %v801, %v955
    %v957 = vpop.f32.mrf.mxu0
    %958 = vmatprep.mubr.bf16.mxu0 0
    %959 = vmatmul.mubr.bf16.gmra.mxu0 %v842
    %v960 = vpop.f32.mrf.mxu0
    %v961 = vadd.f32 %v801, %v960
    %v962 = vpop.f32.mrf.mxu0
    %v963 = vpop.f32.mrf.mxu0
    %v964 = vadd.f32 %v801, %v963
    %v965 = vpop.f32.mrf.mxu0
    %966 = vmatprep.mubr.bf16.mxu0 0
    %967 = vmatmul.mubr.bf16.gmra.mxu0 %v845
    %v968 = vpop.f32.mrf.mxu0
    %v969 = vadd.f32 %v801, %v968
    %v970 = vpop.f32.mrf.mxu0
    %v971 = vpop.f32.mrf.mxu0
    %v972 = vadd.f32 %v801, %v971
    %v973 = vpop.f32.mrf.mxu0
    %974 = vmatprep.mubr.bf16.mxu0 0
    %975 = vmatmul.mubr.bf16.gmra.mxu0 %v848
    %v976 = vpop.f32.mrf.mxu0
    %v977 = vadd.f32 %v801, %v976
    %v978 = vpop.f32.mrf.mxu0
    %v979 = vpop.f32.mrf.mxu0
    %v980 = vadd.f32 %v801, %v979
    %v981 = vpop.f32.mrf.mxu0
    %982 = vmatprep.mubr.bf16.mxu0 0
    %983 = vmatmul.mubr.bf16.gmra.mxu0 %v851
    %v984 = vpop.f32.mrf.mxu0
    %v985 = vadd.f32 %v801, %v984
    %v986 = vpop.f32.mrf.mxu0
    %v987 = vpop.f32.mrf.mxu0
    %v988 = vadd.f32 %v801, %v987
    %v989 = vpop.f32.mrf.mxu0
    %990 = vmatprep.mubr.bf16.mxu0 0
    %991 = vmatmul.mubr.bf16.gmra.mxu0 %v854
    %v992 = vpop.f32.mrf.mxu0
    %v993 = vadd.f32 %v801, %v992
    %v994 = vpop.f32.mrf.mxu0
    %v995 = vpop.f32.mrf.mxu0
    %v996 = vadd.f32 %v801, %v995
    %v997 = vpop.f32.mrf.mxu0
    %998 = vmatprep.mubr.bf16.mxu0 0
    %999 = vmatmul.mubr.bf16.gmra.mxu0 %v857
    %v1000 = vpop.f32.mrf.mxu0
    %v1001 = vadd.f32 %v801, %v1000
    %v1002 = vpop.f32.mrf.mxu0
    %v1003 = vpop.f32.mrf.mxu0
    %v1004 = vadd.f32 %v801, %v1003
    %v1005 = vpop.f32.mrf.mxu0
    %1006 = vmatprep.mubr.bf16.mxu0 0
    %1007 = vmatmul.mubr.bf16.gmra.mxu0 %v860
    %v1008 = vpop.f32.mrf.mxu0
    %v1009 = vadd.f32 %v801, %v1008
    %v1010 = vpop.f32.mrf.mxu0
    %v1011 = vpop.f32.mrf.mxu0
    %v1012 = vadd.f32 %v801, %v1011
    %v1013 = vpop.f32.mrf.mxu0
    %1014 = vmatprep.mubr.bf16.mxu0 0
    %1015 = vmatmul.mubr.bf16.gmra.mxu0 %v863
    %v1016 = vpop.f32.mrf.mxu0
    %v1017 = vadd.f32 %v801, %v1016
    %v1018 = vpop.f32.mrf.mxu0
    %v1019 = vpop.f32.mrf.mxu0
    %v1020 = vadd.f32 %v801, %v1019
    %v1021 = vpop.f32.mrf.mxu0
    %1022 = vmatprep.mubr.bf16.mxu0 0
    %1023 = vmatmul.mubr.bf16.gmra.mxu0 %v866
    %v1024 = vpop.f32.mrf.mxu0
    %v1025 = vadd.f32 %v801, %v1024
    %v1026 = vpop.f32.mrf.mxu0
    %v1027 = vpop.f32.mrf.mxu0
    %v1028 = vadd.f32 %v801, %v1027
    %v1029 = vpop.f32.mrf.mxu0
    %1030 = vmatprep.mubr.bf16.mxu0 0
    %1031 = vmatmul.mubr.bf16.gmra.mxu0 %v869
    %v1032 = vpop.f32.mrf.mxu0
    %v1033 = vadd.f32 %v801, %v1032
    %v1034 = vpop.f32.mrf.mxu0
    %v1035 = vpop.f32.mrf.mxu0
    %v1036 = vadd.f32 %v801, %v1035
    %v1037 = vpop.f32.mrf.mxu0
    %1038 = vmatprep.mubr.bf16.mxu0 0
    %1039 = vmatmul.mubr.bf16.gmra.mxu0 %v872
    %v1040 = vpop.f32.mrf.mxu0
    %v1041 = vadd.f32 %v801, %v1040
    %v1042 = vpop.f32.mrf.mxu0
    %v1043 = vpop.f32.mrf.mxu0
    %v1044 = vadd.f32 %v801, %v1043
    %v1045 = vpop.f32.mrf.mxu0
    %1046 = vmatprep.mubr.bf16.mxu0 0
    %1047 = vmatmul.mubr.bf16.gmra.mxu0 %v875
    %v1048 = vpop.f32.mrf.mxu0
    %v1049 = vadd.f32 %v801, %v1048
    %v1050 = vpop.f32.mrf.mxu0
    %v1051 = vpop.f32.mrf.mxu0
    %v1052 = vadd.f32 %v801, %v1051
    %v1053 = vpop.f32.mrf.mxu0
    %1054 = vmatprep.mubr.bf16.mxu0 0
    %1055 = vmatmul.mubr.bf16.gmra.mxu0 %v878
    %v1056 = vpop.f32.mrf.mxu0
    %v1057 = vadd.f32 %v801, %v1056
    %v1058 = vpop.f32.mrf.mxu0
    %v1059 = vpop.f32.mrf.mxu0
    %v1060 = vadd.f32 %v801, %v1059
    %v1061 = vpop.f32.mrf.mxu0
    %1062 = vmatprep.mubr.bf16.mxu0 0
    %1063 = vmatmul.mubr.bf16.gmra.mxu0 %v881
    %v1064 = vpop.f32.mrf.mxu0
    %v1065 = vadd.f32 %v801, %v1064
    %v1066 = vpop.f32.mrf.mxu0
    %v1067 = vpop.f32.mrf.mxu0
    %v1068 = vadd.f32 %v801, %v1067
    %v1069 = vpop.f32.mrf.mxu0
    %1070 = vmatprep.mubr.bf16.mxu0 0
    %1071 = vmatmul.mubr.bf16.gmra.mxu0 %v884
    %v1072 = vpop.f32.mrf.mxu0
    %v1073 = vadd.f32 %v801, %v1072
    %v1074 = vpop.f32.mrf.mxu0
    %v1075 = vpop.f32.mrf.mxu0
    %v1076 = vadd.f32 %v801, %v1075
    %v1077 = vpop.f32.mrf.mxu0
    %1078 = vdwg.mxu0
    %v1079 = vlaneseq
    %v1080 = vand.u32 %v1079, 127
    %v1081 = vadd.s32 %v1080, 128
    %v1082 = vadd.s32 %v1080, 256
    %v1083 = vlaneseq
    %v1084 = vshrl.u32 %v1083, 7
    %v1085 = vadd.s32 %v1084, 8
    %v1086 = vmul.u32 %v1084, 20
    %v1087 = vmul.u32 %v1085, 20
    %vm1088 = vcmp.ge.s32.totalorder %v1080, %v1086
    %vm1089 = vcmp.ge.s32.totalorder %v1081, %v1086
    %vm1090 = vcmp.ge.s32.totalorder %v1082, %v1086
    %vm1091 = vcmp.ge.s32.totalorder %v1080, %v1087
    %vm1092 = vcmp.ge.s32.totalorder %v1081, %v1087
    %vm1093 = vcmp.ge.s32.totalorder %v1082, %v1087
    %v1094 = vadd.s32 %v1084, 1
    %v1095 = vadd.s32 %v1085, 1
    %v1096 = vmul.u32 %v1094, 20
    %v1097 = vmul.u32 %v1095, 20
    %vm1098 = vcmp.lt.s32.totalorder %v1080, %v1096
    %vm1099 = vcmp.lt.s32.totalorder %v1081, %v1096
    %vm1100 = vcmp.lt.s32.totalorder %v1082, %v1096
    %vm1101 = vcmp.lt.s32.totalorder %v1080, %v1097
    %vm1102 = vcmp.lt.s32.totalorder %v1081, %v1097
    %vm1103 = vcmp.lt.s32.totalorder %v1082, %v1097
    %vm1104 = vmand %vm1088, %vm1098
    %vm1105 = vmand %vm1089, %vm1099
    %vm1106 = vmand %vm1090, %vm1100
    %vm1107 = vmand %vm1091, %vm1101
    %vm1108 = vmand %vm1092, %vm1102
    %vm1109 = vmand %vm1093, %vm1103
    %v1110 = vsel %vm1104, 1.0, 0.0
    %v1111 = vsel %vm1105, 1.0, 0.0
    %v1112 = vsel %vm1106, 1.0, 0.0
    %v1113 = vsel %vm1107, 1.0, 0.0
    %v1114 = vsel %vm1108, 1.0, 0.0
    %v1115 = vsel %vm1109, 1.0, 0.0
    %v1116 = vpack.c.bf16 %v1113, %v1110
    %v1117 = vpack.c.bf16 %v1114, %v1111
    %v1118 = vpack.c.bf16 %v1115, %v1112
    %v1119 = vpack.c.bf16 %v924, %v921
    %v1120 = vpack.c.bf16 %v932, %v929
    %v1121 = vpack.c.bf16 %v940, %v937
    %v1122 = vpack.c.bf16 %v948, %v945
    %v1123 = vpack.c.bf16 %v956, %v953
    %v1124 = vpack.c.bf16 %v964, %v961
    %v1125 = vpack.c.bf16 %v972, %v969
    %v1126 = vpack.c.bf16 %v980, %v977
    %v1127 = vpack.c.bf16 %v988, %v985
    %v1128 = vpack.c.bf16 %v996, %v993
    %v1129 = vpack.c.bf16 %v1004, %v1001
    %v1130 = vpack.c.bf16 %v1012, %v1009
    %v1131 = vpack.c.bf16 %v1020, %v1017
    %v1132 = vpack.c.bf16 %v1028, %v1025
    %v1133 = vpack.c.bf16 %v1036, %v1033
    %v1134 = vpack.c.bf16 %v1044, %v1041
    %v1135 = vpack.c.bf16 %v1052, %v1049
    %v1136 = vpack.c.bf16 %v1060, %v1057
    %v1137 = vpack.c.bf16 %v1068, %v1065
    %v1138 = vpack.c.bf16 %v1076, %v1073
    %v1140 = vsel %vm484, %v1118, 0
    %1142 = vmatprep.subr.bf16.mxu0 0
    %1143 = vmatpush1.bf16.msra.mxu0 %v1126
    %1144 = vmatprep.subr.bf16.mxu0 0
    %1145 = vmatpush1.bf16.msra.mxu0 %v1125
    %1146 = vmatprep.subr.bf16.mxu0 0
    %1147 = vmatpush1.bf16.msra.mxu0 %v1124
    %1148 = vmatprep.subr.bf16.mxu0 0
    %1149 = vmatpush1.bf16.msra.mxu0 %v1123
    %1150 = vmatprep.subr.bf16.mxu0 0
    %1151 = vmatpush1.bf16.msra.mxu0 %v1122
    %1152 = vmatprep.subr.bf16.mxu0 0
    %1153 = vmatpush1.bf16.msra.mxu0 %v1121
    %1154 = vmatprep.subr.bf16.mxu0 0
    %1155 = vmatpush1.bf16.msra.mxu0 %v1120
    %1156 = vmatprep.subr.bf16.mxu0 0
    %1157 = vmatpush1.bf16.msra.mxu0 %v1119
    %1158 = vmatprep.subr.bf16.mxu0 0
    %1159 = vmatpush2.bf16.msra.mxu0 %v1134
    %1160 = vmatprep.subr.bf16.mxu0 0
    %1161 = vmatpush2.bf16.msra.mxu0 %v1133
    %1162 = vmatprep.subr.bf16.mxu0 0
    %1163 = vmatpush2.bf16.msra.mxu0 %v1132
    %1164 = vmatprep.subr.bf16.mxu0 0
    %1165 = vmatpush2.bf16.msra.mxu0 %v1131
    %1166 = vmatprep.subr.bf16.mxu0 0
    %1167 = vmatpush2.bf16.msra.mxu0 %v1130
    %1168 = vmatprep.subr.bf16.mxu0 0
    %1169 = vmatpush2.bf16.msra.mxu0 %v1129
    %1170 = vmatprep.subr.bf16.mxu0 0
    %1171 = vmatpush2.bf16.msra.mxu0 %v1128
    %1172 = vmatprep.subr.bf16.mxu0 0
    %1173 = vmatpush2.bf16.msra.mxu0 %v1127
    %1174 = vmatprep.mubr.bf16.mxu0 %v1117
    %1175 = vmatmul.mubr.bf16.gmra.mxu0 %v1116
    %v1176 = vpop.f32.mrf.mxu0
    %v1177 = vadd.f32 0.0, %v1176
    %v1178 = vpop.f32.mrf.mxu0
    %v1179 = vpop.f32.mrf.mxu0
    %v1180 = vadd.f32 0.0, %v1179
    %v1181 = vpop.f32.mrf.mxu0
    %1182 = vdwg.mxu0
    %1183 = vmatprep.subr.bf16.mxu0 0
    %1184 = vmatpush1.bf16.msra.mxu0 0
    %1185 = vmatprep.subr.bf16.mxu0 0
    %1186 = vmatpush1.bf16.msra.mxu0 0
    %1187 = vmatprep.subr.bf16.mxu0 0
    %1188 = vmatpush1.bf16.msra.mxu0 0
    %1189 = vmatprep.subr.bf16.mxu0 0
    %1190 = vmatpush1.bf16.msra.mxu0 0
    %1191 = vmatprep.subr.bf16.mxu0 0
    %1192 = vmatpush1.bf16.msra.mxu0 %v1138
    %1193 = vmatprep.subr.bf16.mxu0 0
    %1194 = vmatpush1.bf16.msra.mxu0 %v1137
    %1195 = vmatprep.subr.bf16.mxu0 0
    %1196 = vmatpush1.bf16.msra.mxu0 %v1136
    %1197 = vmatprep.subr.bf16.mxu0 0
    %1198 = vmatpush1.bf16.msra.mxu0 %v1135
    %1199 = vmatprep.subr.bf16.mxu0 0
    %1200 = vmatpush2.bf16.msra.mxu0 0
    %1201 = vmatprep.subr.bf16.mxu0 0
    %1202 = vmatpush2.bf16.msra.mxu0 0
    %1203 = vmatprep.subr.bf16.mxu0 0
    %1204 = vmatpush2.bf16.msra.mxu0 0
    %1205 = vmatprep.subr.bf16.mxu0 0
    %1206 = vmatpush2.bf16.msra.mxu0 0
    %1207 = vmatprep.subr.bf16.mxu0 0
    %1208 = vmatpush2.bf16.msra.mxu0 0
    %1209 = vmatprep.subr.bf16.mxu0 0
    %1210 = vmatpush2.bf16.msra.mxu0 0
    %1211 = vmatprep.subr.bf16.mxu0 0
    %1212 = vmatpush2.bf16.msra.mxu0 0
    %1213 = vmatprep.subr.bf16.mxu0 0
    %1214 = vmatpush2.bf16.msra.mxu0 0
    %1215 = vmatprep.mubr.bf16.mxu0 0
    %1216 = vmatmul.mubr.bf16.gmra.mxu0 %v1140
    %v1217 = vpop.f32.mrf.mxu0
    %v1218 = vadd.f32 %v1177, %v1217
    %v1219 = vpop.f32.mrf.mxu0
    %v1220 = vpop.f32.mrf.mxu0
    %v1221 = vadd.f32 %v1180, %v1220
    %v1222 = vpop.f32.mrf.mxu0
    %1223 = vdwg.mxu0
    %v1224 = vmul.f32 %v1218, 0.05
    %v1225 = vmul.f32 %v1221, 0.05
    %v1226 = vld [vmem:[%s1] sm:$0xff]
    %v1227 = vld [vmem:[%s1 + $0x8] sm:$0xff]
    %v1228 = vld [vmem:[%s1 + $0x10] sm:$0xff]
    %v1229 = vld [vmem:[%s1 + $0x18] sm:$0xff]
    %v1230 = vld [vmem:[%s1 + $0x20] sm:$0xff]
    %v1231 = vld [vmem:[%s1 + $0x28] sm:$0xff]
    %v1232 = vld [vmem:[%s1 + $0x30] sm:$0xff]
    %v1233 = vld [vmem:[%s1 + $0x38] sm:$0xff]
    %v1234 = vld [vmem:[%s1 + $0x40] sm:$0xff]
    %v1235 = vld [vmem:[%s1 + $0x48] sm:$0xff]
    %v1236 = vld [vmem:[%s1 + $0x50] sm:$0xff]
    %v1237 = vld [vmem:[%s1 + $0x58] sm:$0xff]
    %v1238 = vld [vmem:[%s1 + $0x60] sm:$0xff]
    %v1239 = vld [vmem:[%s1 + $0x68] sm:$0xff]
    %v1240 = vld [vmem:[%s1 + $0x70] sm:$0xff]
    %v1241 = vld [vmem:[%s1 + $0x78] sm:$0xff]
    %v1242 = vld [vmem:[%s1 + $0x80] sm:$0xff]
    %v1243 = vld [vmem:[%s1 + $0x88] sm:$0xff]
    %v1244 = vld [vmem:[%s1 + $0x90] sm:$0xff]
    %v1245 = vld [vmem:[%s1 + $0x98] sm:$0xff]
    %v1246 = vld [vmem:[%s1 + $0xa0] sm:$0xff]
    %v1247 = vld [vmem:[%s1 + $0xa8] sm:$0xff]
    %v1248 = vld [vmem:[%s1 + $0xb0] sm:$0xff]
    %v1249 = vld [vmem:[%s1 + $0xb8] sm:$0xff]
    %v1250 = vld [vmem:[%s1 + $0xc0] sm:$0xff]
    %v1251 = vld [vmem:[%s1 + $0xc8] sm:$0xff]
    %v1252 = vld [vmem:[%s1 + $0xd0] sm:$0xff]
    %v1253 = vld [vmem:[%s1 + $0xd8] sm:$0xff]
    %v1254 = vld [vmem:[%s1 + $0xe0] sm:$0xff]
    %v1255 = vld [vmem:[%s1 + $0xe8] sm:$0xff]
    %v1256 = vld [vmem:[%s1 + $0xf0] sm:$0xff]
    %v1257 = vld [vmem:[%s1 + $0xf8] sm:$0xff]
    %v1258 = vpack.c.bf16 %v1227, %v1226
    %v1259 = vpack.c.bf16 %v1229, %v1228
    %v1260 = vpack.c.bf16 %v1231, %v1230
    %v1261 = vpack.c.bf16 %v1233, %v1232
    %v1262 = vpack.c.bf16 %v1235, %v1234
    %v1263 = vpack.c.bf16 %v1237, %v1236
    %v1264 = vpack.c.bf16 %v1239, %v1238
    %v1265 = vpack.c.bf16 %v1241, %v1240
    %v1266 = vpack.c.bf16 %v1243, %v1242
    %v1267 = vpack.c.bf16 %v1245, %v1244
    %v1268 = vpack.c.bf16 %v1247, %v1246
    %v1269 = vpack.c.bf16 %v1249, %v1248
    %v1270 = vpack.c.bf16 %v1251, %v1250
    %v1271 = vpack.c.bf16 %v1253, %v1252
    %v1272 = vpack.c.bf16 %v1255, %v1254
    %v1273 = vpack.c.bf16 %v1257, %v1256
    %s1274 = scalar_lea.vmem %s2, 4
    %v1275 = vld [vmem:[%s1274] sm:$0xf]
    %s1276 = scalar_lea.vmem %s3, 32
    %v1277 = vld [vmem:[%s1276] sm:$0xf]
    %v1278 = vld [vmem:[%s1276 + $0x4] sm:$0xf]
    %v1279 = vld [vmem:[%s1276 + $0x8] sm:$0xf]
    %v1280 = vld [vmem:[%s1276 + $0xc] sm:$0xf]
    %v1281 = vld [vmem:[%s1276 + $0x10] sm:$0xf]
    %v1282 = vld [vmem:[%s1276 + $0x14] sm:$0xf]
    %v1283 = vld [vmem:[%s1276 + $0x18] sm:$0xf]
    %v1284 = vld [vmem:[%s1276 + $0x1c] sm:$0xf]
    %s1285 = scalar_lea.vmem %s4, 32
    %v1286 = vld [vmem:[%s1285] sm:$0xf]
    %v1287 = vld [vmem:[%s1285 + $0x4] sm:$0xf]
    %v1288 = vld [vmem:[%s1285 + $0x8] sm:$0xf]
    %v1289 = vld [vmem:[%s1285 + $0xc] sm:$0xf]
    %v1290 = vld [vmem:[%s1285 + $0x10] sm:$0xf]
    %v1291 = vld [vmem:[%s1285 + $0x14] sm:$0xf]
    %v1292 = vld [vmem:[%s1285 + $0x18] sm:$0xf]
    %v1293 = vld [vmem:[%s1285 + $0x1c] sm:$0xf]
    %s1294 = scalar_lea.vmem %s5, 4
    %v1295 = vld [vmem:[%s1294] sm:$0x7]
    %v1296 = vlaneseq
    %v1297 = vshrl.u32 %v1296, 7
    %v1298 = vsub.s32 0, %v1297
    %v1299 = vrot.slane %v1295, %v1298
    %v1301 = vsel %vm138, %v1258, 0
    %v1304 = vsel %vm138, %v1259, 0
    %v1307 = vsel %vm138, %v1260, 0
    %v1310 = vsel %vm138, %v1261, 0
    %v1313 = vsel %vm138, %v1262, 0
    %v1316 = vsel %vm138, %v1263, 0
    %v1319 = vsel %vm138, %v1264, 0
    %v1322 = vsel %vm138, %v1265, 0
    %v1325 = vsel %vm138, %v1266, 0
    %v1328 = vsel %vm138, %v1267, 0
    %v1331 = vsel %vm138, %v1268, 0
    %v1334 = vsel %vm138, %v1269, 0
    %v1337 = vsel %vm138, %v1270, 0
    %v1340 = vsel %vm138, %v1271, 0
    %v1343 = vsel %vm138, %v1272, 0
    %v1346 = vsel %vm138, %v1273, 0
    %v1349 = vsel %vm199, %v1275, 0
    %1351 = vmatprep.subr.bf16.mxu0 0
    %1352 = vmatpush1.bf16.msra.mxu0 0
    %1353 = vmatprep.subr.bf16.mxu0 0
    %1354 = vmatpush1.bf16.msra.mxu0 0
    %1355 = vmatprep.subr.bf16.mxu0 0
    %1356 = vmatpush1.bf16.msra.mxu0 0
    %1357 = vmatprep.subr.bf16.mxu0 0
    %1358 = vmatpush1.bf16.msra.mxu0 0
    %1359 = vmatprep.subr.bf16.mxu0 0
    %1360 = vmatpush1.bf16.msra.mxu0 0
    %1361 = vmatprep.subr.bf16.mxu0 0
    %1362 = vmatpush1.bf16.msra.mxu0 0
    %1363 = vmatprep.subr.bf16.mxu0 0
    %1364 = vmatpush1.bf16.msra.mxu0 0
    %1365 = vmatprep.subr.bf16.mxu0 0
    %1366 = vmatpush1.bf16.msra.mxu0 %v1349
    %1367 = vmatprep.subr.bf16.mxu0 0
    %1368 = vmatpush2.bf16.msra.mxu0 0
    %1369 = vmatprep.subr.bf16.mxu0 0
    %1370 = vmatpush2.bf16.msra.mxu0 0
    %1371 = vmatprep.subr.bf16.mxu0 0
    %1372 = vmatpush2.bf16.msra.mxu0 0
    %1373 = vmatprep.subr.bf16.mxu0 0
    %1374 = vmatpush2.bf16.msra.mxu0 0
    %1375 = vmatprep.subr.bf16.mxu0 0
    %1376 = vmatpush2.bf16.msra.mxu0 0
    %1377 = vmatprep.subr.bf16.mxu0 0
    %1378 = vmatpush2.bf16.msra.mxu0 0
    %1379 = vmatprep.subr.bf16.mxu0 0
    %1380 = vmatpush2.bf16.msra.mxu0 0
    %1381 = vmatprep.subr.bf16.mxu0 0
    %1382 = vmatpush2.bf16.msra.mxu0 0
    %1383 = vmatprep.mubr.bf16.mxu0 0
    %1384 = vmatmul.mubr.bf16.gmra.mxu0 %v1301
    %v1385 = vpop.f32.mrf.mxu0
    %v1386 = vadd.f32 %v1299, %v1385
    %v1387 = vpop.f32.mrf.mxu0
    %v1388 = vpop.f32.mrf.mxu0
    %v1389 = vadd.f32 %v1299, %v1388
    %v1390 = vpop.f32.mrf.mxu0
    %1391 = vmatprep.mubr.bf16.mxu0 0
    %1392 = vmatmul.mubr.bf16.gmra.mxu0 %v1304
    %v1393 = vpop.f32.mrf.mxu0
    %v1394 = vadd.f32 %v1299, %v1393
    %v1395 = vpop.f32.mrf.mxu0
    %v1396 = vpop.f32.mrf.mxu0
    %v1397 = vadd.f32 %v1299, %v1396
    %v1398 = vpop.f32.mrf.mxu0
    %1399 = vmatprep.mubr.bf16.mxu0 0
    %1400 = vmatmul.mubr.bf16.gmra.mxu0 %v1307
    %v1401 = vpop.f32.mrf.mxu0
    %v1402 = vadd.f32 %v1299, %v1401
    %v1403 = vpop.f32.mrf.mxu0
    %v1404 = vpop.f32.mrf.mxu0
    %v1405 = vadd.f32 %v1299, %v1404
    %v1406 = vpop.f32.mrf.mxu0
    %1407 = vmatprep.mubr.bf16.mxu0 0
    %1408 = vmatmul.mubr.bf16.gmra.mxu0 %v1310
    %v1409 = vpop.f32.mrf.mxu0
    %v1410 = vadd.f32 %v1299, %v1409
    %v1411 = vpop.f32.mrf.mxu0
    %v1412 = vpop.f32.mrf.mxu0
    %v1413 = vadd.f32 %v1299, %v1412
    %v1414 = vpop.f32.mrf.mxu0
    %1415 = vmatprep.mubr.bf16.mxu0 0
    %1416 = vmatmul.mubr.bf16.gmra.mxu0 %v1313
    %v1417 = vpop.f32.mrf.mxu0
    %v1418 = vadd.f32 %v1299, %v1417
    %v1419 = vpop.f32.mrf.mxu0
    %v1420 = vpop.f32.mrf.mxu0
    %v1421 = vadd.f32 %v1299, %v1420
    %v1422 = vpop.f32.mrf.mxu0
    %1423 = vmatprep.mubr.bf16.mxu0 0
    %1424 = vmatmul.mubr.bf16.gmra.mxu0 %v1316
    %v1425 = vpop.f32.mrf.mxu0
    %v1426 = vadd.f32 %v1299, %v1425
    %v1427 = vpop.f32.mrf.mxu0
    %v1428 = vpop.f32.mrf.mxu0
    %v1429 = vadd.f32 %v1299, %v1428
    %v1430 = vpop.f32.mrf.mxu0
    %1431 = vmatprep.mubr.bf16.mxu0 0
    %1432 = vmatmul.mubr.bf16.gmra.mxu0 %v1319
    %v1433 = vpop.f32.mrf.mxu0
    %v1434 = vadd.f32 %v1299, %v1433
    %v1435 = vpop.f32.mrf.mxu0
    %v1436 = vpop.f32.mrf.mxu0
    %v1437 = vadd.f32 %v1299, %v1436
    %v1438 = vpop.f32.mrf.mxu0
    %1439 = vmatprep.mubr.bf16.mxu0 0
    %1440 = vmatmul.mubr.bf16.gmra.mxu0 %v1322
    %v1441 = vpop.f32.mrf.mxu0
    %v1442 = vadd.f32 %v1299, %v1441
    %v1443 = vpop.f32.mrf.mxu0
    %v1444 = vpop.f32.mrf.mxu0
    %v1445 = vadd.f32 %v1299, %v1444
    %v1446 = vpop.f32.mrf.mxu0
    %1447 = vmatprep.mubr.bf16.mxu0 0
    %1448 = vmatmul.mubr.bf16.gmra.mxu0 %v1325
    %v1449 = vpop.f32.mrf.mxu0
    %v1450 = vadd.f32 %v1299, %v1449
    %v1451 = vpop.f32.mrf.mxu0
    %v1452 = vpop.f32.mrf.mxu0
    %v1453 = vadd.f32 %v1299, %v1452
    %v1454 = vpop.f32.mrf.mxu0
    %1455 = vmatprep.mubr.bf16.mxu0 0
    %1456 = vmatmul.mubr.bf16.gmra.mxu0 %v1328
    %v1457 = vpop.f32.mrf.mxu0
    %v1458 = vadd.f32 %v1299, %v1457
    %v1459 = vpop.f32.mrf.mxu0
    %v1460 = vpop.f32.mrf.mxu0
    %v1461 = vadd.f32 %v1299, %v1460
    %v1462 = vpop.f32.mrf.mxu0
    %1463 = vmatprep.mubr.bf16.mxu0 0
    %1464 = vmatmul.mubr.bf16.gmra.mxu0 %v1331
    %v1465 = vpop.f32.mrf.mxu0
    %v1466 = vadd.f32 %v1299, %v1465
    %v1467 = vpop.f32.mrf.mxu0
    %v1468 = vpop.f32.mrf.mxu0
    %v1469 = vadd.f32 %v1299, %v1468
    %v1470 = vpop.f32.mrf.mxu0
    %1471 = vmatprep.mubr.bf16.mxu0 0
    %1472 = vmatmul.mubr.bf16.gmra.mxu0 %v1334
    %v1473 = vpop.f32.mrf.mxu0
    %v1474 = vadd.f32 %v1299, %v1473
    %v1475 = vpop.f32.mrf.mxu0
    %v1476 = vpop.f32.mrf.mxu0
    %v1477 = vadd.f32 %v1299, %v1476
    %v1478 = vpop.f32.mrf.mxu0
    %1479 = vmatprep.mubr.bf16.mxu0 0
    %1480 = vmatmul.mubr.bf16.gmra.mxu0 %v1337
    %v1481 = vpop.f32.mrf.mxu0
    %v1482 = vadd.f32 %v1299, %v1481
    %v1483 = vpop.f32.mrf.mxu0
    %v1484 = vpop.f32.mrf.mxu0
    %v1485 = vadd.f32 %v1299, %v1484
    %v1486 = vpop.f32.mrf.mxu0
    %1487 = vmatprep.mubr.bf16.mxu0 0
    %1488 = vmatmul.mubr.bf16.gmra.mxu0 %v1340
    %v1489 = vpop.f32.mrf.mxu0
    %v1490 = vadd.f32 %v1299, %v1489
    %v1491 = vpop.f32.mrf.mxu0
    %v1492 = vpop.f32.mrf.mxu0
    %v1493 = vadd.f32 %v1299, %v1492
    %v1494 = vpop.f32.mrf.mxu0
    %1495 = vmatprep.mubr.bf16.mxu0 0
    %1496 = vmatmul.mubr.bf16.gmra.mxu0 %v1343
    %v1497 = vpop.f32.mrf.mxu0
    %v1498 = vadd.f32 %v1299, %v1497
    %v1499 = vpop.f32.mrf.mxu0
    %v1500 = vpop.f32.mrf.mxu0
    %v1501 = vadd.f32 %v1299, %v1500
    %v1502 = vpop.f32.mrf.mxu0
    %1503 = vmatprep.mubr.bf16.mxu0 0
    %1504 = vmatmul.mubr.bf16.gmra.mxu0 %v1346
    %v1505 = vpop.f32.mrf.mxu0
    %v1506 = vadd.f32 %v1299, %v1505
    %v1507 = vpop.f32.mrf.mxu0
    %v1508 = vpop.f32.mrf.mxu0
    %v1509 = vadd.f32 %v1299, %v1508
    %v1510 = vpop.f32.mrf.mxu0
    %1511 = vdwg.mxu0
    %v1512 = vmax.f32 %v1386, 0.0
    %v1513 = vmax.f32 %v1389, 0.0
    %v1514 = vmax.f32 %v1394, 0.0
    %v1515 = vmax.f32 %v1397, 0.0
    %v1516 = vmax.f32 %v1402, 0.0
    %v1517 = vmax.f32 %v1405, 0.0
    %v1518 = vmax.f32 %v1410, 0.0
    %v1519 = vmax.f32 %v1413, 0.0
    %v1520 = vmax.f32 %v1418, 0.0
    %v1521 = vmax.f32 %v1421, 0.0
    %v1522 = vmax.f32 %v1426, 0.0
    %v1523 = vmax.f32 %v1429, 0.0
    %v1524 = vmax.f32 %v1434, 0.0
    %v1525 = vmax.f32 %v1437, 0.0
    %v1526 = vmax.f32 %v1442, 0.0
    %v1527 = vmax.f32 %v1445, 0.0
    %v1528 = vmax.f32 %v1450, 0.0
    %v1529 = vmax.f32 %v1453, 0.0
    %v1530 = vmax.f32 %v1458, 0.0
    %v1531 = vmax.f32 %v1461, 0.0
    %v1532 = vmax.f32 %v1466, 0.0
    %v1533 = vmax.f32 %v1469, 0.0
    %v1534 = vmax.f32 %v1474, 0.0
    %v1535 = vmax.f32 %v1477, 0.0
    %v1536 = vmax.f32 %v1482, 0.0
    %v1537 = vmax.f32 %v1485, 0.0
    %v1538 = vmax.f32 %v1490, 0.0
    %v1539 = vmax.f32 %v1493, 0.0
    %v1540 = vmax.f32 %v1498, 0.0
    %v1541 = vmax.f32 %v1501, 0.0
    %v1542 = vmax.f32 %v1506, 0.0
    %v1543 = vmax.f32 %v1509, 0.0
    %v1544 = vpack.c.bf16 %v1513, %v1512
    %v1545 = vpack.c.bf16 %v1515, %v1514
    %v1546 = vpack.c.bf16 %v1517, %v1516
    %v1547 = vpack.c.bf16 %v1519, %v1518
    %v1548 = vpack.c.bf16 %v1521, %v1520
    %v1549 = vpack.c.bf16 %v1523, %v1522
    %v1550 = vpack.c.bf16 %v1525, %v1524
    %v1551 = vpack.c.bf16 %v1527, %v1526
    %v1552 = vpack.c.bf16 %v1529, %v1528
    %v1553 = vpack.c.bf16 %v1531, %v1530
    %v1554 = vpack.c.bf16 %v1533, %v1532
    %v1555 = vpack.c.bf16 %v1535, %v1534
    %v1556 = vpack.c.bf16 %v1537, %v1536
    %v1557 = vpack.c.bf16 %v1539, %v1538
    %v1558 = vpack.c.bf16 %v1541, %v1540
    %v1559 = vpack.c.bf16 %v1543, %v1542
    %v1560 = vlaneseq
    %v1561 = vshrl.u32 %v1560, 7
    %v1562 = vsub.s32 1, %v1561
    %v1563 = vrot.slane %v1295, %v1562
    %v1572 = vunpack.c.l.b16 %v1277
    %v1573 = vunpack.c.l.b16 %v1278
    %v1574 = vunpack.c.l.b16 %v1279
    %v1575 = vunpack.c.l.b16 %v1280
    %v1576 = vunpack.c.l.b16 %v1281
    %v1577 = vunpack.c.l.b16 %v1282
    %v1578 = vunpack.c.l.b16 %v1283
    %v1579 = vunpack.c.l.b16 %v1284
    %v1580 = vpack.c.b16 %v1573, %v1572
    %v1581 = vpack.c.b16 %v1575, %v1574
    %v1582 = vpack.c.b16 %v1577, %v1576
    %v1583 = vpack.c.b16 %v1579, %v1578
    %v1589 = vsel %vm484, %v1544, 0
    %v1592 = vsel %vm484, %v1545, 0
    %v1595 = vsel %vm484, %v1546, 0
    %v1598 = vsel %vm484, %v1547, 0
    %v1601 = vsel %vm484, %v1548, 0
    %v1604 = vsel %vm484, %v1549, 0
    %v1607 = vsel %vm484, %v1550, 0
    %v1610 = vsel %vm484, %v1551, 0
    %v1613 = vsel %vm484, %v1552, 0
    %v1616 = vsel %vm484, %v1553, 0
    %v1619 = vsel %vm484, %v1554, 0
    %v1622 = vsel %vm484, %v1555, 0
    %v1625 = vsel %vm484, %v1556, 0
    %v1628 = vsel %vm484, %v1557, 0
    %v1631 = vsel %vm484, %v1558, 0
    %v1634 = vsel %vm484, %v1559, 0
    %1636 = vmatprep.subr.bf16.mxu0 0
    %1637 = vmatpush1.bf16.msra.mxu0 0
    %1638 = vmatprep.subr.bf16.mxu0 0
    %1639 = vmatpush1.bf16.msra.mxu0 0
    %1640 = vmatprep.subr.bf16.mxu0 0
    %1641 = vmatpush1.bf16.msra.mxu0 0
    %1642 = vmatprep.subr.bf16.mxu0 0
    %1643 = vmatpush1.bf16.msra.mxu0 0
    %1644 = vmatprep.subr.bf16.mxu0 0
    %1645 = vmatpush1.bf16.msra.mxu0 %v1583
    %1646 = vmatprep.subr.bf16.mxu0 0
    %1647 = vmatpush1.bf16.msra.mxu0 %v1582
    %1648 = vmatprep.subr.bf16.mxu0 0
    %1649 = vmatpush1.bf16.msra.mxu0 %v1581
    %1650 = vmatprep.subr.bf16.mxu0 0
    %1651 = vmatpush1.bf16.msra.mxu0 %v1580
    %1652 = vmatprep.subr.bf16.mxu0 0
    %1653 = vmatpush2.bf16.msra.mxu0 0
    %1654 = vmatprep.subr.bf16.mxu0 0
    %1655 = vmatpush2.bf16.msra.mxu0 0
    %1656 = vmatprep.subr.bf16.mxu0 0
    %1657 = vmatpush2.bf16.msra.mxu0 0
    %1658 = vmatprep.subr.bf16.mxu0 0
    %1659 = vmatpush2.bf16.msra.mxu0 0
    %1660 = vmatprep.subr.bf16.mxu0 0
    %1661 = vmatpush2.bf16.msra.mxu0 0
    %1662 = vmatprep.subr.bf16.mxu0 0
    %1663 = vmatpush2.bf16.msra.mxu0 0
    %1664 = vmatprep.subr.bf16.mxu0 0
    %1665 = vmatpush2.bf16.msra.mxu0 0
    %1666 = vmatprep.subr.bf16.mxu0 0
    %1667 = vmatpush2.bf16.msra.mxu0 0
    %1668 = vmatprep.mubr.bf16.mxu0 0
    %1669 = vmatmul.mubr.bf16.gmra.mxu0 %v1589
    %v1670 = vpop.f32.mrf.mxu0
    %v1671 = vadd.f32 %v1563, %v1670
    %v1672 = vpop.f32.mrf.mxu0
    %v1673 = vpop.f32.mrf.mxu0
    %v1674 = vadd.f32 %v1563, %v1673
    %v1675 = vpop.f32.mrf.mxu0
    %1676 = vmatprep.mubr.bf16.mxu0 0
    %1677 = vmatmul.mubr.bf16.gmra.mxu0 %v1592
    %v1678 = vpop.f32.mrf.mxu0
    %v1679 = vadd.f32 %v1563, %v1678
    %v1680 = vpop.f32.mrf.mxu0
    %v1681 = vpop.f32.mrf.mxu0
    %v1682 = vadd.f32 %v1563, %v1681
    %v1683 = vpop.f32.mrf.mxu0
    %1684 = vmatprep.mubr.bf16.mxu0 0
    %1685 = vmatmul.mubr.bf16.gmra.mxu0 %v1595
    %v1686 = vpop.f32.mrf.mxu0
    %v1687 = vadd.f32 %v1563, %v1686
    %v1688 = vpop.f32.mrf.mxu0
    %v1689 = vpop.f32.mrf.mxu0
    %v1690 = vadd.f32 %v1563, %v1689
    %v1691 = vpop.f32.mrf.mxu0
    %1692 = vmatprep.mubr.bf16.mxu0 0
    %1693 = vmatmul.mubr.bf16.gmra.mxu0 %v1598
    %v1694 = vpop.f32.mrf.mxu0
    %v1695 = vadd.f32 %v1563, %v1694
    %v1696 = vpop.f32.mrf.mxu0
    %v1697 = vpop.f32.mrf.mxu0
    %v1698 = vadd.f32 %v1563, %v1697
    %v1699 = vpop.f32.mrf.mxu0
    %1700 = vmatprep.mubr.bf16.mxu0 0
    %1701 = vmatmul.mubr.bf16.gmra.mxu0 %v1601
    %v1702 = vpop.f32.mrf.mxu0
    %v1703 = vadd.f32 %v1563, %v1702
    %v1704 = vpop.f32.mrf.mxu0
    %v1705 = vpop.f32.mrf.mxu0
    %v1706 = vadd.f32 %v1563, %v1705
    %v1707 = vpop.f32.mrf.mxu0
    %1708 = vmatprep.mubr.bf16.mxu0 0
    %1709 = vmatmul.mubr.bf16.gmra.mxu0 %v1604
    %v1710 = vpop.f32.mrf.mxu0
    %v1711 = vadd.f32 %v1563, %v1710
    %v1712 = vpop.f32.mrf.mxu0
    %v1713 = vpop.f32.mrf.mxu0
    %v1714 = vadd.f32 %v1563, %v1713
    %v1715 = vpop.f32.mrf.mxu0
    %1716 = vmatprep.mubr.bf16.mxu0 0
    %1717 = vmatmul.mubr.bf16.gmra.mxu0 %v1607
    %v1718 = vpop.f32.mrf.mxu0
    %v1719 = vadd.f32 %v1563, %v1718
    %v1720 = vpop.f32.mrf.mxu0
    %v1721 = vpop.f32.mrf.mxu0
    %v1722 = vadd.f32 %v1563, %v1721
    %v1723 = vpop.f32.mrf.mxu0
    %1724 = vmatprep.mubr.bf16.mxu0 0
    %1725 = vmatmul.mubr.bf16.gmra.mxu0 %v1610
    %v1726 = vpop.f32.mrf.mxu0
    %v1727 = vadd.f32 %v1563, %v1726
    %v1728 = vpop.f32.mrf.mxu0
    %v1729 = vpop.f32.mrf.mxu0
    %v1730 = vadd.f32 %v1563, %v1729
    %v1731 = vpop.f32.mrf.mxu0
    %1732 = vmatprep.mubr.bf16.mxu0 0
    %1733 = vmatmul.mubr.bf16.gmra.mxu0 %v1613
    %v1734 = vpop.f32.mrf.mxu0
    %v1735 = vadd.f32 %v1563, %v1734
    %v1736 = vpop.f32.mrf.mxu0
    %v1737 = vpop.f32.mrf.mxu0
    %v1738 = vadd.f32 %v1563, %v1737
    %v1739 = vpop.f32.mrf.mxu0
    %1740 = vmatprep.mubr.bf16.mxu0 0
    %1741 = vmatmul.mubr.bf16.gmra.mxu0 %v1616
    %v1742 = vpop.f32.mrf.mxu0
    %v1743 = vadd.f32 %v1563, %v1742
    %v1744 = vpop.f32.mrf.mxu0
    %v1745 = vpop.f32.mrf.mxu0
    %v1746 = vadd.f32 %v1563, %v1745
    %v1747 = vpop.f32.mrf.mxu0
    %1748 = vmatprep.mubr.bf16.mxu0 0
    %1749 = vmatmul.mubr.bf16.gmra.mxu0 %v1619
    %v1750 = vpop.f32.mrf.mxu0
    %v1751 = vadd.f32 %v1563, %v1750
    %v1752 = vpop.f32.mrf.mxu0
    %v1753 = vpop.f32.mrf.mxu0
    %v1754 = vadd.f32 %v1563, %v1753
    %v1755 = vpop.f32.mrf.mxu0
    %1756 = vmatprep.mubr.bf16.mxu0 0
    %1757 = vmatmul.mubr.bf16.gmra.mxu0 %v1622
    %v1758 = vpop.f32.mrf.mxu0
    %v1759 = vadd.f32 %v1563, %v1758
    %v1760 = vpop.f32.mrf.mxu0
    %v1761 = vpop.f32.mrf.mxu0
    %v1762 = vadd.f32 %v1563, %v1761
    %v1763 = vpop.f32.mrf.mxu0
    %1764 = vmatprep.mubr.bf16.mxu0 0
    %1765 = vmatmul.mubr.bf16.gmra.mxu0 %v1625
    %v1766 = vpop.f32.mrf.mxu0
    %v1767 = vadd.f32 %v1563, %v1766
    %v1768 = vpop.f32.mrf.mxu0
    %v1769 = vpop.f32.mrf.mxu0
    %v1770 = vadd.f32 %v1563, %v1769
    %v1771 = vpop.f32.mrf.mxu0
    %1772 = vmatprep.mubr.bf16.mxu0 0
    %1773 = vmatmul.mubr.bf16.gmra.mxu0 %v1628
    %v1774 = vpop.f32.mrf.mxu0
    %v1775 = vadd.f32 %v1563, %v1774
    %v1776 = vpop.f32.mrf.mxu0
    %v1777 = vpop.f32.mrf.mxu0
    %v1778 = vadd.f32 %v1563, %v1777
    %v1779 = vpop.f32.mrf.mxu0
    %1780 = vmatprep.mubr.bf16.mxu0 0
    %1781 = vmatmul.mubr.bf16.gmra.mxu0 %v1631
    %v1782 = vpop.f32.mrf.mxu0
    %v1783 = vadd.f32 %v1563, %v1782
    %v1784 = vpop.f32.mrf.mxu0
    %v1785 = vpop.f32.mrf.mxu0
    %v1786 = vadd.f32 %v1563, %v1785
    %v1787 = vpop.f32.mrf.mxu0
    %1788 = vmatprep.mubr.bf16.mxu0 0
    %1789 = vmatmul.mubr.bf16.gmra.mxu0 %v1634
    %v1790 = vpop.f32.mrf.mxu0
    %v1791 = vadd.f32 %v1563, %v1790
    %v1792 = vpop.f32.mrf.mxu0
    %v1793 = vpop.f32.mrf.mxu0
    %v1794 = vadd.f32 %v1563, %v1793
    %v1795 = vpop.f32.mrf.mxu0
    %1796 = vdwg.mxu0
    %v1797 = vmax.f32 %v1671, 0.0
    %v1798 = vmax.f32 %v1674, 0.0
    %v1799 = vmax.f32 %v1679, 0.0
    %v1800 = vmax.f32 %v1682, 0.0
    %v1801 = vmax.f32 %v1687, 0.0
    %v1802 = vmax.f32 %v1690, 0.0
    %v1803 = vmax.f32 %v1695, 0.0
    %v1804 = vmax.f32 %v1698, 0.0
    %v1805 = vmax.f32 %v1703, 0.0
    %v1806 = vmax.f32 %v1706, 0.0
    %v1807 = vmax.f32 %v1711, 0.0
    %v1808 = vmax.f32 %v1714, 0.0
    %v1809 = vmax.f32 %v1719, 0.0
    %v1810 = vmax.f32 %v1722, 0.0
    %v1811 = vmax.f32 %v1727, 0.0
    %v1812 = vmax.f32 %v1730, 0.0
    %v1813 = vmax.f32 %v1735, 0.0
    %v1814 = vmax.f32 %v1738, 0.0
    %v1815 = vmax.f32 %v1743, 0.0
    %v1816 = vmax.f32 %v1746, 0.0
    %v1817 = vmax.f32 %v1751, 0.0
    %v1818 = vmax.f32 %v1754, 0.0
    %v1819 = vmax.f32 %v1759, 0.0
    %v1820 = vmax.f32 %v1762, 0.0
    %v1821 = vmax.f32 %v1767, 0.0
    %v1822 = vmax.f32 %v1770, 0.0
    %v1823 = vmax.f32 %v1775, 0.0
    %v1824 = vmax.f32 %v1778, 0.0
    %v1825 = vmax.f32 %v1783, 0.0
    %v1826 = vmax.f32 %v1786, 0.0
    %v1827 = vmax.f32 %v1791, 0.0
    %v1828 = vmax.f32 %v1794, 0.0
    %v1829 = vpack.c.bf16 %v1798, %v1797
    %v1830 = vpack.c.bf16 %v1800, %v1799
    %v1831 = vpack.c.bf16 %v1802, %v1801
    %v1832 = vpack.c.bf16 %v1804, %v1803
    %v1833 = vpack.c.bf16 %v1806, %v1805
    %v1834 = vpack.c.bf16 %v1808, %v1807
    %v1835 = vpack.c.bf16 %v1810, %v1809
    %v1836 = vpack.c.bf16 %v1812, %v1811
    %v1837 = vpack.c.bf16 %v1814, %v1813
    %v1838 = vpack.c.bf16 %v1816, %v1815
    %v1839 = vpack.c.bf16 %v1818, %v1817
    %v1840 = vpack.c.bf16 %v1820, %v1819
    %v1841 = vpack.c.bf16 %v1822, %v1821
    %v1842 = vpack.c.bf16 %v1824, %v1823
    %v1843 = vpack.c.bf16 %v1826, %v1825
    %v1844 = vpack.c.bf16 %v1828, %v1827
    %v1845 = vlaneseq
    %v1846 = vshrl.u32 %v1845, 7
    %v1847 = vsub.s32 2, %v1846
    %v1848 = vrot.slane %v1295, %v1847
    %v1857 = vunpack.c.l.b16 %v1286
    %v1858 = vunpack.c.l.b16 %v1287
    %v1859 = vunpack.c.l.b16 %v1288
    %v1860 = vunpack.c.l.b16 %v1289
    %v1861 = vunpack.c.l.b16 %v1290
    %v1862 = vunpack.c.l.b16 %v1291
    %v1863 = vunpack.c.l.b16 %v1292
    %v1864 = vunpack.c.l.b16 %v1293
    %v1865 = vpack.c.b16 %v1858, %v1857
    %v1866 = vpack.c.b16 %v1860, %v1859
    %v1867 = vpack.c.b16 %v1862, %v1861
    %v1868 = vpack.c.b16 %v1864, %v1863
    %v1874 = vsel %vm484, %v1829, 0
    %v1877 = vsel %vm484, %v1830, 0
    %v1880 = vsel %vm484, %v1831, 0
    %v1883 = vsel %vm484, %v1832, 0
    %v1886 = vsel %vm484, %v1833, 0
    %v1889 = vsel %vm484, %v1834, 0
    %v1892 = vsel %vm484, %v1835, 0
    %v1895 = vsel %vm484, %v1836, 0
    %v1898 = vsel %vm484, %v1837, 0
    %v1901 = vsel %vm484, %v1838, 0
    %v1904 = vsel %vm484, %v1839, 0
    %v1907 = vsel %vm484, %v1840, 0
    %v1910 = vsel %vm484, %v1841, 0
    %v1913 = vsel %vm484, %v1842, 0
    %v1916 = vsel %vm484, %v1843, 0
    %v1919 = vsel %vm484, %v1844, 0
    %1921 = vmatprep.subr.bf16.mxu0 0
    %1922 = vmatpush1.bf16.msra.mxu0 0
    %1923 = vmatprep.subr.bf16.mxu0 0
    %1924 = vmatpush1.bf16.msra.mxu0 0
    %1925 = vmatprep.subr.bf16.mxu0 0
    %1926 = vmatpush1.bf16.msra.mxu0 0
    %1927 = vmatprep.subr.bf16.mxu0 0
    %1928 = vmatpush1.bf16.msra.mxu0 0
    %1929 = vmatprep.subr.bf16.mxu0 0
    %1930 = vmatpush1.bf16.msra.mxu0 %v1868
    %1931 = vmatprep.subr.bf16.mxu0 0
    %1932 = vmatpush1.bf16.msra.mxu0 %v1867
    %1933 = vmatprep.subr.bf16.mxu0 0
    %1934 = vmatpush1.bf16.msra.mxu0 %v1866
    %1935 = vmatprep.subr.bf16.mxu0 0
    %1936 = vmatpush1.bf16.msra.mxu0 %v1865
    %1937 = vmatprep.subr.bf16.mxu0 0
    %1938 = vmatpush2.bf16.msra.mxu0 0
    %1939 = vmatprep.subr.bf16.mxu0 0
    %1940 = vmatpush2.bf16.msra.mxu0 0
    %1941 = vmatprep.subr.bf16.mxu0 0
    %1942 = vmatpush2.bf16.msra.mxu0 0
    %1943 = vmatprep.subr.bf16.mxu0 0
    %1944 = vmatpush2.bf16.msra.mxu0 0
    %1945 = vmatprep.subr.bf16.mxu0 0
    %1946 = vmatpush2.bf16.msra.mxu0 0
    %1947 = vmatprep.subr.bf16.mxu0 0
    %1948 = vmatpush2.bf16.msra.mxu0 0
    %1949 = vmatprep.subr.bf16.mxu0 0
    %1950 = vmatpush2.bf16.msra.mxu0 0
    %1951 = vmatprep.subr.bf16.mxu0 0
    %1952 = vmatpush2.bf16.msra.mxu0 0
    %1953 = vmatprep.mubr.bf16.mxu0 0
    %1954 = vmatmul.mubr.bf16.gmra.mxu0 %v1874
    %v1955 = vpop.f32.mrf.mxu0
    %v1956 = vadd.f32 %v1848, %v1955
    %v1957 = vpop.f32.mrf.mxu0
    %v1958 = vpop.f32.mrf.mxu0
    %v1959 = vadd.f32 %v1848, %v1958
    %v1960 = vpop.f32.mrf.mxu0
    %1961 = vmatprep.mubr.bf16.mxu0 0
    %1962 = vmatmul.mubr.bf16.gmra.mxu0 %v1877
    %v1963 = vpop.f32.mrf.mxu0
    %v1964 = vadd.f32 %v1848, %v1963
    %v1965 = vpop.f32.mrf.mxu0
    %v1966 = vpop.f32.mrf.mxu0
    %v1967 = vadd.f32 %v1848, %v1966
    %v1968 = vpop.f32.mrf.mxu0
    %1969 = vmatprep.mubr.bf16.mxu0 0
    %1970 = vmatmul.mubr.bf16.gmra.mxu0 %v1880
    %v1971 = vpop.f32.mrf.mxu0
    %v1972 = vadd.f32 %v1848, %v1971
    %v1973 = vpop.f32.mrf.mxu0
    %v1974 = vpop.f32.mrf.mxu0
    %v1975 = vadd.f32 %v1848, %v1974
    %v1976 = vpop.f32.mrf.mxu0
    %1977 = vmatprep.mubr.bf16.mxu0 0
    %1978 = vmatmul.mubr.bf16.gmra.mxu0 %v1883
    %v1979 = vpop.f32.mrf.mxu0
    %v1980 = vadd.f32 %v1848, %v1979
    %v1981 = vpop.f32.mrf.mxu0
    %v1982 = vpop.f32.mrf.mxu0
    %v1983 = vadd.f32 %v1848, %v1982
    %v1984 = vpop.f32.mrf.mxu0
    %1985 = vmatprep.mubr.bf16.mxu0 0
    %1986 = vmatmul.mubr.bf16.gmra.mxu0 %v1886
    %v1987 = vpop.f32.mrf.mxu0
    %v1988 = vadd.f32 %v1848, %v1987
    %v1989 = vpop.f32.mrf.mxu0
    %v1990 = vpop.f32.mrf.mxu0
    %v1991 = vadd.f32 %v1848, %v1990
    %v1992 = vpop.f32.mrf.mxu0
    %1993 = vmatprep.mubr.bf16.mxu0 0
    %1994 = vmatmul.mubr.bf16.gmra.mxu0 %v1889
    %v1995 = vpop.f32.mrf.mxu0
    %v1996 = vadd.f32 %v1848, %v1995
    %v1997 = vpop.f32.mrf.mxu0
    %v1998 = vpop.f32.mrf.mxu0
    %v1999 = vadd.f32 %v1848, %v1998
    %v2000 = vpop.f32.mrf.mxu0
    %2001 = vmatprep.mubr.bf16.mxu0 0
    %2002 = vmatmul.mubr.bf16.gmra.mxu0 %v1892
    %v2003 = vpop.f32.mrf.mxu0
    %v2004 = vadd.f32 %v1848, %v2003
    %v2005 = vpop.f32.mrf.mxu0
    %v2006 = vpop.f32.mrf.mxu0
    %v2007 = vadd.f32 %v1848, %v2006
    %v2008 = vpop.f32.mrf.mxu0
    %2009 = vmatprep.mubr.bf16.mxu0 0
    %2010 = vmatmul.mubr.bf16.gmra.mxu0 %v1895
    %v2011 = vpop.f32.mrf.mxu0
    %v2012 = vadd.f32 %v1848, %v2011
    %v2013 = vpop.f32.mrf.mxu0
    %v2014 = vpop.f32.mrf.mxu0
    %v2015 = vadd.f32 %v1848, %v2014
    %v2016 = vpop.f32.mrf.mxu0
    %2017 = vmatprep.mubr.bf16.mxu0 0
    %2018 = vmatmul.mubr.bf16.gmra.mxu0 %v1898
    %v2019 = vpop.f32.mrf.mxu0
    %v2020 = vadd.f32 %v1848, %v2019
    %v2021 = vpop.f32.mrf.mxu0
    %v2022 = vpop.f32.mrf.mxu0
    %v2023 = vadd.f32 %v1848, %v2022
    %v2024 = vpop.f32.mrf.mxu0
    %2025 = vmatprep.mubr.bf16.mxu0 0
    %2026 = vmatmul.mubr.bf16.gmra.mxu0 %v1901
    %v2027 = vpop.f32.mrf.mxu0
    %v2028 = vadd.f32 %v1848, %v2027
    %v2029 = vpop.f32.mrf.mxu0
    %v2030 = vpop.f32.mrf.mxu0
    %v2031 = vadd.f32 %v1848, %v2030
    %v2032 = vpop.f32.mrf.mxu0
    %2033 = vmatprep.mubr.bf16.mxu0 0
    %2034 = vmatmul.mubr.bf16.gmra.mxu0 %v1904
    %v2035 = vpop.f32.mrf.mxu0
    %v2036 = vadd.f32 %v1848, %v2035
    %v2037 = vpop.f32.mrf.mxu0
    %v2038 = vpop.f32.mrf.mxu0
    %v2039 = vadd.f32 %v1848, %v2038
    %v2040 = vpop.f32.mrf.mxu0
    %2041 = vmatprep.mubr.bf16.mxu0 0
    %2042 = vmatmul.mubr.bf16.gmra.mxu0 %v1907
    %v2043 = vpop.f32.mrf.mxu0
    %v2044 = vadd.f32 %v1848, %v2043
    %v2045 = vpop.f32.mrf.mxu0
    %v2046 = vpop.f32.mrf.mxu0
    %v2047 = vadd.f32 %v1848, %v2046
    %v2048 = vpop.f32.mrf.mxu0
    %2049 = vmatprep.mubr.bf16.mxu0 0
    %2050 = vmatmul.mubr.bf16.gmra.mxu0 %v1910
    %v2051 = vpop.f32.mrf.mxu0
    %v2052 = vadd.f32 %v1848, %v2051
    %v2053 = vpop.f32.mrf.mxu0
    %v2054 = vpop.f32.mrf.mxu0
    %v2055 = vadd.f32 %v1848, %v2054
    %v2056 = vpop.f32.mrf.mxu0
    %2057 = vmatprep.mubr.bf16.mxu0 0
    %2058 = vmatmul.mubr.bf16.gmra.mxu0 %v1913
    %v2059 = vpop.f32.mrf.mxu0
    %v2060 = vadd.f32 %v1848, %v2059
    %v2061 = vpop.f32.mrf.mxu0
    %v2062 = vpop.f32.mrf.mxu0
    %v2063 = vadd.f32 %v1848, %v2062
    %v2064 = vpop.f32.mrf.mxu0
    %2065 = vmatprep.mubr.bf16.mxu0 0
    %2066 = vmatmul.mubr.bf16.gmra.mxu0 %v1916
    %v2067 = vpop.f32.mrf.mxu0
    %v2068 = vadd.f32 %v1848, %v2067
    %v2069 = vpop.f32.mrf.mxu0
    %v2070 = vpop.f32.mrf.mxu0
    %v2071 = vadd.f32 %v1848, %v2070
    %v2072 = vpop.f32.mrf.mxu0
    %2073 = vmatprep.mubr.bf16.mxu0 0
    %2074 = vmatmul.mubr.bf16.gmra.mxu0 %v1919
    %v2075 = vpop.f32.mrf.mxu0
    %v2076 = vadd.f32 %v1848, %v2075
    %v2077 = vpop.f32.mrf.mxu0
    %v2078 = vpop.f32.mrf.mxu0
    %v2079 = vadd.f32 %v1848, %v2078
    %v2080 = vpop.f32.mrf.mxu0
    %2081 = vdwg.mxu0
    %v2082 = vadd.s32 %v1084, 16
    %v2083 = vadd.s32 %v1084, 24
    %v2084 = vadd.s32 %v1084, 32
    %v2085 = vadd.s32 %v1084, 40
    %v2086 = vadd.s32 %v1084, 48
    %v2087 = vadd.s32 %v1084, 56
    %v2088 = vadd.s32 %v1084, 64
    %v2089 = vadd.s32 %v1084, 72
    %v2090 = vadd.s32 %v1084, 80
    %v2091 = vadd.s32 %v1084, 88
    %v2092 = vadd.s32 %v1084, 96
    %v2093 = vadd.s32 %v1084, 104
    %v2094 = vadd.s32 %v1084, 112
    %v2095 = vadd.s32 %v1084, 120
    %v2096 = vadd.s32 %v1084, 128
    %v2097 = vadd.s32 %v1084, 136
    %v2098 = vadd.s32 %v1084, 144
    %v2099 = vadd.s32 %v1084, 152
    %v2100 = vadd.s32 %v1084, 160
    %v2101 = vadd.s32 %v1084, 168
    %v2102 = vadd.s32 %v1084, 176
    %v2103 = vadd.s32 %v1084, 184
    %v2104 = vadd.s32 %v1084, 192
    %v2105 = vadd.s32 %v1084, 200
    %v2106 = vadd.s32 %v1084, 208
    %v2107 = vadd.s32 %v1084, 216
    %v2108 = vadd.s32 %v1084, 224
    %v2109 = vadd.s32 %v1084, 232
    %v2110 = vadd.s32 %v1084, 240
    %v2111 = vadd.s32 %v1084, 248
    %vm2112 = vcmp.lt.s32.totalorder %v1084, 0
    %v2113 = vsub.s32 0, %v1084
    %v2114 = vsel %vm2112, %v2113, %v1084
    %v2115 = vshrl.u32 %v2114, 4
    %v2116 = vand.u32 %v2114, 15
    %v2117 = vsub.s32 0, %v2116
    %v2118 = vsel %vm2112, %v2117, %v2116
    %vm2119 = vcmp.lt.s32.totalorder %v1085, 0
    %v2120 = vsub.s32 0, %v1085
    %v2121 = vsel %vm2119, %v2120, %v1085
    %v2122 = vshrl.u32 %v2121, 4
    %v2123 = vand.u32 %v2121, 15
    %v2124 = vsub.s32 0, %v2123
    %v2125 = vsel %vm2119, %v2124, %v2123
    %vm2126 = vcmp.lt.s32.totalorder %v2082, 0
    %v2127 = vsub.s32 0, %v2082
    %v2128 = vsel %vm2126, %v2127, %v2082
    %v2129 = vshrl.u32 %v2128, 4
    %v2130 = vand.u32 %v2128, 15
    %v2131 = vsub.s32 0, %v2130
    %v2132 = vsel %vm2126, %v2131, %v2130
    %vm2133 = vcmp.lt.s32.totalorder %v2083, 0
    %v2134 = vsub.s32 0, %v2083
    %v2135 = vsel %vm2133, %v2134, %v2083
    %v2136 = vshrl.u32 %v2135, 4
    %v2137 = vand.u32 %v2135, 15
    %v2138 = vsub.s32 0, %v2137
    %v2139 = vsel %vm2133, %v2138, %v2137
    %vm2140 = vcmp.lt.s32.totalorder %v2084, 0
    %v2141 = vsub.s32 0, %v2084
    %v2142 = vsel %vm2140, %v2141, %v2084
    %v2143 = vshrl.u32 %v2142, 4
    %v2144 = vand.u32 %v2142, 15
    %v2145 = vsub.s32 0, %v2144
    %v2146 = vsel %vm2140, %v2145, %v2144
    %vm2147 = vcmp.lt.s32.totalorder %v2085, 0
    %v2148 = vsub.s32 0, %v2085
    %v2149 = vsel %vm2147, %v2148, %v2085
    %v2150 = vshrl.u32 %v2149, 4
    %v2151 = vand.u32 %v2149, 15
    %v2152 = vsub.s32 0, %v2151
    %v2153 = vsel %vm2147, %v2152, %v2151
    %vm2154 = vcmp.lt.s32.totalorder %v2086, 0
    %v2155 = vsub.s32 0, %v2086
    %v2156 = vsel %vm2154, %v2155, %v2086
    %v2157 = vshrl.u32 %v2156, 4
    %v2158 = vand.u32 %v2156, 15
    %v2159 = vsub.s32 0, %v2158
    %v2160 = vsel %vm2154, %v2159, %v2158
    %vm2161 = vcmp.lt.s32.totalorder %v2087, 0
    %v2162 = vsub.s32 0, %v2087
    %v2163 = vsel %vm2161, %v2162, %v2087
    %v2164 = vshrl.u32 %v2163, 4
    %v2165 = vand.u32 %v2163, 15
    %v2166 = vsub.s32 0, %v2165
    %v2167 = vsel %vm2161, %v2166, %v2165
    %vm2168 = vcmp.lt.s32.totalorder %v2088, 0
    %v2169 = vsub.s32 0, %v2088
    %v2170 = vsel %vm2168, %v2169, %v2088
    %v2171 = vshrl.u32 %v2170, 4
    %v2172 = vand.u32 %v2170, 15
    %v2173 = vsub.s32 0, %v2172
    %v2174 = vsel %vm2168, %v2173, %v2172
    %vm2175 = vcmp.lt.s32.totalorder %v2089, 0
    %v2176 = vsub.s32 0, %v2089
    %v2177 = vsel %vm2175, %v2176, %v2089
    %v2178 = vshrl.u32 %v2177, 4
    %v2179 = vand.u32 %v2177, 15
    %v2180 = vsub.s32 0, %v2179
    %v2181 = vsel %vm2175, %v2180, %v2179
    %vm2182 = vcmp.lt.s32.totalorder %v2090, 0
    %v2183 = vsub.s32 0, %v2090
    %v2184 = vsel %vm2182, %v2183, %v2090
    %v2185 = vshrl.u32 %v2184, 4
    %v2186 = vand.u32 %v2184, 15
    %v2187 = vsub.s32 0, %v2186
    %v2188 = vsel %vm2182, %v2187, %v2186
    %vm2189 = vcmp.lt.s32.totalorder %v2091, 0
    %v2190 = vsub.s32 0, %v2091
    %v2191 = vsel %vm2189, %v2190, %v2091
    %v2192 = vshrl.u32 %v2191, 4
    %v2193 = vand.u32 %v2191, 15
    %v2194 = vsub.s32 0, %v2193
    %v2195 = vsel %vm2189, %v2194, %v2193
    %vm2196 = vcmp.lt.s32.totalorder %v2092, 0
    %v2197 = vsub.s32 0, %v2092
    %v2198 = vsel %vm2196, %v2197, %v2092
    %v2199 = vshrl.u32 %v2198, 4
    %v2200 = vand.u32 %v2198, 15
    %v2201 = vsub.s32 0, %v2200
    %v2202 = vsel %vm2196, %v2201, %v2200
    %vm2203 = vcmp.lt.s32.totalorder %v2093, 0
    %v2204 = vsub.s32 0, %v2093
    %v2205 = vsel %vm2203, %v2204, %v2093
    %v2206 = vshrl.u32 %v2205, 4
    %v2207 = vand.u32 %v2205, 15
    %v2208 = vsub.s32 0, %v2207
    %v2209 = vsel %vm2203, %v2208, %v2207
    %vm2210 = vcmp.lt.s32.totalorder %v2094, 0
    %v2211 = vsub.s32 0, %v2094
    %v2212 = vsel %vm2210, %v2211, %v2094
    %v2213 = vshrl.u32 %v2212, 4
    %v2214 = vand.u32 %v2212, 15
    %v2215 = vsub.s32 0, %v2214
    %v2216 = vsel %vm2210, %v2215, %v2214
    %vm2217 = vcmp.lt.s32.totalorder %v2095, 0
    %v2218 = vsub.s32 0, %v2095
    %v2219 = vsel %vm2217, %v2218, %v2095
    %v2220 = vshrl.u32 %v2219, 4
    %v2221 = vand.u32 %v2219, 15
    %v2222 = vsub.s32 0, %v2221
    %v2223 = vsel %vm2217, %v2222, %v2221
    %vm2224 = vcmp.lt.s32.totalorder %v2096, 0
    %v2225 = vsub.s32 0, %v2096
    %v2226 = vsel %vm2224, %v2225, %v2096
    %v2227 = vshrl.u32 %v2226, 4
    %v2228 = vand.u32 %v2226, 15
    %v2229 = vsub.s32 0, %v2228
    %v2230 = vsel %vm2224, %v2229, %v2228
    %vm2231 = vcmp.lt.s32.totalorder %v2097, 0
    %v2232 = vsub.s32 0, %v2097
    %v2233 = vsel %vm2231, %v2232, %v2097
    %v2234 = vshrl.u32 %v2233, 4
    %v2235 = vand.u32 %v2233, 15
    %v2236 = vsub.s32 0, %v2235
    %v2237 = vsel %vm2231, %v2236, %v2235
    %vm2238 = vcmp.lt.s32.totalorder %v2098, 0
    %v2239 = vsub.s32 0, %v2098
    %v2240 = vsel %vm2238, %v2239, %v2098
    %v2241 = vshrl.u32 %v2240, 4
    %v2242 = vand.u32 %v2240, 15
    %v2243 = vsub.s32 0, %v2242
    %v2244 = vsel %vm2238, %v2243, %v2242
    %vm2245 = vcmp.lt.s32.totalorder %v2099, 0
    %v2246 = vsub.s32 0, %v2099
    %v2247 = vsel %vm2245, %v2246, %v2099
    %v2248 = vshrl.u32 %v2247, 4
    %v2249 = vand.u32 %v2247, 15
    %v2250 = vsub.s32 0, %v2249
    %v2251 = vsel %vm2245, %v2250, %v2249
    %vm2252 = vcmp.lt.s32.totalorder %v2100, 0
    %v2253 = vsub.s32 0, %v2100
    %v2254 = vsel %vm2252, %v2253, %v2100
    %v2255 = vshrl.u32 %v2254, 4
    %v2256 = vand.u32 %v2254, 15
    %v2257 = vsub.s32 0, %v2256
    %v2258 = vsel %vm2252, %v2257, %v2256
    %vm2259 = vcmp.lt.s32.totalorder %v2101, 0
    %v2260 = vsub.s32 0, %v2101
    %v2261 = vsel %vm2259, %v2260, %v2101
    %v2262 = vshrl.u32 %v2261, 4
    %v2263 = vand.u32 %v2261, 15
    %v2264 = vsub.s32 0, %v2263
    %v2265 = vsel %vm2259, %v2264, %v2263
    %vm2266 = vcmp.lt.s32.totalorder %v2102, 0
    %v2267 = vsub.s32 0, %v2102
    %v2268 = vsel %vm2266, %v2267, %v2102
    %v2269 = vshrl.u32 %v2268, 4
    %v2270 = vand.u32 %v2268, 15
    %v2271 = vsub.s32 0, %v2270
    %v2272 = vsel %vm2266, %v2271, %v2270
    %vm2273 = vcmp.lt.s32.totalorder %v2103, 0
    %v2274 = vsub.s32 0, %v2103
    %v2275 = vsel %vm2273, %v2274, %v2103
    %v2276 = vshrl.u32 %v2275, 4
    %v2277 = vand.u32 %v2275, 15
    %v2278 = vsub.s32 0, %v2277
    %v2279 = vsel %vm2273, %v2278, %v2277
    %vm2280 = vcmp.lt.s32.totalorder %v2104, 0
    %v2281 = vsub.s32 0, %v2104
    %v2282 = vsel %vm2280, %v2281, %v2104
    %v2283 = vshrl.u32 %v2282, 4
    %v2284 = vand.u32 %v2282, 15
    %v2285 = vsub.s32 0, %v2284
    %v2286 = vsel %vm2280, %v2285, %v2284
    %vm2287 = vcmp.lt.s32.totalorder %v2105, 0
    %v2288 = vsub.s32 0, %v2105
    %v2289 = vsel %vm2287, %v2288, %v2105
    %v2290 = vshrl.u32 %v2289, 4
    %v2291 = vand.u32 %v2289, 15
    %v2292 = vsub.s32 0, %v2291
    %v2293 = vsel %vm2287, %v2292, %v2291
    %vm2294 = vcmp.lt.s32.totalorder %v2106, 0
    %v2295 = vsub.s32 0, %v2106
    %v2296 = vsel %vm2294, %v2295, %v2106
    %v2297 = vshrl.u32 %v2296, 4
    %v2298 = vand.u32 %v2296, 15
    %v2299 = vsub.s32 0, %v2298
    %v2300 = vsel %vm2294, %v2299, %v2298
    %vm2301 = vcmp.lt.s32.totalorder %v2107, 0
    %v2302 = vsub.s32 0, %v2107
    %v2303 = vsel %vm2301, %v2302, %v2107
    %v2304 = vshrl.u32 %v2303, 4
    %v2305 = vand.u32 %v2303, 15
    %v2306 = vsub.s32 0, %v2305
    %v2307 = vsel %vm2301, %v2306, %v2305
    %vm2308 = vcmp.lt.s32.totalorder %v2108, 0
    %v2309 = vsub.s32 0, %v2108
    %v2310 = vsel %vm2308, %v2309, %v2108
    %v2311 = vshrl.u32 %v2310, 4
    %v2312 = vand.u32 %v2310, 15
    %v2313 = vsub.s32 0, %v2312
    %v2314 = vsel %vm2308, %v2313, %v2312
    %vm2315 = vcmp.lt.s32.totalorder %v2109, 0
    %v2316 = vsub.s32 0, %v2109
    %v2317 = vsel %vm2315, %v2316, %v2109
    %v2318 = vshrl.u32 %v2317, 4
    %v2319 = vand.u32 %v2317, 15
    %v2320 = vsub.s32 0, %v2319
    %v2321 = vsel %vm2315, %v2320, %v2319
    %vm2322 = vcmp.lt.s32.totalorder %v2110, 0
    %v2323 = vsub.s32 0, %v2110
    %v2324 = vsel %vm2322, %v2323, %v2110
    %v2325 = vshrl.u32 %v2324, 4
    %v2326 = vand.u32 %v2324, 15
    %v2327 = vsub.s32 0, %v2326
    %v2328 = vsel %vm2322, %v2327, %v2326
    %vm2329 = vcmp.lt.s32.totalorder %v2111, 0
    %v2330 = vsub.s32 0, %v2111
    %v2331 = vsel %vm2329, %v2330, %v2111
    %v2332 = vshrl.u32 %v2331, 4
    %v2333 = vand.u32 %v2331, 15
    %v2334 = vsub.s32 0, %v2333
    %v2335 = vsel %vm2329, %v2334, %v2333
    %vm2336 = vcmp.ne.s32.totalorder %v2118, 0
    %vm2337 = vcmp.ne.s32.totalorder %v2125, 0
    %vm2338 = vcmp.ne.s32.totalorder %v2132, 0
    %vm2339 = vcmp.ne.s32.totalorder %v2139, 0
    %vm2340 = vcmp.ne.s32.totalorder %v2146, 0
    %vm2341 = vcmp.ne.s32.totalorder %v2153, 0
    %vm2342 = vcmp.ne.s32.totalorder %v2160, 0
    %vm2343 = vcmp.ne.s32.totalorder %v2167, 0
    %vm2344 = vcmp.ne.s32.totalorder %v2174, 0
    %vm2345 = vcmp.ne.s32.totalorder %v2181, 0
    %vm2346 = vcmp.ne.s32.totalorder %v2188, 0
    %vm2347 = vcmp.ne.s32.totalorder %v2195, 0
    %vm2348 = vcmp.ne.s32.totalorder %v2202, 0
    %vm2349 = vcmp.ne.s32.totalorder %v2209, 0
    %vm2350 = vcmp.ne.s32.totalorder %v2216, 0
    %vm2351 = vcmp.ne.s32.totalorder %v2223, 0
    %vm2352 = vcmp.ne.s32.totalorder %v2230, 0
    %vm2353 = vcmp.ne.s32.totalorder %v2237, 0
    %vm2354 = vcmp.ne.s32.totalorder %v2244, 0
    %vm2355 = vcmp.ne.s32.totalorder %v2251, 0
    %vm2356 = vcmp.ne.s32.totalorder %v2258, 0
    %vm2357 = vcmp.ne.s32.totalorder %v2265, 0
    %vm2358 = vcmp.ne.s32.totalorder %v2272, 0
    %vm2359 = vcmp.ne.s32.totalorder %v2279, 0
    %vm2360 = vcmp.ne.s32.totalorder %v2286, 0
    %vm2361 = vcmp.ne.s32.totalorder %v2293, 0
    %vm2362 = vcmp.ne.s32.totalorder %v2300, 0
    %vm2363 = vcmp.ne.s32.totalorder %v2307, 0
    %vm2364 = vcmp.ne.s32.totalorder %v2314, 0
    %vm2365 = vcmp.ne.s32.totalorder %v2321, 0
    %vm2366 = vcmp.ne.s32.totalorder %v2328, 0
    %vm2367 = vcmp.ne.s32.totalorder %v2335, 0
    %vm2368 = vcmp.lt.s32.totalorder %v2118, 0
    %vm2369 = vcmp.lt.s32.totalorder %v2125, 0
    %vm2370 = vcmp.lt.s32.totalorder %v2132, 0
    %vm2371 = vcmp.lt.s32.totalorder %v2139, 0
    %vm2372 = vcmp.lt.s32.totalorder %v2146, 0
    %vm2373 = vcmp.lt.s32.totalorder %v2153, 0
    %vm2374 = vcmp.lt.s32.totalorder %v2160, 0
    %vm2375 = vcmp.lt.s32.totalorder %v2167, 0
    %vm2376 = vcmp.lt.s32.totalorder %v2174, 0
    %vm2377 = vcmp.lt.s32.totalorder %v2181, 0
    %vm2378 = vcmp.lt.s32.totalorder %v2188, 0
    %vm2379 = vcmp.lt.s32.totalorder %v2195, 0
    %vm2380 = vcmp.lt.s32.totalorder %v2202, 0
    %vm2381 = vcmp.lt.s32.totalorder %v2209, 0
    %vm2382 = vcmp.lt.s32.totalorder %v2216, 0
    %vm2383 = vcmp.lt.s32.totalorder %v2223, 0
    %vm2384 = vcmp.lt.s32.totalorder %v2230, 0
    %vm2385 = vcmp.lt.s32.totalorder %v2237, 0
    %vm2386 = vcmp.lt.s32.totalorder %v2244, 0
    %vm2387 = vcmp.lt.s32.totalorder %v2251, 0
    %vm2388 = vcmp.lt.s32.totalorder %v2258, 0
    %vm2389 = vcmp.lt.s32.totalorder %v2265, 0
    %vm2390 = vcmp.lt.s32.totalorder %v2272, 0
    %vm2391 = vcmp.lt.s32.totalorder %v2279, 0
    %vm2392 = vcmp.lt.s32.totalorder %v2286, 0
    %vm2393 = vcmp.lt.s32.totalorder %v2293, 0
    %vm2394 = vcmp.lt.s32.totalorder %v2300, 0
    %vm2395 = vcmp.lt.s32.totalorder %v2307, 0
    %vm2396 = vcmp.lt.s32.totalorder %v2314, 0
    %vm2397 = vcmp.lt.s32.totalorder %v2321, 0
    %vm2398 = vcmp.lt.s32.totalorder %v2328, 0
    %vm2399 = vcmp.lt.s32.totalorder %v2335, 0
    %vm2400 = vmand %vm2368, %vm2336
    %vm2401 = vmand %vm2369, %vm2337
    %vm2402 = vmand %vm2370, %vm2338
    %vm2403 = vmand %vm2371, %vm2339
    %vm2404 = vmand %vm2372, %vm2340
    %vm2405 = vmand %vm2373, %vm2341
    %vm2406 = vmand %vm2374, %vm2342
    %vm2407 = vmand %vm2375, %vm2343
    %vm2408 = vmand %vm2376, %vm2344
    %vm2409 = vmand %vm2377, %vm2345
    %vm2410 = vmand %vm2378, %vm2346
    %vm2411 = vmand %vm2379, %vm2347
    %vm2412 = vmand %vm2380, %vm2348
    %vm2413 = vmand %vm2381, %vm2349
    %vm2414 = vmand %vm2382, %vm2350
    %vm2415 = vmand %vm2383, %vm2351
    %vm2416 = vmand %vm2384, %vm2352
    %vm2417 = vmand %vm2385, %vm2353
    %vm2418 = vmand %vm2386, %vm2354
    %vm2419 = vmand %vm2387, %vm2355
    %vm2420 = vmand %vm2388, %vm2356
    %vm2421 = vmand %vm2389, %vm2357
    %vm2422 = vmand %vm2390, %vm2358
    %vm2423 = vmand %vm2391, %vm2359
    %vm2424 = vmand %vm2392, %vm2360
    %vm2425 = vmand %vm2393, %vm2361
    %vm2426 = vmand %vm2394, %vm2362
    %vm2427 = vmand %vm2395, %vm2363
    %vm2428 = vmand %vm2396, %vm2364
    %vm2429 = vmand %vm2397, %vm2365
    %vm2430 = vmand %vm2398, %vm2366
    %vm2431 = vmand %vm2399, %vm2367
    %v2432 = vadd.s32 %v2118, 16
    %v2433 = vadd.s32 %v2125, 16
    %v2434 = vadd.s32 %v2132, 16
    %v2435 = vadd.s32 %v2139, 16
    %v2436 = vadd.s32 %v2146, 16
    %v2437 = vadd.s32 %v2153, 16
    %v2438 = vadd.s32 %v2160, 16
    %v2439 = vadd.s32 %v2167, 16
    %v2440 = vadd.s32 %v2174, 16
    %v2441 = vadd.s32 %v2181, 16
    %v2442 = vadd.s32 %v2188, 16
    %v2443 = vadd.s32 %v2195, 16
    %v2444 = vadd.s32 %v2202, 16
    %v2445 = vadd.s32 %v2209, 16
    %v2446 = vadd.s32 %v2216, 16
    %v2447 = vadd.s32 %v2223, 16
    %v2448 = vadd.s32 %v2230, 16
    %v2449 = vadd.s32 %v2237, 16
    %v2450 = vadd.s32 %v2244, 16
    %v2451 = vadd.s32 %v2251, 16
    %v2452 = vadd.s32 %v2258, 16
    %v2453 = vadd.s32 %v2265, 16
    %v2454 = vadd.s32 %v2272, 16
    %v2455 = vadd.s32 %v2279, 16
    %v2456 = vadd.s32 %v2286, 16
    %v2457 = vadd.s32 %v2293, 16
    %v2458 = vadd.s32 %v2300, 16
    %v2459 = vadd.s32 %v2307, 16
    %v2460 = vadd.s32 %v2314, 16
    %v2461 = vadd.s32 %v2321, 16
    %v2462 = vadd.s32 %v2328, 16
    %v2463 = vadd.s32 %v2335, 16
    %v2464 = vsel %vm2400, %v2432, %v2118
    %v2465 = vsel %vm2401, %v2433, %v2125
    %v2466 = vsel %vm2402, %v2434, %v2132
    %v2467 = vsel %vm2403, %v2435, %v2139
    %v2468 = vsel %vm2404, %v2436, %v2146
    %v2469 = vsel %vm2405, %v2437, %v2153
    %v2470 = vsel %vm2406, %v2438, %v2160
    %v2471 = vsel %vm2407, %v2439, %v2167
    %v2472 = vsel %vm2408, %v2440, %v2174
    %v2473 = vsel %vm2409, %v2441, %v2181
    %v2474 = vsel %vm2410, %v2442, %v2188
    %v2475 = vsel %vm2411, %v2443, %v2195
    %v2476 = vsel %vm2412, %v2444, %v2202
    %v2477 = vsel %vm2413, %v2445, %v2209
    %v2478 = vsel %vm2414, %v2446, %v2216
    %v2479 = vsel %vm2415, %v2447, %v2223
    %v2480 = vsel %vm2416, %v2448, %v2230
    %v2481 = vsel %vm2417, %v2449, %v2237
    %v2482 = vsel %vm2418, %v2450, %v2244
    %v2483 = vsel %vm2419, %v2451, %v2251
    %v2484 = vsel %vm2420, %v2452, %v2258
    %v2485 = vsel %vm2421, %v2453, %v2265
    %v2486 = vsel %vm2422, %v2454, %v2272
    %v2487 = vsel %vm2423, %v2455, %v2279
    %v2488 = vsel %vm2424, %v2456, %v2286
    %v2489 = vsel %vm2425, %v2457, %v2293
    %v2490 = vsel %vm2426, %v2458, %v2300
    %v2491 = vsel %vm2427, %v2459, %v2307
    %v2492 = vsel %vm2428, %v2460, %v2314
    %v2493 = vsel %vm2429, %v2461, %v2321
    %v2494 = vsel %vm2430, %v2462, %v2328
    %v2495 = vsel %vm2431, %v2463, %v2335
    %vm2496 = vcmp.eq.s32.totalorder %v2464, %v1080
    %vm2497 = vcmp.eq.s32.totalorder %v2465, %v1080
    %vm2498 = vcmp.eq.s32.totalorder %v2466, %v1080
    %vm2499 = vcmp.eq.s32.totalorder %v2467, %v1080
    %vm2500 = vcmp.eq.s32.totalorder %v2468, %v1080
    %vm2501 = vcmp.eq.s32.totalorder %v2469, %v1080
    %vm2502 = vcmp.eq.s32.totalorder %v2470, %v1080
    %vm2503 = vcmp.eq.s32.totalorder %v2471, %v1080
    %vm2504 = vcmp.eq.s32.totalorder %v2472, %v1080
    %vm2505 = vcmp.eq.s32.totalorder %v2473, %v1080
    %vm2506 = vcmp.eq.s32.totalorder %v2474, %v1080
    %vm2507 = vcmp.eq.s32.totalorder %v2475, %v1080
    %vm2508 = vcmp.eq.s32.totalorder %v2476, %v1080
    %vm2509 = vcmp.eq.s32.totalorder %v2477, %v1080
    %vm2510 = vcmp.eq.s32.totalorder %v2478, %v1080
    %vm2511 = vcmp.eq.s32.totalorder %v2479, %v1080
    %vm2512 = vcmp.eq.s32.totalorder %v2480, %v1080
    %vm2513 = vcmp.eq.s32.totalorder %v2481, %v1080
    %vm2514 = vcmp.eq.s32.totalorder %v2482, %v1080
    %vm2515 = vcmp.eq.s32.totalorder %v2483, %v1080
    %vm2516 = vcmp.eq.s32.totalorder %v2484, %v1080
    %vm2517 = vcmp.eq.s32.totalorder %v2485, %v1080
    %vm2518 = vcmp.eq.s32.totalorder %v2486, %v1080
    %vm2519 = vcmp.eq.s32.totalorder %v2487, %v1080
    %vm2520 = vcmp.eq.s32.totalorder %v2488, %v1080
    %vm2521 = vcmp.eq.s32.totalorder %v2489, %v1080
    %vm2522 = vcmp.eq.s32.totalorder %v2490, %v1080
    %vm2523 = vcmp.eq.s32.totalorder %v2491, %v1080
    %vm2524 = vcmp.eq.s32.totalorder %v2492, %v1080
    %vm2525 = vcmp.eq.s32.totalorder %v2493, %v1080
    %vm2526 = vcmp.eq.s32.totalorder %v2494, %v1080
    %vm2527 = vcmp.eq.s32.totalorder %v2495, %v1080
    %v2528 = vsel %vm2496, 1.0, 0.0
    %v2529 = vsel %vm2497, 1.0, 0.0
    %v2530 = vsel %vm2498, 1.0, 0.0
    %v2531 = vsel %vm2499, 1.0, 0.0
    %v2532 = vsel %vm2500, 1.0, 0.0
    %v2533 = vsel %vm2501, 1.0, 0.0
    %v2534 = vsel %vm2502, 1.0, 0.0
    %v2535 = vsel %vm2503, 1.0, 0.0
    %v2536 = vsel %vm2504, 1.0, 0.0
    %v2537 = vsel %vm2505, 1.0, 0.0
    %v2538 = vsel %vm2506, 1.0, 0.0
    %v2539 = vsel %vm2507, 1.0, 0.0
    %v2540 = vsel %vm2508, 1.0, 0.0
    %v2541 = vsel %vm2509, 1.0, 0.0
    %v2542 = vsel %vm2510, 1.0, 0.0
    %v2543 = vsel %vm2511, 1.0, 0.0
    %v2544 = vsel %vm2512, 1.0, 0.0
    %v2545 = vsel %vm2513, 1.0, 0.0
    %v2546 = vsel %vm2514, 1.0, 0.0
    %v2547 = vsel %vm2515, 1.0, 0.0
    %v2548 = vsel %vm2516, 1.0, 0.0
    %v2549 = vsel %vm2517, 1.0, 0.0
    %v2550 = vsel %vm2518, 1.0, 0.0
    %v2551 = vsel %vm2519, 1.0, 0.0
    %v2552 = vsel %vm2520, 1.0, 0.0
    %v2553 = vsel %vm2521, 1.0, 0.0
    %v2554 = vsel %vm2522, 1.0, 0.0
    %v2555 = vsel %vm2523, 1.0, 0.0
    %v2556 = vsel %vm2524, 1.0, 0.0
    %v2557 = vsel %vm2525, 1.0, 0.0
    %v2558 = vsel %vm2526, 1.0, 0.0
    %v2559 = vsel %vm2527, 1.0, 0.0
    %v2560 = vpack.c.bf16 %v2529, %v2528
    %v2561 = vpack.c.bf16 %v2531, %v2530
    %v2562 = vpack.c.bf16 %v2533, %v2532
    %v2563 = vpack.c.bf16 %v2535, %v2534
    %v2564 = vpack.c.bf16 %v2537, %v2536
    %v2565 = vpack.c.bf16 %v2539, %v2538
    %v2566 = vpack.c.bf16 %v2541, %v2540
    %v2567 = vpack.c.bf16 %v2543, %v2542
    %v2568 = vpack.c.bf16 %v2545, %v2544
    %v2569 = vpack.c.bf16 %v2547, %v2546
    %v2570 = vpack.c.bf16 %v2549, %v2548
    %v2571 = vpack.c.bf16 %v2551, %v2550
    %v2572 = vpack.c.bf16 %v2553, %v2552
    %v2573 = vpack.c.bf16 %v2555, %v2554
    %v2574 = vpack.c.bf16 %v2557, %v2556
    %v2575 = vpack.c.bf16 %v2559, %v2558
    %v2576 = vpack.c.bf16 %v1225, %v1224
    %vm2577 = vcmask 130048
    %v2579 = vsel %vm2577, %v2560, 0
    %v2582 = vsel %vm2577, %v2561, 0
    %v2585 = vsel %vm2577, %v2562, 0
    %v2588 = vsel %vm2577, %v2563, 0
    %v2591 = vsel %vm2577, %v2564, 0
    %v2594 = vsel %vm2577, %v2565, 0
    %v2597 = vsel %vm2577, %v2566, 0
    %v2600 = vsel %vm2577, %v2567, 0
    %v2603 = vsel %vm2577, %v2568, 0
    %v2606 = vsel %vm2577, %v2569, 0
    %v2609 = vsel %vm2577, %v2570, 0
    %v2612 = vsel %vm2577, %v2571, 0
    %v2615 = vsel %vm2577, %v2572, 0
    %v2618 = vsel %vm2577, %v2573, 0
    %v2621 = vsel %vm2577, %v2574, 0
    %v2624 = vsel %vm2577, %v2575, 0
    %2626 = vmatprep.subr.bf16.mxu0 0
    %2627 = vmatpush1.bf16.msra.mxu0 0
    %2628 = vmatprep.subr.bf16.mxu0 0
    %2629 = vmatpush1.bf16.msra.mxu0 0
    %2630 = vmatprep.subr.bf16.mxu0 0
    %2631 = vmatpush1.bf16.msra.mxu0 0
    %2632 = vmatprep.subr.bf16.mxu0 0
    %2633 = vmatpush1.bf16.msra.mxu0 0
    %2634 = vmatprep.subr.bf16.mxu0 0
    %2635 = vmatpush1.bf16.msra.mxu0 0
    %2636 = vmatprep.subr.bf16.mxu0 0
    %2637 = vmatpush1.bf16.msra.mxu0 0
    %2638 = vmatprep.subr.bf16.mxu0 0
    %2639 = vmatpush1.bf16.msra.mxu0 0
    %2640 = vmatprep.subr.bf16.mxu0 0
    %2641 = vmatpush1.bf16.msra.mxu0 %v2576
    %2642 = vmatprep.subr.bf16.mxu0 0
    %2643 = vmatpush2.bf16.msra.mxu0 0
    %2644 = vmatprep.subr.bf16.mxu0 0
    %2645 = vmatpush2.bf16.msra.mxu0 0
    %2646 = vmatprep.subr.bf16.mxu0 0
    %2647 = vmatpush2.bf16.msra.mxu0 0
    %2648 = vmatprep.subr.bf16.mxu0 0
    %2649 = vmatpush2.bf16.msra.mxu0 0
    %2650 = vmatprep.subr.bf16.mxu0 0
    %2651 = vmatpush2.bf16.msra.mxu0 0
    %2652 = vmatprep.subr.bf16.mxu0 0
    %2653 = vmatpush2.bf16.msra.mxu0 0
    %2654 = vmatprep.subr.bf16.mxu0 0
    %2655 = vmatpush2.bf16.msra.mxu0 0
    %2656 = vmatprep.subr.bf16.mxu0 0
    %2657 = vmatpush2.bf16.msra.mxu0 0
    %2658 = vmatprep.mubr.bf16.mxu0 0
    %2659 = vmatmul.mubr.bf16.gmra.mxu0 %v2579
    %v2660 = vpop.f32.mrf.mxu0
    %v2661 = vadd.f32 0.0, %v2660
    %v2662 = vpop.f32.mrf.mxu0
    %v2663 = vpop.f32.mrf.mxu0
    %v2664 = vadd.f32 0.0, %v2663
    %v2665 = vpop.f32.mrf.mxu0
    %2666 = vmatprep.mubr.bf16.mxu0 0
    %2667 = vmatmul.mubr.bf16.gmra.mxu0 %v2582
    %v2668 = vpop.f32.mrf.mxu0
    %v2669 = vadd.f32 0.0, %v2668
    %v2670 = vpop.f32.mrf.mxu0
    %v2671 = vpop.f32.mrf.mxu0
    %v2672 = vadd.f32 0.0, %v2671
    %v2673 = vpop.f32.mrf.mxu0
    %2674 = vmatprep.mubr.bf16.mxu0 0
    %2675 = vmatmul.mubr.bf16.gmra.mxu0 %v2585
    %v2676 = vpop.f32.mrf.mxu0
    %v2677 = vadd.f32 0.0, %v2676
    %v2678 = vpop.f32.mrf.mxu0
    %v2679 = vpop.f32.mrf.mxu0
    %v2680 = vadd.f32 0.0, %v2679
    %v2681 = vpop.f32.mrf.mxu0
    %2682 = vmatprep.mubr.bf16.mxu0 0
    %2683 = vmatmul.mubr.bf16.gmra.mxu0 %v2588
    %v2684 = vpop.f32.mrf.mxu0
    %v2685 = vadd.f32 0.0, %v2684
    %v2686 = vpop.f32.mrf.mxu0
    %v2687 = vpop.f32.mrf.mxu0
    %v2688 = vadd.f32 0.0, %v2687
    %v2689 = vpop.f32.mrf.mxu0
    %2690 = vmatprep.mubr.bf16.mxu0 0
    %2691 = vmatmul.mubr.bf16.gmra.mxu0 %v2591
    %v2692 = vpop.f32.mrf.mxu0
    %v2693 = vadd.f32 0.0, %v2692
    %v2694 = vpop.f32.mrf.mxu0
    %v2695 = vpop.f32.mrf.mxu0
    %v2696 = vadd.f32 0.0, %v2695
    %v2697 = vpop.f32.mrf.mxu0
    %2698 = vmatprep.mubr.bf16.mxu0 0
    %2699 = vmatmul.mubr.bf16.gmra.mxu0 %v2594
    %v2700 = vpop.f32.mrf.mxu0
    %v2701 = vadd.f32 0.0, %v2700
    %v2702 = vpop.f32.mrf.mxu0
    %v2703 = vpop.f32.mrf.mxu0
    %v2704 = vadd.f32 0.0, %v2703
    %v2705 = vpop.f32.mrf.mxu0
    %2706 = vmatprep.mubr.bf16.mxu0 0
    %2707 = vmatmul.mubr.bf16.gmra.mxu0 %v2597
    %v2708 = vpop.f32.mrf.mxu0
    %v2709 = vadd.f32 0.0, %v2708
    %v2710 = vpop.f32.mrf.mxu0
    %v2711 = vpop.f32.mrf.mxu0
    %v2712 = vadd.f32 0.0, %v2711
    %v2713 = vpop.f32.mrf.mxu0
    %2714 = vmatprep.mubr.bf16.mxu0 0
    %2715 = vmatmul.mubr.bf16.gmra.mxu0 %v2600
    %v2716 = vpop.f32.mrf.mxu0
    %v2717 = vadd.f32 0.0, %v2716
    %v2718 = vpop.f32.mrf.mxu0
    %v2719 = vpop.f32.mrf.mxu0
    %v2720 = vadd.f32 0.0, %v2719
    %v2721 = vpop.f32.mrf.mxu0
    %2722 = vmatprep.mubr.bf16.mxu0 0
    %2723 = vmatmul.mubr.bf16.gmra.mxu0 %v2603
    %v2724 = vpop.f32.mrf.mxu0
    %v2725 = vadd.f32 0.0, %v2724
    %v2726 = vpop.f32.mrf.mxu0
    %v2727 = vpop.f32.mrf.mxu0
    %v2728 = vadd.f32 0.0, %v2727
    %v2729 = vpop.f32.mrf.mxu0
    %2730 = vmatprep.mubr.bf16.mxu0 0
    %2731 = vmatmul.mubr.bf16.gmra.mxu0 %v2606
    %v2732 = vpop.f32.mrf.mxu0
    %v2733 = vadd.f32 0.0, %v2732
    %v2734 = vpop.f32.mrf.mxu0
    %v2735 = vpop.f32.mrf.mxu0
    %v2736 = vadd.f32 0.0, %v2735
    %v2737 = vpop.f32.mrf.mxu0
    %2738 = vmatprep.mubr.bf16.mxu0 0
    %2739 = vmatmul.mubr.bf16.gmra.mxu0 %v2609
    %v2740 = vpop.f32.mrf.mxu0
    %v2741 = vadd.f32 0.0, %v2740
    %v2742 = vpop.f32.mrf.mxu0
    %v2743 = vpop.f32.mrf.mxu0
    %v2744 = vadd.f32 0.0, %v2743
    %v2745 = vpop.f32.mrf.mxu0
    %2746 = vmatprep.mubr.bf16.mxu0 0
    %2747 = vmatmul.mubr.bf16.gmra.mxu0 %v2612
    %v2748 = vpop.f32.mrf.mxu0
    %v2749 = vadd.f32 0.0, %v2748
    %v2750 = vpop.f32.mrf.mxu0
    %v2751 = vpop.f32.mrf.mxu0
    %v2752 = vadd.f32 0.0, %v2751
    %v2753 = vpop.f32.mrf.mxu0
    %2754 = vmatprep.mubr.bf16.mxu0 0
    %2755 = vmatmul.mubr.bf16.gmra.mxu0 %v2615
    %v2756 = vpop.f32.mrf.mxu0
    %v2757 = vadd.f32 0.0, %v2756
    %v2758 = vpop.f32.mrf.mxu0
    %v2759 = vpop.f32.mrf.mxu0
    %v2760 = vadd.f32 0.0, %v2759
    %v2761 = vpop.f32.mrf.mxu0
    %2762 = vmatprep.mubr.bf16.mxu0 0
    %2763 = vmatmul.mubr.bf16.gmra.mxu0 %v2618
    %v2764 = vpop.f32.mrf.mxu0
    %v2765 = vadd.f32 0.0, %v2764
    %v2766 = vpop.f32.mrf.mxu0
    %v2767 = vpop.f32.mrf.mxu0
    %v2768 = vadd.f32 0.0, %v2767
    %v2769 = vpop.f32.mrf.mxu0
    %2770 = vmatprep.mubr.bf16.mxu0 0
    %2771 = vmatmul.mubr.bf16.gmra.mxu0 %v2621
    %v2772 = vpop.f32.mrf.mxu0
    %v2773 = vadd.f32 0.0, %v2772
    %v2774 = vpop.f32.mrf.mxu0
    %v2775 = vpop.f32.mrf.mxu0
    %v2776 = vadd.f32 0.0, %v2775
    %v2777 = vpop.f32.mrf.mxu0
    %2778 = vmatprep.mubr.bf16.mxu0 0
    %2779 = vmatmul.mubr.bf16.gmra.mxu0 %v2624
    %v2780 = vpop.f32.mrf.mxu0
    %v2781 = vadd.f32 0.0, %v2780
    %v2782 = vpop.f32.mrf.mxu0
    %v2783 = vpop.f32.mrf.mxu0
    %v2784 = vadd.f32 0.0, %v2783
    %v2785 = vpop.f32.mrf.mxu0
    %2786 = vdwg.mxu0
    %v2787 = vadd.f32 %v1956, %v2661
    %v2788 = vadd.f32 %v1959, %v2664
    %v2789 = vadd.f32 %v1964, %v2669
    %v2790 = vadd.f32 %v1967, %v2672
    %v2791 = vadd.f32 %v1972, %v2677
    %v2792 = vadd.f32 %v1975, %v2680
    %v2793 = vadd.f32 %v1980, %v2685
    %v2794 = vadd.f32 %v1983, %v2688
    %v2795 = vadd.f32 %v1988, %v2693
    %v2796 = vadd.f32 %v1991, %v2696
    %v2797 = vadd.f32 %v1996, %v2701
    %v2798 = vadd.f32 %v1999, %v2704
    %v2799 = vadd.f32 %v2004, %v2709
    %v2800 = vadd.f32 %v2007, %v2712
    %v2801 = vadd.f32 %v2012, %v2717
    %v2802 = vadd.f32 %v2015, %v2720
    %v2803 = vadd.f32 %v2020, %v2725
    %v2804 = vadd.f32 %v2023, %v2728
    %v2805 = vadd.f32 %v2028, %v2733
    %v2806 = vadd.f32 %v2031, %v2736
    %v2807 = vadd.f32 %v2036, %v2741
    %v2808 = vadd.f32 %v2039, %v2744
    %v2809 = vadd.f32 %v2044, %v2749
    %v2810 = vadd.f32 %v2047, %v2752
    %v2811 = vadd.f32 %v2052, %v2757
    %v2812 = vadd.f32 %v2055, %v2760
    %v2813 = vadd.f32 %v2060, %v2765
    %v2814 = vadd.f32 %v2063, %v2768
    %v2815 = vadd.f32 %v2068, %v2773
    %v2816 = vadd.f32 %v2071, %v2776
    %v2817 = vadd.f32 %v2076, %v2781
    %v2818 = vadd.f32 %v2079, %v2784
    %vm2819 = vcmp.lt.s32.totalorder %v1084, 0
    %v2820 = vsub.s32 0, %v1084
    %v2821 = vsel %vm2819, %v2820, %v1084
    %v2822 = vshrl.u32 %v2821, 3
    %v2823 = vand.u32 %v2821, 7
    %v2824 = vsub.s32 0, %v2823
    %v2825 = vsel %vm2819, %v2824, %v2823
    %vm2826 = vcmp.lt.s32.totalorder %v1085, 0
    %v2827 = vsub.s32 0, %v1085
    %v2828 = vsel %vm2826, %v2827, %v1085
    %v2829 = vshrl.u32 %v2828, 3
    %v2830 = vand.u32 %v2828, 7
    %v2831 = vsub.s32 0, %v2830
    %v2832 = vsel %vm2826, %v2831, %v2830
    %vm2833 = vcmp.lt.s32.totalorder %v2082, 0
    %v2834 = vsub.s32 0, %v2082
    %v2835 = vsel %vm2833, %v2834, %v2082
    %v2836 = vshrl.u32 %v2835, 3
    %v2837 = vand.u32 %v2835, 7
    %v2838 = vsub.s32 0, %v2837
    %v2839 = vsel %vm2833, %v2838, %v2837
    %vm2840 = vcmp.lt.s32.totalorder %v2083, 0
    %v2841 = vsub.s32 0, %v2083
    %v2842 = vsel %vm2840, %v2841, %v2083
    %v2843 = vshrl.u32 %v2842, 3
    %v2844 = vand.u32 %v2842, 7
    %v2845 = vsub.s32 0, %v2844
    %v2846 = vsel %vm2840, %v2845, %v2844
    %vm2847 = vcmp.lt.s32.totalorder %v2084, 0
    %v2848 = vsub.s32 0, %v2084
    %v2849 = vsel %vm2847, %v2848, %v2084
    %v2850 = vshrl.u32 %v2849, 3
    %v2851 = vand.u32 %v2849, 7
    %v2852 = vsub.s32 0, %v2851
    %v2853 = vsel %vm2847, %v2852, %v2851
    %vm2854 = vcmp.lt.s32.totalorder %v2085, 0
    %v2855 = vsub.s32 0, %v2085
    %v2856 = vsel %vm2854, %v2855, %v2085
    %v2857 = vshrl.u32 %v2856, 3
    %v2858 = vand.u32 %v2856, 7
    %v2859 = vsub.s32 0, %v2858
    %v2860 = vsel %vm2854, %v2859, %v2858
    %vm2861 = vcmp.lt.s32.totalorder %v2086, 0
    %v2862 = vsub.s32 0, %v2086
    %v2863 = vsel %vm2861, %v2862, %v2086
    %v2864 = vshrl.u32 %v2863, 3
    %v2865 = vand.u32 %v2863, 7
    %v2866 = vsub.s32 0, %v2865
    %v2867 = vsel %vm2861, %v2866, %v2865
    %vm2868 = vcmp.lt.s32.totalorder %v2087, 0
    %v2869 = vsub.s32 0, %v2087
    %v2870 = vsel %vm2868, %v2869, %v2087
    %v2871 = vshrl.u32 %v2870, 3
    %v2872 = vand.u32 %v2870, 7
    %v2873 = vsub.s32 0, %v2872
    %v2874 = vsel %vm2868, %v2873, %v2872
    %vm2875 = vcmp.lt.s32.totalorder %v2088, 0
    %v2876 = vsub.s32 0, %v2088
    %v2877 = vsel %vm2875, %v2876, %v2088
    %v2878 = vshrl.u32 %v2877, 3
    %v2879 = vand.u32 %v2877, 7
    %v2880 = vsub.s32 0, %v2879
    %v2881 = vsel %vm2875, %v2880, %v2879
    %vm2882 = vcmp.lt.s32.totalorder %v2089, 0
    %v2883 = vsub.s32 0, %v2089
    %v2884 = vsel %vm2882, %v2883, %v2089
    %v2885 = vshrl.u32 %v2884, 3
    %v2886 = vand.u32 %v2884, 7
    %v2887 = vsub.s32 0, %v2886
    %v2888 = vsel %vm2882, %v2887, %v2886
    %vm2889 = vcmp.lt.s32.totalorder %v2090, 0
    %v2890 = vsub.s32 0, %v2090
    %v2891 = vsel %vm2889, %v2890, %v2090
    %v2892 = vshrl.u32 %v2891, 3
    %v2893 = vand.u32 %v2891, 7
    %v2894 = vsub.s32 0, %v2893
    %v2895 = vsel %vm2889, %v2894, %v2893
    %vm2896 = vcmp.lt.s32.totalorder %v2091, 0
    %v2897 = vsub.s32 0, %v2091
    %v2898 = vsel %vm2896, %v2897, %v2091
    %v2899 = vshrl.u32 %v2898, 3
    %v2900 = vand.u32 %v2898, 7
    %v2901 = vsub.s32 0, %v2900
    %v2902 = vsel %vm2896, %v2901, %v2900
    %vm2903 = vcmp.lt.s32.totalorder %v2092, 0
    %v2904 = vsub.s32 0, %v2092
    %v2905 = vsel %vm2903, %v2904, %v2092
    %v2906 = vshrl.u32 %v2905, 3
    %v2907 = vand.u32 %v2905, 7
    %v2908 = vsub.s32 0, %v2907
    %v2909 = vsel %vm2903, %v2908, %v2907
    %vm2910 = vcmp.lt.s32.totalorder %v2093, 0
    %v2911 = vsub.s32 0, %v2093
    %v2912 = vsel %vm2910, %v2911, %v2093
    %v2913 = vshrl.u32 %v2912, 3
    %v2914 = vand.u32 %v2912, 7
    %v2915 = vsub.s32 0, %v2914
    %v2916 = vsel %vm2910, %v2915, %v2914
    %vm2917 = vcmp.lt.s32.totalorder %v2094, 0
    %v2918 = vsub.s32 0, %v2094
    %v2919 = vsel %vm2917, %v2918, %v2094
    %v2920 = vshrl.u32 %v2919, 3
    %v2921 = vand.u32 %v2919, 7
    %v2922 = vsub.s32 0, %v2921
    %v2923 = vsel %vm2917, %v2922, %v2921
    %vm2924 = vcmp.lt.s32.totalorder %v2095, 0
    %v2925 = vsub.s32 0, %v2095
    %v2926 = vsel %vm2924, %v2925, %v2095
    %v2927 = vshrl.u32 %v2926, 3
    %v2928 = vand.u32 %v2926, 7
    %v2929 = vsub.s32 0, %v2928
    %v2930 = vsel %vm2924, %v2929, %v2928
    %vm2931 = vcmp.lt.s32.totalorder %v2096, 0
    %v2932 = vsub.s32 0, %v2096
    %v2933 = vsel %vm2931, %v2932, %v2096
    %v2934 = vshrl.u32 %v2933, 3
    %v2935 = vand.u32 %v2933, 7
    %v2936 = vsub.s32 0, %v2935
    %v2937 = vsel %vm2931, %v2936, %v2935
    %vm2938 = vcmp.lt.s32.totalorder %v2097, 0
    %v2939 = vsub.s32 0, %v2097
    %v2940 = vsel %vm2938, %v2939, %v2097
    %v2941 = vshrl.u32 %v2940, 3
    %v2942 = vand.u32 %v2940, 7
    %v2943 = vsub.s32 0, %v2942
    %v2944 = vsel %vm2938, %v2943, %v2942
    %vm2945 = vcmp.lt.s32.totalorder %v2098, 0
    %v2946 = vsub.s32 0, %v2098
    %v2947 = vsel %vm2945, %v2946, %v2098
    %v2948 = vshrl.u32 %v2947, 3
    %v2949 = vand.u32 %v2947, 7
    %v2950 = vsub.s32 0, %v2949
    %v2951 = vsel %vm2945, %v2950, %v2949
    %vm2952 = vcmp.lt.s32.totalorder %v2099, 0
    %v2953 = vsub.s32 0, %v2099
    %v2954 = vsel %vm2952, %v2953, %v2099
    %v2955 = vshrl.u32 %v2954, 3
    %v2956 = vand.u32 %v2954, 7
    %v2957 = vsub.s32 0, %v2956
    %v2958 = vsel %vm2952, %v2957, %v2956
    %vm2959 = vcmp.lt.s32.totalorder %v2100, 0
    %v2960 = vsub.s32 0, %v2100
    %v2961 = vsel %vm2959, %v2960, %v2100
    %v2962 = vshrl.u32 %v2961, 3
    %v2963 = vand.u32 %v2961, 7
    %v2964 = vsub.s32 0, %v2963
    %v2965 = vsel %vm2959, %v2964, %v2963
    %vm2966 = vcmp.lt.s32.totalorder %v2101, 0
    %v2967 = vsub.s32 0, %v2101
    %v2968 = vsel %vm2966, %v2967, %v2101
    %v2969 = vshrl.u32 %v2968, 3
    %v2970 = vand.u32 %v2968, 7
    %v2971 = vsub.s32 0, %v2970
    %v2972 = vsel %vm2966, %v2971, %v2970
    %vm2973 = vcmp.lt.s32.totalorder %v2102, 0
    %v2974 = vsub.s32 0, %v2102
    %v2975 = vsel %vm2973, %v2974, %v2102
    %v2976 = vshrl.u32 %v2975, 3
    %v2977 = vand.u32 %v2975, 7
    %v2978 = vsub.s32 0, %v2977
    %v2979 = vsel %vm2973, %v2978, %v2977
    %vm2980 = vcmp.lt.s32.totalorder %v2103, 0
    %v2981 = vsub.s32 0, %v2103
    %v2982 = vsel %vm2980, %v2981, %v2103
    %v2983 = vshrl.u32 %v2982, 3
    %v2984 = vand.u32 %v2982, 7
    %v2985 = vsub.s32 0, %v2984
    %v2986 = vsel %vm2980, %v2985, %v2984
    %vm2987 = vcmp.lt.s32.totalorder %v2104, 0
    %v2988 = vsub.s32 0, %v2104
    %v2989 = vsel %vm2987, %v2988, %v2104
    %v2990 = vshrl.u32 %v2989, 3
    %v2991 = vand.u32 %v2989, 7
    %v2992 = vsub.s32 0, %v2991
    %v2993 = vsel %vm2987, %v2992, %v2991
    %vm2994 = vcmp.lt.s32.totalorder %v2105, 0
    %v2995 = vsub.s32 0, %v2105
    %v2996 = vsel %vm2994, %v2995, %v2105
    %v2997 = vshrl.u32 %v2996, 3
    %v2998 = vand.u32 %v2996, 7
    %v2999 = vsub.s32 0, %v2998
    %v3000 = vsel %vm2994, %v2999, %v2998
    %vm3001 = vcmp.lt.s32.totalorder %v2106, 0
    %v3002 = vsub.s32 0, %v2106
    %v3003 = vsel %vm3001, %v3002, %v2106
    %v3004 = vshrl.u32 %v3003, 3
    %v3005 = vand.u32 %v3003, 7
    %v3006 = vsub.s32 0, %v3005
    %v3007 = vsel %vm3001, %v3006, %v3005
    %vm3008 = vcmp.lt.s32.totalorder %v2107, 0
    %v3009 = vsub.s32 0, %v2107
    %v3010 = vsel %vm3008, %v3009, %v2107
    %v3011 = vshrl.u32 %v3010, 3
    %v3012 = vand.u32 %v3010, 7
    %v3013 = vsub.s32 0, %v3012
    %v3014 = vsel %vm3008, %v3013, %v3012
    %vm3015 = vcmp.lt.s32.totalorder %v2108, 0
    %v3016 = vsub.s32 0, %v2108
    %v3017 = vsel %vm3015, %v3016, %v2108
    %v3018 = vshrl.u32 %v3017, 3
    %v3019 = vand.u32 %v3017, 7
    %v3020 = vsub.s32 0, %v3019
    %v3021 = vsel %vm3015, %v3020, %v3019
    %vm3022 = vcmp.lt.s32.totalorder %v2109, 0
    %v3023 = vsub.s32 0, %v2109
    %v3024 = vsel %vm3022, %v3023, %v2109
    %v3025 = vshrl.u32 %v3024, 3
    %v3026 = vand.u32 %v3024, 7
    %v3027 = vsub.s32 0, %v3026
    %v3028 = vsel %vm3022, %v3027, %v3026
    %vm3029 = vcmp.lt.s32.totalorder %v2110, 0
    %v3030 = vsub.s32 0, %v2110
    %v3031 = vsel %vm3029, %v3030, %v2110
    %v3032 = vshrl.u32 %v3031, 3
    %v3033 = vand.u32 %v3031, 7
    %v3034 = vsub.s32 0, %v3033
    %v3035 = vsel %vm3029, %v3034, %v3033
    %vm3036 = vcmp.lt.s32.totalorder %v2111, 0
    %v3037 = vsub.s32 0, %v2111
    %v3038 = vsel %vm3036, %v3037, %v2111
    %v3039 = vshrl.u32 %v3038, 3
    %v3040 = vand.u32 %v3038, 7
    %v3041 = vsub.s32 0, %v3040
    %v3042 = vsel %vm3036, %v3041, %v3040
    %vm3043 = vcmp.ne.s32.totalorder %v2825, 0
    %vm3044 = vcmp.ne.s32.totalorder %v2832, 0
    %vm3045 = vcmp.ne.s32.totalorder %v2839, 0
    %vm3046 = vcmp.ne.s32.totalorder %v2846, 0
    %vm3047 = vcmp.ne.s32.totalorder %v2853, 0
    %vm3048 = vcmp.ne.s32.totalorder %v2860, 0
    %vm3049 = vcmp.ne.s32.totalorder %v2867, 0
    %vm3050 = vcmp.ne.s32.totalorder %v2874, 0
    %vm3051 = vcmp.ne.s32.totalorder %v2881, 0
    %vm3052 = vcmp.ne.s32.totalorder %v2888, 0
    %vm3053 = vcmp.ne.s32.totalorder %v2895, 0
    %vm3054 = vcmp.ne.s32.totalorder %v2902, 0
    %vm3055 = vcmp.ne.s32.totalorder %v2909, 0
    %vm3056 = vcmp.ne.s32.totalorder %v2916, 0
    %vm3057 = vcmp.ne.s32.totalorder %v2923, 0
    %vm3058 = vcmp.ne.s32.totalorder %v2930, 0
    %vm3059 = vcmp.ne.s32.totalorder %v2937, 0
    %vm3060 = vcmp.ne.s32.totalorder %v2944, 0
    %vm3061 = vcmp.ne.s32.totalorder %v2951, 0
    %vm3062 = vcmp.ne.s32.totalorder %v2958, 0
    %vm3063 = vcmp.ne.s32.totalorder %v2965, 0
    %vm3064 = vcmp.ne.s32.totalorder %v2972, 0
    %vm3065 = vcmp.ne.s32.totalorder %v2979, 0
    %vm3066 = vcmp.ne.s32.totalorder %v2986, 0
    %vm3067 = vcmp.ne.s32.totalorder %v2993, 0
    %vm3068 = vcmp.ne.s32.totalorder %v3000, 0
    %vm3069 = vcmp.ne.s32.totalorder %v3007, 0
    %vm3070 = vcmp.ne.s32.totalorder %v3014, 0
    %vm3071 = vcmp.ne.s32.totalorder %v3021, 0
    %vm3072 = vcmp.ne.s32.totalorder %v3028, 0
    %vm3073 = vcmp.ne.s32.totalorder %v3035, 0
    %vm3074 = vcmp.ne.s32.totalorder %v3042, 0
    %vm3075 = vcmp.lt.s32.totalorder %v2825, 0
    %vm3076 = vcmp.lt.s32.totalorder %v2832, 0
    %vm3077 = vcmp.lt.s32.totalorder %v2839, 0
    %vm3078 = vcmp.lt.s32.totalorder %v2846, 0
    %vm3079 = vcmp.lt.s32.totalorder %v2853, 0
    %vm3080 = vcmp.lt.s32.totalorder %v2860, 0
    %vm3081 = vcmp.lt.s32.totalorder %v2867, 0
    %vm3082 = vcmp.lt.s32.totalorder %v2874, 0
    %vm3083 = vcmp.lt.s32.totalorder %v2881, 0
    %vm3084 = vcmp.lt.s32.totalorder %v2888, 0
    %vm3085 = vcmp.lt.s32.totalorder %v2895, 0
    %vm3086 = vcmp.lt.s32.totalorder %v2902, 0
    %vm3087 = vcmp.lt.s32.totalorder %v2909, 0
    %vm3088 = vcmp.lt.s32.totalorder %v2916, 0
    %vm3089 = vcmp.lt.s32.totalorder %v2923, 0
    %vm3090 = vcmp.lt.s32.totalorder %v2930, 0
    %vm3091 = vcmp.lt.s32.totalorder %v2937, 0
    %vm3092 = vcmp.lt.s32.totalorder %v2944, 0
    %vm3093 = vcmp.lt.s32.totalorder %v2951, 0
    %vm3094 = vcmp.lt.s32.totalorder %v2958, 0
    %vm3095 = vcmp.lt.s32.totalorder %v2965, 0
    %vm3096 = vcmp.lt.s32.totalorder %v2972, 0
    %vm3097 = vcmp.lt.s32.totalorder %v2979, 0
    %vm3098 = vcmp.lt.s32.totalorder %v2986, 0
    %vm3099 = vcmp.lt.s32.totalorder %v2993, 0
    %vm3100 = vcmp.lt.s32.totalorder %v3000, 0
    %vm3101 = vcmp.lt.s32.totalorder %v3007, 0
    %vm3102 = vcmp.lt.s32.totalorder %v3014, 0
    %vm3103 = vcmp.lt.s32.totalorder %v3021, 0
    %vm3104 = vcmp.lt.s32.totalorder %v3028, 0
    %vm3105 = vcmp.lt.s32.totalorder %v3035, 0
    %vm3106 = vcmp.lt.s32.totalorder %v3042, 0
    %vm3107 = vmand %vm3075, %vm3043
    %vm3108 = vmand %vm3076, %vm3044
    %vm3109 = vmand %vm3077, %vm3045
    %vm3110 = vmand %vm3078, %vm3046
    %vm3111 = vmand %vm3079, %vm3047
    %vm3112 = vmand %vm3080, %vm3048
    %vm3113 = vmand %vm3081, %vm3049
    %vm3114 = vmand %vm3082, %vm3050
    %vm3115 = vmand %vm3083, %vm3051
    %vm3116 = vmand %vm3084, %vm3052
    %vm3117 = vmand %vm3085, %vm3053
    %vm3118 = vmand %vm3086, %vm3054
    %vm3119 = vmand %vm3087, %vm3055
    %vm3120 = vmand %vm3088, %vm3056
    %vm3121 = vmand %vm3089, %vm3057
    %vm3122 = vmand %vm3090, %vm3058
    %vm3123 = vmand %vm3091, %vm3059
    %vm3124 = vmand %vm3092, %vm3060
    %vm3125 = vmand %vm3093, %vm3061
    %vm3126 = vmand %vm3094, %vm3062
    %vm3127 = vmand %vm3095, %vm3063
    %vm3128 = vmand %vm3096, %vm3064
    %vm3129 = vmand %vm3097, %vm3065
    %vm3130 = vmand %vm3098, %vm3066
    %vm3131 = vmand %vm3099, %vm3067
    %vm3132 = vmand %vm3100, %vm3068
    %vm3133 = vmand %vm3101, %vm3069
    %vm3134 = vmand %vm3102, %vm3070
    %vm3135 = vmand %vm3103, %vm3071
    %vm3136 = vmand %vm3104, %vm3072
    %vm3137 = vmand %vm3105, %vm3073
    %vm3138 = vmand %vm3106, %vm3074
    %v3139 = vadd.s32 %v2825, 8
    %v3140 = vadd.s32 %v2832, 8
    %v3141 = vadd.s32 %v2839, 8
    %v3142 = vadd.s32 %v2846, 8
    %v3143 = vadd.s32 %v2853, 8
    %v3144 = vadd.s32 %v2860, 8
    %v3145 = vadd.s32 %v2867, 8
    %v3146 = vadd.s32 %v2874, 8
    %v3147 = vadd.s32 %v2881, 8
    %v3148 = vadd.s32 %v2888, 8
    %v3149 = vadd.s32 %v2895, 8
    %v3150 = vadd.s32 %v2902, 8
    %v3151 = vadd.s32 %v2909, 8
    %v3152 = vadd.s32 %v2916, 8
    %v3153 = vadd.s32 %v2923, 8
    %v3154 = vadd.s32 %v2930, 8
    %v3155 = vadd.s32 %v2937, 8
    %v3156 = vadd.s32 %v2944, 8
    %v3157 = vadd.s32 %v2951, 8
    %v3158 = vadd.s32 %v2958, 8
    %v3159 = vadd.s32 %v2965, 8
    %v3160 = vadd.s32 %v2972, 8
    %v3161 = vadd.s32 %v2979, 8
    %v3162 = vadd.s32 %v2986, 8
    %v3163 = vadd.s32 %v2993, 8
    %v3164 = vadd.s32 %v3000, 8
    %v3165 = vadd.s32 %v3007, 8
    %v3166 = vadd.s32 %v3014, 8
    %v3167 = vadd.s32 %v3021, 8
    %v3168 = vadd.s32 %v3028, 8
    %v3169 = vadd.s32 %v3035, 8
    %v3170 = vadd.s32 %v3042, 8
    %v3171 = vsel %vm3107, %v3139, %v2825
    %v3172 = vsel %vm3108, %v3140, %v2832
    %v3173 = vsel %vm3109, %v3141, %v2839
    %v3174 = vsel %vm3110, %v3142, %v2846
    %v3175 = vsel %vm3111, %v3143, %v2853
    %v3176 = vsel %vm3112, %v3144, %v2860
    %v3177 = vsel %vm3113, %v3145, %v2867
    %v3178 = vsel %vm3114, %v3146, %v2874
    %v3179 = vsel %vm3115, %v3147, %v2881
    %v3180 = vsel %vm3116, %v3148, %v2888
    %v3181 = vsel %vm3117, %v3149, %v2895
    %v3182 = vsel %vm3118, %v3150, %v2902
    %v3183 = vsel %vm3119, %v3151, %v2909
    %v3184 = vsel %vm3120, %v3152, %v2916
    %v3185 = vsel %vm3121, %v3153, %v2923
    %v3186 = vsel %vm3122, %v3154, %v2930
    %v3187 = vsel %vm3123, %v3155, %v2937
    %v3188 = vsel %vm3124, %v3156, %v2944
    %v3189 = vsel %vm3125, %v3157, %v2951
    %v3190 = vsel %vm3126, %v3158, %v2958
    %v3191 = vsel %vm3127, %v3159, %v2965
    %v3192 = vsel %vm3128, %v3160, %v2972
    %v3193 = vsel %vm3129, %v3161, %v2979
    %v3194 = vsel %vm3130, %v3162, %v2986
    %v3195 = vsel %vm3131, %v3163, %v2993
    %v3196 = vsel %vm3132, %v3164, %v3000
    %v3197 = vsel %vm3133, %v3165, %v3007
    %v3198 = vsel %vm3134, %v3166, %v3014
    %v3199 = vsel %vm3135, %v3167, %v3021
    %v3200 = vsel %vm3136, %v3168, %v3028
    %v3201 = vsel %vm3137, %v3169, %v3035
    %v3202 = vsel %vm3138, %v3170, %v3042
    %vm3203 = vcmp.eq.s32.totalorder %v3171, 0
    %vm3204 = vcmp.eq.s32.totalorder %v3172, 0
    %vm3205 = vcmp.eq.s32.totalorder %v3173, 0
    %vm3206 = vcmp.eq.s32.totalorder %v3174, 0
    %vm3207 = vcmp.eq.s32.totalorder %v3175, 0
    %vm3208 = vcmp.eq.s32.totalorder %v3176, 0
    %vm3209 = vcmp.eq.s32.totalorder %v3177, 0
    %vm3210 = vcmp.eq.s32.totalorder %v3178, 0
    %vm3211 = vcmp.eq.s32.totalorder %v3179, 0
    %vm3212 = vcmp.eq.s32.totalorder %v3180, 0
    %vm3213 = vcmp.eq.s32.totalorder %v3181, 0
    %vm3214 = vcmp.eq.s32.totalorder %v3182, 0
    %vm3215 = vcmp.eq.s32.totalorder %v3183, 0
    %vm3216 = vcmp.eq.s32.totalorder %v3184, 0
    %vm3217 = vcmp.eq.s32.totalorder %v3185, 0
    %vm3218 = vcmp.eq.s32.totalorder %v3186, 0
    %vm3219 = vcmp.eq.s32.totalorder %v3187, 0
    %vm3220 = vcmp.eq.s32.totalorder %v3188, 0
    %vm3221 = vcmp.eq.s32.totalorder %v3189, 0
    %vm3222 = vcmp.eq.s32.totalorder %v3190, 0
    %vm3223 = vcmp.eq.s32.totalorder %v3191, 0
    %vm3224 = vcmp.eq.s32.totalorder %v3192, 0
    %vm3225 = vcmp.eq.s32.totalorder %v3193, 0
    %vm3226 = vcmp.eq.s32.totalorder %v3194, 0
    %vm3227 = vcmp.eq.s32.totalorder %v3195, 0
    %vm3228 = vcmp.eq.s32.totalorder %v3196, 0
    %vm3229 = vcmp.eq.s32.totalorder %v3197, 0
    %vm3230 = vcmp.eq.s32.totalorder %v3198, 0
    %vm3231 = vcmp.eq.s32.totalorder %v3199, 0
    %vm3232 = vcmp.eq.s32.totalorder %v3200, 0
    %vm3233 = vcmp.eq.s32.totalorder %v3201, 0
    %vm3234 = vcmp.eq.s32.totalorder %v3202, 0
    %vm3235 = vcmp.eq.s32.totalorder %v3171, 7
    %vm3236 = vcmp.eq.s32.totalorder %v3172, 7
    %vm3237 = vcmp.eq.s32.totalorder %v3173, 7
    %vm3238 = vcmp.eq.s32.totalorder %v3174, 7
    %vm3239 = vcmp.eq.s32.totalorder %v3175, 7
    %vm3240 = vcmp.eq.s32.totalorder %v3176, 7
    %vm3241 = vcmp.eq.s32.totalorder %v3177, 7
    %vm3242 = vcmp.eq.s32.totalorder %v3178, 7
    %vm3243 = vcmp.eq.s32.totalorder %v3179, 7
    %vm3244 = vcmp.eq.s32.totalorder %v3180, 7
    %vm3245 = vcmp.eq.s32.totalorder %v3181, 7
    %vm3246 = vcmp.eq.s32.totalorder %v3182, 7
    %vm3247 = vcmp.eq.s32.totalorder %v3183, 7
    %vm3248 = vcmp.eq.s32.totalorder %v3184, 7
    %vm3249 = vcmp.eq.s32.totalorder %v3185, 7
    %vm3250 = vcmp.eq.s32.totalorder %v3186, 7
    %vm3251 = vcmp.eq.s32.totalorder %v3187, 7
    %vm3252 = vcmp.eq.s32.totalorder %v3188, 7
    %vm3253 = vcmp.eq.s32.totalorder %v3189, 7
    %vm3254 = vcmp.eq.s32.totalorder %v3190, 7
    %vm3255 = vcmp.eq.s32.totalorder %v3191, 7
    %vm3256 = vcmp.eq.s32.totalorder %v3192, 7
    %vm3257 = vcmp.eq.s32.totalorder %v3193, 7
    %vm3258 = vcmp.eq.s32.totalorder %v3194, 7
    %vm3259 = vcmp.eq.s32.totalorder %v3195, 7
    %vm3260 = vcmp.eq.s32.totalorder %v3196, 7
    %vm3261 = vcmp.eq.s32.totalorder %v3197, 7
    %vm3262 = vcmp.eq.s32.totalorder %v3198, 7
    %vm3263 = vcmp.eq.s32.totalorder %v3199, 7
    %vm3264 = vcmp.eq.s32.totalorder %v3200, 7
    %vm3265 = vcmp.eq.s32.totalorder %v3201, 7
    %vm3266 = vcmp.eq.s32.totalorder %v3202, 7
    loop: start=0, step=1, limit=6
    $region54: #{forward.1} parent=1 // loop_pre_header
      _
    $region55: #{forward.1} parent=1 // loop_header
      %s3268 = sphi 0, %s3272
      %p3269 = scmp.ge.s32.totalorder %s3268, 6
      %v3273 = vphi %v2787, %v6112
      %v3274 = vphi %v2788, %v6113
      %v3275 = vphi %v2789, %v6114
      %v3276 = vphi %v2790, %v6115
      %v3277 = vphi %v2791, %v6116
      %v3278 = vphi %v2792, %v6117
      %v3279 = vphi %v2793, %v6118
      %v3280 = vphi %v2794, %v6119
      %v3281 = vphi %v2795, %v6120
      %v3282 = vphi %v2796, %v6121
      %v3283 = vphi %v2797, %v6122
      %v3284 = vphi %v2798, %v6123
      %v3285 = vphi %v2799, %v6124
      %v3286 = vphi %v2800, %v6125
      %v3287 = vphi %v2801, %v6126
      %v3288 = vphi %v2802, %v6127
      %v3289 = vphi %v2803, %v6128
      %v3290 = vphi %v2804, %v6129
      %v3291 = vphi %v2805, %v6130
      %v3292 = vphi %v2806, %v6131
      %v3293 = vphi %v2807, %v6132
      %v3294 = vphi %v2808, %v6133
      %v3295 = vphi %v2809, %v6134
      %v3296 = vphi %v2810, %v6135
      %v3297 = vphi %v2811, %v6136
      %v3298 = vphi %v2812, %v6137
      %v3299 = vphi %v2813, %v6138
      %v3300 = vphi %v2814, %v6139
      %v3301 = vphi %v2815, %v6140
      %v3302 = vphi %v2816, %v6141
      %v3303 = vphi %v2817, %v6142
      %v3304 = vphi %v2818, %v6143
    $region56: #{forward.1} parent=1 // loop_header_branch
      %3271 = sbr.rel (%p3269) target = $region60
    $region57: #{forward.1} parent=1 // loop_body
      %v3305 = vpack.c.bf16 %v3274, %v3273
      %v3306 = vpack.c.bf16 %v3276, %v3275
      %v3307 = vpack.c.bf16 %v3278, %v3277
      %v3308 = vpack.c.bf16 %v3280, %v3279
      %v3309 = vpack.c.bf16 %v3282, %v3281
      %v3310 = vpack.c.bf16 %v3284, %v3283
      %v3311 = vpack.c.bf16 %v3286, %v3285
      %v3312 = vpack.c.bf16 %v3288, %v3287
      %v3313 = vpack.c.bf16 %v3290, %v3289
      %v3314 = vpack.c.bf16 %v3292, %v3291
      %v3315 = vpack.c.bf16 %v3294, %v3293
      %v3316 = vpack.c.bf16 %v3296, %v3295
      %v3317 = vpack.c.bf16 %v3298, %v3297
      %v3318 = vpack.c.bf16 %v3300, %v3299
      %v3319 = vpack.c.bf16 %v3302, %v3301
      %v3320 = vpack.c.bf16 %v3304, %v3303
      %s3321 = smul.u32 %s3268, 16
      %s3322 = smul.addr %s3321, 4
      %s3323 = scalar_lea.vmem [#allocation2], %s3322
      %v3324 = vld [vmem:[%s3323] sm:$0xff]
      %v3325 = vld [vmem:[%s3323 + $0x8] sm:$0xff]
      %v3326 = vld [vmem:[%s3323 + $0x10] sm:$0xff]
      %v3327 = vld [vmem:[%s3323 + $0x18] sm:$0xff]
      %v3328 = vld [vmem:[%s3323 + $0x20] sm:$0xff]
      %v3329 = vld [vmem:[%s3323 + $0x28] sm:$0xff]
      %v3330 = vld [vmem:[%s3323 + $0x30] sm:$0xff]
      %v3331 = vld [vmem:[%s3323 + $0x38] sm:$0xff]
      %v3340 = vunpack.c.l.b16 %v3324
      %v3341 = vunpack.c.h.b16 %v3324
      %v3342 = vunpack.c.l.b16 %v3325
      %v3343 = vunpack.c.h.b16 %v3325
      %v3344 = vunpack.c.l.b16 %v3326
      %v3345 = vunpack.c.h.b16 %v3326
      %v3346 = vunpack.c.l.b16 %v3327
      %v3347 = vunpack.c.h.b16 %v3327
      %v3348 = vunpack.c.l.b16 %v3328
      %v3349 = vunpack.c.h.b16 %v3328
      %v3350 = vunpack.c.l.b16 %v3329
      %v3351 = vunpack.c.h.b16 %v3329
      %v3352 = vunpack.c.l.b16 %v3330
      %v3353 = vunpack.c.h.b16 %v3330
      %v3354 = vunpack.c.l.b16 %v3331
      %v3355 = vunpack.c.h.b16 %v3331
      %v3356 = vpack.c.b16 %v3342, %v3340
      %v3357 = vpack.c.b16 %v3343, %v3341
      %v3358 = vpack.c.b16 %v3346, %v3344
      %v3359 = vpack.c.b16 %v3347, %v3345
      %v3360 = vpack.c.b16 %v3350, %v3348
      %v3361 = vpack.c.b16 %v3351, %v3349
      %v3362 = vpack.c.b16 %v3354, %v3352
      %v3363 = vpack.c.b16 %v3355, %v3353
      %v3373 = vsel %vm484, %v3305, 0
      %v3376 = vsel %vm484, %v3306, 0
      %v3379 = vsel %vm484, %v3307, 0
      %v3382 = vsel %vm484, %v3308, 0
      %v3385 = vsel %vm484, %v3309, 0
      %v3388 = vsel %vm484, %v3310, 0
      %v3391 = vsel %vm484, %v3311, 0
      %v3394 = vsel %vm484, %v3312, 0
      %v3397 = vsel %vm484, %v3313, 0
      %v3400 = vsel %vm484, %v3314, 0
      %v3403 = vsel %vm484, %v3315, 0
      %v3406 = vsel %vm484, %v3316, 0
      %v3409 = vsel %vm484, %v3317, 0
      %v3412 = vsel %vm484, %v3318, 0
      %v3415 = vsel %vm484, %v3319, 0
      %v3418 = vsel %vm484, %v3320, 0
      %3420 = vmatprep.subr.bf16.mxu0 0
      %3421 = vmatpush1.bf16.msra.mxu0 0
      %3422 = vmatprep.subr.bf16.mxu0 0
      %3423 = vmatpush1.bf16.msra.mxu0 0
      %3424 = vmatprep.subr.bf16.mxu0 0
      %3425 = vmatpush1.bf16.msra.mxu0 0
      %3426 = vmatprep.subr.bf16.mxu0 0
      %3427 = vmatpush1.bf16.msra.mxu0 0
      %3428 = vmatprep.subr.bf16.mxu0 %v3363
      %3429 = vmatpush1.bf16.msra.mxu0 %v3362
      %3430 = vmatprep.subr.bf16.mxu0 %v3361
      %3431 = vmatpush1.bf16.msra.mxu0 %v3360
      %3432 = vmatprep.subr.bf16.mxu0 %v3359
      %3433 = vmatpush1.bf16.msra.mxu0 %v3358
      %3434 = vmatprep.subr.bf16.mxu0 %v3357
      %3435 = vmatpush1.bf16.msra.mxu0 %v3356
      %3436 = vmatprep.subr.bf16.mxu0 0
      %3437 = vmatpush2.bf16.msra.mxu0 0
      %3438 = vmatprep.subr.bf16.mxu0 0
      %3439 = vmatpush2.bf16.msra.mxu0 0
      %3440 = vmatprep.subr.bf16.mxu0 0
      %3441 = vmatpush2.bf16.msra.mxu0 0
      %3442 = vmatprep.subr.bf16.mxu0 0
      %3443 = vmatpush2.bf16.msra.mxu0 0
      %3444 = vmatprep.subr.bf16.mxu0 0
      %3445 = vmatpush2.bf16.msra.mxu0 0
      %3446 = vmatprep.subr.bf16.mxu0 0
      %3447 = vmatpush2.bf16.msra.mxu0 0
      %3448 = vmatprep.subr.bf16.mxu0 0
      %3449 = vmatpush2.bf16.msra.mxu0 0
      %3450 = vmatprep.subr.bf16.mxu0 0
      %3451 = vmatpush2.bf16.msra.mxu0 0
      %3452 = vmatprep.mubr.bf16.mxu0 0
      %3453 = vmatmul.mubr.bf16.gmra.mxu0 %v3373
      %v3454 = vpop.f32.mrf.mxu0
      %v3455 = vadd.f32 0.0, %v3454
      %v3456 = vpop.f32.mrf.mxu0
      %v3457 = vadd.f32 0.0, %v3456
      %v3458 = vpop.f32.mrf.mxu0
      %v3459 = vadd.f32 0.0, %v3458
      %v3460 = vpop.f32.mrf.mxu0
      %v3461 = vadd.f32 0.0, %v3460
      %3462 = vmatprep.mubr.bf16.mxu0 0
      %3463 = vmatmul.mubr.bf16.gmra.mxu0 %v3376
      %v3464 = vpop.f32.mrf.mxu0
      %v3465 = vadd.f32 0.0, %v3464
      %v3466 = vpop.f32.mrf.mxu0
      %v3467 = vadd.f32 0.0, %v3466
      %v3468 = vpop.f32.mrf.mxu0
      %v3469 = vadd.f32 0.0, %v3468
      %v3470 = vpop.f32.mrf.mxu0
      %v3471 = vadd.f32 0.0, %v3470
      %3472 = vmatprep.mubr.bf16.mxu0 0
      %3473 = vmatmul.mubr.bf16.gmra.mxu0 %v3379
      %v3474 = vpop.f32.mrf.mxu0
      %v3475 = vadd.f32 0.0, %v3474
      %v3476 = vpop.f32.mrf.mxu0
      %v3477 = vadd.f32 0.0, %v3476
      %v3478 = vpop.f32.mrf.mxu0
      %v3479 = vadd.f32 0.0, %v3478
      %v3480 = vpop.f32.mrf.mxu0
      %v3481 = vadd.f32 0.0, %v3480
      %3482 = vmatprep.mubr.bf16.mxu0 0
      %3483 = vmatmul.mubr.bf16.gmra.mxu0 %v3382
      %v3484 = vpop.f32.mrf.mxu0
      %v3485 = vadd.f32 0.0, %v3484
      %v3486 = vpop.f32.mrf.mxu0
      %v3487 = vadd.f32 0.0, %v3486
      %v3488 = vpop.f32.mrf.mxu0
      %v3489 = vadd.f32 0.0, %v3488
      %v3490 = vpop.f32.mrf.mxu0
      %v3491 = vadd.f32 0.0, %v3490
      %3492 = vmatprep.mubr.bf16.mxu0 0
      %3493 = vmatmul.mubr.bf16.gmra.mxu0 %v3385
      %v3494 = vpop.f32.mrf.mxu0
      %v3495 = vadd.f32 0.0, %v3494
      %v3496 = vpop.f32.mrf.mxu0
      %v3497 = vadd.f32 0.0, %v3496
      %v3498 = vpop.f32.mrf.mxu0
      %v3499 = vadd.f32 0.0, %v3498
      %v3500 = vpop.f32.mrf.mxu0
      %v3501 = vadd.f32 0.0, %v3500
      %3502 = vmatprep.mubr.bf16.mxu0 0
      %3503 = vmatmul.mubr.bf16.gmra.mxu0 %v3388
      %v3504 = vpop.f32.mrf.mxu0
      %v3505 = vadd.f32 0.0, %v3504
      %v3506 = vpop.f32.mrf.mxu0
      %v3507 = vadd.f32 0.0, %v3506
      %v3508 = vpop.f32.mrf.mxu0
      %v3509 = vadd.f32 0.0, %v3508
      %v3510 = vpop.f32.mrf.mxu0
      %v3511 = vadd.f32 0.0, %v3510
      %3512 = vmatprep.mubr.bf16.mxu0 0
      %3513 = vmatmul.mubr.bf16.gmra.mxu0 %v3391
      %v3514 = vpop.f32.mrf.mxu0
      %v3515 = vadd.f32 0.0, %v3514
      %v3516 = vpop.f32.mrf.mxu0
      %v3517 = vadd.f32 0.0, %v3516
      %v3518 = vpop.f32.mrf.mxu0
      %v3519 = vadd.f32 0.0, %v3518
      %v3520 = vpop.f32.mrf.mxu0
      %v3521 = vadd.f32 0.0, %v3520
      %3522 = vmatprep.mubr.bf16.mxu0 0
      %3523 = vmatmul.mubr.bf16.gmra.mxu0 %v3394
      %v3524 = vpop.f32.mrf.mxu0
      %v3525 = vadd.f32 0.0, %v3524
      %v3526 = vpop.f32.mrf.mxu0
      %v3527 = vadd.f32 0.0, %v3526
      %v3528 = vpop.f32.mrf.mxu0
      %v3529 = vadd.f32 0.0, %v3528
      %v3530 = vpop.f32.mrf.mxu0
      %v3531 = vadd.f32 0.0, %v3530
      %3532 = vmatprep.mubr.bf16.mxu0 0
      %3533 = vmatmul.mubr.bf16.gmra.mxu0 %v3397
      %v3534 = vpop.f32.mrf.mxu0
      %v3535 = vadd.f32 0.0, %v3534
      %v3536 = vpop.f32.mrf.mxu0
      %v3537 = vadd.f32 0.0, %v3536
      %v3538 = vpop.f32.mrf.mxu0
      %v3539 = vadd.f32 0.0, %v3538
      %v3540 = vpop.f32.mrf.mxu0
      %v3541 = vadd.f32 0.0, %v3540
      %3542 = vmatprep.mubr.bf16.mxu0 0
      %3543 = vmatmul.mubr.bf16.gmra.mxu0 %v3400
      %v3544 = vpop.f32.mrf.mxu0
      %v3545 = vadd.f32 0.0, %v3544
      %v3546 = vpop.f32.mrf.mxu0
      %v3547 = vadd.f32 0.0, %v3546
      %v3548 = vpop.f32.mrf.mxu0
      %v3549 = vadd.f32 0.0, %v3548
      %v3550 = vpop.f32.mrf.mxu0
      %v3551 = vadd.f32 0.0, %v3550
      %3552 = vmatprep.mubr.bf16.mxu0 0
      %3553 = vmatmul.mubr.bf16.gmra.mxu0 %v3403
      %v3554 = vpop.f32.mrf.mxu0
      %v3555 = vadd.f32 0.0, %v3554
      %v3556 = vpop.f32.mrf.mxu0
      %v3557 = vadd.f32 0.0, %v3556
      %v3558 = vpop.f32.mrf.mxu0
      %v3559 = vadd.f32 0.0, %v3558
      %v3560 = vpop.f32.mrf.mxu0
      %v3561 = vadd.f32 0.0, %v3560
      %3562 = vmatprep.mubr.bf16.mxu0 0
      %3563 = vmatmul.mubr.bf16.gmra.mxu0 %v3406
      %v3564 = vpop.f32.mrf.mxu0
      %v3565 = vadd.f32 0.0, %v3564
      %v3566 = vpop.f32.mrf.mxu0
      %v3567 = vadd.f32 0.0, %v3566
      %v3568 = vpop.f32.mrf.mxu0
      %v3569 = vadd.f32 0.0, %v3568
      %v3570 = vpop.f32.mrf.mxu0
      %v3571 = vadd.f32 0.0, %v3570
      %3572 = vmatprep.mubr.bf16.mxu0 0
      %3573 = vmatmul.mubr.bf16.gmra.mxu0 %v3409
      %v3574 = vpop.f32.mrf.mxu0
      %v3575 = vadd.f32 0.0, %v3574
      %v3576 = vpop.f32.mrf.mxu0
      %v3577 = vadd.f32 0.0, %v3576
      %v3578 = vpop.f32.mrf.mxu0
      %v3579 = vadd.f32 0.0, %v3578
      %v3580 = vpop.f32.mrf.mxu0
      %v3581 = vadd.f32 0.0, %v3580
      %3582 = vmatprep.mubr.bf16.mxu0 0
      %3583 = vmatmul.mubr.bf16.gmra.mxu0 %v3412
      %v3584 = vpop.f32.mrf.mxu0
      %v3585 = vadd.f32 0.0, %v3584
      %v3586 = vpop.f32.mrf.mxu0
      %v3587 = vadd.f32 0.0, %v3586
      %v3588 = vpop.f32.mrf.mxu0
      %v3589 = vadd.f32 0.0, %v3588
      %v3590 = vpop.f32.mrf.mxu0
      %v3591 = vadd.f32 0.0, %v3590
      %3592 = vmatprep.mubr.bf16.mxu0 0
      %3593 = vmatmul.mubr.bf16.gmra.mxu0 %v3415
      %v3594 = vpop.f32.mrf.mxu0
      %v3595 = vadd.f32 0.0, %v3594
      %v3596 = vpop.f32.mrf.mxu0
      %v3597 = vadd.f32 0.0, %v3596
      %v3598 = vpop.f32.mrf.mxu0
      %v3599 = vadd.f32 0.0, %v3598
      %v3600 = vpop.f32.mrf.mxu0
      %v3601 = vadd.f32 0.0, %v3600
      %3602 = vmatprep.mubr.bf16.mxu0 0
      %3603 = vmatmul.mubr.bf16.gmra.mxu0 %v3418
      %v3604 = vpop.f32.mrf.mxu0
      %v3605 = vadd.f32 0.0, %v3604
      %v3606 = vpop.f32.mrf.mxu0
      %v3607 = vadd.f32 0.0, %v3606
      %v3608 = vpop.f32.mrf.mxu0
      %v3609 = vadd.f32 0.0, %v3608
      %v3610 = vpop.f32.mrf.mxu0
      %v3611 = vadd.f32 0.0, %v3610
      %3612 = vdwg.mxu0
      %s3613 = smul.u32 %s3268, 8
      %s3614 = scalar_lea.vmem %s9, %s3613
      %v3615 = vld [vmem:[%s3614] sm:$0x1f]
      %v3616 = vlaneseq
      %v3617 = vshrl.u32 %v3616, 7
      %v3618 = vsub.s32 0, %v3617
      %v3619 = vrot.slane %v3615, %v3618
      %v3620 = vadd.f32 %v3455, %v3619
      %v3621 = vadd.f32 %v3459, %v3619
      %v3622 = vadd.f32 %v3465, %v3619
      %v3623 = vadd.f32 %v3469, %v3619
      %v3624 = vadd.f32 %v3475, %v3619
      %v3625 = vadd.f32 %v3479, %v3619
      %v3626 = vadd.f32 %v3485, %v3619
      %v3627 = vadd.f32 %v3489, %v3619
      %v3628 = vadd.f32 %v3495, %v3619
      %v3629 = vadd.f32 %v3499, %v3619
      %v3630 = vadd.f32 %v3505, %v3619
      %v3631 = vadd.f32 %v3509, %v3619
      %v3632 = vadd.f32 %v3515, %v3619
      %v3633 = vadd.f32 %v3519, %v3619
      %v3634 = vadd.f32 %v3525, %v3619
      %v3635 = vadd.f32 %v3529, %v3619
      %v3636 = vadd.f32 %v3535, %v3619
      %v3637 = vadd.f32 %v3539, %v3619
      %v3638 = vadd.f32 %v3545, %v3619
      %v3639 = vadd.f32 %v3549, %v3619
      %v3640 = vadd.f32 %v3555, %v3619
      %v3641 = vadd.f32 %v3559, %v3619
      %v3642 = vadd.f32 %v3565, %v3619
      %v3643 = vadd.f32 %v3569, %v3619
      %v3644 = vadd.f32 %v3575, %v3619
      %v3645 = vadd.f32 %v3579, %v3619
      %v3646 = vadd.f32 %v3585, %v3619
      %v3647 = vadd.f32 %v3589, %v3619
      %v3648 = vadd.f32 %v3595, %v3619
      %v3649 = vadd.f32 %v3599, %v3619
      %v3650 = vadd.f32 %v3605, %v3619
      %v3651 = vadd.f32 %v3609, %v3619
      %v3652 = vpack.c.bf16 %v3621, %v3620
      %v3653 = vpack.c.bf16 %v3623, %v3622
      %v3654 = vpack.c.bf16 %v3625, %v3624
      %v3655 = vpack.c.bf16 %v3627, %v3626
      %v3656 = vpack.c.bf16 %v3629, %v3628
      %v3657 = vpack.c.bf16 %v3631, %v3630
      %v3658 = vpack.c.bf16 %v3633, %v3632
      %v3659 = vpack.c.bf16 %v3635, %v3634
      %v3660 = vpack.c.bf16 %v3637, %v3636
      %v3661 = vpack.c.bf16 %v3639, %v3638
      %v3662 = vpack.c.bf16 %v3641, %v3640
      %v3663 = vpack.c.bf16 %v3643, %v3642
      %v3664 = vpack.c.bf16 %v3645, %v3644
      %v3665 = vpack.c.bf16 %v3647, %v3646
      %v3666 = vpack.c.bf16 %v3649, %v3648
      %v3667 = vpack.c.bf16 %v3651, %v3650
      %s3668 = smul.u32 %s3268, 192
      %s3669 = smul.addr %s3668, 4
      %s3670 = scalar_lea.vmem %s7, %s3669
      %v3671 = vld [vmem:[%s3670] sm:$0xff]
      %v3672 = vld [vmem:[%s3670 + $0x8] sm:$0xff]
      %v3673 = vld [vmem:[%s3670 + $0x10] sm:$0xff]
      %v3674 = vld [vmem:[%s3670 + $0x18] sm:$0xff]
      %v3675 = vld [vmem:[%s3670 + $0x20] sm:$0xff]
      %v3676 = vld [vmem:[%s3670 + $0x28] sm:$0xff]
      %v3677 = vld [vmem:[%s3670 + $0x30] sm:$0xff]
      %v3678 = vld [vmem:[%s3670 + $0x38] sm:$0xff]
      %v3679 = vld [vmem:[%s3670 + $0x40] sm:$0xff]
      %v3680 = vld [vmem:[%s3670 + $0x48] sm:$0xff]
      %v3681 = vld [vmem:[%s3670 + $0x50] sm:$0xff]
      %v3682 = vld [vmem:[%s3670 + $0x58] sm:$0xff]
      %v3683 = vld [vmem:[%s3670 + $0x60] sm:$0xff]
      %v3684 = vld [vmem:[%s3670 + $0x68] sm:$0xff]
      %v3685 = vld [vmem:[%s3670 + $0x70] sm:$0xff]
      %v3686 = vld [vmem:[%s3670 + $0x78] sm:$0xff]
      %v3687 = vld [vmem:[%s3670 + $0x80] sm:$0xff]
      %v3688 = vld [vmem:[%s3670 + $0x88] sm:$0xff]
      %v3689 = vld [vmem:[%s3670 + $0x90] sm:$0xff]
      %v3690 = vld [vmem:[%s3670 + $0x98] sm:$0xff]
      %v3691 = vld [vmem:[%s3670 + $0xa0] sm:$0xff]
      %v3692 = vld [vmem:[%s3670 + $0xa8] sm:$0xff]
      %v3693 = vld [vmem:[%s3670 + $0xb0] sm:$0xff]
      %v3694 = vld [vmem:[%s3670 + $0xb8] sm:$0xff]
      %v3695 = vld [vmem:[%s3670 + $0xc0] sm:$0xff]
      %v3696 = vld [vmem:[%s3670 + $0xc8] sm:$0xff]
      %v3697 = vld [vmem:[%s3670 + $0xd0] sm:$0xff]
      %v3698 = vld [vmem:[%s3670 + $0xd8] sm:$0xff]
      %v3699 = vld [vmem:[%s3670 + $0xe0] sm:$0xff]
      %v3700 = vld [vmem:[%s3670 + $0xe8] sm:$0xff]
      %v3701 = vld [vmem:[%s3670 + $0xf0] sm:$0xff]
      %v3702 = vld [vmem:[%s3670 + $0xf8] sm:$0xff]
      %v3703 = vlaneseq
      %v3704 = vshrl.u32 %v3703, 7
      %v3705 = vsub.s32 1, %v3704
      %v3706 = vrot.slane %v3615, %v3705
      %3708 = vrot.lane.b32.xlu0 %v3706, 64
      %v3709 = vpop.permute.xlu0 %3708
      %v3711 = vadd.f32 %v3455, %v3709
      %v3712 = vadd.f32 %v3459, %v3709
      %v3713 = vadd.f32 %v3465, %v3709
      %v3714 = vadd.f32 %v3469, %v3709
      %v3715 = vadd.f32 %v3475, %v3709
      %v3716 = vadd.f32 %v3479, %v3709
      %v3717 = vadd.f32 %v3485, %v3709
      %v3718 = vadd.f32 %v3489, %v3709
      %v3719 = vadd.f32 %v3495, %v3709
      %v3720 = vadd.f32 %v3499, %v3709
      %v3721 = vadd.f32 %v3505, %v3709
      %v3722 = vadd.f32 %v3509, %v3709
      %v3723 = vadd.f32 %v3515, %v3709
      %v3724 = vadd.f32 %v3519, %v3709
      %v3725 = vadd.f32 %v3525, %v3709
      %v3726 = vadd.f32 %v3529, %v3709
      %v3727 = vadd.f32 %v3535, %v3709
      %v3728 = vadd.f32 %v3539, %v3709
      %v3729 = vadd.f32 %v3545, %v3709
      %v3730 = vadd.f32 %v3549, %v3709
      %v3731 = vadd.f32 %v3555, %v3709
      %v3732 = vadd.f32 %v3559, %v3709
      %v3733 = vadd.f32 %v3565, %v3709
      %v3734 = vadd.f32 %v3569, %v3709
      %v3735 = vadd.f32 %v3575, %v3709
      %v3736 = vadd.f32 %v3579, %v3709
      %v3737 = vadd.f32 %v3585, %v3709
      %v3738 = vadd.f32 %v3589, %v3709
      %v3739 = vadd.f32 %v3595, %v3709
      %v3740 = vadd.f32 %v3599, %v3709
      %v3741 = vadd.f32 %v3605, %v3709
      %v3742 = vadd.f32 %v3609, %v3709
      %v3743 = vpack.c.bf16 %v3712, %v3711
      %v3744 = vpack.c.bf16 %v3714, %v3713
      %v3745 = vpack.c.bf16 %v3716, %v3715
      %v3746 = vpack.c.bf16 %v3718, %v3717
      %v3747 = vpack.c.bf16 %v3720, %v3719
      %v3748 = vpack.c.bf16 %v3722, %v3721
      %v3749 = vpack.c.bf16 %v3724, %v3723
      %v3750 = vpack.c.bf16 %v3726, %v3725
      %v3751 = vpack.c.bf16 %v3728, %v3727
      %v3752 = vpack.c.bf16 %v3730, %v3729
      %v3753 = vpack.c.bf16 %v3732, %v3731
      %v3754 = vpack.c.bf16 %v3734, %v3733
      %v3755 = vpack.c.bf16 %v3736, %v3735
      %v3756 = vpack.c.bf16 %v3738, %v3737
      %v3757 = vpack.c.bf16 %v3740, %v3739
      %v3758 = vpack.c.bf16 %v3742, %v3741
      %s3759 = sadd.s32 64, %s3668
      %s3760 = smul.addr %s3759, 4
      %s3761 = scalar_lea.vmem %s7, %s3760
      %v3762 = vld [vmem:[%s3761] sm:$0xff]
      %v3763 = vld [vmem:[%s3761 + $0x8] sm:$0xff]
      %v3764 = vld [vmem:[%s3761 + $0x10] sm:$0xff]
      %v3765 = vld [vmem:[%s3761 + $0x18] sm:$0xff]
      %v3766 = vld [vmem:[%s3761 + $0x20] sm:$0xff]
      %v3767 = vld [vmem:[%s3761 + $0x28] sm:$0xff]
      %v3768 = vld [vmem:[%s3761 + $0x30] sm:$0xff]
      %v3769 = vld [vmem:[%s3761 + $0x38] sm:$0xff]
      %v3770 = vld [vmem:[%s3761 + $0x40] sm:$0xff]
      %v3771 = vld [vmem:[%s3761 + $0x48] sm:$0xff]
      %v3772 = vld [vmem:[%s3761 + $0x50] sm:$0xff]
      %v3773 = vld [vmem:[%s3761 + $0x58] sm:$0xff]
      %v3774 = vld [vmem:[%s3761 + $0x60] sm:$0xff]
      %v3775 = vld [vmem:[%s3761 + $0x68] sm:$0xff]
      %v3776 = vld [vmem:[%s3761 + $0x70] sm:$0xff]
      %v3777 = vld [vmem:[%s3761 + $0x78] sm:$0xff]
      %v3778 = vld [vmem:[%s3761 + $0x80] sm:$0xff]
      %v3779 = vld [vmem:[%s3761 + $0x88] sm:$0xff]
      %v3780 = vld [vmem:[%s3761 + $0x90] sm:$0xff]
      %v3781 = vld [vmem:[%s3761 + $0x98] sm:$0xff]
      %v3782 = vld [vmem:[%s3761 + $0xa0] sm:$0xff]
      %v3783 = vld [vmem:[%s3761 + $0xa8] sm:$0xff]
      %v3784 = vld [vmem:[%s3761 + $0xb0] sm:$0xff]
      %v3785 = vld [vmem:[%s3761 + $0xb8] sm:$0xff]
      %v3786 = vld [vmem:[%s3761 + $0xc0] sm:$0xff]
      %v3787 = vld [vmem:[%s3761 + $0xc8] sm:$0xff]
      %v3788 = vld [vmem:[%s3761 + $0xd0] sm:$0xff]
      %v3789 = vld [vmem:[%s3761 + $0xd8] sm:$0xff]
      %v3790 = vld [vmem:[%s3761 + $0xe0] sm:$0xff]
      %v3791 = vld [vmem:[%s3761 + $0xe8] sm:$0xff]
      %v3792 = vld [vmem:[%s3761 + $0xf0] sm:$0xff]
      %v3793 = vld [vmem:[%s3761 + $0xf8] sm:$0xff]
      %v3826 = vunpack.c.l.b16 %v3762
      %v3827 = vunpack.c.h.b16 %v3762
      %v3828 = vunpack.c.l.b16 %v3763
      %v3829 = vunpack.c.h.b16 %v3763
      %v3830 = vunpack.c.l.b16 %v3764
      %v3831 = vunpack.c.h.b16 %v3764
      %v3832 = vunpack.c.l.b16 %v3765
      %v3833 = vunpack.c.h.b16 %v3765
      %v3834 = vunpack.c.l.b16 %v3766
      %v3835 = vunpack.c.h.b16 %v3766
      %v3836 = vunpack.c.l.b16 %v3767
      %v3837 = vunpack.c.h.b16 %v3767
      %v3838 = vunpack.c.l.b16 %v3768
      %v3839 = vunpack.c.h.b16 %v3768
      %v3840 = vunpack.c.l.b16 %v3769
      %v3841 = vunpack.c.h.b16 %v3769
      %v3842 = vunpack.c.l.b16 %v3770
      %v3843 = vunpack.c.h.b16 %v3770
      %v3844 = vunpack.c.l.b16 %v3771
      %v3845 = vunpack.c.h.b16 %v3771
      %v3846 = vunpack.c.l.b16 %v3772
      %v3847 = vunpack.c.h.b16 %v3772
      %v3848 = vunpack.c.l.b16 %v3773
      %v3849 = vunpack.c.h.b16 %v3773
      %v3850 = vunpack.c.l.b16 %v3774
      %v3851 = vunpack.c.h.b16 %v3774
      %v3852 = vunpack.c.l.b16 %v3775
      %v3853 = vunpack.c.h.b16 %v3775
      %v3854 = vunpack.c.l.b16 %v3776
      %v3855 = vunpack.c.h.b16 %v3776
      %v3856 = vunpack.c.l.b16 %v3777
      %v3857 = vunpack.c.h.b16 %v3777
      %v3858 = vunpack.c.l.b16 %v3778
      %v3859 = vunpack.c.h.b16 %v3778
      %v3860 = vunpack.c.l.b16 %v3779
      %v3861 = vunpack.c.h.b16 %v3779
      %v3862 = vunpack.c.l.b16 %v3780
      %v3863 = vunpack.c.h.b16 %v3780
      %v3864 = vunpack.c.l.b16 %v3781
      %v3865 = vunpack.c.h.b16 %v3781
      %v3866 = vunpack.c.l.b16 %v3782
      %v3867 = vunpack.c.h.b16 %v3782
      %v3868 = vunpack.c.l.b16 %v3783
      %v3869 = vunpack.c.h.b16 %v3783
      %v3870 = vunpack.c.l.b16 %v3784
      %v3871 = vunpack.c.h.b16 %v3784
      %v3872 = vunpack.c.l.b16 %v3785
      %v3873 = vunpack.c.h.b16 %v3785
      %v3874 = vunpack.c.l.b16 %v3786
      %v3875 = vunpack.c.h.b16 %v3786
      %v3876 = vunpack.c.l.b16 %v3787
      %v3877 = vunpack.c.h.b16 %v3787
      %v3878 = vunpack.c.l.b16 %v3788
      %v3879 = vunpack.c.h.b16 %v3788
      %v3880 = vunpack.c.l.b16 %v3789
      %v3881 = vunpack.c.h.b16 %v3789
      %v3882 = vunpack.c.l.b16 %v3790
      %v3883 = vunpack.c.h.b16 %v3790
      %v3884 = vunpack.c.l.b16 %v3791
      %v3885 = vunpack.c.h.b16 %v3791
      %v3886 = vunpack.c.l.b16 %v3792
      %v3887 = vunpack.c.h.b16 %v3792
      %v3888 = vunpack.c.l.b16 %v3793
      %v3889 = vunpack.c.h.b16 %v3793
      %v3890 = vpack.c.b16 %v3828, %v3826
      %v3891 = vpack.c.b16 %v3829, %v3827
      %v3892 = vpack.c.b16 %v3832, %v3830
      %v3893 = vpack.c.b16 %v3833, %v3831
      %v3894 = vpack.c.b16 %v3836, %v3834
      %v3895 = vpack.c.b16 %v3837, %v3835
      %v3896 = vpack.c.b16 %v3840, %v3838
      %v3897 = vpack.c.b16 %v3841, %v3839
      %v3898 = vpack.c.b16 %v3844, %v3842
      %v3899 = vpack.c.b16 %v3845, %v3843
      %v3900 = vpack.c.b16 %v3848, %v3846
      %v3901 = vpack.c.b16 %v3849, %v3847
      %v3902 = vpack.c.b16 %v3852, %v3850
      %v3903 = vpack.c.b16 %v3853, %v3851
      %v3904 = vpack.c.b16 %v3856, %v3854
      %v3905 = vpack.c.b16 %v3857, %v3855
      %v3906 = vpack.c.b16 %v3860, %v3858
      %v3907 = vpack.c.b16 %v3861, %v3859
      %v3908 = vpack.c.b16 %v3864, %v3862
      %v3909 = vpack.c.b16 %v3865, %v3863
      %v3910 = vpack.c.b16 %v3868, %v3866
      %v3911 = vpack.c.b16 %v3869, %v3867
      %v3912 = vpack.c.b16 %v3872, %v3870
      %v3913 = vpack.c.b16 %v3873, %v3871
      %v3914 = vpack.c.b16 %v3876, %v3874
      %v3915 = vpack.c.b16 %v3877, %v3875
      %v3916 = vpack.c.b16 %v3880, %v3878
      %v3917 = vpack.c.b16 %v3881, %v3879
      %v3918 = vpack.c.b16 %v3884, %v3882
      %v3919 = vpack.c.b16 %v3885, %v3883
      %v3920 = vpack.c.b16 %v3888, %v3886
      %v3921 = vpack.c.b16 %v3889, %v3887
      %3970 = vrot.lane.b32.xlu0 %v3743, 64
      %v3971 = vpop.permute.xlu0 %3970
      %3972 = vrot.lane.b32.xlu0 %v3744, 64
      %v3973 = vpop.permute.xlu0 %3972
      %3974 = vrot.lane.b32.xlu0 %v3745, 64
      %v3975 = vpop.permute.xlu0 %3974
      %3976 = vrot.lane.b32.xlu0 %v3746, 64
      %v3977 = vpop.permute.xlu0 %3976
      %3978 = vrot.lane.b32.xlu0 %v3747, 64
      %v3979 = vpop.permute.xlu0 %3978
      %3980 = vrot.lane.b32.xlu0 %v3748, 64
      %v3981 = vpop.permute.xlu0 %3980
      %3982 = vrot.lane.b32.xlu0 %v3749, 64
      %v3983 = vpop.permute.xlu0 %3982
      %3984 = vrot.lane.b32.xlu0 %v3750, 64
      %v3985 = vpop.permute.xlu0 %3984
      %3986 = vrot.lane.b32.xlu0 %v3751, 64
      %v3987 = vpop.permute.xlu0 %3986
      %3988 = vrot.lane.b32.xlu0 %v3752, 64
      %v3989 = vpop.permute.xlu0 %3988
      %3990 = vrot.lane.b32.xlu0 %v3753, 64
      %v3991 = vpop.permute.xlu0 %3990
      %3992 = vrot.lane.b32.xlu0 %v3754, 64
      %v3993 = vpop.permute.xlu0 %3992
      %3994 = vrot.lane.b32.xlu0 %v3755, 64
      %v3995 = vpop.permute.xlu0 %3994
      %3996 = vrot.lane.b32.xlu0 %v3756, 64
      %v3997 = vpop.permute.xlu0 %3996
      %3998 = vrot.lane.b32.xlu0 %v3757, 64
      %v3999 = vpop.permute.xlu0 %3998
      %4000 = vrot.lane.b32.xlu0 %v3758, 64
      %v4001 = vpop.permute.xlu0 %4000
      %4018 = vmatprep.subr.bf16.mxu0 0
      %4019 = vmatpush1.bf16.msra.mxu0 %v3985
      %4020 = vmatprep.subr.bf16.mxu0 0
      %4021 = vmatpush1.bf16.msra.mxu0 %v3983
      %4022 = vmatprep.subr.bf16.mxu0 0
      %4023 = vmatpush1.bf16.msra.mxu0 %v3981
      %4024 = vmatprep.subr.bf16.mxu0 0
      %4025 = vmatpush1.bf16.msra.mxu0 %v3979
      %4026 = vmatprep.subr.bf16.mxu0 0
      %4027 = vmatpush1.bf16.msra.mxu0 %v3977
      %4028 = vmatprep.subr.bf16.mxu0 0
      %4029 = vmatpush1.bf16.msra.mxu0 %v3975
      %4030 = vmatprep.subr.bf16.mxu0 0
      %4031 = vmatpush1.bf16.msra.mxu0 %v3973
      %4032 = vmatprep.subr.bf16.mxu0 0
      %4033 = vmatpush1.bf16.msra.mxu0 %v3971
      %4034 = vmatprep.subr.bf16.mxu0 0
      %4035 = vmatpush2.bf16.msra.mxu0 %v4001
      %4036 = vmatprep.subr.bf16.mxu0 0
      %4037 = vmatpush2.bf16.msra.mxu0 %v3999
      %4038 = vmatprep.subr.bf16.mxu0 0
      %4039 = vmatpush2.bf16.msra.mxu0 %v3997
      %4040 = vmatprep.subr.bf16.mxu0 0
      %4041 = vmatpush2.bf16.msra.mxu0 %v3995
      %4042 = vmatprep.subr.bf16.mxu0 0
      %4043 = vmatpush2.bf16.msra.mxu0 %v3993
      %4044 = vmatprep.subr.bf16.mxu0 0
      %4045 = vmatpush2.bf16.msra.mxu0 %v3991
      %4046 = vmatprep.subr.bf16.mxu0 0
      %4047 = vmatpush2.bf16.msra.mxu0 %v3989
      %4048 = vmatprep.subr.bf16.mxu0 0
      %4049 = vmatpush2.bf16.msra.mxu0 %v3987
      %4050 = vmatprep.mubr.bf16.mxu0 %v3891
      %4051 = vmatmul.mubr.bf16.gmra.mxu0 %v3890
      %v4052 = vpop.f32.mrf.mxu0
      %v4053 = vadd.f32 0.0, %v4052
      %v4054 = vpop.f32.mrf.mxu0
      %v4055 = vpop.f32.mrf.mxu0
      %v4056 = vadd.f32 0.0, %v4055
      %v4057 = vpop.f32.mrf.mxu0
      %4058 = vmatprep.mubr.bf16.mxu0 %v3893
      %4059 = vmatmul.mubr.bf16.gmra.mxu0 %v3892
      %v4060 = vpop.f32.mrf.mxu0
      %v4061 = vadd.f32 0.0, %v4060
      %v4062 = vpop.f32.mrf.mxu0
      %v4063 = vpop.f32.mrf.mxu0
      %v4064 = vadd.f32 0.0, %v4063
      %v4065 = vpop.f32.mrf.mxu0
      %4066 = vmatprep.mubr.bf16.mxu0 %v3895
      %4067 = vmatmul.mubr.bf16.gmra.mxu0 %v3894
      %v4068 = vpop.f32.mrf.mxu0
      %v4069 = vadd.f32 0.0, %v4068
      %v4070 = vpop.f32.mrf.mxu0
      %v4071 = vpop.f32.mrf.mxu0
      %v4072 = vadd.f32 0.0, %v4071
      %v4073 = vpop.f32.mrf.mxu0
      %4074 = vmatprep.mubr.bf16.mxu0 %v3897
      %4075 = vmatmul.mubr.bf16.gmra.mxu0 %v3896
      %v4076 = vpop.f32.mrf.mxu0
      %v4077 = vadd.f32 0.0, %v4076
      %v4078 = vpop.f32.mrf.mxu0
      %v4079 = vpop.f32.mrf.mxu0
      %v4080 = vadd.f32 0.0, %v4079
      %v4081 = vpop.f32.mrf.mxu0
      %4082 = vmatprep.mubr.bf16.mxu0 %v3899
      %4083 = vmatmul.mubr.bf16.gmra.mxu0 %v3898
      %v4084 = vpop.f32.mrf.mxu0
      %v4085 = vadd.f32 0.0, %v4084
      %v4086 = vpop.f32.mrf.mxu0
      %v4087 = vpop.f32.mrf.mxu0
      %v4088 = vadd.f32 0.0, %v4087
      %v4089 = vpop.f32.mrf.mxu0
      %4090 = vmatprep.mubr.bf16.mxu0 %v3901
      %4091 = vmatmul.mubr.bf16.gmra.mxu0 %v3900
      %v4092 = vpop.f32.mrf.mxu0
      %v4093 = vadd.f32 0.0, %v4092
      %v4094 = vpop.f32.mrf.mxu0
      %v4095 = vpop.f32.mrf.mxu0
      %v4096 = vadd.f32 0.0, %v4095
      %v4097 = vpop.f32.mrf.mxu0
      %4098 = vmatprep.mubr.bf16.mxu0 %v3903
      %4099 = vmatmul.mubr.bf16.gmra.mxu0 %v3902
      %v4100 = vpop.f32.mrf.mxu0
      %v4101 = vadd.f32 0.0, %v4100
      %v4102 = vpop.f32.mrf.mxu0
      %v4103 = vpop.f32.mrf.mxu0
      %v4104 = vadd.f32 0.0, %v4103
      %v4105 = vpop.f32.mrf.mxu0
      %4106 = vmatprep.mubr.bf16.mxu0 %v3905
      %4107 = vmatmul.mubr.bf16.gmra.mxu0 %v3904
      %v4108 = vpop.f32.mrf.mxu0
      %v4109 = vadd.f32 0.0, %v4108
      %v4110 = vpop.f32.mrf.mxu0
      %v4111 = vpop.f32.mrf.mxu0
      %v4112 = vadd.f32 0.0, %v4111
      %v4113 = vpop.f32.mrf.mxu0
      %4114 = vmatprep.mubr.bf16.mxu0 %v3907
      %4115 = vmatmul.mubr.bf16.gmra.mxu0 %v3906
      %v4116 = vpop.f32.mrf.mxu0
      %v4117 = vadd.f32 0.0, %v4116
      %v4118 = vpop.f32.mrf.mxu0
      %v4119 = vpop.f32.mrf.mxu0
      %v4120 = vadd.f32 0.0, %v4119
      %v4121 = vpop.f32.mrf.mxu0
      %4122 = vmatprep.mubr.bf16.mxu0 %v3909
      %4123 = vmatmul.mubr.bf16.gmra.mxu0 %v3908
      %v4124 = vpop.f32.mrf.mxu0
      %v4125 = vadd.f32 0.0, %v4124
      %v4126 = vpop.f32.mrf.mxu0
      %v4127 = vpop.f32.mrf.mxu0
      %v4128 = vadd.f32 0.0, %v4127
      %v4129 = vpop.f32.mrf.mxu0
      %4130 = vmatprep.mubr.bf16.mxu0 %v3911
      %4131 = vmatmul.mubr.bf16.gmra.mxu0 %v3910
      %v4132 = vpop.f32.mrf.mxu0
      %v4133 = vadd.f32 0.0, %v4132
      %v4134 = vpop.f32.mrf.mxu0
      %v4135 = vpop.f32.mrf.mxu0
      %v4136 = vadd.f32 0.0, %v4135
      %v4137 = vpop.f32.mrf.mxu0
      %4138 = vmatprep.mubr.bf16.mxu0 %v3913
      %4139 = vmatmul.mubr.bf16.gmra.mxu0 %v3912
      %v4140 = vpop.f32.mrf.mxu0
      %v4141 = vadd.f32 0.0, %v4140
      %v4142 = vpop.f32.mrf.mxu0
      %v4143 = vpop.f32.mrf.mxu0
      %v4144 = vadd.f32 0.0, %v4143
      %v4145 = vpop.f32.mrf.mxu0
      %4146 = vmatprep.mubr.bf16.mxu0 %v3915
      %4147 = vmatmul.mubr.bf16.gmra.mxu0 %v3914
      %v4148 = vpop.f32.mrf.mxu0
      %v4149 = vadd.f32 0.0, %v4148
      %v4150 = vpop.f32.mrf.mxu0
      %v4151 = vpop.f32.mrf.mxu0
      %v4152 = vadd.f32 0.0, %v4151
      %v4153 = vpop.f32.mrf.mxu0
      %4154 = vmatprep.mubr.bf16.mxu0 %v3917
      %4155 = vmatmul.mubr.bf16.gmra.mxu0 %v3916
      %v4156 = vpop.f32.mrf.mxu0
      %v4157 = vadd.f32 0.0, %v4156
      %v4158 = vpop.f32.mrf.mxu0
      %v4159 = vpop.f32.mrf.mxu0
      %v4160 = vadd.f32 0.0, %v4159
      %v4161 = vpop.f32.mrf.mxu0
      %4162 = vmatprep.mubr.bf16.mxu0 %v3919
      %4163 = vmatmul.mubr.bf16.gmra.mxu0 %v3918
      %v4164 = vpop.f32.mrf.mxu0
      %v4165 = vadd.f32 0.0, %v4164
      %v4166 = vpop.f32.mrf.mxu0
      %v4167 = vpop.f32.mrf.mxu0
      %v4168 = vadd.f32 0.0, %v4167
      %v4169 = vpop.f32.mrf.mxu0
      %4170 = vmatprep.mubr.bf16.mxu0 %v3921
      %4171 = vmatmul.mubr.bf16.gmra.mxu0 %v3920
      %v4172 = vpop.f32.mrf.mxu0
      %v4173 = vadd.f32 0.0, %v4172
      %v4174 = vpop.f32.mrf.mxu0
      %v4175 = vpop.f32.mrf.mxu0
      %v4176 = vadd.f32 0.0, %v4175
      %v4177 = vpop.f32.mrf.mxu0
      %4178 = vdwg.mxu0
      %v4211 = vunpack.c.l.b16 %v3671
      %v4212 = vunpack.c.h.b16 %v3671
      %v4213 = vunpack.c.l.b16 %v3672
      %v4214 = vunpack.c.h.b16 %v3672
      %v4215 = vunpack.c.l.b16 %v3673
      %v4216 = vunpack.c.h.b16 %v3673
      %v4217 = vunpack.c.l.b16 %v3674
      %v4218 = vunpack.c.h.b16 %v3674
      %v4219 = vunpack.c.l.b16 %v3675
      %v4220 = vunpack.c.h.b16 %v3675
      %v4221 = vunpack.c.l.b16 %v3676
      %v4222 = vunpack.c.h.b16 %v3676
      %v4223 = vunpack.c.l.b16 %v3677
      %v4224 = vunpack.c.h.b16 %v3677
      %v4225 = vunpack.c.l.b16 %v3678
      %v4226 = vunpack.c.h.b16 %v3678
      %v4227 = vunpack.c.l.b16 %v3679
      %v4228 = vunpack.c.h.b16 %v3679
      %v4229 = vunpack.c.l.b16 %v3680
      %v4230 = vunpack.c.h.b16 %v3680
      %v4231 = vunpack.c.l.b16 %v3681
      %v4232 = vunpack.c.h.b16 %v3681
      %v4233 = vunpack.c.l.b16 %v3682
      %v4234 = vunpack.c.h.b16 %v3682
      %v4235 = vunpack.c.l.b16 %v3683
      %v4236 = vunpack.c.h.b16 %v3683
      %v4237 = vunpack.c.l.b16 %v3684
      %v4238 = vunpack.c.h.b16 %v3684
      %v4239 = vunpack.c.l.b16 %v3685
      %v4240 = vunpack.c.h.b16 %v3685
      %v4241 = vunpack.c.l.b16 %v3686
      %v4242 = vunpack.c.h.b16 %v3686
      %v4243 = vunpack.c.l.b16 %v3687
      %v4244 = vunpack.c.h.b16 %v3687
      %v4245 = vunpack.c.l.b16 %v3688
      %v4246 = vunpack.c.h.b16 %v3688
      %v4247 = vunpack.c.l.b16 %v3689
      %v4248 = vunpack.c.h.b16 %v3689
      %v4249 = vunpack.c.l.b16 %v3690
      %v4250 = vunpack.c.h.b16 %v3690
      %v4251 = vunpack.c.l.b16 %v3691
      %v4252 = vunpack.c.h.b16 %v3691
      %v4253 = vunpack.c.l.b16 %v3692
      %v4254 = vunpack.c.h.b16 %v3692
      %v4255 = vunpack.c.l.b16 %v3693
      %v4256 = vunpack.c.h.b16 %v3693
      %v4257 = vunpack.c.l.b16 %v3694
      %v4258 = vunpack.c.h.b16 %v3694
      %v4259 = vunpack.c.l.b16 %v3695
      %v4260 = vunpack.c.h.b16 %v3695
      %v4261 = vunpack.c.l.b16 %v3696
      %v4262 = vunpack.c.h.b16 %v3696
      %v4263 = vunpack.c.l.b16 %v3697
      %v4264 = vunpack.c.h.b16 %v3697
      %v4265 = vunpack.c.l.b16 %v3698
      %v4266 = vunpack.c.h.b16 %v3698
      %v4267 = vunpack.c.l.b16 %v3699
      %v4268 = vunpack.c.h.b16 %v3699
      %v4269 = vunpack.c.l.b16 %v3700
      %v4270 = vunpack.c.h.b16 %v3700
      %v4271 = vunpack.c.l.b16 %v3701
      %v4272 = vunpack.c.h.b16 %v3701
      %v4273 = vunpack.c.l.b16 %v3702
      %v4274 = vunpack.c.h.b16 %v3702
      %v4275 = vpack.c.b16 %v4213, %v4211
      %v4276 = vpack.c.b16 %v4214, %v4212
      %v4277 = vpack.c.b16 %v4217, %v4215
      %v4278 = vpack.c.b16 %v4218, %v4216
      %v4279 = vpack.c.b16 %v4221, %v4219
      %v4280 = vpack.c.b16 %v4222, %v4220
      %v4281 = vpack.c.b16 %v4225, %v4223
      %v4282 = vpack.c.b16 %v4226, %v4224
      %v4283 = vpack.c.b16 %v4229, %v4227
      %v4284 = vpack.c.b16 %v4230, %v4228
      %v4285 = vpack.c.b16 %v4233, %v4231
      %v4286 = vpack.c.b16 %v4234, %v4232
      %v4287 = vpack.c.b16 %v4237, %v4235
      %v4288 = vpack.c.b16 %v4238, %v4236
      %v4289 = vpack.c.b16 %v4241, %v4239
      %v4290 = vpack.c.b16 %v4242, %v4240
      %v4291 = vpack.c.b16 %v4245, %v4243
      %v4292 = vpack.c.b16 %v4246, %v4244
      %v4293 = vpack.c.b16 %v4249, %v4247
      %v4294 = vpack.c.b16 %v4250, %v4248
      %v4295 = vpack.c.b16 %v4253, %v4251
      %v4296 = vpack.c.b16 %v4254, %v4252
      %v4297 = vpack.c.b16 %v4257, %v4255
      %v4298 = vpack.c.b16 %v4258, %v4256
      %v4299 = vpack.c.b16 %v4261, %v4259
      %v4300 = vpack.c.b16 %v4262, %v4260
      %v4301 = vpack.c.b16 %v4265, %v4263
      %v4302 = vpack.c.b16 %v4266, %v4264
      %v4303 = vpack.c.b16 %v4269, %v4267
      %v4304 = vpack.c.b16 %v4270, %v4268
      %v4305 = vpack.c.b16 %v4273, %v4271
      %v4306 = vpack.c.b16 %v4274, %v4272
      %4339 = vmatprep.subr.bf16.mxu0 0
      %4340 = vmatpush1.bf16.msra.mxu0 %v3659
      %4341 = vmatprep.subr.bf16.mxu0 0
      %4342 = vmatpush1.bf16.msra.mxu0 %v3658
      %4343 = vmatprep.subr.bf16.mxu0 0
      %4344 = vmatpush1.bf16.msra.mxu0 %v3657
      %4345 = vmatprep.subr.bf16.mxu0 0
      %4346 = vmatpush1.bf16.msra.mxu0 %v3656
      %4347 = vmatprep.subr.bf16.mxu0 0
      %4348 = vmatpush1.bf16.msra.mxu0 %v3655
      %4349 = vmatprep.subr.bf16.mxu0 0
      %4350 = vmatpush1.bf16.msra.mxu0 %v3654
      %4351 = vmatprep.subr.bf16.mxu0 0
      %4352 = vmatpush1.bf16.msra.mxu0 %v3653
      %4353 = vmatprep.subr.bf16.mxu0 0
      %4354 = vmatpush1.bf16.msra.mxu0 %v3652
      %4355 = vmatprep.subr.bf16.mxu0 0
      %4356 = vmatpush2.bf16.msra.mxu0 %v3667
      %4357 = vmatprep.subr.bf16.mxu0 0
      %4358 = vmatpush2.bf16.msra.mxu0 %v3666
      %4359 = vmatprep.subr.bf16.mxu0 0
      %4360 = vmatpush2.bf16.msra.mxu0 %v3665
      %4361 = vmatprep.subr.bf16.mxu0 0
      %4362 = vmatpush2.bf16.msra.mxu0 %v3664
      %4363 = vmatprep.subr.bf16.mxu0 0
      %4364 = vmatpush2.bf16.msra.mxu0 %v3663
      %4365 = vmatprep.subr.bf16.mxu0 0
      %4366 = vmatpush2.bf16.msra.mxu0 %v3662
      %4367 = vmatprep.subr.bf16.mxu0 0
      %4368 = vmatpush2.bf16.msra.mxu0 %v3661
      %4369 = vmatprep.subr.bf16.mxu0 0
      %4370 = vmatpush2.bf16.msra.mxu0 %v3660
      %4371 = vmatprep.mubr.bf16.mxu0 %v4276
      %4372 = vmatmul.mubr.bf16.gmra.mxu0 %v4275
      %v4373 = vpop.f32.mrf.mxu0
      %v4374 = vadd.f32 %v4053, %v4373
      %v4375 = vpop.f32.mrf.mxu0
      %v4376 = vpop.f32.mrf.mxu0
      %v4377 = vadd.f32 %v4056, %v4376
      %v4378 = vpop.f32.mrf.mxu0
      %4379 = vmatprep.mubr.bf16.mxu0 %v4278
      %4380 = vmatmul.mubr.bf16.gmra.mxu0 %v4277
      %v4381 = vpop.f32.mrf.mxu0
      %v4382 = vadd.f32 %v4061, %v4381
      %v4383 = vpop.f32.mrf.mxu0
      %v4384 = vpop.f32.mrf.mxu0
      %v4385 = vadd.f32 %v4064, %v4384
      %v4386 = vpop.f32.mrf.mxu0
      %4387 = vmatprep.mubr.bf16.mxu0 %v4280
      %4388 = vmatmul.mubr.bf16.gmra.mxu0 %v4279
      %v4389 = vpop.f32.mrf.mxu0
      %v4390 = vadd.f32 %v4069, %v4389
      %v4391 = vpop.f32.mrf.mxu0
      %v4392 = vpop.f32.mrf.mxu0
      %v4393 = vadd.f32 %v4072, %v4392
      %v4394 = vpop.f32.mrf.mxu0
      %4395 = vmatprep.mubr.bf16.mxu0 %v4282
      %4396 = vmatmul.mubr.bf16.gmra.mxu0 %v4281
      %v4397 = vpop.f32.mrf.mxu0
      %v4398 = vadd.f32 %v4077, %v4397
      %v4399 = vpop.f32.mrf.mxu0
      %v4400 = vpop.f32.mrf.mxu0
      %v4401 = vadd.f32 %v4080, %v4400
      %v4402 = vpop.f32.mrf.mxu0
      %4403 = vmatprep.mubr.bf16.mxu0 %v4284
      %4404 = vmatmul.mubr.bf16.gmra.mxu0 %v4283
      %v4405 = vpop.f32.mrf.mxu0
      %v4406 = vadd.f32 %v4085, %v4405
      %v4407 = vpop.f32.mrf.mxu0
      %v4408 = vpop.f32.mrf.mxu0
      %v4409 = vadd.f32 %v4088, %v4408
      %v4410 = vpop.f32.mrf.mxu0
      %4411 = vmatprep.mubr.bf16.mxu0 %v4286
      %4412 = vmatmul.mubr.bf16.gmra.mxu0 %v4285
      %v4413 = vpop.f32.mrf.mxu0
      %v4414 = vadd.f32 %v4093, %v4413
      %v4415 = vpop.f32.mrf.mxu0
      %v4416 = vpop.f32.mrf.mxu0
      %v4417 = vadd.f32 %v4096, %v4416
      %v4418 = vpop.f32.mrf.mxu0
      %4419 = vmatprep.mubr.bf16.mxu0 %v4288
      %4420 = vmatmul.mubr.bf16.gmra.mxu0 %v4287
      %v4421 = vpop.f32.mrf.mxu0
      %v4422 = vadd.f32 %v4101, %v4421
      %v4423 = vpop.f32.mrf.mxu0
      %v4424 = vpop.f32.mrf.mxu0
      %v4425 = vadd.f32 %v4104, %v4424
      %v4426 = vpop.f32.mrf.mxu0
      %4427 = vmatprep.mubr.bf16.mxu0 %v4290
      %4428 = vmatmul.mubr.bf16.gmra.mxu0 %v4289
      %v4429 = vpop.f32.mrf.mxu0
      %v4430 = vadd.f32 %v4109, %v4429
      %v4431 = vpop.f32.mrf.mxu0
      %v4432 = vpop.f32.mrf.mxu0
      %v4433 = vadd.f32 %v4112, %v4432
      %v4434 = vpop.f32.mrf.mxu0
      %4435 = vmatprep.mubr.bf16.mxu0 %v4292
      %4436 = vmatmul.mubr.bf16.gmra.mxu0 %v4291
      %v4437 = vpop.f32.mrf.mxu0
      %v4438 = vadd.f32 %v4117, %v4437
      %v4439 = vpop.f32.mrf.mxu0
      %v4440 = vpop.f32.mrf.mxu0
      %v4441 = vadd.f32 %v4120, %v4440
      %v4442 = vpop.f32.mrf.mxu0
      %4443 = vmatprep.mubr.bf16.mxu0 %v4294
      %4444 = vmatmul.mubr.bf16.gmra.mxu0 %v4293
      %v4445 = vpop.f32.mrf.mxu0
      %v4446 = vadd.f32 %v4125, %v4445
      %v4447 = vpop.f32.mrf.mxu0
      %v4448 = vpop.f32.mrf.mxu0
      %v4449 = vadd.f32 %v4128, %v4448
      %v4450 = vpop.f32.mrf.mxu0
      %4451 = vmatprep.mubr.bf16.mxu0 %v4296
      %4452 = vmatmul.mubr.bf16.gmra.mxu0 %v4295
      %v4453 = vpop.f32.mrf.mxu0
      %v4454 = vadd.f32 %v4133, %v4453
      %v4455 = vpop.f32.mrf.mxu0
      %v4456 = vpop.f32.mrf.mxu0
      %v4457 = vadd.f32 %v4136, %v4456
      %v4458 = vpop.f32.mrf.mxu0
      %4459 = vmatprep.mubr.bf16.mxu0 %v4298
      %4460 = vmatmul.mubr.bf16.gmra.mxu0 %v4297
      %v4461 = vpop.f32.mrf.mxu0
      %v4462 = vadd.f32 %v4141, %v4461
      %v4463 = vpop.f32.mrf.mxu0
      %v4464 = vpop.f32.mrf.mxu0
      %v4465 = vadd.f32 %v4144, %v4464
      %v4466 = vpop.f32.mrf.mxu0
      %4467 = vmatprep.mubr.bf16.mxu0 %v4300
      %4468 = vmatmul.mubr.bf16.gmra.mxu0 %v4299
      %v4469 = vpop.f32.mrf.mxu0
      %v4470 = vadd.f32 %v4149, %v4469
      %v4471 = vpop.f32.mrf.mxu0
      %v4472 = vpop.f32.mrf.mxu0
      %v4473 = vadd.f32 %v4152, %v4472
      %v4474 = vpop.f32.mrf.mxu0
      %4475 = vmatprep.mubr.bf16.mxu0 %v4302
      %4476 = vmatmul.mubr.bf16.gmra.mxu0 %v4301
      %v4477 = vpop.f32.mrf.mxu0
      %v4478 = vadd.f32 %v4157, %v4477
      %v4479 = vpop.f32.mrf.mxu0
      %v4480 = vpop.f32.mrf.mxu0
      %v4481 = vadd.f32 %v4160, %v4480
      %v4482 = vpop.f32.mrf.mxu0
      %4483 = vmatprep.mubr.bf16.mxu0 %v4304
      %4484 = vmatmul.mubr.bf16.gmra.mxu0 %v4303
      %v4485 = vpop.f32.mrf.mxu0
      %v4486 = vadd.f32 %v4165, %v4485
      %v4487 = vpop.f32.mrf.mxu0
      %v4488 = vpop.f32.mrf.mxu0
      %v4489 = vadd.f32 %v4168, %v4488
      %v4490 = vpop.f32.mrf.mxu0
      %4491 = vmatprep.mubr.bf16.mxu0 %v4306
      %4492 = vmatmul.mubr.bf16.gmra.mxu0 %v4305
      %v4493 = vpop.f32.mrf.mxu0
      %v4494 = vadd.f32 %v4173, %v4493
      %v4495 = vpop.f32.mrf.mxu0
      %v4496 = vpop.f32.mrf.mxu0
      %v4497 = vadd.f32 %v4176, %v4496
      %v4498 = vpop.f32.mrf.mxu0
      %4499 = vdwg.mxu0
      %v4500 = vlaneseq
      %v4501 = vshrl.u32 %v4500, 7
      %v4502 = vsub.s32 2, %v4501
      %v4503 = vrot.slane %v3615, %v4502
      %v4504 = vadd.f32 %v3457, %v4503
      %v4505 = vadd.f32 %v3461, %v4503
      %v4506 = vadd.f32 %v3467, %v4503
      %v4507 = vadd.f32 %v3471, %v4503
      %v4508 = vadd.f32 %v3477, %v4503
      %v4509 = vadd.f32 %v3481, %v4503
      %v4510 = vadd.f32 %v3487, %v4503
      %v4511 = vadd.f32 %v3491, %v4503
      %v4512 = vadd.f32 %v3497, %v4503
      %v4513 = vadd.f32 %v3501, %v4503
      %v4514 = vadd.f32 %v3507, %v4503
      %v4515 = vadd.f32 %v3511, %v4503
      %v4516 = vadd.f32 %v3517, %v4503
      %v4517 = vadd.f32 %v3521, %v4503
      %v4518 = vadd.f32 %v3527, %v4503
      %v4519 = vadd.f32 %v3531, %v4503
      %v4520 = vadd.f32 %v3537, %v4503
      %v4521 = vadd.f32 %v3541, %v4503
      %v4522 = vadd.f32 %v3547, %v4503
      %v4523 = vadd.f32 %v3551, %v4503
      %v4524 = vadd.f32 %v3557, %v4503
      %v4525 = vadd.f32 %v3561, %v4503
      %v4526 = vadd.f32 %v3567, %v4503
      %v4527 = vadd.f32 %v3571, %v4503
      %v4528 = vadd.f32 %v3577, %v4503
      %v4529 = vadd.f32 %v3581, %v4503
      %v4530 = vadd.f32 %v3587, %v4503
      %v4531 = vadd.f32 %v3591, %v4503
      %v4532 = vadd.f32 %v3597, %v4503
      %v4533 = vadd.f32 %v3601, %v4503
      %v4534 = vadd.f32 %v3607, %v4503
      %v4535 = vadd.f32 %v3611, %v4503
      %v4536 = vpack.c.bf16 %v4505, %v4504
      %v4537 = vpack.c.bf16 %v4507, %v4506
      %v4538 = vpack.c.bf16 %v4509, %v4508
      %v4539 = vpack.c.bf16 %v4511, %v4510
      %v4540 = vpack.c.bf16 %v4513, %v4512
      %v4541 = vpack.c.bf16 %v4515, %v4514
      %v4542 = vpack.c.bf16 %v4517, %v4516
      %v4543 = vpack.c.bf16 %v4519, %v4518
      %v4544 = vpack.c.bf16 %v4521, %v4520
      %v4545 = vpack.c.bf16 %v4523, %v4522
      %v4546 = vpack.c.bf16 %v4525, %v4524
      %v4547 = vpack.c.bf16 %v4527, %v4526
      %v4548 = vpack.c.bf16 %v4529, %v4528
      %v4549 = vpack.c.bf16 %v4531, %v4530
      %v4550 = vpack.c.bf16 %v4533, %v4532
      %v4551 = vpack.c.bf16 %v4535, %v4534
      %s4552 = sadd.s32 128, %s3668
      %s4553 = smul.addr %s4552, 4
      %s4554 = scalar_lea.vmem %s7, %s4553
      %v4555 = vld [vmem:[%s4554] sm:$0xff]
      %v4556 = vld [vmem:[%s4554 + $0x8] sm:$0xff]
      %v4557 = vld [vmem:[%s4554 + $0x10] sm:$0xff]
      %v4558 = vld [vmem:[%s4554 + $0x18] sm:$0xff]
      %v4559 = vld [vmem:[%s4554 + $0x20] sm:$0xff]
      %v4560 = vld [vmem:[%s4554 + $0x28] sm:$0xff]
      %v4561 = vld [vmem:[%s4554 + $0x30] sm:$0xff]
      %v4562 = vld [vmem:[%s4554 + $0x38] sm:$0xff]
      %v4563 = vld [vmem:[%s4554 + $0x40] sm:$0xff]
      %v4564 = vld [vmem:[%s4554 + $0x48] sm:$0xff]
      %v4565 = vld [vmem:[%s4554 + $0x50] sm:$0xff]
      %v4566 = vld [vmem:[%s4554 + $0x58] sm:$0xff]
      %v4567 = vld [vmem:[%s4554 + $0x60] sm:$0xff]
      %v4568 = vld [vmem:[%s4554 + $0x68] sm:$0xff]
      %v4569 = vld [vmem:[%s4554 + $0x70] sm:$0xff]
      %v4570 = vld [vmem:[%s4554 + $0x78] sm:$0xff]
      %v4571 = vld [vmem:[%s4554 + $0x80] sm:$0xff]
      %v4572 = vld [vmem:[%s4554 + $0x88] sm:$0xff]
      %v4573 = vld [vmem:[%s4554 + $0x90] sm:$0xff]
      %v4574 = vld [vmem:[%s4554 + $0x98] sm:$0xff]
      %v4575 = vld [vmem:[%s4554 + $0xa0] sm:$0xff]
      %v4576 = vld [vmem:[%s4554 + $0xa8] sm:$0xff]
      %v4577 = vld [vmem:[%s4554 + $0xb0] sm:$0xff]
      %v4578 = vld [vmem:[%s4554 + $0xb8] sm:$0xff]
      %v4579 = vld [vmem:[%s4554 + $0xc0] sm:$0xff]
      %v4580 = vld [vmem:[%s4554 + $0xc8] sm:$0xff]
      %v4581 = vld [vmem:[%s4554 + $0xd0] sm:$0xff]
      %v4582 = vld [vmem:[%s4554 + $0xd8] sm:$0xff]
      %v4583 = vld [vmem:[%s4554 + $0xe0] sm:$0xff]
      %v4584 = vld [vmem:[%s4554 + $0xe8] sm:$0xff]
      %v4585 = vld [vmem:[%s4554 + $0xf0] sm:$0xff]
      %v4586 = vld [vmem:[%s4554 + $0xf8] sm:$0xff]
      %v4619 = vunpack.c.l.b16 %v4555
      %v4620 = vunpack.c.h.b16 %v4555
      %v4621 = vunpack.c.l.b16 %v4556
      %v4622 = vunpack.c.h.b16 %v4556
      %v4623 = vunpack.c.l.b16 %v4557
      %v4624 = vunpack.c.h.b16 %v4557
      %v4625 = vunpack.c.l.b16 %v4558
      %v4626 = vunpack.c.h.b16 %v4558
      %v4627 = vunpack.c.l.b16 %v4559
      %v4628 = vunpack.c.h.b16 %v4559
      %v4629 = vunpack.c.l.b16 %v4560
      %v4630 = vunpack.c.h.b16 %v4560
      %v4631 = vunpack.c.l.b16 %v4561
      %v4632 = vunpack.c.h.b16 %v4561
      %v4633 = vunpack.c.l.b16 %v4562
      %v4634 = vunpack.c.h.b16 %v4562
      %v4635 = vunpack.c.l.b16 %v4563
      %v4636 = vunpack.c.h.b16 %v4563
      %v4637 = vunpack.c.l.b16 %v4564
      %v4638 = vunpack.c.h.b16 %v4564
      %v4639 = vunpack.c.l.b16 %v4565
      %v4640 = vunpack.c.h.b16 %v4565
      %v4641 = vunpack.c.l.b16 %v4566
      %v4642 = vunpack.c.h.b16 %v4566
      %v4643 = vunpack.c.l.b16 %v4567
      %v4644 = vunpack.c.h.b16 %v4567
      %v4645 = vunpack.c.l.b16 %v4568
      %v4646 = vunpack.c.h.b16 %v4568
      %v4647 = vunpack.c.l.b16 %v4569
      %v4648 = vunpack.c.h.b16 %v4569
      %v4649 = vunpack.c.l.b16 %v4570
      %v4650 = vunpack.c.h.b16 %v4570
      %v4651 = vunpack.c.l.b16 %v4571
      %v4652 = vunpack.c.h.b16 %v4571
      %v4653 = vunpack.c.l.b16 %v4572
      %v4654 = vunpack.c.h.b16 %v4572
      %v4655 = vunpack.c.l.b16 %v4573
      %v4656 = vunpack.c.h.b16 %v4573
      %v4657 = vunpack.c.l.b16 %v4574
      %v4658 = vunpack.c.h.b16 %v4574
      %v4659 = vunpack.c.l.b16 %v4575
      %v4660 = vunpack.c.h.b16 %v4575
      %v4661 = vunpack.c.l.b16 %v4576
      %v4662 = vunpack.c.h.b16 %v4576
      %v4663 = vunpack.c.l.b16 %v4577
      %v4664 = vunpack.c.h.b16 %v4577
      %v4665 = vunpack.c.l.b16 %v4578
      %v4666 = vunpack.c.h.b16 %v4578
      %v4667 = vunpack.c.l.b16 %v4579
      %v4668 = vunpack.c.h.b16 %v4579
      %v4669 = vunpack.c.l.b16 %v4580
      %v4670 = vunpack.c.h.b16 %v4580
      %v4671 = vunpack.c.l.b16 %v4581
      %v4672 = vunpack.c.h.b16 %v4581
      %v4673 = vunpack.c.l.b16 %v4582
      %v4674 = vunpack.c.h.b16 %v4582
      %v4675 = vunpack.c.l.b16 %v4583
      %v4676 = vunpack.c.h.b16 %v4583
      %v4677 = vunpack.c.l.b16 %v4584
      %v4678 = vunpack.c.h.b16 %v4584
      %v4679 = vunpack.c.l.b16 %v4585
      %v4680 = vunpack.c.h.b16 %v4585
      %v4681 = vunpack.c.l.b16 %v4586
      %v4682 = vunpack.c.h.b16 %v4586
      %v4683 = vpack.c.b16 %v4621, %v4619
      %v4684 = vpack.c.b16 %v4622, %v4620
      %v4685 = vpack.c.b16 %v4625, %v4623
      %v4686 = vpack.c.b16 %v4626, %v4624
      %v4687 = vpack.c.b16 %v4629, %v4627
      %v4688 = vpack.c.b16 %v4630, %v4628
      %v4689 = vpack.c.b16 %v4633, %v4631
      %v4690 = vpack.c.b16 %v4634, %v4632
      %v4691 = vpack.c.b16 %v4637, %v4635
      %v4692 = vpack.c.b16 %v4638, %v4636
      %v4693 = vpack.c.b16 %v4641, %v4639
      %v4694 = vpack.c.b16 %v4642, %v4640
      %v4695 = vpack.c.b16 %v4645, %v4643
      %v4696 = vpack.c.b16 %v4646, %v4644
      %v4697 = vpack.c.b16 %v4649, %v4647
      %v4698 = vpack.c.b16 %v4650, %v4648
      %v4699 = vpack.c.b16 %v4653, %v4651
      %v4700 = vpack.c.b16 %v4654, %v4652
      %v4701 = vpack.c.b16 %v4657, %v4655
      %v4702 = vpack.c.b16 %v4658, %v4656
      %v4703 = vpack.c.b16 %v4661, %v4659
      %v4704 = vpack.c.b16 %v4662, %v4660
      %v4705 = vpack.c.b16 %v4665, %v4663
      %v4706 = vpack.c.b16 %v4666, %v4664
      %v4707 = vpack.c.b16 %v4669, %v4667
      %v4708 = vpack.c.b16 %v4670, %v4668
      %v4709 = vpack.c.b16 %v4673, %v4671
      %v4710 = vpack.c.b16 %v4674, %v4672
      %v4711 = vpack.c.b16 %v4677, %v4675
      %v4712 = vpack.c.b16 %v4678, %v4676
      %v4713 = vpack.c.b16 %v4681, %v4679
      %v4714 = vpack.c.b16 %v4682, %v4680
      %4747 = vmatprep.subr.bf16.mxu0 0
      %4748 = vmatpush1.bf16.msra.mxu0 %v4543
      %4749 = vmatprep.subr.bf16.mxu0 0
      %4750 = vmatpush1.bf16.msra.mxu0 %v4542
      %4751 = vmatprep.subr.bf16.mxu0 0
      %4752 = vmatpush1.bf16.msra.mxu0 %v4541
      %4753 = vmatprep.subr.bf16.mxu0 0
      %4754 = vmatpush1.bf16.msra.mxu0 %v4540
      %4755 = vmatprep.subr.bf16.mxu0 0
      %4756 = vmatpush1.bf16.msra.mxu0 %v4539
      %4757 = vmatprep.subr.bf16.mxu0 0
      %4758 = vmatpush1.bf16.msra.mxu0 %v4538
      %4759 = vmatprep.subr.bf16.mxu0 0
      %4760 = vmatpush1.bf16.msra.mxu0 %v4537
      %4761 = vmatprep.subr.bf16.mxu0 0
      %4762 = vmatpush1.bf16.msra.mxu0 %v4536
      %4763 = vmatprep.subr.bf16.mxu0 0
      %4764 = vmatpush2.bf16.msra.mxu0 %v4551
      %4765 = vmatprep.subr.bf16.mxu0 0
      %4766 = vmatpush2.bf16.msra.mxu0 %v4550
      %4767 = vmatprep.subr.bf16.mxu0 0
      %4768 = vmatpush2.bf16.msra.mxu0 %v4549
      %4769 = vmatprep.subr.bf16.mxu0 0
      %4770 = vmatpush2.bf16.msra.mxu0 %v4548
      %4771 = vmatprep.subr.bf16.mxu0 0
      %4772 = vmatpush2.bf16.msra.mxu0 %v4547
      %4773 = vmatprep.subr.bf16.mxu0 0
      %4774 = vmatpush2.bf16.msra.mxu0 %v4546
      %4775 = vmatprep.subr.bf16.mxu0 0
      %4776 = vmatpush2.bf16.msra.mxu0 %v4545
      %4777 = vmatprep.subr.bf16.mxu0 0
      %4778 = vmatpush2.bf16.msra.mxu0 %v4544
      %4779 = vmatprep.mubr.bf16.mxu0 %v4684
      %4780 = vmatmul.mubr.bf16.gmra.mxu0 %v4683
      %v4781 = vpop.f32.mrf.mxu0
      %v4782 = vadd.f32 0.0, %v4781
      %v4783 = vpop.f32.mrf.mxu0
      %v4784 = vpop.f32.mrf.mxu0
      %v4785 = vadd.f32 0.0, %v4784
      %v4786 = vpop.f32.mrf.mxu0
      %4787 = vmatprep.mubr.bf16.mxu0 %v4686
      %4788 = vmatmul.mubr.bf16.gmra.mxu0 %v4685
      %v4789 = vpop.f32.mrf.mxu0
      %v4790 = vadd.f32 0.0, %v4789
      %v4791 = vpop.f32.mrf.mxu0
      %v4792 = vpop.f32.mrf.mxu0
      %v4793 = vadd.f32 0.0, %v4792
      %v4794 = vpop.f32.mrf.mxu0
      %4795 = vmatprep.mubr.bf16.mxu0 %v4688
      %4796 = vmatmul.mubr.bf16.gmra.mxu0 %v4687
      %v4797 = vpop.f32.mrf.mxu0
      %v4798 = vadd.f32 0.0, %v4797
      %v4799 = vpop.f32.mrf.mxu0
      %v4800 = vpop.f32.mrf.mxu0
      %v4801 = vadd.f32 0.0, %v4800
      %v4802 = vpop.f32.mrf.mxu0
      %4803 = vmatprep.mubr.bf16.mxu0 %v4690
      %4804 = vmatmul.mubr.bf16.gmra.mxu0 %v4689
      %v4805 = vpop.f32.mrf.mxu0
      %v4806 = vadd.f32 0.0, %v4805
      %v4807 = vpop.f32.mrf.mxu0
      %v4808 = vpop.f32.mrf.mxu0
      %v4809 = vadd.f32 0.0, %v4808
      %v4810 = vpop.f32.mrf.mxu0
      %4811 = vmatprep.mubr.bf16.mxu0 %v4692
      %4812 = vmatmul.mubr.bf16.gmra.mxu0 %v4691
      %v4813 = vpop.f32.mrf.mxu0
      %v4814 = vadd.f32 0.0, %v4813
      %v4815 = vpop.f32.mrf.mxu0
      %v4816 = vpop.f32.mrf.mxu0
      %v4817 = vadd.f32 0.0, %v4816
      %v4818 = vpop.f32.mrf.mxu0
      %4819 = vmatprep.mubr.bf16.mxu0 %v4694
      %4820 = vmatmul.mubr.bf16.gmra.mxu0 %v4693
      %v4821 = vpop.f32.mrf.mxu0
      %v4822 = vadd.f32 0.0, %v4821
      %v4823 = vpop.f32.mrf.mxu0
      %v4824 = vpop.f32.mrf.mxu0
      %v4825 = vadd.f32 0.0, %v4824
      %v4826 = vpop.f32.mrf.mxu0
      %4827 = vmatprep.mubr.bf16.mxu0 %v4696
      %4828 = vmatmul.mubr.bf16.gmra.mxu0 %v4695
      %v4829 = vpop.f32.mrf.mxu0
      %v4830 = vadd.f32 0.0, %v4829
      %v4831 = vpop.f32.mrf.mxu0
      %v4832 = vpop.f32.mrf.mxu0
      %v4833 = vadd.f32 0.0, %v4832
      %v4834 = vpop.f32.mrf.mxu0
      %4835 = vmatprep.mubr.bf16.mxu0 %v4698
      %4836 = vmatmul.mubr.bf16.gmra.mxu0 %v4697
      %v4837 = vpop.f32.mrf.mxu0
      %v4838 = vadd.f32 0.0, %v4837
      %v4839 = vpop.f32.mrf.mxu0
      %v4840 = vpop.f32.mrf.mxu0
      %v4841 = vadd.f32 0.0, %v4840
      %v4842 = vpop.f32.mrf.mxu0
      %4843 = vmatprep.mubr.bf16.mxu0 %v4700
      %4844 = vmatmul.mubr.bf16.gmra.mxu0 %v4699
      %v4845 = vpop.f32.mrf.mxu0
      %v4846 = vadd.f32 0.0, %v4845
      %v4847 = vpop.f32.mrf.mxu0
      %v4848 = vpop.f32.mrf.mxu0
      %v4849 = vadd.f32 0.0, %v4848
      %v4850 = vpop.f32.mrf.mxu0
      %4851 = vmatprep.mubr.bf16.mxu0 %v4702
      %4852 = vmatmul.mubr.bf16.gmra.mxu0 %v4701
      %v4853 = vpop.f32.mrf.mxu0
      %v4854 = vadd.f32 0.0, %v4853
      %v4855 = vpop.f32.mrf.mxu0
      %v4856 = vpop.f32.mrf.mxu0
      %v4857 = vadd.f32 0.0, %v4856
      %v4858 = vpop.f32.mrf.mxu0
      %4859 = vmatprep.mubr.bf16.mxu0 %v4704
      %4860 = vmatmul.mubr.bf16.gmra.mxu0 %v4703
      %v4861 = vpop.f32.mrf.mxu0
      %v4862 = vadd.f32 0.0, %v4861
      %v4863 = vpop.f32.mrf.mxu0
      %v4864 = vpop.f32.mrf.mxu0
      %v4865 = vadd.f32 0.0, %v4864
      %v4866 = vpop.f32.mrf.mxu0
      %4867 = vmatprep.mubr.bf16.mxu0 %v4706
      %4868 = vmatmul.mubr.bf16.gmra.mxu0 %v4705
      %v4869 = vpop.f32.mrf.mxu0
      %v4870 = vadd.f32 0.0, %v4869
      %v4871 = vpop.f32.mrf.mxu0
      %v4872 = vpop.f32.mrf.mxu0
      %v4873 = vadd.f32 0.0, %v4872
      %v4874 = vpop.f32.mrf.mxu0
      %4875 = vmatprep.mubr.bf16.mxu0 %v4708
      %4876 = vmatmul.mubr.bf16.gmra.mxu0 %v4707
      %v4877 = vpop.f32.mrf.mxu0
      %v4878 = vadd.f32 0.0, %v4877
      %v4879 = vpop.f32.mrf.mxu0
      %v4880 = vpop.f32.mrf.mxu0
      %v4881 = vadd.f32 0.0, %v4880
      %v4882 = vpop.f32.mrf.mxu0
      %4883 = vmatprep.mubr.bf16.mxu0 %v4710
      %4884 = vmatmul.mubr.bf16.gmra.mxu0 %v4709
      %v4885 = vpop.f32.mrf.mxu0
      %v4886 = vadd.f32 0.0, %v4885
      %v4887 = vpop.f32.mrf.mxu0
      %v4888 = vpop.f32.mrf.mxu0
      %v4889 = vadd.f32 0.0, %v4888
      %v4890 = vpop.f32.mrf.mxu0
      %4891 = vmatprep.mubr.bf16.mxu0 %v4712
      %4892 = vmatmul.mubr.bf16.gmra.mxu0 %v4711
      %v4893 = vpop.f32.mrf.mxu0
      %v4894 = vadd.f32 0.0, %v4893
      %v4895 = vpop.f32.mrf.mxu0
      %v4896 = vpop.f32.mrf.mxu0
      %v4897 = vadd.f32 0.0, %v4896
      %v4898 = vpop.f32.mrf.mxu0
      %4899 = vmatprep.mubr.bf16.mxu0 %v4714
      %4900 = vmatmul.mubr.bf16.gmra.mxu0 %v4713
      %v4901 = vpop.f32.mrf.mxu0
      %v4902 = vadd.f32 0.0, %v4901
      %v4903 = vpop.f32.mrf.mxu0
      %v4904 = vpop.f32.mrf.mxu0
      %v4905 = vadd.f32 0.0, %v4904
      %v4906 = vpop.f32.mrf.mxu0
      %4907 = vdwg.mxu0
      %v4908 = vadd.f32 %v4374, %v4782
      %v4909 = vadd.f32 %v4377, %v4785
      %v4910 = vadd.f32 %v4382, %v4790
      %v4911 = vadd.f32 %v4385, %v4793
      %v4912 = vadd.f32 %v4390, %v4798
      %v4913 = vadd.f32 %v4393, %v4801
      %v4914 = vadd.f32 %v4398, %v4806
      %v4915 = vadd.f32 %v4401, %v4809
      %v4916 = vadd.f32 %v4406, %v4814
      %v4917 = vadd.f32 %v4409, %v4817
      %v4918 = vadd.f32 %v4414, %v4822
      %v4919 = vadd.f32 %v4417, %v4825
      %v4920 = vadd.f32 %v4422, %v4830
      %v4921 = vadd.f32 %v4425, %v4833
      %v4922 = vadd.f32 %v4430, %v4838
      %v4923 = vadd.f32 %v4433, %v4841
      %v4924 = vadd.f32 %v4438, %v4846
      %v4925 = vadd.f32 %v4441, %v4849
      %v4926 = vadd.f32 %v4446, %v4854
      %v4927 = vadd.f32 %v4449, %v4857
      %v4928 = vadd.f32 %v4454, %v4862
      %v4929 = vadd.f32 %v4457, %v4865
      %v4930 = vadd.f32 %v4462, %v4870
      %v4931 = vadd.f32 %v4465, %v4873
      %v4932 = vadd.f32 %v4470, %v4878
      %v4933 = vadd.f32 %v4473, %v4881
      %v4934 = vadd.f32 %v4478, %v4886
      %v4935 = vadd.f32 %v4481, %v4889
      %v4936 = vadd.f32 %v4486, %v4894
      %v4937 = vadd.f32 %v4489, %v4897
      %v4938 = vadd.f32 %v4494, %v4902
      %v4939 = vadd.f32 %v4497, %v4905
      %v4940 = vlaneseq
      %v4941 = vshrl.u32 %v4940, 7
      %v4942 = vsub.s32 3, %v4941
      %v4943 = vrot.slane %v3615, %v4942
      %v4944 = vadd.f32 %v4908, %v4943
      %v4945 = vadd.f32 %v4909, %v4943
      %v4946 = vadd.f32 %v4910, %v4943
      %v4947 = vadd.f32 %v4911, %v4943
      %v4948 = vadd.f32 %v4912, %v4943
      %v4949 = vadd.f32 %v4913, %v4943
      %v4950 = vadd.f32 %v4914, %v4943
      %v4951 = vadd.f32 %v4915, %v4943
      %v4952 = vadd.f32 %v4916, %v4943
      %v4953 = vadd.f32 %v4917, %v4943
      %v4954 = vadd.f32 %v4918, %v4943
      %v4955 = vadd.f32 %v4919, %v4943
      %v4956 = vadd.f32 %v4920, %v4943
      %v4957 = vadd.f32 %v4921, %v4943
      %v4958 = vadd.f32 %v4922, %v4943
      %v4959 = vadd.f32 %v4923, %v4943
      %v4960 = vadd.f32 %v4924, %v4943
      %v4961 = vadd.f32 %v4925, %v4943
      %v4962 = vadd.f32 %v4926, %v4943
      %v4963 = vadd.f32 %v4927, %v4943
      %v4964 = vadd.f32 %v4928, %v4943
      %v4965 = vadd.f32 %v4929, %v4943
      %v4966 = vadd.f32 %v4930, %v4943
      %v4967 = vadd.f32 %v4931, %v4943
      %v4968 = vadd.f32 %v4932, %v4943
      %v4969 = vadd.f32 %v4933, %v4943
      %v4970 = vadd.f32 %v4934, %v4943
      %v4971 = vadd.f32 %v4935, %v4943
      %v4972 = vadd.f32 %v4936, %v4943
      %v4973 = vadd.f32 %v4937, %v4943
      %v4974 = vadd.f32 %v4938, %v4943
      %v4975 = vadd.f32 %v4939, %v4943
      %v4976 = vmax.f32 %v4944, 0.0
      %v4977 = vmax.f32 %v4945, 0.0
      %v4978 = vmax.f32 %v4946, 0.0
      %v4979 = vmax.f32 %v4947, 0.0
      %v4980 = vmax.f32 %v4948, 0.0
      %v4981 = vmax.f32 %v4949, 0.0
      %v4982 = vmax.f32 %v4950, 0.0
      %v4983 = vmax.f32 %v4951, 0.0
      %v4984 = vmax.f32 %v4952, 0.0
      %v4985 = vmax.f32 %v4953, 0.0
      %v4986 = vmax.f32 %v4954, 0.0
      %v4987 = vmax.f32 %v4955, 0.0
      %v4988 = vmax.f32 %v4956, 0.0
      %v4989 = vmax.f32 %v4957, 0.0
      %v4990 = vmax.f32 %v4958, 0.0
      %v4991 = vmax.f32 %v4959, 0.0
      %v4992 = vmax.f32 %v4960, 0.0
      %v4993 = vmax.f32 %v4961, 0.0
      %v4994 = vmax.f32 %v4962, 0.0
      %v4995 = vmax.f32 %v4963, 0.0
      %v4996 = vmax.f32 %v4964, 0.0
      %v4997 = vmax.f32 %v4965, 0.0
      %v4998 = vmax.f32 %v4966, 0.0
      %v4999 = vmax.f32 %v4967, 0.0
      %v5000 = vmax.f32 %v4968, 0.0
      %v5001 = vmax.f32 %v4969, 0.0
      %v5002 = vmax.f32 %v4970, 0.0
      %v5003 = vmax.f32 %v4971, 0.0
      %v5004 = vmax.f32 %v4972, 0.0
      %v5005 = vmax.f32 %v4973, 0.0
      %v5006 = vmax.f32 %v4974, 0.0
      %v5007 = vmax.f32 %v4975, 0.0
      %v5008 = vrot.slane %v4976, 7
      %v5009 = vrot.slane %v4977, 7
      %v5010 = vrot.slane %v4978, 7
      %v5011 = vrot.slane %v4979, 7
      %v5012 = vrot.slane %v4980, 7
      %v5013 = vrot.slane %v4981, 7
      %v5014 = vrot.slane %v4982, 7
      %v5015 = vrot.slane %v4983, 7
      %v5016 = vrot.slane %v4984, 7
      %v5017 = vrot.slane %v4985, 7
      %v5018 = vrot.slane %v4986, 7
      %v5019 = vrot.slane %v4987, 7
      %v5020 = vrot.slane %v4988, 7
      %v5021 = vrot.slane %v4989, 7
      %v5022 = vrot.slane %v4990, 7
      %v5023 = vrot.slane %v4991, 7
      %v5024 = vrot.slane %v4992, 7
      %v5025 = vrot.slane %v4993, 7
      %v5026 = vrot.slane %v4994, 7
      %v5027 = vrot.slane %v4995, 7
      %v5028 = vrot.slane %v4996, 7
      %v5029 = vrot.slane %v4997, 7
      %v5030 = vrot.slane %v4998, 7
      %v5031 = vrot.slane %v4999, 7
      %v5032 = vrot.slane %v5000, 7
      %v5033 = vrot.slane %v5001, 7
      %v5034 = vrot.slane %v5002, 7
      %v5035 = vrot.slane %v5003, 7
      %v5036 = vrot.slane %v5004, 7
      %v5037 = vrot.slane %v5005, 7
      %v5038 = vrot.slane %v5006, 7
      %v5039 = vrot.slane %v5007, 7
      %vm5040 = vcmp.lt.s32.totalorder %v1084, 1
      %v5041 = vsel %vm5040, %v5038, %v5039
      %v5042 = vsel %vm5040, %v5037, %v5038
      %v5043 = vsel %vm5040, %v5036, %v5037
      %v5044 = vsel %vm5040, %v5035, %v5036
      %v5045 = vsel %vm5040, %v5034, %v5035
      %v5046 = vsel %vm5040, %v5033, %v5034
      %v5047 = vsel %vm5040, %v5032, %v5033
      %v5048 = vsel %vm5040, %v5031, %v5032
      %v5049 = vsel %vm5040, %v5030, %v5031
      %v5050 = vsel %vm5040, %v5029, %v5030
      %v5051 = vsel %vm5040, %v5028, %v5029
      %v5052 = vsel %vm5040, %v5027, %v5028
      %v5053 = vsel %vm5040, %v5026, %v5027
      %v5054 = vsel %vm5040, %v5025, %v5026
      %v5055 = vsel %vm5040, %v5024, %v5025
      %v5056 = vsel %vm5040, %v5023, %v5024
      %v5057 = vsel %vm5040, %v5022, %v5023
      %v5058 = vsel %vm5040, %v5021, %v5022
      %v5059 = vsel %vm5040, %v5020, %v5021
      %v5060 = vsel %vm5040, %v5019, %v5020
      %v5061 = vsel %vm5040, %v5018, %v5019
      %v5062 = vsel %vm5040, %v5017, %v5018
      %v5063 = vsel %vm5040, %v5016, %v5017
      %v5064 = vsel %vm5040, %v5015, %v5016
      %v5065 = vsel %vm5040, %v5014, %v5015
      %v5066 = vsel %vm5040, %v5013, %v5014
      %v5067 = vsel %vm5040, %v5012, %v5013
      %v5068 = vsel %vm5040, %v5011, %v5012
      %v5069 = vsel %vm5040, %v5010, %v5011
      %v5070 = vsel %vm5040, %v5009, %v5010
      %v5071 = vsel %vm5040, %v5008, %v5009
      %v5072 = vsel %vm5040, %v5039, %v5008
      %v5073 = vsel %vm3203, 0.0, %v5072
      %v5074 = vsel %vm3204, 0.0, %v5071
      %v5075 = vsel %vm3205, 0.0, %v5070
      %v5076 = vsel %vm3206, 0.0, %v5069
      %v5077 = vsel %vm3207, 0.0, %v5068
      %v5078 = vsel %vm3208, 0.0, %v5067
      %v5079 = vsel %vm3209, 0.0, %v5066
      %v5080 = vsel %vm3210, 0.0, %v5065
      %v5081 = vsel %vm3211, 0.0, %v5064
      %v5082 = vsel %vm3212, 0.0, %v5063
      %v5083 = vsel %vm3213, 0.0, %v5062
      %v5084 = vsel %vm3214, 0.0, %v5061
      %v5085 = vsel %vm3215, 0.0, %v5060
      %v5086 = vsel %vm3216, 0.0, %v5059
      %v5087 = vsel %vm3217, 0.0, %v5058
      %v5088 = vsel %vm3218, 0.0, %v5057
      %v5089 = vsel %vm3219, 0.0, %v5056
      %v5090 = vsel %vm3220, 0.0, %v5055
      %v5091 = vsel %vm3221, 0.0, %v5054
      %v5092 = vsel %vm3222, 0.0, %v5053
      %v5093 = vsel %vm3223, 0.0, %v5052
      %v5094 = vsel %vm3224, 0.0, %v5051
      %v5095 = vsel %vm3225, 0.0, %v5050
      %v5096 = vsel %vm3226, 0.0, %v5049
      %v5097 = vsel %vm3227, 0.0, %v5048
      %v5098 = vsel %vm3228, 0.0, %v5047
      %v5099 = vsel %vm3229, 0.0, %v5046
      %v5100 = vsel %vm3230, 0.0, %v5045
      %v5101 = vsel %vm3231, 0.0, %v5044
      %v5102 = vsel %vm3232, 0.0, %v5043
      %v5103 = vsel %vm3233, 0.0, %v5042
      %v5104 = vsel %vm3234, 0.0, %v5041
      %v5105 = vpack.c.bf16 %v5074, %v5073
      %v5106 = vpack.c.bf16 %v5076, %v5075
      %v5107 = vpack.c.bf16 %v5078, %v5077
      %v5108 = vpack.c.bf16 %v5080, %v5079
      %v5109 = vpack.c.bf16 %v5082, %v5081
      %v5110 = vpack.c.bf16 %v5084, %v5083
      %v5111 = vpack.c.bf16 %v5086, %v5085
      %v5112 = vpack.c.bf16 %v5088, %v5087
      %v5113 = vpack.c.bf16 %v5090, %v5089
      %v5114 = vpack.c.bf16 %v5092, %v5091
      %v5115 = vpack.c.bf16 %v5094, %v5093
      %v5116 = vpack.c.bf16 %v5096, %v5095
      %v5117 = vpack.c.bf16 %v5098, %v5097
      %v5118 = vpack.c.bf16 %v5100, %v5099
      %v5119 = vpack.c.bf16 %v5102, %v5101
      %v5120 = vpack.c.bf16 %v5104, %v5103
      %v5121 = vrot.slane %v4976, 1
      %v5122 = vrot.slane %v4977, 1
      %v5123 = vrot.slane %v4978, 1
      %v5124 = vrot.slane %v4979, 1
      %v5125 = vrot.slane %v4980, 1
      %v5126 = vrot.slane %v4981, 1
      %v5127 = vrot.slane %v4982, 1
      %v5128 = vrot.slane %v4983, 1
      %v5129 = vrot.slane %v4984, 1
      %v5130 = vrot.slane %v4985, 1
      %v5131 = vrot.slane %v4986, 1
      %v5132 = vrot.slane %v4987, 1
      %v5133 = vrot.slane %v4988, 1
      %v5134 = vrot.slane %v4989, 1
      %v5135 = vrot.slane %v4990, 1
      %v5136 = vrot.slane %v4991, 1
      %v5137 = vrot.slane %v4992, 1
      %v5138 = vrot.slane %v4993, 1
      %v5139 = vrot.slane %v4994, 1
      %v5140 = vrot.slane %v4995, 1
      %v5141 = vrot.slane %v4996, 1
      %v5142 = vrot.slane %v4997, 1
      %v5143 = vrot.slane %v4998, 1
      %v5144 = vrot.slane %v4999, 1
      %v5145 = vrot.slane %v5000, 1
      %v5146 = vrot.slane %v5001, 1
      %v5147 = vrot.slane %v5002, 1
      %v5148 = vrot.slane %v5003, 1
      %v5149 = vrot.slane %v5004, 1
      %v5150 = vrot.slane %v5005, 1
      %v5151 = vrot.slane %v5006, 1
      %v5152 = vrot.slane %v5007, 1
      %vm5153 = vcmp.lt.s32.totalorder %v1084, 7
      %v5154 = vsel %vm5153, %v5151, %v5152
      %v5155 = vsel %vm5153, %v5150, %v5151
      %v5156 = vsel %vm5153, %v5149, %v5150
      %v5157 = vsel %vm5153, %v5148, %v5149
      %v5158 = vsel %vm5153, %v5147, %v5148
      %v5159 = vsel %vm5153, %v5146, %v5147
      %v5160 = vsel %vm5153, %v5145, %v5146
      %v5161 = vsel %vm5153, %v5144, %v5145
      %v5162 = vsel %vm5153, %v5143, %v5144
      %v5163 = vsel %vm5153, %v5142, %v5143
      %v5164 = vsel %vm5153, %v5141, %v5142
      %v5165 = vsel %vm5153, %v5140, %v5141
      %v5166 = vsel %vm5153, %v5139, %v5140
      %v5167 = vsel %vm5153, %v5138, %v5139
      %v5168 = vsel %vm5153, %v5137, %v5138
      %v5169 = vsel %vm5153, %v5136, %v5137
      %v5170 = vsel %vm5153, %v5135, %v5136
      %v5171 = vsel %vm5153, %v5134, %v5135
      %v5172 = vsel %vm5153, %v5133, %v5134
      %v5173 = vsel %vm5153, %v5132, %v5133
      %v5174 = vsel %vm5153, %v5131, %v5132
      %v5175 = vsel %vm5153, %v5130, %v5131
      %v5176 = vsel %vm5153, %v5129, %v5130
      %v5177 = vsel %vm5153, %v5128, %v5129
      %v5178 = vsel %vm5153, %v5127, %v5128
      %v5179 = vsel %vm5153, %v5126, %v5127
      %v5180 = vsel %vm5153, %v5125, %v5126
      %v5181 = vsel %vm5153, %v5124, %v5125
      %v5182 = vsel %vm5153, %v5123, %v5124
      %v5183 = vsel %vm5153, %v5122, %v5123
      %v5184 = vsel %vm5153, %v5121, %v5122
      %v5185 = vsel %vm5153, %v5152, %v5121
      %v5186 = vsel %vm3235, 0.0, %v5184
      %v5187 = vsel %vm3236, 0.0, %v5183
      %v5188 = vsel %vm3237, 0.0, %v5182
      %v5189 = vsel %vm3238, 0.0, %v5181
      %v5190 = vsel %vm3239, 0.0, %v5180
      %v5191 = vsel %vm3240, 0.0, %v5179
      %v5192 = vsel %vm3241, 0.0, %v5178
      %v5193 = vsel %vm3242, 0.0, %v5177
      %v5194 = vsel %vm3243, 0.0, %v5176
      %v5195 = vsel %vm3244, 0.0, %v5175
      %v5196 = vsel %vm3245, 0.0, %v5174
      %v5197 = vsel %vm3246, 0.0, %v5173
      %v5198 = vsel %vm3247, 0.0, %v5172
      %v5199 = vsel %vm3248, 0.0, %v5171
      %v5200 = vsel %vm3249, 0.0, %v5170
      %v5201 = vsel %vm3250, 0.0, %v5169
      %v5202 = vsel %vm3251, 0.0, %v5168
      %v5203 = vsel %vm3252, 0.0, %v5167
      %v5204 = vsel %vm3253, 0.0, %v5166
      %v5205 = vsel %vm3254, 0.0, %v5165
      %v5206 = vsel %vm3255, 0.0, %v5164
      %v5207 = vsel %vm3256, 0.0, %v5163
      %v5208 = vsel %vm3257, 0.0, %v5162
      %v5209 = vsel %vm3258, 0.0, %v5161
      %v5210 = vsel %vm3259, 0.0, %v5160
      %v5211 = vsel %vm3260, 0.0, %v5159
      %v5212 = vsel %vm3261, 0.0, %v5158
      %v5213 = vsel %vm3262, 0.0, %v5157
      %v5214 = vsel %vm3263, 0.0, %v5156
      %v5215 = vsel %vm3264, 0.0, %v5155
      %v5216 = vsel %vm3265, 0.0, %v5154
      %v5217 = vsel %vm3266, 0.0, %v5185
      %v5218 = vpack.c.bf16 %v5187, %v5186
      %v5219 = vpack.c.bf16 %v5189, %v5188
      %v5220 = vpack.c.bf16 %v5191, %v5190
      %v5221 = vpack.c.bf16 %v5193, %v5192
      %v5222 = vpack.c.bf16 %v5195, %v5194
      %v5223 = vpack.c.bf16 %v5197, %v5196
      %v5224 = vpack.c.bf16 %v5199, %v5198
      %v5225 = vpack.c.bf16 %v5201, %v5200
      %v5226 = vpack.c.bf16 %v5203, %v5202
      %v5227 = vpack.c.bf16 %v5205, %v5204
      %v5228 = vpack.c.bf16 %v5207, %v5206
      %v5229 = vpack.c.bf16 %v5209, %v5208
      %v5230 = vpack.c.bf16 %v5211, %v5210
      %v5231 = vpack.c.bf16 %v5213, %v5212
      %v5232 = vpack.c.bf16 %v5215, %v5214
      %v5233 = vpack.c.bf16 %v5217, %v5216
      %s5234 = smul.u32 %s3268, 24
      %s5235 = smul.addr %s5234, 4
      %s5236 = scalar_lea.vmem %s8, %s5235
      %v5237 = vld [vmem:[%s5236] sm:$0xf]
      %v5238 = vld [vmem:[%s5236 + $0x4] sm:$0xf]
      %v5239 = vld [vmem:[%s5236 + $0x8] sm:$0xf]
      %v5240 = vld [vmem:[%s5236 + $0xc] sm:$0xf]
      %v5241 = vld [vmem:[%s5236 + $0x10] sm:$0xf]
      %v5242 = vld [vmem:[%s5236 + $0x14] sm:$0xf]
      %v5243 = vld [vmem:[%s5236 + $0x18] sm:$0xf]
      %v5244 = vld [vmem:[%s5236 + $0x1c] sm:$0xf]
      %v5245 = vld [vmem:[%s5236 + $0x20] sm:$0xf]
      %v5246 = vld [vmem:[%s5236 + $0x24] sm:$0xf]
      %v5247 = vld [vmem:[%s5236 + $0x28] sm:$0xf]
      %v5248 = vld [vmem:[%s5236 + $0x2c] sm:$0xf]
      %v5249 = vld [vmem:[%s5236 + $0x30] sm:$0xf]
      %v5250 = vld [vmem:[%s5236 + $0x34] sm:$0xf]
      %v5251 = vld [vmem:[%s5236 + $0x38] sm:$0xf]
      %v5252 = vld [vmem:[%s5236 + $0x3c] sm:$0xf]
      %v5253 = vld [vmem:[%s5236 + $0x40] sm:$0xf]
      %v5254 = vld [vmem:[%s5236 + $0x44] sm:$0xf]
      %v5255 = vld [vmem:[%s5236 + $0x48] sm:$0xf]
      %v5256 = vld [vmem:[%s5236 + $0x4c] sm:$0xf]
      %v5257 = vld [vmem:[%s5236 + $0x50] sm:$0xf]
      %v5258 = vld [vmem:[%s5236 + $0x54] sm:$0xf]
      %v5259 = vld [vmem:[%s5236 + $0x58] sm:$0xf]
      %v5260 = vld [vmem:[%s5236 + $0x5c] sm:$0xf]
      %v5261 = vpack.c.bf16 %v4977, %v4976
      %v5262 = vpack.c.bf16 %v4979, %v4978
      %v5263 = vpack.c.bf16 %v4981, %v4980
      %v5264 = vpack.c.bf16 %v4983, %v4982
      %v5265 = vpack.c.bf16 %v4985, %v4984
      %v5266 = vpack.c.bf16 %v4987, %v4986
      %v5267 = vpack.c.bf16 %v4989, %v4988
      %v5268 = vpack.c.bf16 %v4991, %v4990
      %v5269 = vpack.c.bf16 %v4993, %v4992
      %v5270 = vpack.c.bf16 %v4995, %v4994
      %v5271 = vpack.c.bf16 %v4997, %v4996
      %v5272 = vpack.c.bf16 %v4999, %v4998
      %v5273 = vpack.c.bf16 %v5001, %v5000
      %v5274 = vpack.c.bf16 %v5003, %v5002
      %v5275 = vpack.c.bf16 %v5005, %v5004
      %v5276 = vpack.c.bf16 %v5007, %v5006
      %v5285 = vunpack.c.l.b16 %v5245
      %v5286 = vunpack.c.l.b16 %v5246
      %v5287 = vunpack.c.l.b16 %v5247
      %v5288 = vunpack.c.l.b16 %v5248
      %v5289 = vunpack.c.l.b16 %v5249
      %v5290 = vunpack.c.l.b16 %v5250
      %v5291 = vunpack.c.l.b16 %v5251
      %v5292 = vunpack.c.l.b16 %v5252
      %v5293 = vpack.c.b16 %v5286, %v5285
      %v5294 = vpack.c.b16 %v5288, %v5287
      %v5295 = vpack.c.b16 %v5290, %v5289
      %v5296 = vpack.c.b16 %v5292, %v5291
      %v5302 = vsel %vm484, %v5261, 0
      %v5305 = vsel %vm484, %v5262, 0
      %v5308 = vsel %vm484, %v5263, 0
      %v5311 = vsel %vm484, %v5264, 0
      %v5314 = vsel %vm484, %v5265, 0
      %v5317 = vsel %vm484, %v5266, 0
      %v5320 = vsel %vm484, %v5267, 0
      %v5323 = vsel %vm484, %v5268, 0
      %v5326 = vsel %vm484, %v5269, 0
      %v5329 = vsel %vm484, %v5270, 0
      %v5332 = vsel %vm484, %v5271, 0
      %v5335 = vsel %vm484, %v5272, 0
      %v5338 = vsel %vm484, %v5273, 0
      %v5341 = vsel %vm484, %v5274, 0
      %v5344 = vsel %vm484, %v5275, 0
      %v5347 = vsel %vm484, %v5276, 0
      %5349 = vmatprep.subr.bf16.mxu0 0
      %5350 = vmatpush1.bf16.msra.mxu0 0
      %5351 = vmatprep.subr.bf16.mxu0 0
      %5352 = vmatpush1.bf16.msra.mxu0 0
      %5353 = vmatprep.subr.bf16.mxu0 0
      %5354 = vmatpush1.bf16.msra.mxu0 0
      %5355 = vmatprep.subr.bf16.mxu0 0
      %5356 = vmatpush1.bf16.msra.mxu0 0
      %5357 = vmatprep.subr.bf16.mxu0 0
      %5358 = vmatpush1.bf16.msra.mxu0 %v5296
      %5359 = vmatprep.subr.bf16.mxu0 0
      %5360 = vmatpush1.bf16.msra.mxu0 %v5295
      %5361 = vmatprep.subr.bf16.mxu0 0
      %5362 = vmatpush1.bf16.msra.mxu0 %v5294
      %5363 = vmatprep.subr.bf16.mxu0 0
      %5364 = vmatpush1.bf16.msra.mxu0 %v5293
      %5365 = vmatprep.subr.bf16.mxu0 0
      %5366 = vmatpush2.bf16.msra.mxu0 0
      %5367 = vmatprep.subr.bf16.mxu0 0
      %5368 = vmatpush2.bf16.msra.mxu0 0
      %5369 = vmatprep.subr.bf16.mxu0 0
      %5370 = vmatpush2.bf16.msra.mxu0 0
      %5371 = vmatprep.subr.bf16.mxu0 0
      %5372 = vmatpush2.bf16.msra.mxu0 0
      %5373 = vmatprep.subr.bf16.mxu0 0
      %5374 = vmatpush2.bf16.msra.mxu0 0
      %5375 = vmatprep.subr.bf16.mxu0 0
      %5376 = vmatpush2.bf16.msra.mxu0 0
      %5377 = vmatprep.subr.bf16.mxu0 0
      %5378 = vmatpush2.bf16.msra.mxu0 0
      %5379 = vmatprep.subr.bf16.mxu0 0
      %5380 = vmatpush2.bf16.msra.mxu0 0
      %5381 = vmatprep.mubr.bf16.mxu0 0
      %5382 = vmatmul.mubr.bf16.gmra.mxu0 %v5302
      %v5383 = vpop.f32.mrf.mxu0
      %v5384 = vadd.f32 0.0, %v5383
      %v5385 = vpop.f32.mrf.mxu0
      %v5386 = vpop.f32.mrf.mxu0
      %v5387 = vadd.f32 0.0, %v5386
      %v5388 = vpop.f32.mrf.mxu0
      %5389 = vmatprep.mubr.bf16.mxu0 0
      %5390 = vmatmul.mubr.bf16.gmra.mxu0 %v5305
      %v5391 = vpop.f32.mrf.mxu0
      %v5392 = vadd.f32 0.0, %v5391
      %v5393 = vpop.f32.mrf.mxu0
      %v5394 = vpop.f32.mrf.mxu0
      %v5395 = vadd.f32 0.0, %v5394
      %v5396 = vpop.f32.mrf.mxu0
      %5397 = vmatprep.mubr.bf16.mxu0 0
      %5398 = vmatmul.mubr.bf16.gmra.mxu0 %v5308
      %v5399 = vpop.f32.mrf.mxu0
      %v5400 = vadd.f32 0.0, %v5399
      %v5401 = vpop.f32.mrf.mxu0
      %v5402 = vpop.f32.mrf.mxu0
      %v5403 = vadd.f32 0.0, %v5402
      %v5404 = vpop.f32.mrf.mxu0
      %5405 = vmatprep.mubr.bf16.mxu0 0
      %5406 = vmatmul.mubr.bf16.gmra.mxu0 %v5311
      %v5407 = vpop.f32.mrf.mxu0
      %v5408 = vadd.f32 0.0, %v5407
      %v5409 = vpop.f32.mrf.mxu0
      %v5410 = vpop.f32.mrf.mxu0
      %v5411 = vadd.f32 0.0, %v5410
      %v5412 = vpop.f32.mrf.mxu0
      %5413 = vmatprep.mubr.bf16.mxu0 0
      %5414 = vmatmul.mubr.bf16.gmra.mxu0 %v5314
      %v5415 = vpop.f32.mrf.mxu0
      %v5416 = vadd.f32 0.0, %v5415
      %v5417 = vpop.f32.mrf.mxu0
      %v5418 = vpop.f32.mrf.mxu0
      %v5419 = vadd.f32 0.0, %v5418
      %v5420 = vpop.f32.mrf.mxu0
      %5421 = vmatprep.mubr.bf16.mxu0 0
      %5422 = vmatmul.mubr.bf16.gmra.mxu0 %v5317
      %v5423 = vpop.f32.mrf.mxu0
      %v5424 = vadd.f32 0.0, %v5423
      %v5425 = vpop.f32.mrf.mxu0
      %v5426 = vpop.f32.mrf.mxu0
      %v5427 = vadd.f32 0.0, %v5426
      %v5428 = vpop.f32.mrf.mxu0
      %5429 = vmatprep.mubr.bf16.mxu0 0
      %5430 = vmatmul.mubr.bf16.gmra.mxu0 %v5320
      %v5431 = vpop.f32.mrf.mxu0
      %v5432 = vadd.f32 0.0, %v5431
      %v5433 = vpop.f32.mrf.mxu0
      %v5434 = vpop.f32.mrf.mxu0
      %v5435 = vadd.f32 0.0, %v5434
      %v5436 = vpop.f32.mrf.mxu0
      %5437 = vmatprep.mubr.bf16.mxu0 0
      %5438 = vmatmul.mubr.bf16.gmra.mxu0 %v5323
      %v5439 = vpop.f32.mrf.mxu0
      %v5440 = vadd.f32 0.0, %v5439
      %v5441 = vpop.f32.mrf.mxu0
      %v5442 = vpop.f32.mrf.mxu0
      %v5443 = vadd.f32 0.0, %v5442
      %v5444 = vpop.f32.mrf.mxu0
      %5445 = vmatprep.mubr.bf16.mxu0 0
      %5446 = vmatmul.mubr.bf16.gmra.mxu0 %v5326
      %v5447 = vpop.f32.mrf.mxu0
      %v5448 = vadd.f32 0.0, %v5447
      %v5449 = vpop.f32.mrf.mxu0
      %v5450 = vpop.f32.mrf.mxu0
      %v5451 = vadd.f32 0.0, %v5450
      %v5452 = vpop.f32.mrf.mxu0
      %5453 = vmatprep.mubr.bf16.mxu0 0
      %5454 = vmatmul.mubr.bf16.gmra.mxu0 %v5329
      %v5455 = vpop.f32.mrf.mxu0
      %v5456 = vadd.f32 0.0, %v5455
      %v5457 = vpop.f32.mrf.mxu0
      %v5458 = vpop.f32.mrf.mxu0
      %v5459 = vadd.f32 0.0, %v5458
      %v5460 = vpop.f32.mrf.mxu0
      %5461 = vmatprep.mubr.bf16.mxu0 0
      %5462 = vmatmul.mubr.bf16.gmra.mxu0 %v5332
      %v5463 = vpop.f32.mrf.mxu0
      %v5464 = vadd.f32 0.0, %v5463
      %v5465 = vpop.f32.mrf.mxu0
      %v5466 = vpop.f32.mrf.mxu0
      %v5467 = vadd.f32 0.0, %v5466
      %v5468 = vpop.f32.mrf.mxu0
      %5469 = vmatprep.mubr.bf16.mxu0 0
      %5470 = vmatmul.mubr.bf16.gmra.mxu0 %v5335
      %v5471 = vpop.f32.mrf.mxu0
      %v5472 = vadd.f32 0.0, %v5471
      %v5473 = vpop.f32.mrf.mxu0
      %v5474 = vpop.f32.mrf.mxu0
      %v5475 = vadd.f32 0.0, %v5474
      %v5476 = vpop.f32.mrf.mxu0
      %5477 = vmatprep.mubr.bf16.mxu0 0
      %5478 = vmatmul.mubr.bf16.gmra.mxu0 %v5338
      %v5479 = vpop.f32.mrf.mxu0
      %v5480 = vadd.f32 0.0, %v5479
      %v5481 = vpop.f32.mrf.mxu0
      %v5482 = vpop.f32.mrf.mxu0
      %v5483 = vadd.f32 0.0, %v5482
      %v5484 = vpop.f32.mrf.mxu0
      %5485 = vmatprep.mubr.bf16.mxu0 0
      %5486 = vmatmul.mubr.bf16.gmra.mxu0 %v5341
      %v5487 = vpop.f32.mrf.mxu0
      %v5488 = vadd.f32 0.0, %v5487
      %v5489 = vpop.f32.mrf.mxu0
      %v5490 = vpop.f32.mrf.mxu0
      %v5491 = vadd.f32 0.0, %v5490
      %v5492 = vpop.f32.mrf.mxu0
      %5493 = vmatprep.mubr.bf16.mxu0 0
      %5494 = vmatmul.mubr.bf16.gmra.mxu0 %v5344
      %v5495 = vpop.f32.mrf.mxu0
      %v5496 = vadd.f32 0.0, %v5495
      %v5497 = vpop.f32.mrf.mxu0
      %v5498 = vpop.f32.mrf.mxu0
      %v5499 = vadd.f32 0.0, %v5498
      %v5500 = vpop.f32.mrf.mxu0
      %5501 = vmatprep.mubr.bf16.mxu0 0
      %5502 = vmatmul.mubr.bf16.gmra.mxu0 %v5347
      %v5503 = vpop.f32.mrf.mxu0
      %v5504 = vadd.f32 0.0, %v5503
      %v5505 = vpop.f32.mrf.mxu0
      %v5506 = vpop.f32.mrf.mxu0
      %v5507 = vadd.f32 0.0, %v5506
      %v5508 = vpop.f32.mrf.mxu0
      %5509 = vdwg.mxu0
      %v5518 = vunpack.c.l.b16 %v5237
      %v5519 = vunpack.c.l.b16 %v5238
      %v5520 = vunpack.c.l.b16 %v5239
      %v5521 = vunpack.c.l.b16 %v5240
      %v5522 = vunpack.c.l.b16 %v5241
      %v5523 = vunpack.c.l.b16 %v5242
      %v5524 = vunpack.c.l.b16 %v5243
      %v5525 = vunpack.c.l.b16 %v5244
      %v5526 = vpack.c.b16 %v5519, %v5518
      %v5527 = vpack.c.b16 %v5521, %v5520
      %v5528 = vpack.c.b16 %v5523, %v5522
      %v5529 = vpack.c.b16 %v5525, %v5524
      %v5535 = vsel %vm484, %v5105, 0
      %v5538 = vsel %vm484, %v5106, 0
      %v5541 = vsel %vm484, %v5107, 0
      %v5544 = vsel %vm484, %v5108, 0
      %v5547 = vsel %vm484, %v5109, 0
      %v5550 = vsel %vm484, %v5110, 0
      %v5553 = vsel %vm484, %v5111, 0
      %v5556 = vsel %vm484, %v5112, 0
      %v5559 = vsel %vm484, %v5113, 0
      %v5562 = vsel %vm484, %v5114, 0
      %v5565 = vsel %vm484, %v5115, 0
      %v5568 = vsel %vm484, %v5116, 0
      %v5571 = vsel %vm484, %v5117, 0
      %v5574 = vsel %vm484, %v5118, 0
      %v5577 = vsel %vm484, %v5119, 0
      %v5580 = vsel %vm484, %v5120, 0
      %5582 = vmatprep.subr.bf16.mxu0 0
      %5583 = vmatpush1.bf16.msra.mxu0 0
      %5584 = vmatprep.subr.bf16.mxu0 0
      %5585 = vmatpush1.bf16.msra.mxu0 0
      %5586 = vmatprep.subr.bf16.mxu0 0
      %5587 = vmatpush1.bf16.msra.mxu0 0
      %5588 = vmatprep.subr.bf16.mxu0 0
      %5589 = vmatpush1.bf16.msra.mxu0 0
      %5590 = vmatprep.subr.bf16.mxu0 0
      %5591 = vmatpush1.bf16.msra.mxu0 %v5529
      %5592 = vmatprep.subr.bf16.mxu0 0
      %5593 = vmatpush1.bf16.msra.mxu0 %v5528
      %5594 = vmatprep.subr.bf16.mxu0 0
      %5595 = vmatpush1.bf16.msra.mxu0 %v5527
      %5596 = vmatprep.subr.bf16.mxu0 0
      %5597 = vmatpush1.bf16.msra.mxu0 %v5526
      %5598 = vmatprep.subr.bf16.mxu0 0
      %5599 = vmatpush2.bf16.msra.mxu0 0
      %5600 = vmatprep.subr.bf16.mxu0 0
      %5601 = vmatpush2.bf16.msra.mxu0 0
      %5602 = vmatprep.subr.bf16.mxu0 0
      %5603 = vmatpush2.bf16.msra.mxu0 0
      %5604 = vmatprep.subr.bf16.mxu0 0
      %5605 = vmatpush2.bf16.msra.mxu0 0
      %5606 = vmatprep.subr.bf16.mxu0 0
      %5607 = vmatpush2.bf16.msra.mxu0 0
      %5608 = vmatprep.subr.bf16.mxu0 0
      %5609 = vmatpush2.bf16.msra.mxu0 0
      %5610 = vmatprep.subr.bf16.mxu0 0
      %5611 = vmatpush2.bf16.msra.mxu0 0
      %5612 = vmatprep.subr.bf16.mxu0 0
      %5613 = vmatpush2.bf16.msra.mxu0 0
      %5614 = vmatprep.mubr.bf16.mxu0 0
      %5615 = vmatmul.mubr.bf16.gmra.mxu0 %v5535
      %v5616 = vpop.f32.mrf.mxu0
      %v5617 = vadd.f32 %v5384, %v5616
      %v5618 = vpop.f32.mrf.mxu0
      %v5619 = vpop.f32.mrf.mxu0
      %v5620 = vadd.f32 %v5387, %v5619
      %v5621 = vpop.f32.mrf.mxu0
      %5622 = vmatprep.mubr.bf16.mxu0 0
      %5623 = vmatmul.mubr.bf16.gmra.mxu0 %v5538
      %v5624 = vpop.f32.mrf.mxu0
      %v5625 = vadd.f32 %v5392, %v5624
      %v5626 = vpop.f32.mrf.mxu0
      %v5627 = vpop.f32.mrf.mxu0
      %v5628 = vadd.f32 %v5395, %v5627
      %v5629 = vpop.f32.mrf.mxu0
      %5630 = vmatprep.mubr.bf16.mxu0 0
      %5631 = vmatmul.mubr.bf16.gmra.mxu0 %v5541
      %v5632 = vpop.f32.mrf.mxu0
      %v5633 = vadd.f32 %v5400, %v5632
      %v5634 = vpop.f32.mrf.mxu0
      %v5635 = vpop.f32.mrf.mxu0
      %v5636 = vadd.f32 %v5403, %v5635
      %v5637 = vpop.f32.mrf.mxu0
      %5638 = vmatprep.mubr.bf16.mxu0 0
      %5639 = vmatmul.mubr.bf16.gmra.mxu0 %v5544
      %v5640 = vpop.f32.mrf.mxu0
      %v5641 = vadd.f32 %v5408, %v5640
      %v5642 = vpop.f32.mrf.mxu0
      %v5643 = vpop.f32.mrf.mxu0
      %v5644 = vadd.f32 %v5411, %v5643
      %v5645 = vpop.f32.mrf.mxu0
      %5646 = vmatprep.mubr.bf16.mxu0 0
      %5647 = vmatmul.mubr.bf16.gmra.mxu0 %v5547
      %v5648 = vpop.f32.mrf.mxu0
      %v5649 = vadd.f32 %v5416, %v5648
      %v5650 = vpop.f32.mrf.mxu0
      %v5651 = vpop.f32.mrf.mxu0
      %v5652 = vadd.f32 %v5419, %v5651
      %v5653 = vpop.f32.mrf.mxu0
      %5654 = vmatprep.mubr.bf16.mxu0 0
      %5655 = vmatmul.mubr.bf16.gmra.mxu0 %v5550
      %v5656 = vpop.f32.mrf.mxu0
      %v5657 = vadd.f32 %v5424, %v5656
      %v5658 = vpop.f32.mrf.mxu0
      %v5659 = vpop.f32.mrf.mxu0
      %v5660 = vadd.f32 %v5427, %v5659
      %v5661 = vpop.f32.mrf.mxu0
      %5662 = vmatprep.mubr.bf16.mxu0 0
      %5663 = vmatmul.mubr.bf16.gmra.mxu0 %v5553
      %v5664 = vpop.f32.mrf.mxu0
      %v5665 = vadd.f32 %v5432, %v5664
      %v5666 = vpop.f32.mrf.mxu0
      %v5667 = vpop.f32.mrf.mxu0
      %v5668 = vadd.f32 %v5435, %v5667
      %v5669 = vpop.f32.mrf.mxu0
      %5670 = vmatprep.mubr.bf16.mxu0 0
      %5671 = vmatmul.mubr.bf16.gmra.mxu0 %v5556
      %v5672 = vpop.f32.mrf.mxu0
      %v5673 = vadd.f32 %v5440, %v5672
      %v5674 = vpop.f32.mrf.mxu0
      %v5675 = vpop.f32.mrf.mxu0
      %v5676 = vadd.f32 %v5443, %v5675
      %v5677 = vpop.f32.mrf.mxu0
      %5678 = vmatprep.mubr.bf16.mxu0 0
      %5679 = vmatmul.mubr.bf16.gmra.mxu0 %v5559
      %v5680 = vpop.f32.mrf.mxu0
      %v5681 = vadd.f32 %v5448, %v5680
      %v5682 = vpop.f32.mrf.mxu0
      %v5683 = vpop.f32.mrf.mxu0
      %v5684 = vadd.f32 %v5451, %v5683
      %v5685 = vpop.f32.mrf.mxu0
      %5686 = vmatprep.mubr.bf16.mxu0 0
      %5687 = vmatmul.mubr.bf16.gmra.mxu0 %v5562
      %v5688 = vpop.f32.mrf.mxu0
      %v5689 = vadd.f32 %v5456, %v5688
      %v5690 = vpop.f32.mrf.mxu0
      %v5691 = vpop.f32.mrf.mxu0
      %v5692 = vadd.f32 %v5459, %v5691
      %v5693 = vpop.f32.mrf.mxu0
      %5694 = vmatprep.mubr.bf16.mxu0 0
      %5695 = vmatmul.mubr.bf16.gmra.mxu0 %v5565
      %v5696 = vpop.f32.mrf.mxu0
      %v5697 = vadd.f32 %v5464, %v5696
      %v5698 = vpop.f32.mrf.mxu0
      %v5699 = vpop.f32.mrf.mxu0
      %v5700 = vadd.f32 %v5467, %v5699
      %v5701 = vpop.f32.mrf.mxu0
      %5702 = vmatprep.mubr.bf16.mxu0 0
      %5703 = vmatmul.mubr.bf16.gmra.mxu0 %v5568
      %v5704 = vpop.f32.mrf.mxu0
      %v5705 = vadd.f32 %v5472, %v5704
      %v5706 = vpop.f32.mrf.mxu0
      %v5707 = vpop.f32.mrf.mxu0
      %v5708 = vadd.f32 %v5475, %v5707
      %v5709 = vpop.f32.mrf.mxu0
      %5710 = vmatprep.mubr.bf16.mxu0 0
      %5711 = vmatmul.mubr.bf16.gmra.mxu0 %v5571
      %v5712 = vpop.f32.mrf.mxu0
      %v5713 = vadd.f32 %v5480, %v5712
      %v5714 = vpop.f32.mrf.mxu0
      %v5715 = vpop.f32.mrf.mxu0
      %v5716 = vadd.f32 %v5483, %v5715
      %v5717 = vpop.f32.mrf.mxu0
      %5718 = vmatprep.mubr.bf16.mxu0 0
      %5719 = vmatmul.mubr.bf16.gmra.mxu0 %v5574
      %v5720 = vpop.f32.mrf.mxu0
      %v5721 = vadd.f32 %v5488, %v5720
      %v5722 = vpop.f32.mrf.mxu0
      %v5723 = vpop.f32.mrf.mxu0
      %v5724 = vadd.f32 %v5491, %v5723
      %v5725 = vpop.f32.mrf.mxu0
      %5726 = vmatprep.mubr.bf16.mxu0 0
      %5727 = vmatmul.mubr.bf16.gmra.mxu0 %v5577
      %v5728 = vpop.f32.mrf.mxu0
      %v5729 = vadd.f32 %v5496, %v5728
      %v5730 = vpop.f32.mrf.mxu0
      %v5731 = vpop.f32.mrf.mxu0
      %v5732 = vadd.f32 %v5499, %v5731
      %v5733 = vpop.f32.mrf.mxu0
      %5734 = vmatprep.mubr.bf16.mxu0 0
      %5735 = vmatmul.mubr.bf16.gmra.mxu0 %v5580
      %v5736 = vpop.f32.mrf.mxu0
      %v5737 = vadd.f32 %v5504, %v5736
      %v5738 = vpop.f32.mrf.mxu0
      %v5739 = vpop.f32.mrf.mxu0
      %v5740 = vadd.f32 %v5507, %v5739
      %v5741 = vpop.f32.mrf.mxu0
      %5742 = vdwg.mxu0
      %v5751 = vunpack.c.l.b16 %v5253
      %v5752 = vunpack.c.l.b16 %v5254
      %v5753 = vunpack.c.l.b16 %v5255
      %v5754 = vunpack.c.l.b16 %v5256
      %v5755 = vunpack.c.l.b16 %v5257
      %v5756 = vunpack.c.l.b16 %v5258
      %v5757 = vunpack.c.l.b16 %v5259
      %v5758 = vunpack.c.l.b16 %v5260
      %v5759 = vpack.c.b16 %v5752, %v5751
      %v5760 = vpack.c.b16 %v5754, %v5753
      %v5761 = vpack.c.b16 %v5756, %v5755
      %v5762 = vpack.c.b16 %v5758, %v5757
      %v5768 = vsel %vm484, %v5218, 0
      %v5771 = vsel %vm484, %v5219, 0
      %v5774 = vsel %vm484, %v5220, 0
      %v5777 = vsel %vm484, %v5221, 0
      %v5780 = vsel %vm484, %v5222, 0
      %v5783 = vsel %vm484, %v5223, 0
      %v5786 = vsel %vm484, %v5224, 0
      %v5789 = vsel %vm484, %v5225, 0
      %v5792 = vsel %vm484, %v5226, 0
      %v5795 = vsel %vm484, %v5227, 0
      %v5798 = vsel %vm484, %v5228, 0
      %v5801 = vsel %vm484, %v5229, 0
      %v5804 = vsel %vm484, %v5230, 0
      %v5807 = vsel %vm484, %v5231, 0
      %v5810 = vsel %vm484, %v5232, 0
      %v5813 = vsel %vm484, %v5233, 0
      %5815 = vmatprep.subr.bf16.mxu0 0
      %5816 = vmatpush1.bf16.msra.mxu0 0
      %5817 = vmatprep.subr.bf16.mxu0 0
      %5818 = vmatpush1.bf16.msra.mxu0 0
      %5819 = vmatprep.subr.bf16.mxu0 0
      %5820 = vmatpush1.bf16.msra.mxu0 0
      %5821 = vmatprep.subr.bf16.mxu0 0
      %5822 = vmatpush1.bf16.msra.mxu0 0
      %5823 = vmatprep.subr.bf16.mxu0 0
      %5824 = vmatpush1.bf16.msra.mxu0 %v5762
      %5825 = vmatprep.subr.bf16.mxu0 0
      %5826 = vmatpush1.bf16.msra.mxu0 %v5761
      %5827 = vmatprep.subr.bf16.mxu0 0
      %5828 = vmatpush1.bf16.msra.mxu0 %v5760
      %5829 = vmatprep.subr.bf16.mxu0 0
      %5830 = vmatpush1.bf16.msra.mxu0 %v5759
      %5831 = vmatprep.subr.bf16.mxu0 0
      %5832 = vmatpush2.bf16.msra.mxu0 0
      %5833 = vmatprep.subr.bf16.mxu0 0
      %5834 = vmatpush2.bf16.msra.mxu0 0
      %5835 = vmatprep.subr.bf16.mxu0 0
      %5836 = vmatpush2.bf16.msra.mxu0 0
      %5837 = vmatprep.subr.bf16.mxu0 0
      %5838 = vmatpush2.bf16.msra.mxu0 0
      %5839 = vmatprep.subr.bf16.mxu0 0
      %5840 = vmatpush2.bf16.msra.mxu0 0
      %5841 = vmatprep.subr.bf16.mxu0 0
      %5842 = vmatpush2.bf16.msra.mxu0 0
      %5843 = vmatprep.subr.bf16.mxu0 0
      %5844 = vmatpush2.bf16.msra.mxu0 0
      %5845 = vmatprep.subr.bf16.mxu0 0
      %5846 = vmatpush2.bf16.msra.mxu0 0
      %5847 = vmatprep.mubr.bf16.mxu0 0
      %5848 = vmatmul.mubr.bf16.gmra.mxu0 %v5768
      %v5849 = vpop.f32.mrf.mxu0
      %v5850 = vadd.f32 0.0, %v5849
      %v5851 = vpop.f32.mrf.mxu0
      %v5852 = vpop.f32.mrf.mxu0
      %v5853 = vadd.f32 0.0, %v5852
      %v5854 = vpop.f32.mrf.mxu0
      %5855 = vmatprep.mubr.bf16.mxu0 0
      %5856 = vmatmul.mubr.bf16.gmra.mxu0 %v5771
      %v5857 = vpop.f32.mrf.mxu0
      %v5858 = vadd.f32 0.0, %v5857
      %v5859 = vpop.f32.mrf.mxu0
      %v5860 = vpop.f32.mrf.mxu0
      %v5861 = vadd.f32 0.0, %v5860
      %v5862 = vpop.f32.mrf.mxu0
      %5863 = vmatprep.mubr.bf16.mxu0 0
      %5864 = vmatmul.mubr.bf16.gmra.mxu0 %v5774
      %v5865 = vpop.f32.mrf.mxu0
      %v5866 = vadd.f32 0.0, %v5865
      %v5867 = vpop.f32.mrf.mxu0
      %v5868 = vpop.f32.mrf.mxu0
      %v5869 = vadd.f32 0.0, %v5868
      %v5870 = vpop.f32.mrf.mxu0
      %5871 = vmatprep.mubr.bf16.mxu0 0
      %5872 = vmatmul.mubr.bf16.gmra.mxu0 %v5777
      %v5873 = vpop.f32.mrf.mxu0
      %v5874 = vadd.f32 0.0, %v5873
      %v5875 = vpop.f32.mrf.mxu0
      %v5876 = vpop.f32.mrf.mxu0
      %v5877 = vadd.f32 0.0, %v5876
      %v5878 = vpop.f32.mrf.mxu0
      %5879 = vmatprep.mubr.bf16.mxu0 0
      %5880 = vmatmul.mubr.bf16.gmra.mxu0 %v5780
      %v5881 = vpop.f32.mrf.mxu0
      %v5882 = vadd.f32 0.0, %v5881
      %v5883 = vpop.f32.mrf.mxu0
      %v5884 = vpop.f32.mrf.mxu0
      %v5885 = vadd.f32 0.0, %v5884
      %v5886 = vpop.f32.mrf.mxu0
      %5887 = vmatprep.mubr.bf16.mxu0 0
      %5888 = vmatmul.mubr.bf16.gmra.mxu0 %v5783
      %v5889 = vpop.f32.mrf.mxu0
      %v5890 = vadd.f32 0.0, %v5889
      %v5891 = vpop.f32.mrf.mxu0
      %v5892 = vpop.f32.mrf.mxu0
      %v5893 = vadd.f32 0.0, %v5892
      %v5894 = vpop.f32.mrf.mxu0
      %5895 = vmatprep.mubr.bf16.mxu0 0
      %5896 = vmatmul.mubr.bf16.gmra.mxu0 %v5786
      %v5897 = vpop.f32.mrf.mxu0
      %v5898 = vadd.f32 0.0, %v5897
      %v5899 = vpop.f32.mrf.mxu0
      %v5900 = vpop.f32.mrf.mxu0
      %v5901 = vadd.f32 0.0, %v5900
      %v5902 = vpop.f32.mrf.mxu0
      %5903 = vmatprep.mubr.bf16.mxu0 0
      %5904 = vmatmul.mubr.bf16.gmra.mxu0 %v5789
      %v5905 = vpop.f32.mrf.mxu0
      %v5906 = vadd.f32 0.0, %v5905
      %v5907 = vpop.f32.mrf.mxu0
      %v5908 = vpop.f32.mrf.mxu0
      %v5909 = vadd.f32 0.0, %v5908
      %v5910 = vpop.f32.mrf.mxu0
      %5911 = vmatprep.mubr.bf16.mxu0 0
      %5912 = vmatmul.mubr.bf16.gmra.mxu0 %v5792
      %v5913 = vpop.f32.mrf.mxu0
      %v5914 = vadd.f32 0.0, %v5913
      %v5915 = vpop.f32.mrf.mxu0
      %v5916 = vpop.f32.mrf.mxu0
      %v5917 = vadd.f32 0.0, %v5916
      %v5918 = vpop.f32.mrf.mxu0
      %5919 = vmatprep.mubr.bf16.mxu0 0
      %5920 = vmatmul.mubr.bf16.gmra.mxu0 %v5795
      %v5921 = vpop.f32.mrf.mxu0
      %v5922 = vadd.f32 0.0, %v5921
      %v5923 = vpop.f32.mrf.mxu0
      %v5924 = vpop.f32.mrf.mxu0
      %v5925 = vadd.f32 0.0, %v5924
      %v5926 = vpop.f32.mrf.mxu0
      %5927 = vmatprep.mubr.bf16.mxu0 0
      %5928 = vmatmul.mubr.bf16.gmra.mxu0 %v5798
      %v5929 = vpop.f32.mrf.mxu0
      %v5930 = vadd.f32 0.0, %v5929
      %v5931 = vpop.f32.mrf.mxu0
      %v5932 = vpop.f32.mrf.mxu0
      %v5933 = vadd.f32 0.0, %v5932
      %v5934 = vpop.f32.mrf.mxu0
      %5935 = vmatprep.mubr.bf16.mxu0 0
      %5936 = vmatmul.mubr.bf16.gmra.mxu0 %v5801
      %v5937 = vpop.f32.mrf.mxu0
      %v5938 = vadd.f32 0.0, %v5937
      %v5939 = vpop.f32.mrf.mxu0
      %v5940 = vpop.f32.mrf.mxu0
      %v5941 = vadd.f32 0.0, %v5940
      %v5942 = vpop.f32.mrf.mxu0
      %5943 = vmatprep.mubr.bf16.mxu0 0
      %5944 = vmatmul.mubr.bf16.gmra.mxu0 %v5804
      %v5945 = vpop.f32.mrf.mxu0
      %v5946 = vadd.f32 0.0, %v5945
      %v5947 = vpop.f32.mrf.mxu0
      %v5948 = vpop.f32.mrf.mxu0
      %v5949 = vadd.f32 0.0, %v5948
      %v5950 = vpop.f32.mrf.mxu0
      %5951 = vmatprep.mubr.bf16.mxu0 0
      %5952 = vmatmul.mubr.bf16.gmra.mxu0 %v5807
      %v5953 = vpop.f32.mrf.mxu0
      %v5954 = vadd.f32 0.0, %v5953
      %v5955 = vpop.f32.mrf.mxu0
      %v5956 = vpop.f32.mrf.mxu0
      %v5957 = vadd.f32 0.0, %v5956
      %v5958 = vpop.f32.mrf.mxu0
      %5959 = vmatprep.mubr.bf16.mxu0 0
      %5960 = vmatmul.mubr.bf16.gmra.mxu0 %v5810
      %v5961 = vpop.f32.mrf.mxu0
      %v5962 = vadd.f32 0.0, %v5961
      %v5963 = vpop.f32.mrf.mxu0
      %v5964 = vpop.f32.mrf.mxu0
      %v5965 = vadd.f32 0.0, %v5964
      %v5966 = vpop.f32.mrf.mxu0
      %5967 = vmatprep.mubr.bf16.mxu0 0
      %5968 = vmatmul.mubr.bf16.gmra.mxu0 %v5813
      %v5969 = vpop.f32.mrf.mxu0
      %v5970 = vadd.f32 0.0, %v5969
      %v5971 = vpop.f32.mrf.mxu0
      %v5972 = vpop.f32.mrf.mxu0
      %v5973 = vadd.f32 0.0, %v5972
      %v5974 = vpop.f32.mrf.mxu0
      %5975 = vdwg.mxu0
      %v5976 = vadd.f32 %v5617, %v5850
      %v5977 = vadd.f32 %v5620, %v5853
      %v5978 = vadd.f32 %v5625, %v5858
      %v5979 = vadd.f32 %v5628, %v5861
      %v5980 = vadd.f32 %v5633, %v5866
      %v5981 = vadd.f32 %v5636, %v5869
      %v5982 = vadd.f32 %v5641, %v5874
      %v5983 = vadd.f32 %v5644, %v5877
      %v5984 = vadd.f32 %v5649, %v5882
      %v5985 = vadd.f32 %v5652, %v5885
      %v5986 = vadd.f32 %v5657, %v5890
      %v5987 = vadd.f32 %v5660, %v5893
      %v5988 = vadd.f32 %v5665, %v5898
      %v5989 = vadd.f32 %v5668, %v5901
      %v5990 = vadd.f32 %v5673, %v5906
      %v5991 = vadd.f32 %v5676, %v5909
      %v5992 = vadd.f32 %v5681, %v5914
      %v5993 = vadd.f32 %v5684, %v5917
      %v5994 = vadd.f32 %v5689, %v5922
      %v5995 = vadd.f32 %v5692, %v5925
      %v5996 = vadd.f32 %v5697, %v5930
      %v5997 = vadd.f32 %v5700, %v5933
      %v5998 = vadd.f32 %v5705, %v5938
      %v5999 = vadd.f32 %v5708, %v5941
      %v6000 = vadd.f32 %v5713, %v5946
      %v6001 = vadd.f32 %v5716, %v5949
      %v6002 = vadd.f32 %v5721, %v5954
      %v6003 = vadd.f32 %v5724, %v5957
      %v6004 = vadd.f32 %v5729, %v5962
      %v6005 = vadd.f32 %v5732, %v5965
      %v6006 = vadd.f32 %v5737, %v5970
      %v6007 = vadd.f32 %v5740, %v5973
      %v6008 = vlaneseq
      %v6009 = vshrl.u32 %v6008, 7
      %v6010 = vsub.s32 4, %v6009
      %v6011 = vrot.slane %v3615, %v6010
      %v6012 = vadd.f32 %v5976, %v6011
      %v6013 = vadd.f32 %v5977, %v6011
      %v6014 = vadd.f32 %v5978, %v6011
      %v6015 = vadd.f32 %v5979, %v6011
      %v6016 = vadd.f32 %v5980, %v6011
      %v6017 = vadd.f32 %v5981, %v6011
      %v6018 = vadd.f32 %v5982, %v6011
      %v6019 = vadd.f32 %v5983, %v6011
      %v6020 = vadd.f32 %v5984, %v6011
      %v6021 = vadd.f32 %v5985, %v6011
      %v6022 = vadd.f32 %v5986, %v6011
      %v6023 = vadd.f32 %v5987, %v6011
      %v6024 = vadd.f32 %v5988, %v6011
      %v6025 = vadd.f32 %v5989, %v6011
      %v6026 = vadd.f32 %v5990, %v6011
      %v6027 = vadd.f32 %v5991, %v6011
      %v6028 = vadd.f32 %v5992, %v6011
      %v6029 = vadd.f32 %v5993, %v6011
      %v6030 = vadd.f32 %v5994, %v6011
      %v6031 = vadd.f32 %v5995, %v6011
      %v6032 = vadd.f32 %v5996, %v6011
      %v6033 = vadd.f32 %v5997, %v6011
      %v6034 = vadd.f32 %v5998, %v6011
      %v6035 = vadd.f32 %v5999, %v6011
      %v6036 = vadd.f32 %v6000, %v6011
      %v6037 = vadd.f32 %v6001, %v6011
      %v6038 = vadd.f32 %v6002, %v6011
      %v6039 = vadd.f32 %v6003, %v6011
      %v6040 = vadd.f32 %v6004, %v6011
      %v6041 = vadd.f32 %v6005, %v6011
      %v6042 = vadd.f32 %v6006, %v6011
      %v6043 = vadd.f32 %v6007, %v6011
      %p6044 = scmp.gt.s32.totalorder %s3268, 0
      %s6045 = scalar_select %p6044, 1, 0
      %s6046 = scvt.s32.f32 %s6045
      %v6047 = vstv %s6046
      %v6048 = vmul.f32 %v6047, %v3273
      %v6049 = vmul.f32 %v6047, %v3274
      %v6050 = vmul.f32 %v6047, %v3275
      %v6051 = vmul.f32 %v6047, %v3276
      %v6052 = vmul.f32 %v6047, %v3277
      %v6053 = vmul.f32 %v6047, %v3278
      %v6054 = vmul.f32 %v6047, %v3279
      %v6055 = vmul.f32 %v6047, %v3280
      %v6056 = vmul.f32 %v6047, %v3281
      %v6057 = vmul.f32 %v6047, %v3282
      %v6058 = vmul.f32 %v6047, %v3283
      %v6059 = vmul.f32 %v6047, %v3284
      %v6060 = vmul.f32 %v6047, %v3285
      %v6061 = vmul.f32 %v6047, %v3286
      %v6062 = vmul.f32 %v6047, %v3287
      %v6063 = vmul.f32 %v6047, %v3288
      %v6064 = vmul.f32 %v6047, %v3289
      %v6065 = vmul.f32 %v6047, %v3290
      %v6066 = vmul.f32 %v6047, %v3291
      %v6067 = vmul.f32 %v6047, %v3292
      %v6068 = vmul.f32 %v6047, %v3293
      %v6069 = vmul.f32 %v6047, %v3294
      %v6070 = vmul.f32 %v6047, %v3295
      %v6071 = vmul.f32 %v6047, %v3296
      %v6072 = vmul.f32 %v6047, %v3297
      %v6073 = vmul.f32 %v6047, %v3298
      %v6074 = vmul.f32 %v6047, %v3299
      %v6075 = vmul.f32 %v6047, %v3300
      %v6076 = vmul.f32 %v6047, %v3301
      %v6077 = vmul.f32 %v6047, %v3302
      %v6078 = vmul.f32 %v6047, %v3303
      %v6079 = vmul.f32 %v6047, %v3304
      %v6080 = vadd.f32 %v6012, %v6048
      %v6081 = vadd.f32 %v6013, %v6049
      %v6082 = vadd.f32 %v6014, %v6050
      %v6083 = vadd.f32 %v6015, %v6051
      %v6084 = vadd.f32 %v6016, %v6052
      %v6085 = vadd.f32 %v6017, %v6053
      %v6086 = vadd.f32 %v6018, %v6054
      %v6087 = vadd.f32 %v6019, %v6055
      %v6088 = vadd.f32 %v6020, %v6056
      %v6089 = vadd.f32 %v6021, %v6057
      %v6090 = vadd.f32 %v6022, %v6058
      %v6091 = vadd.f32 %v6023, %v6059
      %v6092 = vadd.f32 %v6024, %v6060
      %v6093 = vadd.f32 %v6025, %v6061
      %v6094 = vadd.f32 %v6026, %v6062
      %v6095 = vadd.f32 %v6027, %v6063
      %v6096 = vadd.f32 %v6028, %v6064
      %v6097 = vadd.f32 %v6029, %v6065
      %v6098 = vadd.f32 %v6030, %v6066
      %v6099 = vadd.f32 %v6031, %v6067
      %v6100 = vadd.f32 %v6032, %v6068
      %v6101 = vadd.f32 %v6033, %v6069
      %v6102 = vadd.f32 %v6034, %v6070
      %v6103 = vadd.f32 %v6035, %v6071
      %v6104 = vadd.f32 %v6036, %v6072
      %v6105 = vadd.f32 %v6037, %v6073
      %v6106 = vadd.f32 %v6038, %v6074
      %v6107 = vadd.f32 %v6039, %v6075
      %v6108 = vadd.f32 %v6040, %v6076
      %v6109 = vadd.f32 %v6041, %v6077
      %v6110 = vadd.f32 %v6042, %v6078
      %v6111 = vadd.f32 %v6043, %v6079
      %v6112 = vmax.f32 %v6080, 0.0
      %v6113 = vmax.f32 %v6081, 0.0
      %v6114 = vmax.f32 %v6082, 0.0
      %v6115 = vmax.f32 %v6083, 0.0
      %v6116 = vmax.f32 %v6084, 0.0
      %v6117 = vmax.f32 %v6085, 0.0
      %v6118 = vmax.f32 %v6086, 0.0
      %v6119 = vmax.f32 %v6087, 0.0
      %v6120 = vmax.f32 %v6088, 0.0
      %v6121 = vmax.f32 %v6089, 0.0
      %v6122 = vmax.f32 %v6090, 0.0
      %v6123 = vmax.f32 %v6091, 0.0
      %v6124 = vmax.f32 %v6092, 0.0
      %v6125 = vmax.f32 %v6093, 0.0
      %v6126 = vmax.f32 %v6094, 0.0
      %v6127 = vmax.f32 %v6095, 0.0
      %v6128 = vmax.f32 %v6096, 0.0
      %v6129 = vmax.f32 %v6097, 0.0
      %v6130 = vmax.f32 %v6098, 0.0
      %v6131 = vmax.f32 %v6099, 0.0
      %v6132 = vmax.f32 %v6100, 0.0
      %v6133 = vmax.f32 %v6101, 0.0
      %v6134 = vmax.f32 %v6102, 0.0
      %v6135 = vmax.f32 %v6103, 0.0
      %v6136 = vmax.f32 %v6104, 0.0
      %v6137 = vmax.f32 %v6105, 0.0
      %v6138 = vmax.f32 %v6106, 0.0
      %v6139 = vmax.f32 %v6107, 0.0
      %v6140 = vmax.f32 %v6108, 0.0
      %v6141 = vmax.f32 %v6109, 0.0
      %v6142 = vmax.f32 %v6110, 0.0
      %v6143 = vmax.f32 %v6111, 0.0
    $region58: #{forward.1} parent=1 // loop_footer
      %s3272 = sadd.s32 1, %s3268
    $region59: #{forward.1} parent=1 // loop_footer_branch
      %3267 = sbr.rel target = $region55
    $region60: #{forward.1} parent=1 // loop_exit
      _
    %6146 = vrot.lane.b32.xlu0 %v3275, 64
    %v6147 = vpop.permute.xlu0 %6146
    %6148 = vrot.lane.b32.xlu0 %v3276, 64
    %v6149 = vpop.permute.xlu0 %6148
    %6154 = vrot.lane.b32.xlu0 %v3279, 64
    %v6155 = vpop.permute.xlu0 %6154
    %6156 = vrot.lane.b32.xlu0 %v3280, 64
    %v6157 = vpop.permute.xlu0 %6156
    %6162 = vrot.lane.b32.xlu0 %v3283, 64
    %v6163 = vpop.permute.xlu0 %6162
    %6164 = vrot.lane.b32.xlu0 %v3284, 64
    %v6165 = vpop.permute.xlu0 %6164
    %6170 = vrot.lane.b32.xlu0 %v3287, 64
    %v6171 = vpop.permute.xlu0 %6170
    %6172 = vrot.lane.b32.xlu0 %v3288, 64
    %v6173 = vpop.permute.xlu0 %6172
    %6178 = vrot.lane.b32.xlu0 %v3291, 64
    %v6179 = vpop.permute.xlu0 %6178
    %6180 = vrot.lane.b32.xlu0 %v3292, 64
    %v6181 = vpop.permute.xlu0 %6180
    %6186 = vrot.lane.b32.xlu0 %v3295, 64
    %v6187 = vpop.permute.xlu0 %6186
    %6188 = vrot.lane.b32.xlu0 %v3296, 64
    %v6189 = vpop.permute.xlu0 %6188
    %6194 = vrot.lane.b32.xlu0 %v3299, 64
    %v6195 = vpop.permute.xlu0 %6194
    %6196 = vrot.lane.b32.xlu0 %v3300, 64
    %v6197 = vpop.permute.xlu0 %6196
    %6202 = vrot.lane.b32.xlu0 %v3303, 64
    %v6203 = vpop.permute.xlu0 %6202
    %6204 = vrot.lane.b32.xlu0 %v3304, 64
    %v6205 = vpop.permute.xlu0 %6204
    %v6208 = vsel %vm484, %v3273, %v6147
    %v6209 = vsel %vm484, %v3274, %v6149
    %v6210 = vsel %vm484, %v3277, %v6155
    %v6211 = vsel %vm484, %v3278, %v6157
    %v6212 = vsel %vm484, %v3281, %v6163
    %v6213 = vsel %vm484, %v3282, %v6165
    %v6214 = vsel %vm484, %v3285, %v6171
    %v6215 = vsel %vm484, %v3286, %v6173
    %v6216 = vsel %vm484, %v3289, %v6179
    %v6217 = vsel %vm484, %v3290, %v6181
    %v6218 = vsel %vm484, %v3293, %v6187
    %v6219 = vsel %vm484, %v3294, %v6189
    %v6220 = vsel %vm484, %v3297, %v6195
    %v6221 = vsel %vm484, %v3298, %v6197
    %v6222 = vsel %vm484, %v3301, %v6203
    %v6223 = vsel %vm484, %v3302, %v6205
    %v6224 = vpack.c.bf16 %v6209, %v6208
    %v6225 = vpack.c.bf16 %v6211, %v6210
    %v6226 = vpack.c.bf16 %v6213, %v6212
    %v6227 = vpack.c.bf16 %v6215, %v6214
    %v6228 = vpack.c.bf16 %v6217, %v6216
    %v6229 = vpack.c.bf16 %v6219, %v6218
    %v6230 = vpack.c.bf16 %v6221, %v6220
    %v6231 = vpack.c.bf16 %v6223, %v6222
    %v6232 = vld [vmem:[%s10] sm:$0xff]
    %v6233 = vld [vmem:[%s10 + $0x8] sm:$0xff]
    %v6234 = vld [vmem:[%s10 + $0x10] sm:$0xff]
    %v6235 = vld [vmem:[%s10 + $0x18] sm:$0xff]
    %v6236 = vld [vmem:[%s10 + $0x20] sm:$0xff]
    %v6237 = vld [vmem:[%s10 + $0x28] sm:$0xff]
    %v6238 = vld [vmem:[%s10 + $0x30] sm:$0xff]
    %v6239 = vld [vmem:[%s10 + $0x38] sm:$0xff]
    %v6240 = vld [vmem:[%s10 + $0x40] sm:$0xff]
    %v6241 = vld [vmem:[%s10 + $0x48] sm:$0xff]
    %v6242 = vld [vmem:[%s10 + $0x50] sm:$0xff]
    %v6243 = vld [vmem:[%s10 + $0x58] sm:$0xff]
    %v6244 = vld [vmem:[%s10 + $0x60] sm:$0xff]
    %v6245 = vld [vmem:[%s10 + $0x68] sm:$0xff]
    %v6246 = vld [vmem:[%s10 + $0x70] sm:$0xff]
    %v6247 = vld [vmem:[%s10 + $0x78] sm:$0xff]
    %v6248 = vld [vmem:[%s10 + $0x80] sm:$0xff]
    %v6249 = vld [vmem:[%s10 + $0x88] sm:$0xff]
    %v6250 = vld [vmem:[%s10 + $0x90] sm:$0xff]
    %v6251 = vld [vmem:[%s10 + $0x98] sm:$0xff]
    %v6252 = vld [vmem:[%s10 + $0xa0] sm:$0xff]
    %v6253 = vld [vmem:[%s10 + $0xa8] sm:$0xff]
    %v6254 = vld [vmem:[%s10 + $0xb0] sm:$0xff]
    %v6255 = vld [vmem:[%s10 + $0xb8] sm:$0xff]
    %v6256 = vld [vmem:[%s10 + $0xc0] sm:$0xff]
    %v6257 = vld [vmem:[%s10 + $0xc8] sm:$0xff]
    %v6258 = vld [vmem:[%s10 + $0xd0] sm:$0xff]
    %v6259 = vld [vmem:[%s10 + $0xd8] sm:$0xff]
    %v6260 = vld [vmem:[%s10 + $0xe0] sm:$0xff]
    %v6261 = vld [vmem:[%s10 + $0xe8] sm:$0xff]
    %v6262 = vld [vmem:[%s10 + $0xf0] sm:$0xff]
    %v6263 = vld [vmem:[%s10 + $0xf8] sm:$0xff]
    %v6264 = vld [vmem:[%s10 + $0x100] sm:$0xff]
    %v6265 = vld [vmem:[%s10 + $0x108] sm:$0xff]
    %v6266 = vld [vmem:[%s10 + $0x110] sm:$0xff]
    %v6267 = vld [vmem:[%s10 + $0x118] sm:$0xff]
    %v6268 = vld [vmem:[%s10 + $0x120] sm:$0xff]
    %v6269 = vld [vmem:[%s10 + $0x128] sm:$0xff]
    %v6270 = vld [vmem:[%s10 + $0x130] sm:$0xff]
    %v6271 = vld [vmem:[%s10 + $0x138] sm:$0xff]
    %v6272 = vld [vmem:[%s10 + $0x140] sm:$0xff]
    %v6273 = vld [vmem:[%s10 + $0x148] sm:$0xff]
    %v6274 = vld [vmem:[%s10 + $0x150] sm:$0xff]
    %v6275 = vld [vmem:[%s10 + $0x158] sm:$0xff]
    %v6276 = vld [vmem:[%s10 + $0x160] sm:$0xff]
    %v6277 = vld [vmem:[%s10 + $0x168] sm:$0xff]
    %v6278 = vld [vmem:[%s10 + $0x170] sm:$0xff]
    %v6279 = vld [vmem:[%s10 + $0x178] sm:$0xff]
    %v6280 = vld [vmem:[%s10 + $0x180] sm:$0xff]
    %v6281 = vld [vmem:[%s10 + $0x188] sm:$0xff]
    %v6282 = vld [vmem:[%s10 + $0x190] sm:$0xff]
    %v6283 = vld [vmem:[%s10 + $0x198] sm:$0xff]
    %v6284 = vld [vmem:[%s10 + $0x1a0] sm:$0xff]
    %v6285 = vld [vmem:[%s10 + $0x1a8] sm:$0xff]
    %v6286 = vld [vmem:[%s10 + $0x1b0] sm:$0xff]
    %v6287 = vld [vmem:[%s10 + $0x1b8] sm:$0xff]
    %v6288 = vld [vmem:[%s10 + $0x1c0] sm:$0xff]
    %v6289 = vld [vmem:[%s10 + $0x1c8] sm:$0xff]
    %v6290 = vld [vmem:[%s10 + $0x1d0] sm:$0xff]
    %v6291 = vld [vmem:[%s10 + $0x1d8] sm:$0xff]
    %v6292 = vld [vmem:[%s10 + $0x1e0] sm:$0xff]
    %v6293 = vld [vmem:[%s10 + $0x1e8] sm:$0xff]
    %v6294 = vld [vmem:[%s10 + $0x1f0] sm:$0xff]
    %v6295 = vld [vmem:[%s10 + $0x1f8] sm:$0xff]
    %v6296 = vld [vmem:[%s10 + $0x200] sm:$0xff]
    %v6297 = vld [vmem:[%s10 + $0x208] sm:$0xff]
    %v6298 = vld [vmem:[%s10 + $0x210] sm:$0xff]
    %v6299 = vld [vmem:[%s10 + $0x218] sm:$0xff]
    %v6300 = vld [vmem:[%s10 + $0x220] sm:$0xff]
    %v6301 = vld [vmem:[%s10 + $0x228] sm:$0xff]
    %v6302 = vld [vmem:[%s10 + $0x230] sm:$0xff]
    %v6303 = vld [vmem:[%s10 + $0x238] sm:$0xff]
    %v6304 = vld [vmem:[%s10 + $0x240] sm:$0xff]
    %v6305 = vld [vmem:[%s10 + $0x248] sm:$0xff]
    %v6306 = vld [vmem:[%s10 + $0x250] sm:$0xff]
    %v6307 = vld [vmem:[%s10 + $0x258] sm:$0xff]
    %v6308 = vld [vmem:[%s10 + $0x260] sm:$0xff]
    %v6309 = vld [vmem:[%s10 + $0x268] sm:$0xff]
    %v6310 = vld [vmem:[%s10 + $0x270] sm:$0xff]
    %v6311 = vld [vmem:[%s10 + $0x278] sm:$0xff]
    %v6312 = vld [vmem:[%s10 + $0x280] sm:$0xff]
    %v6313 = vld [vmem:[%s10 + $0x288] sm:$0xff]
    %v6314 = vld [vmem:[%s10 + $0x290] sm:$0xff]
    %v6315 = vld [vmem:[%s10 + $0x298] sm:$0xff]
    %v6316 = vld [vmem:[%s10 + $0x2a0] sm:$0xff]
    %v6317 = vld [vmem:[%s10 + $0x2a8] sm:$0xff]
    %v6318 = vld [vmem:[%s10 + $0x2b0] sm:$0xff]
    %v6319 = vld [vmem:[%s10 + $0x2b8] sm:$0xff]
    %v6320 = vld [vmem:[%s10 + $0x2c0] sm:$0xff]
    %v6321 = vld [vmem:[%s10 + $0x2c8] sm:$0xff]
    %v6322 = vld [vmem:[%s10 + $0x2d0] sm:$0xff]
    %v6323 = vld [vmem:[%s10 + $0x2d8] sm:$0xff]
    %v6324 = vld [vmem:[%s10 + $0x2e0] sm:$0xff]
    %v6325 = vld [vmem:[%s10 + $0x2e8] sm:$0xff]
    %v6326 = vld [vmem:[%s10 + $0x2f0] sm:$0xff]
    %v6327 = vld [vmem:[%s10 + $0x2f8] sm:$0xff]
    %v6328 = vld [vmem:[%s10 + $0x300] sm:$0xff]
    %v6329 = vld [vmem:[%s10 + $0x308] sm:$0xff]
    %v6330 = vld [vmem:[%s10 + $0x310] sm:$0xff]
    %v6331 = vld [vmem:[%s10 + $0x318] sm:$0xff]
    %v6332 = vld [vmem:[%s10 + $0x320] sm:$0xff]
    %v6333 = vld [vmem:[%s10 + $0x328] sm:$0xff]
    %v6334 = vld [vmem:[%s10 + $0x330] sm:$0xff]
    %v6335 = vld [vmem:[%s10 + $0x338] sm:$0xff]
    %v6336 = vld [vmem:[%s10 + $0x340] sm:$0xff]
    %v6337 = vld [vmem:[%s10 + $0x348] sm:$0xff]
    %v6338 = vld [vmem:[%s10 + $0x350] sm:$0xff]
    %v6339 = vld [vmem:[%s10 + $0x358] sm:$0xff]
    %v6340 = vld [vmem:[%s10 + $0x360] sm:$0xff]
    %v6341 = vld [vmem:[%s10 + $0x368] sm:$0xff]
    %v6342 = vld [vmem:[%s10 + $0x370] sm:$0xff]
    %v6343 = vld [vmem:[%s10 + $0x378] sm:$0xff]
    %v6344 = vld [vmem:[%s10 + $0x380] sm:$0xff]
    %v6345 = vld [vmem:[%s10 + $0x388] sm:$0xff]
    %v6346 = vld [vmem:[%s10 + $0x390] sm:$0xff]
    %v6347 = vld [vmem:[%s10 + $0x398] sm:$0xff]
    %v6348 = vld [vmem:[%s10 + $0x3a0] sm:$0xff]
    %v6349 = vld [vmem:[%s10 + $0x3a8] sm:$0xff]
    %v6350 = vld [vmem:[%s10 + $0x3b0] sm:$0xff]
    %v6351 = vld [vmem:[%s10 + $0x3b8] sm:$0xff]
    %v6352 = vld [vmem:[%s10 + $0x3c0] sm:$0xff]
    %v6353 = vld [vmem:[%s10 + $0x3c8] sm:$0xff]
    %v6354 = vld [vmem:[%s10 + $0x3d0] sm:$0xff]
    %v6355 = vld [vmem:[%s10 + $0x3d8] sm:$0xff]
    %v6356 = vld [vmem:[%s10 + $0x3e0] sm:$0xff]
    %v6357 = vld [vmem:[%s10 + $0x3e8] sm:$0xff]
    %v6358 = vld [vmem:[%s10 + $0x3f0] sm:$0xff]
    %v6359 = vld [vmem:[%s10 + $0x3f8] sm:$0xff]
    %v6360 = vld [vmem:[%s11] sm:$0x3]
    %v6362 = vlaneseq
    %v6363 = vshrl.u32 %v6362, 7
    %v6364 = vsub.s32 0, %v6363
    %v6365 = vrot.slane %v6360, %v6364
    %v6366 = vlaneseq
    %v6367 = vshrl.u32 %v6366, 7
    %v6368 = vsub.s32 1, %v6367
    %v6369 = vrot.slane %v6360, %v6368
    %v6500 = vunpack.c.l.b16 %v6232
    %v6501 = vunpack.c.h.b16 %v6232
    %v6502 = vunpack.c.l.b16 %v6233
    %v6503 = vunpack.c.h.b16 %v6233
    %v6504 = vunpack.c.l.b16 %v6234
    %v6505 = vunpack.c.h.b16 %v6234
    %v6506 = vunpack.c.l.b16 %v6235
    %v6507 = vunpack.c.h.b16 %v6235
    %v6508 = vunpack.c.l.b16 %v6236
    %v6509 = vunpack.c.h.b16 %v6236
    %v6510 = vunpack.c.l.b16 %v6237
    %v6511 = vunpack.c.h.b16 %v6237
    %v6512 = vunpack.c.l.b16 %v6238
    %v6513 = vunpack.c.h.b16 %v6238
    %v6514 = vunpack.c.l.b16 %v6239
    %v6515 = vunpack.c.h.b16 %v6239
    %v6516 = vunpack.c.l.b16 %v6240
    %v6517 = vunpack.c.h.b16 %v6240
    %v6518 = vunpack.c.l.b16 %v6241
    %v6519 = vunpack.c.h.b16 %v6241
    %v6520 = vunpack.c.l.b16 %v6242
    %v6521 = vunpack.c.h.b16 %v6242
    %v6522 = vunpack.c.l.b16 %v6243
    %v6523 = vunpack.c.h.b16 %v6243
    %v6524 = vunpack.c.l.b16 %v6244
    %v6525 = vunpack.c.h.b16 %v6244
    %v6526 = vunpack.c.l.b16 %v6245
    %v6527 = vunpack.c.h.b16 %v6245
    %v6528 = vunpack.c.l.b16 %v6246
    %v6529 = vunpack.c.h.b16 %v6246
    %v6530 = vunpack.c.l.b16 %v6247
    %v6531 = vunpack.c.h.b16 %v6247
    %v6532 = vunpack.c.l.b16 %v6248
    %v6533 = vunpack.c.h.b16 %v6248
    %v6534 = vunpack.c.l.b16 %v6249
    %v6535 = vunpack.c.h.b16 %v6249
    %v6536 = vunpack.c.l.b16 %v6250
    %v6537 = vunpack.c.h.b16 %v6250
    %v6538 = vunpack.c.l.b16 %v6251
    %v6539 = vunpack.c.h.b16 %v6251
    %v6540 = vunpack.c.l.b16 %v6252
    %v6541 = vunpack.c.h.b16 %v6252
    %v6542 = vunpack.c.l.b16 %v6253
    %v6543 = vunpack.c.h.b16 %v6253
    %v6544 = vunpack.c.l.b16 %v6254
    %v6545 = vunpack.c.h.b16 %v6254
    %v6546 = vunpack.c.l.b16 %v6255
    %v6547 = vunpack.c.h.b16 %v6255
    %v6548 = vunpack.c.l.b16 %v6256
    %v6549 = vunpack.c.h.b16 %v6256
    %v6550 = vunpack.c.l.b16 %v6257
    %v6551 = vunpack.c.h.b16 %v6257
    %v6552 = vunpack.c.l.b16 %v6258
    %v6553 = vunpack.c.h.b16 %v6258
    %v6554 = vunpack.c.l.b16 %v6259
    %v6555 = vunpack.c.h.b16 %v6259
    %v6556 = vunpack.c.l.b16 %v6260
    %v6557 = vunpack.c.h.b16 %v6260
    %v6558 = vunpack.c.l.b16 %v6261
    %v6559 = vunpack.c.h.b16 %v6261
    %v6560 = vunpack.c.l.b16 %v6262
    %v6561 = vunpack.c.h.b16 %v6262
    %v6562 = vunpack.c.l.b16 %v6263
    %v6563 = vunpack.c.h.b16 %v6263
    %v6564 = vunpack.c.l.b16 %v6264
    %v6565 = vunpack.c.h.b16 %v6264
    %v6566 = vunpack.c.l.b16 %v6265
    %v6567 = vunpack.c.h.b16 %v6265
    %v6568 = vunpack.c.l.b16 %v6266
    %v6569 = vunpack.c.h.b16 %v6266
    %v6570 = vunpack.c.l.b16 %v6267
    %v6571 = vunpack.c.h.b16 %v6267
    %v6572 = vunpack.c.l.b16 %v6268
    %v6573 = vunpack.c.h.b16 %v6268
    %v6574 = vunpack.c.l.b16 %v6269
    %v6575 = vunpack.c.h.b16 %v6269
    %v6576 = vunpack.c.l.b16 %v6270
    %v6577 = vunpack.c.h.b16 %v6270
    %v6578 = vunpack.c.l.b16 %v6271
    %v6579 = vunpack.c.h.b16 %v6271
    %v6580 = vunpack.c.l.b16 %v6272
    %v6581 = vunpack.c.h.b16 %v6272
    %v6582 = vunpack.c.l.b16 %v6273
    %v6583 = vunpack.c.h.b16 %v6273
    %v6584 = vunpack.c.l.b16 %v6274
    %v6585 = vunpack.c.h.b16 %v6274
    %v6586 = vunpack.c.l.b16 %v6275
    %v6587 = vunpack.c.h.b16 %v6275
    %v6588 = vunpack.c.l.b16 %v6276
    %v6589 = vunpack.c.h.b16 %v6276
    %v6590 = vunpack.c.l.b16 %v6277
    %v6591 = vunpack.c.h.b16 %v6277
    %v6592 = vunpack.c.l.b16 %v6278
    %v6593 = vunpack.c.h.b16 %v6278
    %v6594 = vunpack.c.l.b16 %v6279
    %v6595 = vunpack.c.h.b16 %v6279
    %v6596 = vunpack.c.l.b16 %v6280
    %v6597 = vunpack.c.h.b16 %v6280
    %v6598 = vunpack.c.l.b16 %v6281
    %v6599 = vunpack.c.h.b16 %v6281
    %v6600 = vunpack.c.l.b16 %v6282
    %v6601 = vunpack.c.h.b16 %v6282
    %v6602 = vunpack.c.l.b16 %v6283
    %v6603 = vunpack.c.h.b16 %v6283
    %v6604 = vunpack.c.l.b16 %v6284
    %v6605 = vunpack.c.h.b16 %v6284
    %v6606 = vunpack.c.l.b16 %v6285
    %v6607 = vunpack.c.h.b16 %v6285
    %v6608 = vunpack.c.l.b16 %v6286
    %v6609 = vunpack.c.h.b16 %v6286
    %v6610 = vunpack.c.l.b16 %v6287
    %v6611 = vunpack.c.h.b16 %v6287
    %v6612 = vunpack.c.l.b16 %v6288
    %v6613 = vunpack.c.h.b16 %v6288
    %v6614 = vunpack.c.l.b16 %v6289
    %v6615 = vunpack.c.h.b16 %v6289
    %v6616 = vunpack.c.l.b16 %v6290
    %v6617 = vunpack.c.h.b16 %v6290
    %v6618 = vunpack.c.l.b16 %v6291
    %v6619 = vunpack.c.h.b16 %v6291
    %v6620 = vunpack.c.l.b16 %v6292
    %v6621 = vunpack.c.h.b16 %v6292
    %v6622 = vunpack.c.l.b16 %v6293
    %v6623 = vunpack.c.h.b16 %v6293
    %v6624 = vunpack.c.l.b16 %v6294
    %v6625 = vunpack.c.h.b16 %v6294
    %v6626 = vunpack.c.l.b16 %v6295
    %v6627 = vunpack.c.h.b16 %v6295
    %v6628 = vunpack.c.l.b16 %v6296
    %v6629 = vunpack.c.h.b16 %v6296
    %v6630 = vunpack.c.l.b16 %v6297
    %v6631 = vunpack.c.h.b16 %v6297
    %v6632 = vunpack.c.l.b16 %v6298
    %v6633 = vunpack.c.h.b16 %v6298
    %v6634 = vunpack.c.l.b16 %v6299
    %v6635 = vunpack.c.h.b16 %v6299
    %v6636 = vunpack.c.l.b16 %v6300
    %v6637 = vunpack.c.h.b16 %v6300
    %v6638 = vunpack.c.l.b16 %v6301
    %v6639 = vunpack.c.h.b16 %v6301
    %v6640 = vunpack.c.l.b16 %v6302
    %v6641 = vunpack.c.h.b16 %v6302
    %v6642 = vunpack.c.l.b16 %v6303
    %v6643 = vunpack.c.h.b16 %v6303
    %v6644 = vunpack.c.l.b16 %v6304
    %v6645 = vunpack.c.h.b16 %v6304
    %v6646 = vunpack.c.l.b16 %v6305
    %v6647 = vunpack.c.h.b16 %v6305
    %v6648 = vunpack.c.l.b16 %v6306
    %v6649 = vunpack.c.h.b16 %v6306
    %v6650 = vunpack.c.l.b16 %v6307
    %v6651 = vunpack.c.h.b16 %v6307
    %v6652 = vunpack.c.l.b16 %v6308
    %v6653 = vunpack.c.h.b16 %v6308
    %v6654 = vunpack.c.l.b16 %v6309
    %v6655 = vunpack.c.h.b16 %v6309
    %v6656 = vunpack.c.l.b16 %v6310
    %v6657 = vunpack.c.h.b16 %v6310
    %v6658 = vunpack.c.l.b16 %v6311
    %v6659 = vunpack.c.h.b16 %v6311
    %v6660 = vunpack.c.l.b16 %v6312
    %v6661 = vunpack.c.h.b16 %v6312
    %v6662 = vunpack.c.l.b16 %v6313
    %v6663 = vunpack.c.h.b16 %v6313
    %v6664 = vunpack.c.l.b16 %v6314
    %v6665 = vunpack.c.h.b16 %v6314
    %v6666 = vunpack.c.l.b16 %v6315
    %v6667 = vunpack.c.h.b16 %v6315
    %v6668 = vunpack.c.l.b16 %v6316
    %v6669 = vunpack.c.h.b16 %v6316
    %v6670 = vunpack.c.l.b16 %v6317
    %v6671 = vunpack.c.h.b16 %v6317
    %v6672 = vunpack.c.l.b16 %v6318
    %v6673 = vunpack.c.h.b16 %v6318
    %v6674 = vunpack.c.l.b16 %v6319
    %v6675 = vunpack.c.h.b16 %v6319
    %v6676 = vunpack.c.l.b16 %v6320
    %v6677 = vunpack.c.h.b16 %v6320
    %v6678 = vunpack.c.l.b16 %v6321
    %v6679 = vunpack.c.h.b16 %v6321
    %v6680 = vunpack.c.l.b16 %v6322
    %v6681 = vunpack.c.h.b16 %v6322
    %v6682 = vunpack.c.l.b16 %v6323
    %v6683 = vunpack.c.h.b16 %v6323
    %v6684 = vunpack.c.l.b16 %v6324
    %v6685 = vunpack.c.h.b16 %v6324
    %v6686 = vunpack.c.l.b16 %v6325
    %v6687 = vunpack.c.h.b16 %v6325
    %v6688 = vunpack.c.l.b16 %v6326
    %v6689 = vunpack.c.h.b16 %v6326
    %v6690 = vunpack.c.l.b16 %v6327
    %v6691 = vunpack.c.h.b16 %v6327
    %v6692 = vunpack.c.l.b16 %v6328
    %v6693 = vunpack.c.h.b16 %v6328
    %v6694 = vunpack.c.l.b16 %v6329
    %v6695 = vunpack.c.h.b16 %v6329
    %v6696 = vunpack.c.l.b16 %v6330
    %v6697 = vunpack.c.h.b16 %v6330
    %v6698 = vunpack.c.l.b16 %v6331
    %v6699 = vunpack.c.h.b16 %v6331
    %v6700 = vunpack.c.l.b16 %v6332
    %v6701 = vunpack.c.h.b16 %v6332
    %v6702 = vunpack.c.l.b16 %v6333
    %v6703 = vunpack.c.h.b16 %v6333
    %v6704 = vunpack.c.l.b16 %v6334
    %v6705 = vunpack.c.h.b16 %v6334
    %v6706 = vunpack.c.l.b16 %v6335
    %v6707 = vunpack.c.h.b16 %v6335
    %v6708 = vunpack.c.l.b16 %v6336
    %v6709 = vunpack.c.h.b16 %v6336
    %v6710 = vunpack.c.l.b16 %v6337
    %v6711 = vunpack.c.h.b16 %v6337
    %v6712 = vunpack.c.l.b16 %v6338
    %v6713 = vunpack.c.h.b16 %v6338
    %v6714 = vunpack.c.l.b16 %v6339
    %v6715 = vunpack.c.h.b16 %v6339
    %v6716 = vunpack.c.l.b16 %v6340
    %v6717 = vunpack.c.h.b16 %v6340
    %v6718 = vunpack.c.l.b16 %v6341
    %v6719 = vunpack.c.h.b16 %v6341
    %v6720 = vunpack.c.l.b16 %v6342
    %v6721 = vunpack.c.h.b16 %v6342
    %v6722 = vunpack.c.l.b16 %v6343
    %v6723 = vunpack.c.h.b16 %v6343
    %v6724 = vunpack.c.l.b16 %v6344
    %v6725 = vunpack.c.h.b16 %v6344
    %v6726 = vunpack.c.l.b16 %v6345
    %v6727 = vunpack.c.h.b16 %v6345
    %v6728 = vunpack.c.l.b16 %v6346
    %v6729 = vunpack.c.h.b16 %v6346
    %v6730 = vunpack.c.l.b16 %v6347
    %v6731 = vunpack.c.h.b16 %v6347
    %v6732 = vunpack.c.l.b16 %v6348
    %v6733 = vunpack.c.h.b16 %v6348
    %v6734 = vunpack.c.l.b16 %v6349
    %v6735 = vunpack.c.h.b16 %v6349
    %v6736 = vunpack.c.l.b16 %v6350
    %v6737 = vunpack.c.h.b16 %v6350
    %v6738 = vunpack.c.l.b16 %v6351
    %v6739 = vunpack.c.h.b16 %v6351
    %v6740 = vunpack.c.l.b16 %v6352
    %v6741 = vunpack.c.h.b16 %v6352
    %v6742 = vunpack.c.l.b16 %v6353
    %v6743 = vunpack.c.h.b16 %v6353
    %v6744 = vunpack.c.l.b16 %v6354
    %v6745 = vunpack.c.h.b16 %v6354
    %v6746 = vunpack.c.l.b16 %v6355
    %v6747 = vunpack.c.h.b16 %v6355
    %v6748 = vunpack.c.l.b16 %v6356
    %v6749 = vunpack.c.h.b16 %v6356
    %v6750 = vunpack.c.l.b16 %v6357
    %v6751 = vunpack.c.h.b16 %v6357
    %v6752 = vunpack.c.l.b16 %v6358
    %v6753 = vunpack.c.h.b16 %v6358
    %v6754 = vunpack.c.l.b16 %v6359
    %v6755 = vunpack.c.h.b16 %v6359
    %v6756 = vpack.c.b16 %v6502, %v6500
    %v6757 = vpack.c.b16 %v6503, %v6501
    %v6758 = vpack.c.b16 %v6506, %v6504
    %v6759 = vpack.c.b16 %v6507, %v6505
    %v6760 = vpack.c.b16 %v6510, %v6508
    %v6761 = vpack.c.b16 %v6511, %v6509
    %v6762 = vpack.c.b16 %v6514, %v6512
    %v6763 = vpack.c.b16 %v6515, %v6513
    %v6764 = vpack.c.b16 %v6518, %v6516
    %v6765 = vpack.c.b16 %v6519, %v6517
    %v6766 = vpack.c.b16 %v6522, %v6520
    %v6767 = vpack.c.b16 %v6523, %v6521
    %v6768 = vpack.c.b16 %v6526, %v6524
    %v6769 = vpack.c.b16 %v6527, %v6525
    %v6770 = vpack.c.b16 %v6530, %v6528
    %v6771 = vpack.c.b16 %v6531, %v6529
    %v6772 = vpack.c.b16 %v6534, %v6532
    %v6773 = vpack.c.b16 %v6535, %v6533
    %v6774 = vpack.c.b16 %v6538, %v6536
    %v6775 = vpack.c.b16 %v6539, %v6537
    %v6776 = vpack.c.b16 %v6542, %v6540
    %v6777 = vpack.c.b16 %v6543, %v6541
    %v6778 = vpack.c.b16 %v6546, %v6544
    %v6779 = vpack.c.b16 %v6547, %v6545
    %v6780 = vpack.c.b16 %v6550, %v6548
    %v6781 = vpack.c.b16 %v6551, %v6549
    %v6782 = vpack.c.b16 %v6554, %v6552
    %v6783 = vpack.c.b16 %v6555, %v6553
    %v6784 = vpack.c.b16 %v6558, %v6556
    %v6785 = vpack.c.b16 %v6559, %v6557
    %v6786 = vpack.c.b16 %v6562, %v6560
    %v6787 = vpack.c.b16 %v6563, %v6561
    %v6788 = vpack.c.b16 %v6566, %v6564
    %v6789 = vpack.c.b16 %v6567, %v6565
    %v6790 = vpack.c.b16 %v6570, %v6568
    %v6791 = vpack.c.b16 %v6571, %v6569
    %v6792 = vpack.c.b16 %v6574, %v6572
    %v6793 = vpack.c.b16 %v6575, %v6573
    %v6794 = vpack.c.b16 %v6578, %v6576
    %v6795 = vpack.c.b16 %v6579, %v6577
    %v6796 = vpack.c.b16 %v6582, %v6580
    %v6797 = vpack.c.b16 %v6583, %v6581
    %v6798 = vpack.c.b16 %v6586, %v6584
    %v6799 = vpack.c.b16 %v6587, %v6585
    %v6800 = vpack.c.b16 %v6590, %v6588
    %v6801 = vpack.c.b16 %v6591, %v6589
    %v6802 = vpack.c.b16 %v6594, %v6592
    %v6803 = vpack.c.b16 %v6595, %v6593
    %v6804 = vpack.c.b16 %v6598, %v6596
    %v6805 = vpack.c.b16 %v6599, %v6597
    %v6806 = vpack.c.b16 %v6602, %v6600
    %v6807 = vpack.c.b16 %v6603, %v6601
    %v6808 = vpack.c.b16 %v6606, %v6604
    %v6809 = vpack.c.b16 %v6607, %v6605
    %v6810 = vpack.c.b16 %v6610, %v6608
    %v6811 = vpack.c.b16 %v6611, %v6609
    %v6812 = vpack.c.b16 %v6614, %v6612
    %v6813 = vpack.c.b16 %v6615, %v6613
    %v6814 = vpack.c.b16 %v6618, %v6616
    %v6815 = vpack.c.b16 %v6619, %v6617
    %v6816 = vpack.c.b16 %v6622, %v6620
    %v6817 = vpack.c.b16 %v6623, %v6621
    %v6818 = vpack.c.b16 %v6626, %v6624
    %v6819 = vpack.c.b16 %v6627, %v6625
    %v6820 = vpack.c.b16 %v6630, %v6628
    %v6821 = vpack.c.b16 %v6631, %v6629
    %v6822 = vpack.c.b16 %v6634, %v6632
    %v6823 = vpack.c.b16 %v6635, %v6633
    %v6824 = vpack.c.b16 %v6638, %v6636
    %v6825 = vpack.c.b16 %v6639, %v6637
    %v6826 = vpack.c.b16 %v6642, %v6640
    %v6827 = vpack.c.b16 %v6643, %v6641
    %v6828 = vpack.c.b16 %v6646, %v6644
    %v6829 = vpack.c.b16 %v6647, %v6645
    %v6830 = vpack.c.b16 %v6650, %v6648
    %v6831 = vpack.c.b16 %v6651, %v6649
    %v6832 = vpack.c.b16 %v6654, %v6652
    %v6833 = vpack.c.b16 %v6655, %v6653
    %v6834 = vpack.c.b16 %v6658, %v6656
    %v6835 = vpack.c.b16 %v6659, %v6657
    %v6836 = vpack.c.b16 %v6662, %v6660
    %v6837 = vpack.c.b16 %v6663, %v6661
    %v6838 = vpack.c.b16 %v6666, %v6664
    %v6839 = vpack.c.b16 %v6667, %v6665
    %v6840 = vpack.c.b16 %v6670, %v6668
    %v6841 = vpack.c.b16 %v6671, %v6669
    %v6842 = vpack.c.b16 %v6674, %v6672
    %v6843 = vpack.c.b16 %v6675, %v6673
    %v6844 = vpack.c.b16 %v6678, %v6676
    %v6845 = vpack.c.b16 %v6679, %v6677
    %v6846 = vpack.c.b16 %v6682, %v6680
    %v6847 = vpack.c.b16 %v6683, %v6681
    %v6848 = vpack.c.b16 %v6686, %v6684
    %v6849 = vpack.c.b16 %v6687, %v6685
    %v6850 = vpack.c.b16 %v6690, %v6688
    %v6851 = vpack.c.b16 %v6691, %v6689
    %v6852 = vpack.c.b16 %v6694, %v6692
    %v6853 = vpack.c.b16 %v6695, %v6693
    %v6854 = vpack.c.b16 %v6698, %v6696
    %v6855 = vpack.c.b16 %v6699, %v6697
    %v6856 = vpack.c.b16 %v6702, %v6700
    %v6857 = vpack.c.b16 %v6703, %v6701
    %v6858 = vpack.c.b16 %v6706, %v6704
    %v6859 = vpack.c.b16 %v6707, %v6705
    %v6860 = vpack.c.b16 %v6710, %v6708
    %v6861 = vpack.c.b16 %v6711, %v6709
    %v6862 = vpack.c.b16 %v6714, %v6712
    %v6863 = vpack.c.b16 %v6715, %v6713
    %v6864 = vpack.c.b16 %v6718, %v6716
    %v6865 = vpack.c.b16 %v6719, %v6717
    %v6866 = vpack.c.b16 %v6722, %v6720
    %v6867 = vpack.c.b16 %v6723, %v6721
    %v6868 = vpack.c.b16 %v6726, %v6724
    %v6869 = vpack.c.b16 %v6727, %v6725
    %v6870 = vpack.c.b16 %v6730, %v6728
    %v6871 = vpack.c.b16 %v6731, %v6729
    %v6872 = vpack.c.b16 %v6734, %v6732
    %v6873 = vpack.c.b16 %v6735, %v6733
    %v6874 = vpack.c.b16 %v6738, %v6736
    %v6875 = vpack.c.b16 %v6739, %v6737
    %v6876 = vpack.c.b16 %v6742, %v6740
    %v6877 = vpack.c.b16 %v6743, %v6741
    %v6878 = vpack.c.b16 %v6746, %v6744
    %v6879 = vpack.c.b16 %v6747, %v6745
    %v6880 = vpack.c.b16 %v6750, %v6748
    %v6881 = vpack.c.b16 %v6751, %v6749
    %v6882 = vpack.c.b16 %v6754, %v6752
    %v6883 = vpack.c.b16 %v6755, %v6753
    %7012 = vmatprep.subr.bf16.mxu0 %v6771
    %7013 = vmatpush1.bf16.msra.mxu0 %v6770
    %7014 = vmatprep.subr.bf16.mxu0 %v6769
    %7015 = vmatpush1.bf16.msra.mxu0 %v6768
    %7016 = vmatprep.subr.bf16.mxu0 %v6767
    %7017 = vmatpush1.bf16.msra.mxu0 %v6766
    %7018 = vmatprep.subr.bf16.mxu0 %v6765
    %7019 = vmatpush1.bf16.msra.mxu0 %v6764
    %7020 = vmatprep.subr.bf16.mxu0 %v6763
    %7021 = vmatpush1.bf16.msra.mxu0 %v6762
    %7022 = vmatprep.subr.bf16.mxu0 %v6761
    %7023 = vmatpush1.bf16.msra.mxu0 %v6760
    %7024 = vmatprep.subr.bf16.mxu0 %v6759
    %7025 = vmatpush1.bf16.msra.mxu0 %v6758
    %7026 = vmatprep.subr.bf16.mxu0 %v6757
    %7027 = vmatpush1.bf16.msra.mxu0 %v6756
    %7028 = vmatprep.subr.bf16.mxu0 %v6787
    %7029 = vmatpush2.bf16.msra.mxu0 %v6786
    %7030 = vmatprep.subr.bf16.mxu0 %v6785
    %7031 = vmatpush2.bf16.msra.mxu0 %v6784
    %7032 = vmatprep.subr.bf16.mxu0 %v6783
    %7033 = vmatpush2.bf16.msra.mxu0 %v6782
    %7034 = vmatprep.subr.bf16.mxu0 %v6781
    %7035 = vmatpush2.bf16.msra.mxu0 %v6780
    %7036 = vmatprep.subr.bf16.mxu0 %v6779
    %7037 = vmatpush2.bf16.msra.mxu0 %v6778
    %7038 = vmatprep.subr.bf16.mxu0 %v6777
    %7039 = vmatpush2.bf16.msra.mxu0 %v6776
    %7040 = vmatprep.subr.bf16.mxu0 %v6775
    %7041 = vmatpush2.bf16.msra.mxu0 %v6774
    %7042 = vmatprep.subr.bf16.mxu0 %v6773
    %7043 = vmatpush2.bf16.msra.mxu0 %v6772
    %7044 = vmatprep.mubr.bf16.mxu0 %v6225
    %7045 = vmatmul.mubr.bf16.gmra.mxu0 %v6224
    %v7046 = vpop.f32.mrf.mxu0
    %v7047 = vadd.f32 %v6365, %v7046
    %v7048 = vpop.f32.mrf.mxu0
    %v7049 = vadd.f32 %v6369, %v7048
    %v7050 = vpop.f32.mrf.mxu0
    %v7051 = vadd.f32 %v6365, %v7050
    %v7052 = vpop.f32.mrf.mxu0
    %v7053 = vadd.f32 %v6369, %v7052
    %7054 = vdwg.mxu0
    %7055 = vmatprep.subr.bf16.mxu0 %v6803
    %7056 = vmatpush1.bf16.msra.mxu0 %v6802
    %7057 = vmatprep.subr.bf16.mxu0 %v6801
    %7058 = vmatpush1.bf16.msra.mxu0 %v6800
    %7059 = vmatprep.subr.bf16.mxu0 %v6799
    %7060 = vmatpush1.bf16.msra.mxu0 %v6798
    %7061 = vmatprep.subr.bf16.mxu0 %v6797
    %7062 = vmatpush1.bf16.msra.mxu0 %v6796
    %7063 = vmatprep.subr.bf16.mxu0 %v6795
    %7064 = vmatpush1.bf16.msra.mxu0 %v6794
    %7065 = vmatprep.subr.bf16.mxu0 %v6793
    %7066 = vmatpush1.bf16.msra.mxu0 %v6792
    %7067 = vmatprep.subr.bf16.mxu0 %v6791
    %7068 = vmatpush1.bf16.msra.mxu0 %v6790
    %7069 = vmatprep.subr.bf16.mxu0 %v6789
    %7070 = vmatpush1.bf16.msra.mxu0 %v6788
    %7071 = vmatprep.subr.bf16.mxu0 %v6819
    %7072 = vmatpush2.bf16.msra.mxu0 %v6818
    %7073 = vmatprep.subr.bf16.mxu0 %v6817
    %7074 = vmatpush2.bf16.msra.mxu0 %v6816
    %7075 = vmatprep.subr.bf16.mxu0 %v6815
    %7076 = vmatpush2.bf16.msra.mxu0 %v6814
    %7077 = vmatprep.subr.bf16.mxu0 %v6813
    %7078 = vmatpush2.bf16.msra.mxu0 %v6812
    %7079 = vmatprep.subr.bf16.mxu0 %v6811
    %7080 = vmatpush2.bf16.msra.mxu0 %v6810
    %7081 = vmatprep.subr.bf16.mxu0 %v6809
    %7082 = vmatpush2.bf16.msra.mxu0 %v6808
    %7083 = vmatprep.subr.bf16.mxu0 %v6807
    %7084 = vmatpush2.bf16.msra.mxu0 %v6806
    %7085 = vmatprep.subr.bf16.mxu0 %v6805
    %7086 = vmatpush2.bf16.msra.mxu0 %v6804
    %7087 = vmatprep.mubr.bf16.mxu0 %v6227
    %7088 = vmatmul.mubr.bf16.gmra.mxu0 %v6226
    %v7089 = vpop.f32.mrf.mxu0
    %v7090 = vadd.f32 %v7047, %v7089
    %v7091 = vpop.f32.mrf.mxu0
    %v7092 = vadd.f32 %v7049, %v7091
    %v7093 = vpop.f32.mrf.mxu0
    %v7094 = vadd.f32 %v7051, %v7093
    %v7095 = vpop.f32.mrf.mxu0
    %v7096 = vadd.f32 %v7053, %v7095
    %7097 = vdwg.mxu0
    %7098 = vmatprep.subr.bf16.mxu0 %v6835
    %7099 = vmatpush1.bf16.msra.mxu0 %v6834
    %7100 = vmatprep.subr.bf16.mxu0 %v6833
    %7101 = vmatpush1.bf16.msra.mxu0 %v6832
    %7102 = vmatprep.subr.bf16.mxu0 %v6831
    %7103 = vmatpush1.bf16.msra.mxu0 %v6830
    %7104 = vmatprep.subr.bf16.mxu0 %v6829
    %7105 = vmatpush1.bf16.msra.mxu0 %v6828
    %7106 = vmatprep.subr.bf16.mxu0 %v6827
    %7107 = vmatpush1.bf16.msra.mxu0 %v6826
    %7108 = vmatprep.subr.bf16.mxu0 %v6825
    %7109 = vmatpush1.bf16.msra.mxu0 %v6824
    %7110 = vmatprep.subr.bf16.mxu0 %v6823
    %7111 = vmatpush1.bf16.msra.mxu0 %v6822
    %7112 = vmatprep.subr.bf16.mxu0 %v6821
    %7113 = vmatpush1.bf16.msra.mxu0 %v6820
    %7114 = vmatprep.subr.bf16.mxu0 %v6851
    %7115 = vmatpush2.bf16.msra.mxu0 %v6850
    %7116 = vmatprep.subr.bf16.mxu0 %v6849
    %7117 = vmatpush2.bf16.msra.mxu0 %v6848
    %7118 = vmatprep.subr.bf16.mxu0 %v6847
    %7119 = vmatpush2.bf16.msra.mxu0 %v6846
    %7120 = vmatprep.subr.bf16.mxu0 %v6845
    %7121 = vmatpush2.bf16.msra.mxu0 %v6844
    %7122 = vmatprep.subr.bf16.mxu0 %v6843
    %7123 = vmatpush2.bf16.msra.mxu0 %v6842
    %7124 = vmatprep.subr.bf16.mxu0 %v6841
    %7125 = vmatpush2.bf16.msra.mxu0 %v6840
    %7126 = vmatprep.subr.bf16.mxu0 %v6839
    %7127 = vmatpush2.bf16.msra.mxu0 %v6838
    %7128 = vmatprep.subr.bf16.mxu0 %v6837
    %7129 = vmatpush2.bf16.msra.mxu0 %v6836
    %7130 = vmatprep.mubr.bf16.mxu0 %v6229
    %7131 = vmatmul.mubr.bf16.gmra.mxu0 %v6228
    %v7132 = vpop.f32.mrf.mxu0
    %v7133 = vadd.f32 %v7090, %v7132
    %v7134 = vpop.f32.mrf.mxu0
    %v7135 = vadd.f32 %v7092, %v7134
    %v7136 = vpop.f32.mrf.mxu0
    %v7137 = vadd.f32 %v7094, %v7136
    %v7138 = vpop.f32.mrf.mxu0
    %v7139 = vadd.f32 %v7096, %v7138
    %7140 = vdwg.mxu0
    %7141 = vmatprep.subr.bf16.mxu0 %v6867
    %7142 = vmatpush1.bf16.msra.mxu0 %v6866
    %7143 = vmatprep.subr.bf16.mxu0 %v6865
    %7144 = vmatpush1.bf16.msra.mxu0 %v6864
    %7145 = vmatprep.subr.bf16.mxu0 %v6863
    %7146 = vmatpush1.bf16.msra.mxu0 %v6862
    %7147 = vmatprep.subr.bf16.mxu0 %v6861
    %7148 = vmatpush1.bf16.msra.mxu0 %v6860
    %7149 = vmatprep.subr.bf16.mxu0 %v6859
    %7150 = vmatpush1.bf16.msra.mxu0 %v6858
    %7151 = vmatprep.subr.bf16.mxu0 %v6857
    %7152 = vmatpush1.bf16.msra.mxu0 %v6856
    %7153 = vmatprep.subr.bf16.mxu0 %v6855
    %7154 = vmatpush1.bf16.msra.mxu0 %v6854
    %7155 = vmatprep.subr.bf16.mxu0 %v6853
    %7156 = vmatpush1.bf16.msra.mxu0 %v6852
    %7157 = vmatprep.subr.bf16.mxu0 %v6883
    %7158 = vmatpush2.bf16.msra.mxu0 %v6882
    %7159 = vmatprep.subr.bf16.mxu0 %v6881
    %7160 = vmatpush2.bf16.msra.mxu0 %v6880
    %7161 = vmatprep.subr.bf16.mxu0 %v6879
    %7162 = vmatpush2.bf16.msra.mxu0 %v6878
    %7163 = vmatprep.subr.bf16.mxu0 %v6877
    %7164 = vmatpush2.bf16.msra.mxu0 %v6876
    %7165 = vmatprep.subr.bf16.mxu0 %v6875
    %7166 = vmatpush2.bf16.msra.mxu0 %v6874
    %7167 = vmatprep.subr.bf16.mxu0 %v6873
    %7168 = vmatpush2.bf16.msra.mxu0 %v6872
    %7169 = vmatprep.subr.bf16.mxu0 %v6871
    %7170 = vmatpush2.bf16.msra.mxu0 %v6870
    %7171 = vmatprep.subr.bf16.mxu0 %v6869
    %7172 = vmatpush2.bf16.msra.mxu0 %v6868
    %7173 = vmatprep.mubr.bf16.mxu0 %v6231
    %7174 = vmatmul.mubr.bf16.gmra.mxu0 %v6230
    %v7175 = vpop.f32.mrf.mxu0
    %v7176 = vadd.f32 %v7133, %v7175
    %v7177 = vpop.f32.mrf.mxu0
    %v7178 = vadd.f32 %v7135, %v7177
    %v7179 = vpop.f32.mrf.mxu0
    %v7180 = vadd.f32 %v7137, %v7179
    %v7181 = vpop.f32.mrf.mxu0
    %v7182 = vadd.f32 %v7139, %v7181
    %7183 = vdwg.mxu0
    %7184 = vst [vmem:[%s12] sm:$0xff] %v7176
    %7185 = vst [vmem:[%s12 + $0x8] sm:$0xff] %v7178
    %7186 = vst [vmem:[%s12 + $0x10] sm:$0xff] %v7180
    %7187 = vst [vmem:[%s12 + $0x18] sm:$0xff] %v7182
    // Predicated region
    $region61: #{forward.1} parent=1 // pred_check
      _
    $region62: #{forward.1} parent=1 // pred_check_branch
      %7189 = sbr.rel (0) target = $region64
    $region63: #{forward.1} parent=1 // pred_region
      _
    $region64: #{forward.1} parent=1 // pred_fallthru
      _
    // Predicated region
    $region65: #{forward.1} parent=1 // pred_check
      _
    $region66: #{forward.1} parent=1 // pred_check_branch
      %7191 = sbr.rel (0) target = $region68
    $region67: #{forward.1} parent=1 // pred_region
      _
    $region68: #{forward.1} parent=1 // pred_fallthru
      _
    %7192 = vsyncpa [#allocation3], 1

</llo_original>
